<compile_context>
chip_gen: v7x
topology: tpu7x:2x2x1
jax: 0.10.0
libtpu: 0.0.40
codegen_flags: <defaults>
</compile_context>

<pallas_src>
import functools
import itertools
import math
import types

import jax
import jax.numpy as jnp
from jax import lax
from jax.experimental import pallas as pl
from jax.experimental.pallas import tpu as pltpu

BN_EPS = 1e-3
BN_SCALE = 1.0 / math.sqrt(1.0 + BN_EPS)   # folded eval-mode BatchNorm
ACT_DTYPE = jnp.bfloat16                   # activations / weights on the MXU
TM = 256                                   # output-row tile (multiple of 16)


# ---------------------------------------------------------------------------
# Core Pallas kernel: tap-reduction matmul with fused BN / ReLU / mask epilogue
# ---------------------------------------------------------------------------
def _tap_matmul_kernel(*refs, offsets, tm, relu, use_mask):
    if use_mask:
        x_ref, w_ref, s_ref, b_ref, m_ref, o_ref = refs
    else:
        x_ref, w_ref, s_ref, b_ref, o_ref = refs
        m_ref = None
    cout = o_ref.shape[-1]
    base = pl.program_id(0) * tm
    acc = jnp.zeros((tm, cout), jnp.float32)
    for t, off in enumerate(offsets):            # static unrolled tap loop
        q = (off // 16) * 16                     # 16-aligned part of tap offset
        r = off - q                              # static residual shift (< 16)
        start = pl.multiple_of(base + q, 16)
        blk = x_ref[pl.ds(start, tm + 16), :]    # aligned dynamic row window
        a = blk[r:r + tm, :]                     # static residual slice (bf16)
        acc = acc + jnp.dot(a, w_ref[t], preferred_element_type=jnp.float32)
    acc = acc * s_ref[...] + b_ref[...]          # folded BatchNorm
    if relu:
        acc = jnp.maximum(acc, 0.0)
    if use_mask:
        acc = acc * m_ref[...]                   # fused submanifold mask
    o_ref[...] = acc.astype(o_ref.dtype)


def tap_matmul(xf, w, scale, bias, offsets, mask=None, relu=True, tm=TM):
    """y[r] = epilogue(sum_t xf[r + offsets[t]] @ w[t]) for r in [0, R).

    xf:   (R, Cin)  activation rows (flattened padded grid positions)
    w:    (T, Cin, Cout)
    mask: (R, 1) or None -- fused multiplicative row mask (submanifold sparsity)
    """
    R, cin = xf.shape
    T, _, cout = w.shape
    n_tiles = pl.cdiv(R, tm)
    r_out = n_tiles * tm
    off_max = max(offsets)
    r_in = n_tiles * tm + (off_max // 16) * 16 + 16     # rows reachable in-kernel
    xf_p = jnp.pad(xf.astype(ACT_DTYPE), ((0, r_in - R), (0, 0)))

    in_specs = [
        pl.BlockSpec((r_in, cin), lambda i: (0, 0)),        # whole activation, resident
        pl.BlockSpec((T, cin, cout), lambda i: (0, 0, 0)),  # whole weight, resident
        pl.BlockSpec((1, cout), lambda i: (0, 0)),
        pl.BlockSpec((1, cout), lambda i: (0, 0)),
    ]
    args = [xf_p, w.astype(ACT_DTYPE),
            scale.reshape(1, cout).astype(jnp.float32),
            bias.reshape(1, cout).astype(jnp.float32)]
    use_mask = mask is not None
    if use_mask:
        mk = jnp.pad(mask.astype(jnp.float32), ((0, r_out - R), (0, 0)))
        in_specs.append(pl.BlockSpec((tm, 1), lambda i: (i, 0)))
        args.append(mk)

    flops = 2 * r_out * T * cin * cout
    bytes_accessed = int(xf_p.size) * 2 + int(w.size) * 2 + r_out * cout * 2
    out = pl.pallas_call(
        functools.partial(_tap_matmul_kernel,
                          offsets=tuple(int(o) for o in offsets),
                          tm=tm, relu=relu, use_mask=use_mask),
        out_shape=jax.ShapeDtypeStruct((r_out, cout), ACT_DTYPE),
        grid=(n_tiles,),
        in_specs=in_specs,
        out_specs=pl.BlockSpec((tm, cout), lambda i: (i, 0)),
        compiler_params=pltpu.CompilerParams(dimension_semantics=("parallel",)),
        cost_estimate=pl.CostEstimate(flops=flops, transcendentals=0,
                                      bytes_accessed=bytes_accessed),
    )(*args)
    return out[:R]


# ---------------------------------------------------------------------------
# Conv wrapper: flatten padded grid to rows; taps become static row offsets
# ---------------------------------------------------------------------------
def conv_nd_affine(x, w, scale, bias, ksize, stride, padding, relu, mask=None):
    """Dense n-D conv + folded BN (+ ReLU, + optional submanifold mask).

    x: (B, *spatial, Cin); w: (prod(ksize), Cin, Cout).
    A stride-1 "full" conv over the zero-padded grid is computed entirely inside
    the Pallas kernel; strided outputs are subsampled afterwards in XLA.
    """
    B = x.shape[0]
    spatial = x.shape[1:-1]
    cin = x.shape[-1]
    cout = w.shape[-1]
    pads = [(0, 0)] + [(p, p) for p in padding] + [(0, 0)]
    xp = jnp.pad(x.astype(ACT_DTYPE), pads)
    sp = tuple(s + 2 * p for s, p in zip(spatial, padding))
    rstr = [1] * len(sp)                          # flat row strides of padded grid
    for d in range(len(sp) - 2, -1, -1):
        rstr[d] = rstr[d + 1] * sp[d + 1]
    offsets = [sum(t * s for t, s in zip(tap, rstr))
               for tap in itertools.product(*[range(k) for k in ksize])]
    R = B * math.prod(sp)
    xf = xp.reshape(R, cin)
    maskf = None
    if mask is not None:
        maskf = jnp.pad(mask.astype(jnp.float32), pads).reshape(R, 1)
    y = tap_matmul(xf, w, scale, bias, offsets, mask=maskf, relu=relu)
    yfull = y.reshape((B,) + sp + (cout,))
    slc = [slice(None)]
    for s_dim, k, st, p in zip(spatial, ksize, stride, padding):
        dout = (s_dim + 2 * p - k) // st + 1
        slc.append(slice(0, (dout - 1) * st + 1, st))
    slc.append(slice(None))
    return yfull[tuple(slc)]


# ---------------------------------------------------------------------------
# Module pieces (glue in XLA)
# ---------------------------------------------------------------------------
def compute_grid_shape(cfg):
    lower, upper = cfg.GRID_BOUNDS[:3], cfg.GRID_BOUNDS[3:]
    gs = [int(round((u - l) / v)) for l, u, v in zip(lower, upper, cfg.VOXEL_SIZE)]
    gs = [gs[0], gs[1], gs[2] + 1]
    return gs[::-1]   # ZYX -> (D, H, W)


def voxel_feature_extractor(features, occupancy):
    """Mean of (zero-padded) points per voxel: (N, K, C), (N,) -> (N, C)."""
    # TODO(synk): kept in XLA — C=4 lanes is too narrow to usefully occupy a vreg.
    occ = jnp.maximum(occupancy.astype(jnp.float32), 1.0)[:, None]
    return (jnp.sum(features.astype(jnp.float32), axis=1) / occ).astype(ACT_DTYPE)


def downsample_mask(mask, ksize, stride, padding):
    """Active-site bookkeeping for a strided sparse conv (glue, not a hot path)."""
    return lax.reduce_window(
        mask, 0.0, lax.max,
        window_dimensions=(1,) + tuple(ksize) + (1,),
        window_strides=(1,) + tuple(stride) + (1,),
        padding=((0, 0),) + tuple((p, p) for p in padding) + ((0, 0),))


def middle_forward(params, voxel_feats, coords, batch_size, grid_shape):
    D, H, W = grid_shape
    C_in = voxel_feats.shape[-1]
    dense = jnp.zeros((batch_size, D, H, W, C_in), ACT_DTYPE)
    dense = dense.at[coords[:, 0], coords[:, 1], coords[:, 2], coords[:, 3]].set(
        voxel_feats.astype(ACT_DTYPE))
    mask = jnp.zeros((batch_size, D, H, W, 1), jnp.float32)
    mask = mask.at[coords[:, 0], coords[:, 1], coords[:, 2], coords[:, 3], 0].set(1.0)

    x = dense
    for block in params["blocks"]:
        for layer in block:
            is_subm = layer["kind"] == "subm"
            x = conv_nd_affine(x, layer["w"], layer["scale"], layer["bias"],
                               layer["ksize"], layer["stride"], layer["pad"],
                               relu=True, mask=mask if is_subm else None)
            if not is_subm:
                mask = downsample_mask(mask, layer["ksize"], layer["stride"],
                                       layer["pad"])
    # to_bev: torch dense (B, C, D, H, W) -> (B, C*D, H, W); channel index = c*D + d
    B, D4, H4, W4, C4 = x.shape
    bev = jnp.transpose(x, (0, 2, 3, 4, 1)).reshape(B, H4, W4, C4 * D4)
    return bev


def rpn_forward(params, x):
    for layer in params["down"]:
        x = conv_nd_affine(x, layer["w"], layer["scale"], layer["bias"],
                           (3, 3), (1, 1), (1, 1), relu=True)
    up = params["up"]
    x = conv_nd_affine(x, up["w"], up["scale"], up["bias"],
                       (1, 1), (1, 1), (0, 0), relu=True)
    return x


def head_forward(params, x, cfg):
    B, ny, nx, C = x.shape
    n_cls, n_yaw, dof = cfg.NUM_CLASSES, cfg.NUM_YAW, cfg.BOX_DOF
    n_cls_ch = n_cls * n_yaw
    n_reg_ch = n_cls * n_yaw * dof
    a = x.reshape(-1, C)
    # cls + reg 1x1 convs fused into one lane-dense (128-wide) matmul
    y = tap_matmul(a, params["w"], params["scale"], params["bias"],
                   offsets=(0,), mask=None, relu=False).astype(jnp.float32)
    cls_flat = y[:, :n_cls_ch]
    reg_flat = y[:, n_cls_ch:n_cls_ch + n_reg_ch]
    cls_nchw = cls_flat.reshape(B, ny, nx, n_cls_ch).transpose(0, 3, 1, 2)
    cls_map = cls_nchw.reshape(B, n_cls, n_yaw, ny, nx)
    reg_nchw = reg_flat.reshape(B, ny, nx, n_reg_ch).transpose(0, 3, 1, 2)
    reg_map = reg_nchw.reshape(B, n_cls, dof, n_yaw, ny, nx).transpose(0, 1, 3, 4, 5, 2)
    return cls_map, reg_map


def second_forward(params, item, cfg, grid_shape):
    feats = voxel_feature_extractor(item["features"], item["occupancy"])
    bev = middle_forward(params["cnn"], feats, item["coordinates"],
                         item["batch_size"], grid_shape)
    x = rpn_forward(params["rpn"], bev)
    cls_map, reg_map = head_forward(params["head"], x, cfg)
    out = dict(item)
    out.update(dict(P_cls=cls_map, P_reg=reg_map))
    return out


# ---------------------------------------------------------------------------
# Deterministic parameter init (weights stored bf16, taps-major layout)
# ---------------------------------------------------------------------------
def _conv_init(key, t, cin, cout):
    w = jax.random.normal(key, (t, cin, cout), jnp.float32) * math.sqrt(2.0 / (t * cin))
    return w.astype(ACT_DTYPE)


def init_params(key, cfg):
    def bn_fold(cout):
        return (jnp.full((cout,), BN_SCALE, jnp.float32),
                jnp.zeros((cout,), jnp.float32))

    # Middle (SpMiddleFHD) block specs: (kind, Cin, Cout, ksize, stride, pad)
    specs = [
        [("subm", cfg.C_IN, 16, (3, 3, 3), (1, 1, 1), (1, 1, 1)),
         ("subm", 16, 16, (3, 3, 3), (1, 1, 1), (1, 1, 1)),
         ("conv", 16, 32, (3, 3, 3), (2, 2, 2), (1, 1, 1))],
        [("subm", 32, 32, (3, 3, 3), (1, 1, 1), (1, 1, 1)),
         ("subm", 32, 32, (3, 3, 3), (1, 1, 1), (1, 1, 1)),
         ("conv", 32, 64, (3, 3, 3), (2, 2, 2), (1, 1, 1))],
        [("subm", 64, 64, (3, 3, 3), (1, 1, 1), (1, 1, 1))] * 3 +
        [("conv", 64, 64, (3, 3, 3), (2, 2, 2), (0, 1, 1))],
        [("subm", 64, 64, (3, 3, 3), (1, 1, 1), (1, 1, 1))] * 3 +
        [("conv", 64, 64, (3, 1, 1), (2, 1, 1), (0, 0, 0))],
    ]
    blocks = []
    for blk in specs:
        layers = []
        for kind, cin, cout, ksize, stride, pad in blk:
            key, sub = jax.random.split(key)
            scale, bias = bn_fold(cout)
            layers.append(dict(kind=kind, ksize=ksize, stride=stride, pad=pad,
                               w=_conv_init(sub, math.prod(ksize), cin, cout),
                               scale=scale, bias=bias))
        blocks.append(layers)
    cnn = dict(blocks=blocks)

    # RPN: 6 x (conv3x3 128->128, BN, ReLU) down, 1 x (conv1x1, BN, ReLU) up
    down = []
    for _ in range(6):
        key, sub = jax.random.split(key)
        scale, bias = bn_fold(128)
        down.append(dict(w=_conv_init(sub, 9, 128, 128), scale=scale, bias=bias))
    key, sub = jax.random.split(key)
    scale, bias = bn_fold(128)
    up = dict(w=_conv_init(sub, 1, 128, 128), scale=scale, bias=bias)
    rpn = dict(down=down, up=up)

    # ProposalLayer: cls & reg 1x1 convs fused into one 128-wide weight
    n_cls_ch = cfg.NUM_CLASSES * cfg.NUM_YAW
    n_reg_ch = cfg.NUM_CLASSES * cfg.NUM_YAW * cfg.BOX_DOF
    key, k1, k2 = jax.random.split(key, 3)
    w_head = jnp.zeros((1, 128, 128), jnp.float32)
    w_head = w_head.at[0, :, :n_cls_ch].set(
        jax.random.normal(k1, (128, n_cls_ch), jnp.float32) * 0.01)
    w_head = w_head.at[0, :, n_cls_ch:n_cls_ch + n_reg_ch].set(
        jax.random.normal(k2, (128, n_reg_ch), jnp.float32) * 0.01)
    b_head = jnp.zeros((128,), jnp.float32)
    b_head = b_head.at[:n_cls_ch].set(-math.log((1 - 0.01) / 0.01))  # focal prior
    head = dict(w=w_head.astype(ACT_DTYPE),
                scale=jnp.ones((128,), jnp.float32), bias=b_head)
    return dict(cnn=cnn, rpn=rpn, head=head)


# ---------------------------------------------------------------------------
# Main
# ---------------------------------------------------------------------------
if __name__ == "__main__":
    cfg = types.SimpleNamespace(
        C_IN=4, NUM_CLASSES=3, NUM_YAW=2, BOX_DOF=7,
        VOXEL_SIZE=[0.25, 0.25, 0.25],
        GRID_BOUNDS=[0.0, 0.0, 0.0, 4.0, 4.0, 10.0],
        PROPOSAL=types.SimpleNamespace(C_IN=128, TOPK=16),
    )
    grid_shape = compute_grid_shape(cfg)           # (D, H, W) = (41, 16, 16)
    D, H, W = grid_shape

    key = jax.random.PRNGKey(0)
    key, kp, kf, ko, kc = jax.random.split(key, 5)
    params = init_params(kp, cfg)

    # Synthetic sparse point cloud: B=2 samples, 32 unique voxels each, K=8 pts/voxel.
    B, n_vox_per_batch, K_pts = 2, 32, 8
    N_vox = B * n_vox_per_batch
    coords_list = []
    for b in range(B):
        flat_idx = jax.random.choice(jax.random.fold_in(kc, b), D * H * W,
                                     (n_vox_per_batch,), replace=False)
        z = flat_idx // (H * W)
        y = (flat_idx // W) % H
        x = flat_idx % W
        coords_list.append(jnp.stack([jnp.full_like(z, b), z, y, x], axis=1))
    coordinates = jnp.concatenate(coords_list, axis=0).astype(jnp.int32)

    item = dict(
        features=jax.random.normal(kf, (N_vox, K_pts, cfg.C_IN), jnp.float32),
        occupancy=jax.random.randint(ko, (N_vox,), 1, K_pts + 1),
        coordinates=coordinates,
        batch_size=B,
    )

    out = second_forward(params, item, cfg, grid_shape)
    jax.block_until_ready(out["P_cls"])
    jax.block_until_ready(out["P_reg"])
    assert out["P_cls"].shape == (B, cfg.NUM_CLASSES, cfg.NUM_YAW, 2, 2)
    assert out["P_reg"].shape == (B, cfg.NUM_CLASSES, cfg.NUM_YAW, 2, 2, cfg.BOX_DOF)
    print("KERNEL_OK")
</pallas_src>

<mosaic_0001>
module attributes {stable_mosaic.version = 11 : i64} {
  func.func @_tap_matmul_kernel(%arg0: i32, %arg1: memref<28592x4xbf16, #tpu.memory_space<vmem>>, %arg2: memref<27x4x16xbf16, #tpu.memory_space<vmem>>, %arg3: memref<1x16xf32, #tpu.memory_space<vmem>>, %arg4: memref<1x16xf32, #tpu.memory_space<vmem>>, %arg5: memref<256x1xf32, #tpu.memory_space<vmem>>, %arg6: memref<256x16xbf16, #tpu.memory_space<vmem>>) attributes {dimension_semantics = [#tpu.dimension_semantics<parallel>], iteration_bounds = array<i64: 109>, scalar_prefetch = 0 : i64, scratch_operands = 0 : i64, tpu.core_type = #tpu.core_type<tc>, window_params = [{pipeline_mode = #tpu.pipeline_mode<synchronous>, transform_indices = @transform_0, window_bounds = array<i64: 28592, 4>}, {pipeline_mode = #tpu.pipeline_mode<synchronous>, transform_indices = @transform_1, window_bounds = array<i64: 27, 4, 16>}, {pipeline_mode = #tpu.pipeline_mode<synchronous>, transform_indices = @transform_2, window_bounds = array<i64: 1, 16>}, {pipeline_mode = #tpu.pipeline_mode<synchronous>, transform_indices = @transform_3, window_bounds = array<i64: 1, 16>}, {transform_indices = @transform_4, window_bounds = array<i64: 256, 1>}, {transform_indices = @transform_5, window_bounds = array<i64: 256, 16>}]} {
    %c256_i32 = arith.constant 256 : i32
    %0 = arith.muli %arg0, %c256_i32 : i32
    %cst = arith.constant 0.000000e+00 : f32
    %1 = vector.broadcast %cst : f32 to vector<256x16xf32>
    %c0_i32 = arith.constant 0 : i32
    %2 = arith.addi %0, %c0_i32 : i32
    %3 = tpu.assume_multiple %2, 16 : i32
    %4 = arith.index_cast %3 : i32 to index
    %c0 = arith.constant 0 : index
    %5 = vector.load %arg1[%4, %c0] : memref<28592x4xbf16, #tpu.memory_space<vmem>>, vector<272x4xbf16>
    %6 = vector.extract_strided_slice %5 {offsets = [0, 0], sizes = [256, 4], strides = [1, 1]} : vector<272x4xbf16> to vector<256x4xbf16>
    %c0_0 = arith.constant 0 : index
    %c0_1 = arith.constant 0 : index
    %c0_2 = arith.constant 0 : index
    %7 = vector.load %arg2[%c0_0, %c0_1, %c0_2] : memref<27x4x16xbf16, #tpu.memory_space<vmem>>, vector<1x4x16xbf16>
    %8 = vector.shape_cast %7 : vector<1x4x16xbf16> to vector<4x16xbf16>
    %cst_3 = arith.constant dense<0.000000e+00> : vector<256x16xf32>
    %9 = tpu.matmul %6, %8, %cst_3 {dimension_numbers = #tpu.dot_dimension_numbers<[1], [0], [0], [1], [0, 0, 1, 1], [], []>} : vector<256x4xbf16>, vector<4x16xbf16>, vector<256x16xf32> -> vector<256x16xf32>
    %10 = arith.addf %1, %9 : vector<256x16xf32>
    %c0_i32_4 = arith.constant 0 : i32
    %11 = arith.addi %0, %c0_i32_4 : i32
    %12 = tpu.assume_multiple %11, 16 : i32
    %13 = arith.index_cast %12 : i32 to index
    %c0_5 = arith.constant 0 : index
    %14 = vector.load %arg1[%13, %c0_5] : memref<28592x4xbf16, #tpu.memory_space<vmem>>, vector<272x4xbf16>
    %15 = vector.extract_strided_slice %14 {offsets = [1, 0], sizes = [256, 4], strides = [1, 1]} : vector<272x4xbf16> to vector<256x4xbf16>
    %c1 = arith.constant 1 : index
    %c0_6 = arith.constant 0 : index
    %c0_7 = arith.constant 0 : index
    %16 = vector.load %arg2[%c1, %c0_6, %c0_7] : memref<27x4x16xbf16, #tpu.memory_space<vmem>>, vector<1x4x16xbf16>
    %17 = vector.shape_cast %16 : vector<1x4x16xbf16> to vector<4x16xbf16>
    %cst_8 = arith.constant dense<0.000000e+00> : vector<256x16xf32>
    %18 = tpu.matmul %15, %17, %cst_8 {dimension_numbers = #tpu.dot_dimension_numbers<[1], [0], [0], [1], [0, 0, 1, 1], [], []>} : vector<256x4xbf16>, vector<4x16xbf16>, vector<256x16xf32> -> vector<256x16xf32>
    %19 = arith.addf %10, %18 : vector<256x16xf32>
    %c0_i32_9 = arith.constant 0 : i32
    %20 = arith.addi %0, %c0_i32_9 : i32
    %21 = tpu.assume_multiple %20, 16 : i32
    %22 = arith.index_cast %21 : i32 to index
    %c0_10 = arith.constant 0 : index
    %23 = vector.load %arg1[%22, %c0_10] : memref<28592x4xbf16, #tpu.memory_space<vmem>>, vector<272x4xbf16>
    %24 = vector.extract_strided_slice %23 {offsets = [2, 0], sizes = [256, 4], strides = [1, 1]} : vector<272x4xbf16> to vector<256x4xbf16>
    %c2 = arith.constant 2 : index
    %c0_11 = arith.constant 0 : index
    %c0_12 = arith.constant 0 : index
    %25 = vector.load %arg2[%c2, %c0_11, %c0_12] : memref<27x4x16xbf16, #tpu.memory_space<vmem>>, vector<1x4x16xbf16>
    %26 = vector.shape_cast %25 : vector<1x4x16xbf16> to vector<4x16xbf16>
    %cst_13 = arith.constant dense<0.000000e+00> : vector<256x16xf32>
    %27 = tpu.matmul %24, %26, %cst_13 {dimension_numbers = #tpu.dot_dimension_numbers<[1], [0], [0], [1], [0, 0, 1, 1], [], []>} : vector<256x4xbf16>, vector<4x16xbf16>, vector<256x16xf32> -> vector<256x16xf32>
    %28 = arith.addf %19, %27 : vector<256x16xf32>
    %c16_i32 = arith.constant 16 : i32
    %29 = arith.addi %0, %c16_i32 : i32
    %30 = tpu.assume_multiple %29, 16 : i32
    %31 = arith.index_cast %30 : i32 to index
    %c0_14 = arith.constant 0 : index
    %32 = vector.load %arg1[%31, %c0_14] : memref<28592x4xbf16, #tpu.memory_space<vmem>>, vector<272x4xbf16>
    %33 = vector.extract_strided_slice %32 {offsets = [2, 0], sizes = [256, 4], strides = [1, 1]} : vector<272x4xbf16> to vector<256x4xbf16>
    %c3 = arith.constant 3 : index
    %c0_15 = arith.constant 0 : index
    %c0_16 = arith.constant 0 : index
    %34 = vector.load %arg2[%c3, %c0_15, %c0_16] : memref<27x4x16xbf16, #tpu.memory_space<vmem>>, vector<1x4x16xbf16>
    %35 = vector.shape_cast %34 : vector<1x4x16xbf16> to vector<4x16xbf16>
    %cst_17 = arith.constant dense<0.000000e+00> : vector<256x16xf32>
    %36 = tpu.matmul %33, %35, %cst_17 {dimension_numbers = #tpu.dot_dimension_numbers<[1], [0], [0], [1], [0, 0, 1, 1], [], []>} : vector<256x4xbf16>, vector<4x16xbf16>, vector<256x16xf32> -> vector<256x16xf32>
    %37 = arith.addf %28, %36 : vector<256x16xf32>
    %c16_i32_18 = arith.constant 16 : i32
    %38 = arith.addi %0, %c16_i32_18 : i32
    %39 = tpu.assume_multiple %38, 16 : i32
    %40 = arith.index_cast %39 : i32 to index
    %c0_19 = arith.constant 0 : index
    %41 = vector.load %arg1[%40, %c0_19] : memref<28592x4xbf16, #tpu.memory_space<vmem>>, vector<272x4xbf16>
    %42 = vector.extract_strided_slice %41 {offsets = [3, 0], sizes = [256, 4], strides = [1, 1]} : vector<272x4xbf16> to vector<256x4xbf16>
    %c4 = arith.constant 4 : index
    %c0_20 = arith.constant 0 : index
    %c0_21 = arith.constant 0 : index
    %43 = vector.load %arg2[%c4, %c0_20, %c0_21] : memref<27x4x16xbf16, #tpu.memory_space<vmem>>, vector<1x4x16xbf16>
    %44 = vector.shape_cast %43 : vector<1x4x16xbf16> to vector<4x16xbf16>
    %cst_22 = arith.constant dense<0.000000e+00> : vector<256x16xf32>
    %45 = tpu.matmul %42, %44, %cst_22 {dimension_numbers = #tpu.dot_dimension_numbers<[1], [0], [0], [1], [0, 0, 1, 1], [], []>} : vector<256x4xbf16>, vector<4x16xbf16>, vector<256x16xf32> -> vector<256x16xf32>
    %46 = arith.addf %37, %45 : vector<256x16xf32>
    %c16_i32_23 = arith.constant 16 : i32
    %47 = arith.addi %0, %c16_i32_23 : i32
    %48 = tpu.assume_multiple %47, 16 : i32
    %49 = arith.index_cast %48 : i32 to index
    %c0_24 = arith.constant 0 : index
    %50 = vector.load %arg1[%49, %c0_24] : memref<28592x4xbf16, #tpu.memory_space<vmem>>, vector<272x4xbf16>
    %51 = vector.extract_strided_slice %50 {offsets = [4, 0], sizes = [256, 4], strides = [1, 1]} : vector<272x4xbf16> to vector<256x4xbf16>
    %c5 = arith.constant 5 : index
    %c0_25 = arith.constant 0 : index
    %c0_26 = arith.constant 0 : index
    %52 = vector.load %arg2[%c5, %c0_25, %c0_26] : memref<27x4x16xbf16, #tpu.memory_space<vmem>>, vector<1x4x16xbf16>
    %53 = vector.shape_cast %52 : vector<1x4x16xbf16> to vector<4x16xbf16>
    %cst_27 = arith.constant dense<0.000000e+00> : vector<256x16xf32>
    %54 = tpu.matmul %51, %53, %cst_27 {dimension_numbers = #tpu.dot_dimension_numbers<[1], [0], [0], [1], [0, 0, 1, 1], [], []>} : vector<256x4xbf16>, vector<4x16xbf16>, vector<256x16xf32> -> vector<256x16xf32>
    %55 = arith.addf %46, %54 : vector<256x16xf32>
    %c32_i32 = arith.constant 32 : i32
    %56 = arith.addi %0, %c32_i32 : i32
    %57 = tpu.assume_multiple %56, 16 : i32
    %58 = arith.index_cast %57 : i32 to index
    %c0_28 = arith.constant 0 : index
    %59 = vector.load %arg1[%58, %c0_28] : memref<28592x4xbf16, #tpu.memory_space<vmem>>, vector<272x4xbf16>
    %60 = vector.extract_strided_slice %59 {offsets = [4, 0], sizes = [256, 4], strides = [1, 1]} : vector<272x4xbf16> to vector<256x4xbf16>
    %c6 = arith.constant 6 : index
    %c0_29 = arith.constant 0 : index
    %c0_30 = arith.constant 0 : index
    %61 = vector.load %arg2[%c6, %c0_29, %c0_30] : memref<27x4x16xbf16, #tpu.memory_space<vmem>>, vector<1x4x16xbf16>
    %62 = vector.shape_cast %61 : vector<1x4x16xbf16> to vector<4x16xbf16>
    %cst_31 = arith.constant dense<0.000000e+00> : vector<256x16xf32>
    %63 = tpu.matmul %60, %62, %cst_31 {dimension_numbers = #tpu.dot_dimension_numbers<[1], [0], [0], [1], [0, 0, 1, 1], [], []>} : vector<256x4xbf16>, vector<4x16xbf16>, vector<256x16xf32> -> vector<256x16xf32>
    %64 = arith.addf %55, %63 : vector<256x16xf32>
    %c32_i32_32 = arith.constant 32 : i32
    %65 = arith.addi %0, %c32_i32_32 : i32
    %66 = tpu.assume_multiple %65, 16 : i32
    %67 = arith.index_cast %66 : i32 to index
    %c0_33 = arith.constant 0 : index
    %68 = vector.load %arg1[%67, %c0_33] : memref<28592x4xbf16, #tpu.memory_space<vmem>>, vector<272x4xbf16>
    %69 = vector.extract_strided_slice %68 {offsets = [5, 0], sizes = [256, 4], strides = [1, 1]} : vector<272x4xbf16> to vector<256x4xbf16>
    %c7 = arith.constant 7 : index
    %c0_34 = arith.constant 0 : index
    %c0_35 = arith.constant 0 : index
    %70 = vector.load %arg2[%c7, %c0_34, %c0_35] : memref<27x4x16xbf16, #tpu.memory_space<vmem>>, vector<1x4x16xbf16>
    %71 = vector.shape_cast %70 : vector<1x4x16xbf16> to vector<4x16xbf16>
    %cst_36 = arith.constant dense<0.000000e+00> : vector<256x16xf32>
    %72 = tpu.matmul %69, %71, %cst_36 {dimension_numbers = #tpu.dot_dimension_numbers<[1], [0], [0], [1], [0, 0, 1, 1], [], []>} : vector<256x4xbf16>, vector<4x16xbf16>, vector<256x16xf32> -> vector<256x16xf32>
    %73 = arith.addf %64, %72 : vector<256x16xf32>
    %c32_i32_37 = arith.constant 32 : i32
    %74 = arith.addi %0, %c32_i32_37 : i32
    %75 = tpu.assume_multiple %74, 16 : i32
    %76 = arith.index_cast %75 : i32 to index
    %c0_38 = arith.constant 0 : index
    %77 = vector.load %arg1[%76, %c0_38] : memref<28592x4xbf16, #tpu.memory_space<vmem>>, vector<272x4xbf16>
    %78 = vector.extract_strided_slice %77 {offsets = [6, 0], sizes = [256, 4], strides = [1, 1]} : vector<272x4xbf16> to vector<256x4xbf16>
    %c8 = arith.constant 8 : index
    %c0_39 = arith.constant 0 : index
    %c0_40 = arith.constant 0 : index
    %79 = vector.load %arg2[%c8, %c0_39, %c0_40] : memref<27x4x16xbf16, #tpu.memory_space<vmem>>, vector<1x4x16xbf16>
    %80 = vector.shape_cast %79 : vector<1x4x16xbf16> to vector<4x16xbf16>
    %cst_41 = arith.constant dense<0.000000e+00> : vector<256x16xf32>
    %81 = tpu.matmul %78, %80, %cst_41 {dimension_numbers = #tpu.dot_dimension_numbers<[1], [0], [0], [1], [0, 0, 1, 1], [], []>} : vector<256x4xbf16>, vector<4x16xbf16>, vector<256x16xf32> -> vector<256x16xf32>
    %82 = arith.addf %73, %81 : vector<256x16xf32>
    %c320_i32 = arith.constant 320 : i32
    %83 = arith.addi %0, %c320_i32 : i32
    %84 = tpu.assume_multiple %83, 16 : i32
    %85 = arith.index_cast %84 : i32 to index
    %c0_42 = arith.constant 0 : index
    %86 = vector.load %arg1[%85, %c0_42] : memref<28592x4xbf16, #tpu.memory_space<vmem>>, vector<272x4xbf16>
    %87 = vector.extract_strided_slice %86 {offsets = [4, 0], sizes = [256, 4], strides = [1, 1]} : vector<272x4xbf16> to vector<256x4xbf16>
    %c9 = arith.constant 9 : index
    %c0_43 = arith.constant 0 : index
    %c0_44 = arith.constant 0 : index
    %88 = vector.load %arg2[%c9, %c0_43, %c0_44] : memref<27x4x16xbf16, #tpu.memory_space<vmem>>, vector<1x4x16xbf16>
    %89 = vector.shape_cast %88 : vector<1x4x16xbf16> to vector<4x16xbf16>
    %cst_45 = arith.constant dense<0.000000e+00> : vector<256x16xf32>
    %90 = tpu.matmul %87, %89, %cst_45 {dimension_numbers = #tpu.dot_dimension_numbers<[1], [0], [0], [1], [0, 0, 1, 1], [], []>} : vector<256x4xbf16>, vector<4x16xbf16>, vector<256x16xf32> -> vector<256x16xf32>
    %91 = arith.addf %82, %90 : vector<256x16xf32>
    %c320_i32_46 = arith.constant 320 : i32
    %92 = arith.addi %0, %c320_i32_46 : i32
    %93 = tpu.assume_multiple %92, 16 : i32
    %94 = arith.index_cast %93 : i32 to index
    %c0_47 = arith.constant 0 : index
    %95 = vector.load %arg1[%94, %c0_47] : memref<28592x4xbf16, #tpu.memory_space<vmem>>, vector<272x4xbf16>
    %96 = vector.extract_strided_slice %95 {offsets = [5, 0], sizes = [256, 4], strides = [1, 1]} : vector<272x4xbf16> to vector<256x4xbf16>
    %c10 = arith.constant 10 : index
    %c0_48 = arith.constant 0 : index
    %c0_49 = arith.constant 0 : index
    %97 = vector.load %arg2[%c10, %c0_48, %c0_49] : memref<27x4x16xbf16, #tpu.memory_space<vmem>>, vector<1x4x16xbf16>
    %98 = vector.shape_cast %97 : vector<1x4x16xbf16> to vector<4x16xbf16>
    %cst_50 = arith.constant dense<0.000000e+00> : vector<256x16xf32>
    %99 = tpu.matmul %96, %98, %cst_50 {dimension_numbers = #tpu.dot_dimension_numbers<[1], [0], [0], [1], [0, 0, 1, 1], [], []>} : vector<256x4xbf16>, vector<4x16xbf16>, vector<256x16xf32> -> vector<256x16xf32>
    %100 = arith.addf %91, %99 : vector<256x16xf32>
    %c320_i32_51 = arith.constant 320 : i32
    %101 = arith.addi %0, %c320_i32_51 : i32
    %102 = tpu.assume_multiple %101, 16 : i32
    %103 = arith.index_cast %102 : i32 to index
    %c0_52 = arith.constant 0 : index
    %104 = vector.load %arg1[%103, %c0_52] : memref<28592x4xbf16, #tpu.memory_space<vmem>>, vector<272x4xbf16>
    %105 = vector.extract_strided_slice %104 {offsets = [6, 0], sizes = [256, 4], strides = [1, 1]} : vector<272x4xbf16> to vector<256x4xbf16>
    %c11 = arith.constant 11 : index
    %c0_53 = arith.constant 0 : index
    %c0_54 = arith.constant 0 : index
    %106 = vector.load %arg2[%c11, %c0_53, %c0_54] : memref<27x4x16xbf16, #tpu.memory_space<vmem>>, vector<1x4x16xbf16>
    %107 = vector.shape_cast %106 : vector<1x4x16xbf16> to vector<4x16xbf16>
    %cst_55 = arith.constant dense<0.000000e+00> : vector<256x16xf32>
    %108 = tpu.matmul %105, %107, %cst_55 {dimension_numbers = #tpu.dot_dimension_numbers<[1], [0], [0], [1], [0, 0, 1, 1], [], []>} : vector<256x4xbf16>, vector<4x16xbf16>, vector<256x16xf32> -> vector<256x16xf32>
    %109 = arith.addf %100, %108 : vector<256x16xf32>
    %c336_i32 = arith.constant 336 : i32
    %110 = arith.addi %0, %c336_i32 : i32
    %111 = tpu.assume_multiple %110, 16 : i32
    %112 = arith.index_cast %111 : i32 to index
    %c0_56 = arith.constant 0 : index
    %113 = vector.load %arg1[%112, %c0_56] : memref<28592x4xbf16, #tpu.memory_space<vmem>>, vector<272x4xbf16>
    %114 = vector.extract_strided_slice %113 {offsets = [6, 0], sizes = [256, 4], strides = [1, 1]} : vector<272x4xbf16> to vector<256x4xbf16>
    %c12 = arith.constant 12 : index
    %c0_57 = arith.constant 0 : index
    %c0_58 = arith.constant 0 : index
    %115 = vector.load %arg2[%c12, %c0_57, %c0_58] : memref<27x4x16xbf16, #tpu.memory_space<vmem>>, vector<1x4x16xbf16>
    %116 = vector.shape_cast %115 : vector<1x4x16xbf16> to vector<4x16xbf16>
    %cst_59 = arith.constant dense<0.000000e+00> : vector<256x16xf32>
    %117 = tpu.matmul %114, %116, %cst_59 {dimension_numbers = #tpu.dot_dimension_numbers<[1], [0], [0], [1], [0, 0, 1, 1], [], []>} : vector<256x4xbf16>, vector<4x16xbf16>, vector<256x16xf32> -> vector<256x16xf32>
    %118 = arith.addf %109, %117 : vector<256x16xf32>
    %c336_i32_60 = arith.constant 336 : i32
    %119 = arith.addi %0, %c336_i32_60 : i32
    %120 = tpu.assume_multiple %119, 16 : i32
    %121 = arith.index_cast %120 : i32 to index
    %c0_61 = arith.constant 0 : index
    %122 = vector.load %arg1[%121, %c0_61] : memref<28592x4xbf16, #tpu.memory_space<vmem>>, vector<272x4xbf16>
    %123 = vector.extract_strided_slice %122 {offsets = [7, 0], sizes = [256, 4], strides = [1, 1]} : vector<272x4xbf16> to vector<256x4xbf16>
    %c13 = arith.constant 13 : index
    %c0_62 = arith.constant 0 : index
    %c0_63 = arith.constant 0 : index
    %124 = vector.load %arg2[%c13, %c0_62, %c0_63] : memref<27x4x16xbf16, #tpu.memory_space<vmem>>, vector<1x4x16xbf16>
    %125 = vector.shape_cast %124 : vector<1x4x16xbf16> to vector<4x16xbf16>
    %cst_64 = arith.constant dense<0.000000e+00> : vector<256x16xf32>
    %126 = tpu.matmul %123, %125, %cst_64 {dimension_numbers = #tpu.dot_dimension_numbers<[1], [0], [0], [1], [0, 0, 1, 1], [], []>} : vector<256x4xbf16>, vector<4x16xbf16>, vector<256x16xf32> -> vector<256x16xf32>
    %127 = arith.addf %118, %126 : vector<256x16xf32>
    %c336_i32_65 = arith.constant 336 : i32
    %128 = arith.addi %0, %c336_i32_65 : i32
    %129 = tpu.assume_multiple %128, 16 : i32
    %130 = arith.index_cast %129 : i32 to index
    %c0_66 = arith.constant 0 : index
    %131 = vector.load %arg1[%130, %c0_66] : memref<28592x4xbf16, #tpu.memory_space<vmem>>, vector<272x4xbf16>
    %132 = vector.extract_strided_slice %131 {offsets = [8, 0], sizes = [256, 4], strides = [1, 1]} : vector<272x4xbf16> to vector<256x4xbf16>
    %c14 = arith.constant 14 : index
    %c0_67 = arith.constant 0 : index
    %c0_68 = arith.constant 0 : index
    %133 = vector.load %arg2[%c14, %c0_67, %c0_68] : memref<27x4x16xbf16, #tpu.memory_space<vmem>>, vector<1x4x16xbf16>
    %134 = vector.shape_cast %133 : vector<1x4x16xbf16> to vector<4x16xbf16>
    %cst_69 = arith.constant dense<0.000000e+00> : vector<256x16xf32>
    %135 = tpu.matmul %132, %134, %cst_69 {dimension_numbers = #tpu.dot_dimension_numbers<[1], [0], [0], [1], [0, 0, 1, 1], [], []>} : vector<256x4xbf16>, vector<4x16xbf16>, vector<256x16xf32> -> vector<256x16xf32>
    %136 = arith.addf %127, %135 : vector<256x16xf32>
    %c352_i32 = arith.constant 352 : i32
    %137 = arith.addi %0, %c352_i32 : i32
    %138 = tpu.assume_multiple %137, 16 : i32
    %139 = arith.index_cast %138 : i32 to index
    %c0_70 = arith.constant 0 : index
    %140 = vector.load %arg1[%139, %c0_70] : memref<28592x4xbf16, #tpu.memory_space<vmem>>, vector<272x4xbf16>
    %141 = vector.extract_strided_slice %140 {offsets = [8, 0], sizes = [256, 4], strides = [1, 1]} : vector<272x4xbf16> to vector<256x4xbf16>
    %c15 = arith.constant 15 : index
    %c0_71 = arith.constant 0 : index
    %c0_72 = arith.constant 0 : index
    %142 = vector.load %arg2[%c15, %c0_71, %c0_72] : memref<27x4x16xbf16, #tpu.memory_space<vmem>>, vector<1x4x16xbf16>
    %143 = vector.shape_cast %142 : vector<1x4x16xbf16> to vector<4x16xbf16>
    %cst_73 = arith.constant dense<0.000000e+00> : vector<256x16xf32>
    %144 = tpu.matmul %141, %143, %cst_73 {dimension_numbers = #tpu.dot_dimension_numbers<[1], [0], [0], [1], [0, 0, 1, 1], [], []>} : vector<256x4xbf16>, vector<4x16xbf16>, vector<256x16xf32> -> vector<256x16xf32>
    %145 = arith.addf %136, %144 : vector<256x16xf32>
    %c352_i32_74 = arith.constant 352 : i32
    %146 = arith.addi %0, %c352_i32_74 : i32
    %147 = tpu.assume_multiple %146, 16 : i32
    %148 = arith.index_cast %147 : i32 to index
    %c0_75 = arith.constant 0 : index
    %149 = vector.load %arg1[%148, %c0_75] : memref<28592x4xbf16, #tpu.memory_space<vmem>>, vector<272x4xbf16>
    %150 = vector.extract_strided_slice %149 {offsets = [9, 0], sizes = [256, 4], strides = [1, 1]} : vector<272x4xbf16> to vector<256x4xbf16>
    %c16 = arith.constant 16 : index
    %c0_76 = arith.constant 0 : index
    %c0_77 = arith.constant 0 : index
    %151 = vector.load %arg2[%c16, %c0_76, %c0_77] : memref<27x4x16xbf16, #tpu.memory_space<vmem>>, vector<1x4x16xbf16>
    %152 = vector.shape_cast %151 : vector<1x4x16xbf16> to vector<4x16xbf16>
    %cst_78 = arith.constant dense<0.000000e+00> : vector<256x16xf32>
    %153 = tpu.matmul %150, %152, %cst_78 {dimension_numbers = #tpu.dot_dimension_numbers<[1], [0], [0], [1], [0, 0, 1, 1], [], []>} : vector<256x4xbf16>, vector<4x16xbf16>, vector<256x16xf32> -> vector<256x16xf32>
    %154 = arith.addf %145, %153 : vector<256x16xf32>
    %c352_i32_79 = arith.constant 352 : i32
    %155 = arith.addi %0, %c352_i32_79 : i32
    %156 = tpu.assume_multiple %155, 16 : i32
    %157 = arith.index_cast %156 : i32 to index
    %c0_80 = arith.constant 0 : index
    %158 = vector.load %arg1[%157, %c0_80] : memref<28592x4xbf16, #tpu.memory_space<vmem>>, vector<272x4xbf16>
    %159 = vector.extract_strided_slice %158 {offsets = [10, 0], sizes = [256, 4], strides = [1, 1]} : vector<272x4xbf16> to vector<256x4xbf16>
    %c17 = arith.constant 17 : index
    %c0_81 = arith.constant 0 : index
    %c0_82 = arith.constant 0 : index
    %160 = vector.load %arg2[%c17, %c0_81, %c0_82] : memref<27x4x16xbf16, #tpu.memory_space<vmem>>, vector<1x4x16xbf16>
    %161 = vector.shape_cast %160 : vector<1x4x16xbf16> to vector<4x16xbf16>
    %cst_83 = arith.constant dense<0.000000e+00> : vector<256x16xf32>
    %162 = tpu.matmul %159, %161, %cst_83 {dimension_numbers = #tpu.dot_dimension_numbers<[1], [0], [0], [1], [0, 0, 1, 1], [], []>} : vector<256x4xbf16>, vector<4x16xbf16>, vector<256x16xf32> -> vector<256x16xf32>
    %163 = arith.addf %154, %162 : vector<256x16xf32>
    %c640_i32 = arith.constant 640 : i32
    %164 = arith.addi %0, %c640_i32 : i32
    %165 = tpu.assume_multiple %164, 16 : i32
    %166 = arith.index_cast %165 : i32 to index
    %c0_84 = arith.constant 0 : index
    %167 = vector.load %arg1[%166, %c0_84] : memref<28592x4xbf16, #tpu.memory_space<vmem>>, vector<272x4xbf16>
    %168 = vector.extract_strided_slice %167 {offsets = [8, 0], sizes = [256, 4], strides = [1, 1]} : vector<272x4xbf16> to vector<256x4xbf16>
    %c18 = arith.constant 18 : index
    %c0_85 = arith.constant 0 : index
    %c0_86 = arith.constant 0 : index
    %169 = vector.load %arg2[%c18, %c0_85, %c0_86] : memref<27x4x16xbf16, #tpu.memory_space<vmem>>, vector<1x4x16xbf16>
    %170 = vector.shape_cast %169 : vector<1x4x16xbf16> to vector<4x16xbf16>
    %cst_87 = arith.constant dense<0.000000e+00> : vector<256x16xf32>
    %171 = tpu.matmul %168, %170, %cst_87 {dimension_numbers = #tpu.dot_dimension_numbers<[1], [0], [0], [1], [0, 0, 1, 1], [], []>} : vector<256x4xbf16>, vector<4x16xbf16>, vector<256x16xf32> -> vector<256x16xf32>
    %172 = arith.addf %163, %171 : vector<256x16xf32>
    %c640_i32_88 = arith.constant 640 : i32
    %173 = arith.addi %0, %c640_i32_88 : i32
    %174 = tpu.assume_multiple %173, 16 : i32
    %175 = arith.index_cast %174 : i32 to index
    %c0_89 = arith.constant 0 : index
    %176 = vector.load %arg1[%175, %c0_89] : memref<28592x4xbf16, #tpu.memory_space<vmem>>, vector<272x4xbf16>
    %177 = vector.extract_strided_slice %176 {offsets = [9, 0], sizes = [256, 4], strides = [1, 1]} : vector<272x4xbf16> to vector<256x4xbf16>
    %c19 = arith.constant 19 : index
    %c0_90 = arith.constant 0 : index
    %c0_91 = arith.constant 0 : index
    %178 = vector.load %arg2[%c19, %c0_90, %c0_91] : memref<27x4x16xbf16, #tpu.memory_space<vmem>>, vector<1x4x16xbf16>
    %179 = vector.shape_cast %178 : vector<1x4x16xbf16> to vector<4x16xbf16>
    %cst_92 = arith.constant dense<0.000000e+00> : vector<256x16xf32>
    %180 = tpu.matmul %177, %179, %cst_92 {dimension_numbers = #tpu.dot_dimension_numbers<[1], [0], [0], [1], [0, 0, 1, 1], [], []>} : vector<256x4xbf16>, vector<4x16xbf16>, vector<256x16xf32> -> vector<256x16xf32>
    %181 = arith.addf %172, %180 : vector<256x16xf32>
    %c640_i32_93 = arith.constant 640 : i32
    %182 = arith.addi %0, %c640_i32_93 : i32
    %183 = tpu.assume_multiple %182, 16 : i32
    %184 = arith.index_cast %183 : i32 to index
    %c0_94 = arith.constant 0 : index
    %185 = vector.load %arg1[%184, %c0_94] : memref<28592x4xbf16, #tpu.memory_space<vmem>>, vector<272x4xbf16>
    %186 = vector.extract_strided_slice %185 {offsets = [10, 0], sizes = [256, 4], strides = [1, 1]} : vector<272x4xbf16> to vector<256x4xbf16>
    %c20 = arith.constant 20 : index
    %c0_95 = arith.constant 0 : index
    %c0_96 = arith.constant 0 : index
    %187 = vector.load %arg2[%c20, %c0_95, %c0_96] : memref<27x4x16xbf16, #tpu.memory_space<vmem>>, vector<1x4x16xbf16>
    %188 = vector.shape_cast %187 : vector<1x4x16xbf16> to vector<4x16xbf16>
    %cst_97 = arith.constant dense<0.000000e+00> : vector<256x16xf32>
    %189 = tpu.matmul %186, %188, %cst_97 {dimension_numbers = #tpu.dot_dimension_numbers<[1], [0], [0], [1], [0, 0, 1, 1], [], []>} : vector<256x4xbf16>, vector<4x16xbf16>, vector<256x16xf32> -> vector<256x16xf32>
    %190 = arith.addf %181, %189 : vector<256x16xf32>
    %c656_i32 = arith.constant 656 : i32
    %191 = arith.addi %0, %c656_i32 : i32
    %192 = tpu.assume_multiple %191, 16 : i32
    %193 = arith.index_cast %192 : i32 to index
    %c0_98 = arith.constant 0 : index
    %194 = vector.load %arg1[%193, %c0_98] : memref<28592x4xbf16, #tpu.memory_space<vmem>>, vector<272x4xbf16>
    %195 = vector.extract_strided_slice %194 {offsets = [10, 0], sizes = [256, 4], strides = [1, 1]} : vector<272x4xbf16> to vector<256x4xbf16>
    %c21 = arith.constant 21 : index
    %c0_99 = arith.constant 0 : index
    %c0_100 = arith.constant 0 : index
    %196 = vector.load %arg2[%c21, %c0_99, %c0_100] : memref<27x4x16xbf16, #tpu.memory_space<vmem>>, vector<1x4x16xbf16>
    %197 = vector.shape_cast %196 : vector<1x4x16xbf16> to vector<4x16xbf16>
    %cst_101 = arith.constant dense<0.000000e+00> : vector<256x16xf32>
    %198 = tpu.matmul %195, %197, %cst_101 {dimension_numbers = #tpu.dot_dimension_numbers<[1], [0], [0], [1], [0, 0, 1, 1], [], []>} : vector<256x4xbf16>, vector<4x16xbf16>, vector<256x16xf32> -> vector<256x16xf32>
    %199 = arith.addf %190, %198 : vector<256x16xf32>
    %c656_i32_102 = arith.constant 656 : i32
    %200 = arith.addi %0, %c656_i32_102 : i32
    %201 = tpu.assume_multiple %200, 16 : i32
    %202 = arith.index_cast %201 : i32 to index
    %c0_103 = arith.constant 0 : index
    %203 = vector.load %arg1[%202, %c0_103] : memref<28592x4xbf16, #tpu.memory_space<vmem>>, vector<272x4xbf16>
    %204 = vector.extract_strided_slice %203 {offsets = [11, 0], sizes = [256, 4], strides = [1, 1]} : vector<272x4xbf16> to vector<256x4xbf16>
    %c22 = arith.constant 22 : index
    %c0_104 = arith.constant 0 : index
    %c0_105 = arith.constant 0 : index
    %205 = vector.load %arg2[%c22, %c0_104, %c0_105] : memref<27x4x16xbf16, #tpu.memory_space<vmem>>, vector<1x4x16xbf16>
    %206 = vector.shape_cast %205 : vector<1x4x16xbf16> to vector<4x16xbf16>
    %cst_106 = arith.constant dense<0.000000e+00> : vector<256x16xf32>
    %207 = tpu.matmul %204, %206, %cst_106 {dimension_numbers = #tpu.dot_dimension_numbers<[1], [0], [0], [1], [0, 0, 1, 1], [], []>} : vector<256x4xbf16>, vector<4x16xbf16>, vector<256x16xf32> -> vector<256x16xf32>
    %208 = arith.addf %199, %207 : vector<256x16xf32>
    %c656_i32_107 = arith.constant 656 : i32
    %209 = arith.addi %0, %c656_i32_107 : i32
    %210 = tpu.assume_multiple %209, 16 : i32
    %211 = arith.index_cast %210 : i32 to index
    %c0_108 = arith.constant 0 : index
    %212 = vector.load %arg1[%211, %c0_108] : memref<28592x4xbf16, #tpu.memory_space<vmem>>, vector<272x4xbf16>
    %213 = vector.extract_strided_slice %212 {offsets = [12, 0], sizes = [256, 4], strides = [1, 1]} : vector<272x4xbf16> to vector<256x4xbf16>
    %c23 = arith.constant 23 : index
    %c0_109 = arith.constant 0 : index
    %c0_110 = arith.constant 0 : index
    %214 = vector.load %arg2[%c23, %c0_109, %c0_110] : memref<27x4x16xbf16, #tpu.memory_space<vmem>>, vector<1x4x16xbf16>
    %215 = vector.shape_cast %214 : vector<1x4x16xbf16> to vector<4x16xbf16>
    %cst_111 = arith.constant dense<0.000000e+00> : vector<256x16xf32>
    %216 = tpu.matmul %213, %215, %cst_111 {dimension_numbers = #tpu.dot_dimension_numbers<[1], [0], [0], [1], [0, 0, 1, 1], [], []>} : vector<256x4xbf16>, vector<4x16xbf16>, vector<256x16xf32> -> vector<256x16xf32>
    %217 = arith.addf %208, %216 : vector<256x16xf32>
    %c672_i32 = arith.constant 672 : i32
    %218 = arith.addi %0, %c672_i32 : i32
    %219 = tpu.assume_multiple %218, 16 : i32
    %220 = arith.index_cast %219 : i32 to index
    %c0_112 = arith.constant 0 : index
    %221 = vector.load %arg1[%220, %c0_112] : memref<28592x4xbf16, #tpu.memory_space<vmem>>, vector<272x4xbf16>
    %222 = vector.extract_strided_slice %221 {offsets = [12, 0], sizes = [256, 4], strides = [1, 1]} : vector<272x4xbf16> to vector<256x4xbf16>
    %c24 = arith.constant 24 : index
    %c0_113 = arith.constant 0 : index
    %c0_114 = arith.constant 0 : index
    %223 = vector.load %arg2[%c24, %c0_113, %c0_114] : memref<27x4x16xbf16, #tpu.memory_space<vmem>>, vector<1x4x16xbf16>
    %224 = vector.shape_cast %223 : vector<1x4x16xbf16> to vector<4x16xbf16>
    %cst_115 = arith.constant dense<0.000000e+00> : vector<256x16xf32>
    %225 = tpu.matmul %222, %224, %cst_115 {dimension_numbers = #tpu.dot_dimension_numbers<[1], [0], [0], [1], [0, 0, 1, 1], [], []>} : vector<256x4xbf16>, vector<4x16xbf16>, vector<256x16xf32> -> vector<256x16xf32>
    %226 = arith.addf %217, %225 : vector<256x16xf32>
    %c672_i32_116 = arith.constant 672 : i32
    %227 = arith.addi %0, %c672_i32_116 : i32
    %228 = tpu.assume_multiple %227, 16 : i32
    %229 = arith.index_cast %228 : i32 to index
    %c0_117 = arith.constant 0 : index
    %230 = vector.load %arg1[%229, %c0_117] : memref<28592x4xbf16, #tpu.memory_space<vmem>>, vector<272x4xbf16>
    %231 = vector.extract_strided_slice %230 {offsets = [13, 0], sizes = [256, 4], strides = [1, 1]} : vector<272x4xbf16> to vector<256x4xbf16>
    %c25 = arith.constant 25 : index
    %c0_118 = arith.constant 0 : index
    %c0_119 = arith.constant 0 : index
    %232 = vector.load %arg2[%c25, %c0_118, %c0_119] : memref<27x4x16xbf16, #tpu.memory_space<vmem>>, vector<1x4x16xbf16>
    %233 = vector.shape_cast %232 : vector<1x4x16xbf16> to vector<4x16xbf16>
    %cst_120 = arith.constant dense<0.000000e+00> : vector<256x16xf32>
    %234 = tpu.matmul %231, %233, %cst_120 {dimension_numbers = #tpu.dot_dimension_numbers<[1], [0], [0], [1], [0, 0, 1, 1], [], []>} : vector<256x4xbf16>, vector<4x16xbf16>, vector<256x16xf32> -> vector<256x16xf32>
    %235 = arith.addf %226, %234 : vector<256x16xf32>
    %c672_i32_121 = arith.constant 672 : i32
    %236 = arith.addi %0, %c672_i32_121 : i32
    %237 = tpu.assume_multiple %236, 16 : i32
    %238 = arith.index_cast %237 : i32 to index
    %c0_122 = arith.constant 0 : index
    %239 = vector.load %arg1[%238, %c0_122] : memref<28592x4xbf16, #tpu.memory_space<vmem>>, vector<272x4xbf16>
    %240 = vector.extract_strided_slice %239 {offsets = [14, 0], sizes = [256, 4], strides = [1, 1]} : vector<272x4xbf16> to vector<256x4xbf16>
    %c26 = arith.constant 26 : index
    %c0_123 = arith.constant 0 : index
    %c0_124 = arith.constant 0 : index
    %241 = vector.load %arg2[%c26, %c0_123, %c0_124] : memref<27x4x16xbf16, #tpu.memory_space<vmem>>, vector<1x4x16xbf16>
    %242 = vector.shape_cast %241 : vector<1x4x16xbf16> to vector<4x16xbf16>
    %cst_125 = arith.constant dense<0.000000e+00> : vector<256x16xf32>
    %243 = tpu.matmul %240, %242, %cst_125 {dimension_numbers = #tpu.dot_dimension_numbers<[1], [0], [0], [1], [0, 0, 1, 1], [], []>} : vector<256x4xbf16>, vector<4x16xbf16>, vector<256x16xf32> -> vector<256x16xf32>
    %244 = arith.addf %235, %243 : vector<256x16xf32>
    %c0_126 = arith.constant 0 : index
    %c0_127 = arith.constant 0 : index
    %245 = vector.load %arg3[%c0_126, %c0_127] : memref<1x16xf32, #tpu.memory_space<vmem>>, vector<1x16xf32>
    %246 = vector.broadcast %245 : vector<1x16xf32> to vector<256x16xf32>
    %247 = arith.mulf %244, %246 : vector<256x16xf32>
    %c0_128 = arith.constant 0 : index
    %c0_129 = arith.constant 0 : index
    %248 = vector.load %arg4[%c0_128, %c0_129] : memref<1x16xf32, #tpu.memory_space<vmem>>, vector<1x16xf32>
    %249 = vector.broadcast %248 : vector<1x16xf32> to vector<256x16xf32>
    %250 = arith.addf %247, %249 : vector<256x16xf32>
    %cst_130 = arith.constant 0.000000e+00 : f32
    %251 = vector.broadcast %cst_130 : f32 to vector<256x16xf32>
    %252 = arith.maximumf %250, %251 : vector<256x16xf32>
    %c0_131 = arith.constant 0 : index
    %c0_132 = arith.constant 0 : index
    %253 = vector.load %arg5[%c0_131, %c0_132] : memref<256x1xf32, #tpu.memory_space<vmem>>, vector<256x1xf32>
    %254 = vector.broadcast %253 : vector<256x1xf32> to vector<256x16xf32>
    %255 = arith.mulf %252, %254 : vector<256x16xf32>
    %256 = arith.truncf %255 : vector<256x16xf32> to vector<256x16xbf16>
    %c0_133 = arith.constant 0 : index
    %c0_134 = arith.constant 0 : index
    %257 = vector.load %arg6[%c0_133, %c0_134] : memref<256x16xbf16, #tpu.memory_space<vmem>>, vector<256x16xbf16>
    tpu.vector_store %arg6[%c0_133, %c0_134], %256 {strides = array<i32>} : memref<256x16xbf16, #tpu.memory_space<vmem>>, vector<256x16xbf16>,
    return
  }
  func.func @transform_0(%arg0: i32) -> (i32, i32) {
    %c0_i32 = arith.constant 0 : i32
    %c0_i32_0 = arith.constant 0 : i32
    %c0_i32_1 = arith.constant 0 : i32
    return %c0_i32, %c0_i32_0 : i32, i32
  }
  func.func @transform_1(%arg0: i32) -> (i32, i32, i32) {
    %c0_i32 = arith.constant 0 : i32
    %c0_i32_0 = arith.constant 0 : i32
    %c0_i32_1 = arith.constant 0 : i32
    %c0_i32_2 = arith.constant 0 : i32
    return %c0_i32, %c0_i32_0, %c0_i32_1 : i32, i32, i32
  }
  func.func @transform_2(%arg0: i32) -> (i32, i32) {
    %c0_i32 = arith.constant 0 : i32
    %c0_i32_0 = arith.constant 0 : i32
    %c0_i32_1 = arith.constant 0 : i32
    return %c0_i32, %c0_i32_0 : i32, i32
  }
  func.func @transform_3(%arg0: i32) -> (i32, i32) {
    %c0_i32 = arith.constant 0 : i32
    %c0_i32_0 = arith.constant 0 : i32
    %c0_i32_1 = arith.constant 0 : i32
    return %c0_i32, %c0_i32_0 : i32, i32
  }
  func.func @transform_4(%arg0: i32) -> (i32, i32) {
    %c0_i32 = arith.constant 0 : i32
    %c0_i32_0 = arith.constant 0 : i32
    return %arg0, %c0_i32 : i32, i32
  }
  func.func @transform_5(%arg0: i32) -> (i32, i32) {
    %c0_i32 = arith.constant 0 : i32
    %c0_i32_0 = arith.constant 0 : i32
    return %arg0, %c0_i32 : i32, i32
  }
}

</mosaic_0001>

<llo_original>
// kernel: tpu_custom_call.1
$region0: #{tpu_custom_call.1}
  #allocation0 [shape = 'u32[]', space=smem, size = 0x4, offset = 0x4, fixed_abs, tag = 'smem constant byte address 0x4 - core index']
  #allocation1 [shape = 'u32[144,128]{1,0:T(1,128)}', space=vmem, size = 0x12000, scoped, tag = 'internal scratch']
  %s0 = inlined_call_operand.vmem [shape: bf16[28592,4], index: 0, kind: input, shape index: {}]
  %s1 = inlined_call_operand.vmem [shape: bf16[27,4,16], index: 1, kind: input, shape index: {}]
  %s2 = inlined_call_operand.vmem [shape: f32[1,16], index: 2, kind: input, shape index: {}]
  %s3 = inlined_call_operand.vmem [shape: f32[1,16], index: 3, kind: input, shape index: {}]
  %s4 = inlined_call_operand.vmem [shape: f32[27904,1], index: 4, kind: input, shape index: {}]
  %s5 = inlined_call_operand.vmem [shape: bf16[27904,16], index: 5, kind: output, shape index: {}]
  %s6 = sld [smem:[#allocation0]]
  $region53: #{tpu_custom_call.1} parent=0
    _
  %s8 = ssub.s32 1, %s6
  %s9 = scalar_select 0, %s8, %s6
  loop: start=0, step=1, limit=111
  $region2: #{tpu_custom_call.1} parent=0 // loop_pre_header
    _
  $region3: #{tpu_custom_call.1} parent=0 // loop_header
    %s11 = sphi 0, %s15
    %p12 = scmp.ge.s32.totalorder %s11, 111
    %s19 = sphi 0, %s19
    %s21 = sphi 0, %s19
    %s22 = sphi 0, %s21
    %s36 = sphi 0, %s22
    %s40 = sphi 0, %s40
    %s42 = sphi 0, %s40
    %s43 = sphi 0, %s42
    %s57 = sphi 0, %s43
    %s61 = sphi 0, %s61
    %s63 = sphi 0, %s61
    %s64 = sphi 0, %s63
    %s78 = sphi 0, %s64
    %s82 = sphi 0, %s82
    %s84 = sphi 0, %s82
    %s85 = sphi 0, %s84
    %s99 = sphi 0, %s85
    %s105 = sphi 0, %s107
    %s108 = sphi 0, %s105
    %s109 = sphi 0, %s108
    %s125 = sphi 0, %s109
    %s131 = sphi 0, %s133
    %s134 = sphi 0, %s131
    %s135 = sphi 0, %s134
    %s151 = sphi 0, %s135
  $region4: #{tpu_custom_call.1} parent=0 // loop_header_branch
    %14 = sbr.rel (%p12) target = $region8
  $region5: #{tpu_custom_call.1} parent=0 // loop_body
    %s16 = ssub.s32 %s11, 1
    %s17 = ssub.s32 %s11, 2
    %s18 = sadd.s32 %s11, 1
    %s20 = sadd.s32 %s19, 1
    %p23 = scmp.eq.s32.totalorder %s11, 108
    %p24 = scmp.ne.s32.totalorder %s19, %s21
    %p25 = scmp.eq.s32.totalorder %s11, 0
    %p26 = por %p24, %p25
    %p27 = scmp.ne.s32.totalorder %s19, %s21
    %p28 = scmp.eq.s32.totalorder %s16, 108
    %p29 = por %p27, %p28
    %p30 = scmp.ne.s32.totalorder %s21, %s22
    %p31 = scmp.eq.s32.totalorder %s16, 0
    %p32 = por %p30, %p31
    %p33 = scmp.ne.s32.totalorder %s21, %s22
    %p34 = scmp.eq.s32.totalorder %s17, 108
    %p35 = por %p33, %p34
    %p37 = scmp.ne.s32.totalorder %s22, %s36
    %p38 = scmp.eq.s32.totalorder %s17, 0
    %p39 = por %p37, %p38
    %s41 = sadd.s32 %s40, 1
    %p44 = scmp.eq.s32.totalorder %s11, 108
    %p45 = scmp.ne.s32.totalorder %s40, %s42
    %p46 = scmp.eq.s32.totalorder %s11, 0
    %p47 = por %p45, %p46
    %p48 = scmp.ne.s32.totalorder %s40, %s42
    %p49 = scmp.eq.s32.totalorder %s16, 108
    %p50 = por %p48, %p49
    %p51 = scmp.ne.s32.totalorder %s42, %s43
    %p52 = scmp.eq.s32.totalorder %s16, 0
    %p53 = por %p51, %p52
    %p54 = scmp.ne.s32.totalorder %s42, %s43
    %p55 = scmp.eq.s32.totalorder %s17, 108
    %p56 = por %p54, %p55
    %p58 = scmp.ne.s32.totalorder %s43, %s57
    %p59 = scmp.eq.s32.totalorder %s17, 0
    %p60 = por %p58, %p59
    %s62 = sadd.s32 %s61, 1
    %p65 = scmp.eq.s32.totalorder %s11, 108
    %p66 = scmp.ne.s32.totalorder %s61, %s63
    %p67 = scmp.eq.s32.totalorder %s11, 0
    %p68 = por %p66, %p67
    %p69 = scmp.ne.s32.totalorder %s61, %s63
    %p70 = scmp.eq.s32.totalorder %s16, 108
    %p71 = por %p69, %p70
    %p72 = scmp.ne.s32.totalorder %s63, %s64
    %p73 = scmp.eq.s32.totalorder %s16, 0
    %p74 = por %p72, %p73
    %p75 = scmp.ne.s32.totalorder %s63, %s64
    %p76 = scmp.eq.s32.totalorder %s17, 108
    %p77 = por %p75, %p76
    %p79 = scmp.ne.s32.totalorder %s64, %s78
    %p80 = scmp.eq.s32.totalorder %s17, 0
    %p81 = por %p79, %p80
    %s83 = sadd.s32 %s82, 1
    %p86 = scmp.eq.s32.totalorder %s11, 108
    %p87 = scmp.ne.s32.totalorder %s82, %s84
    %p88 = scmp.eq.s32.totalorder %s11, 0
    %p89 = por %p87, %p88
    %p90 = scmp.ne.s32.totalorder %s82, %s84
    %p91 = scmp.eq.s32.totalorder %s16, 108
    %p92 = por %p90, %p91
    %p93 = scmp.ne.s32.totalorder %s84, %s85
    %p94 = scmp.eq.s32.totalorder %s16, 0
    %p95 = por %p93, %p94
    %p96 = scmp.ne.s32.totalorder %s84, %s85
    %p97 = scmp.eq.s32.totalorder %s17, 108
    %p98 = por %p96, %p97
    %p100 = scmp.ne.s32.totalorder %s85, %s99
    %p101 = scmp.eq.s32.totalorder %s17, 0
    %p102 = por %p100, %p101
    %s103 = ssub.s32 %s11, %s18
    %p104 = scmp.eq.s32.totalorder %s103, 0
    %s106 = sadd.s32 %s105, 1
    %s107 = scalar_select %p104, %s105, %s106
    %p110 = pneg %p104
    %p111 = scmp.eq.s32.totalorder %s11, 108
    %p112 = por %p110, %p111
    %p113 = scmp.ne.s32.totalorder %s105, %s108
    %p114 = scmp.eq.s32.totalorder %s11, 0
    %p115 = por %p113, %p114
    %p116 = scmp.ne.s32.totalorder %s105, %s108
    %p117 = scmp.eq.s32.totalorder %s16, 108
    %p118 = por %p116, %p117
    %p119 = scmp.ne.s32.totalorder %s108, %s109
    %p120 = scmp.eq.s32.totalorder %s16, 0
    %p121 = por %p119, %p120
    %p122 = scmp.ne.s32.totalorder %s108, %s109
    %p123 = scmp.eq.s32.totalorder %s17, 108
    %p124 = por %p122, %p123
    %p126 = scmp.ne.s32.totalorder %s109, %s125
    %p127 = scmp.eq.s32.totalorder %s17, 0
    %p128 = por %p126, %p127
    %s129 = ssub.s32 %s11, %s18
    %p130 = scmp.eq.s32.totalorder %s129, 0
    %s132 = sadd.s32 %s131, 1
    %s133 = scalar_select %p130, %s131, %s132
    %p136 = pneg %p130
    %p137 = scmp.eq.s32.totalorder %s11, 108
    %p138 = por %p136, %p137
    %p139 = scmp.ne.s32.totalorder %s131, %s134
    %p140 = scmp.eq.s32.totalorder %s11, 0
    %p141 = por %p139, %p140
    %p142 = scmp.ne.s32.totalorder %s131, %s134
    %p143 = scmp.eq.s32.totalorder %s16, 108
    %p144 = por %p142, %p143
    %p145 = scmp.ne.s32.totalorder %s134, %s135
    %p146 = scmp.eq.s32.totalorder %s16, 0
    %p147 = por %p145, %p146
    %p148 = scmp.ne.s32.totalorder %s134, %s135
    %p149 = scmp.eq.s32.totalorder %s17, 108
    %p150 = por %p148, %p149
    %p152 = scmp.ne.s32.totalorder %s135, %s151
    %p153 = scmp.eq.s32.totalorder %s17, 0
    %p154 = por %p152, %p153
    %p155 = scmp.le.s32.totalorder 1, %s11
    %p156 = scmp.lt.s32.totalorder %s11, 110
    %p157 = pnand %p155, %p156
    %p158 = pneg %p157
    // Predicated region
    $region9: #{tpu_custom_call.1} parent=5 // pred_check
      _
    $region10: #{tpu_custom_call.1} parent=5 // pred_check_branch
      %160 = sbr.rel (%p157) target = $region12
    $region11: #{tpu_custom_call.1} parent=5 // pred_region
      %s161 = ssub.s32 %s11, 1
      // Predicated region
      $region13: #{tpu_custom_call.1} parent=11 // pred_check
        %p162 = pneg %p32
      $region14: #{tpu_custom_call.1} parent=11 // pred_check_branch
        %164 = sbr.rel (%p162) target = $region16
      $region15: #{tpu_custom_call.1} parent=11 // pred_region
        _
      $region16: #{tpu_custom_call.1} parent=11 // pred_fallthru
        _
      // Predicated region
      $region17: #{tpu_custom_call.1} parent=11 // pred_check
        %p165 = pneg %p53
      $region18: #{tpu_custom_call.1} parent=11 // pred_check_branch
        %167 = sbr.rel (%p165) target = $region20
      $region19: #{tpu_custom_call.1} parent=11 // pred_region
        _
      $region20: #{tpu_custom_call.1} parent=11 // pred_fallthru
        _
      // Predicated region
      $region21: #{tpu_custom_call.1} parent=11 // pred_check
        %p168 = pneg %p74
      $region22: #{tpu_custom_call.1} parent=11 // pred_check_branch
        %170 = sbr.rel (%p168) target = $region24
      $region23: #{tpu_custom_call.1} parent=11 // pred_region
        _
      $region24: #{tpu_custom_call.1} parent=11 // pred_fallthru
        _
      // Predicated region
      $region25: #{tpu_custom_call.1} parent=11 // pred_check
        %p171 = pneg %p95
      $region26: #{tpu_custom_call.1} parent=11 // pred_check_branch
        %173 = sbr.rel (%p171) target = $region28
      $region27: #{tpu_custom_call.1} parent=11 // pred_region
        _
      $region28: #{tpu_custom_call.1} parent=11 // pred_fallthru
        _
    $region12: #{tpu_custom_call.1} parent=5 // pred_fallthru
      _
    %p174 = scmp.lt.s32.totalorder %s11, 109
    // Predicated region
    $region29: #{tpu_custom_call.1} parent=5 // pred_check
      %p175 = pneg %p174
    $region30: #{tpu_custom_call.1} parent=5 // pred_check_branch
      %177 = sbr.rel (%p175) target = $region32
    $region31: #{tpu_custom_call.1} parent=5 // pred_region
      // Predicated region
      $region33: #{tpu_custom_call.1} parent=31 // pred_check
        %p178 = pneg %p115
      $region34: #{tpu_custom_call.1} parent=31 // pred_check_branch
        %180 = sbr.rel (%p178) target = $region36
      $region35: #{tpu_custom_call.1} parent=31 // pred_region
        %s181 = smul.u32 32, %s11
        %p182 = scmp.lt.s32.totalorder %s181, 3487
        %s183 = scalar_select %p182, %s181, 3487
        %s184 = smul.addr %s183, 8
        %s185 = scalar_lea.vmem %s4, %s184
        %s186 = smul.u32 32, %s11
      $region36: #{tpu_custom_call.1} parent=31 // pred_fallthru
        _
    $region32: #{tpu_custom_call.1} parent=5 // pred_fallthru
      _
    %p187 = scmp.le.s32.totalorder 1, %s11
    %p188 = scmp.lt.s32.totalorder %s11, 110
    %p189 = pnand %p187, %p188
    %p190 = pneg %p189
    // Predicated region
    $region37: #{tpu_custom_call.1} parent=5 // pred_check
      _
    $region38: #{tpu_custom_call.1} parent=5 // pred_check_branch
      %192 = sbr.rel (%p189) target = $region40
    $region39: #{tpu_custom_call.1} parent=5 // pred_region
      %s193 = ssub.s32 %s11, 1
      %p194 = pneg %p32
      %p195 = pneg %p29
      %p196 = pneg %p53
      %p197 = pneg %p50
      %p198 = pneg %p74
      %p199 = pneg %p71
      %p200 = pneg %p95
      %p201 = pneg %p92
      %s202 = smul.u32 32, %s16
      %p203 = scmp.lt.s32.totalorder %s202, 3487
      %s204 = scalar_select %p203, %s202, 3487
      %s205 = smul.addr %s204, 8
      %s206 = scalar_lea.vmem %s4, %s205
      %p207 = pneg %p121
      %p208 = pneg %p118
      %p209 = pneg %p147
      %p210 = pneg %p144
      %s211 = smul.u32 32, %s16
      %p212 = scmp.lt.s32.totalorder %s211, 3487
      %s213 = scalar_select %p212, %s211, 3487
      %s214 = smul.addr %s213, 4
      %s215 = scalar_lea.vmem %s5, %s214
      %s216 = smul.u32 32, %s16
      %p217 = scmp.lt.s32.totalorder %s216, 3487
      %s218 = scalar_select %p217, %s216, 3487
      %s219 = smul.addr %s218, 8
      %s220 = scalar_lea.vmem %s4, %s219
      %s221 = smul.u32 32, %s16
      %s222 = smul.u32 32, %s16
      %p223 = scmp.lt.s32.totalorder %s222, 3487
      %s224 = scalar_select %p223, %s222, 3487
      %s225 = smul.addr %s224, 4
      %s226 = scalar_lea.vmem %s5, %s225
      %s227 = smul.u32 32, %s16
      %s229 = smul.u32 %s16, 256
      %s230 = sshra.s32 %s229, 3
      %s231 = sand.u32 %s229, 7
      %s232 = smul.addr %s230, 4
      %s233 = scalar_lea.vmem %s0, %s232
      %v234 = vld [vmem:[%s233] sm:$0xf]
      %v235 = vld [vmem:[%s233 + $0x4] sm:$0xf]
      %v236 = vld [vmem:[%s233 + $0x8] sm:$0xf]
      %v237 = vld [vmem:[%s233 + $0xc] sm:$0xf]
      %v238 = vld [vmem:[%s233 + $0x10] sm:$0xf]
      %v239 = vld [vmem:[%s233 + $0x14] sm:$0xf]
      %v240 = vld [vmem:[%s233 + $0x18] sm:$0xf]
      %v241 = vld [vmem:[%s233 + $0x1c] sm:$0xf]
      %v242 = vld [vmem:[%s233 + $0x20] sm:$0xf]
      %v243 = vld [vmem:[%s233 + $0x24] sm:$0xf]
      %v244 = vld [vmem:[%s233 + $0x28] sm:$0xf]
      %v245 = vld [vmem:[%s233 + $0x2c] sm:$0xf]
      %v246 = vld [vmem:[%s233 + $0x30] sm:$0xf]
      %v247 = vld [vmem:[%s233 + $0x34] sm:$0xf]
      %v248 = vld [vmem:[%s233 + $0x38] sm:$0xf]
      %v249 = vld [vmem:[%s233 + $0x3c] sm:$0xf]
      %v250 = vld [vmem:[%s233 + $0x40] sm:$0xf]
      %v251 = vld [vmem:[%s233 + $0x44] sm:$0xf]
      %v252 = vld [vmem:[%s233 + $0x48] sm:$0xf]
      %v253 = vld [vmem:[%s233 + $0x4c] sm:$0xf]
      %v254 = vld [vmem:[%s233 + $0x50] sm:$0xf]
      %v255 = vld [vmem:[%s233 + $0x54] sm:$0xf]
      %v256 = vld [vmem:[%s233 + $0x58] sm:$0xf]
      %v257 = vld [vmem:[%s233 + $0x5c] sm:$0xf]
      %v258 = vld [vmem:[%s233 + $0x60] sm:$0xf]
      %v259 = vld [vmem:[%s233 + $0x64] sm:$0xf]
      %v260 = vld [vmem:[%s233 + $0x68] sm:$0xf]
      %v261 = vld [vmem:[%s233 + $0x6c] sm:$0xf]
      %v262 = vld [vmem:[%s233 + $0x70] sm:$0xf]
      %v263 = vld [vmem:[%s233 + $0x74] sm:$0xf]
      %v264 = vld [vmem:[%s233 + $0x78] sm:$0xf]
      %v265 = vld [vmem:[%s233 + $0x7c] sm:$0xf]
      %v266 = vld [vmem:[%s233 + $0x80] sm:$0xf]
      %v267 = vld [vmem:[%s1] sm:$0x3]
      %s268 = scalar_lea.vmem %s1, 2
      %v269 = vld [vmem:[%s268] sm:$0x3]
      %v303 = vunpack.c.l.b16 %v234
      %v304 = vunpack.c.l.b16 %v235
      %v305 = vunpack.c.l.b16 %v236
      %v306 = vunpack.c.l.b16 %v237
      %v307 = vunpack.c.l.b16 %v238
      %v308 = vunpack.c.l.b16 %v239
      %v309 = vunpack.c.l.b16 %v240
      %v310 = vunpack.c.l.b16 %v241
      %v311 = vunpack.c.l.b16 %v242
      %v312 = vunpack.c.l.b16 %v243
      %v313 = vunpack.c.l.b16 %v244
      %v314 = vunpack.c.l.b16 %v245
      %v315 = vunpack.c.l.b16 %v246
      %v316 = vunpack.c.l.b16 %v247
      %v317 = vunpack.c.l.b16 %v248
      %v318 = vunpack.c.l.b16 %v249
      %v319 = vunpack.c.l.b16 %v250
      %v320 = vunpack.c.l.b16 %v251
      %v321 = vunpack.c.l.b16 %v252
      %v322 = vunpack.c.l.b16 %v253
      %v323 = vunpack.c.l.b16 %v254
      %v324 = vunpack.c.l.b16 %v255
      %v325 = vunpack.c.l.b16 %v256
      %v326 = vunpack.c.l.b16 %v257
      %v327 = vunpack.c.l.b16 %v258
      %v328 = vunpack.c.l.b16 %v259
      %v329 = vunpack.c.l.b16 %v260
      %v330 = vunpack.c.l.b16 %v261
      %v331 = vunpack.c.l.b16 %v262
      %v332 = vunpack.c.l.b16 %v263
      %v333 = vunpack.c.l.b16 %v264
      %v334 = vunpack.c.l.b16 %v265
      %v335 = vunpack.c.l.b16 %v266
      %v336 = vpack.c.b16 %v304, %v303
      %v337 = vpack.c.b16 %v306, %v305
      %v338 = vpack.c.b16 %v308, %v307
      %v339 = vpack.c.b16 %v310, %v309
      %v340 = vpack.c.b16 %v312, %v311
      %v341 = vpack.c.b16 %v314, %v313
      %v342 = vpack.c.b16 %v316, %v315
      %v343 = vpack.c.b16 %v318, %v317
      %v344 = vpack.c.b16 %v320, %v319
      %v345 = vpack.c.b16 %v322, %v321
      %v346 = vpack.c.b16 %v324, %v323
      %v347 = vpack.c.b16 %v326, %v325
      %v348 = vpack.c.b16 %v328, %v327
      %v349 = vpack.c.b16 %v330, %v329
      %v350 = vpack.c.b16 %v332, %v331
      %v351 = vpack.c.b16 %v334, %v333
      %v352 = vpack.c.b16 %v335, %v335
      %vm353 = vsmask.f32 7424
      %v355 = vshrl.u32 %v336, 16
      %v357 = vshll.u32 %v336, 16
      %v359 = vrot.slane %v357, 1
      %v360 = vor.u32 %v355, %v359
      %v362 = vshll.u32 %v337, 16
      %v364 = vrot.slane %v362, 1
      %v365 = vsel %vm353, %v360, %v364
      %v366 = vshrl.u32 %v337, 16
      %v368 = vor.u32 %v366, %v364
      %v370 = vshll.u32 %v338, 16
      %v372 = vrot.slane %v370, 1
      %v373 = vsel %vm353, %v368, %v372
      %v374 = vshrl.u32 %v338, 16
      %v376 = vor.u32 %v374, %v372
      %v378 = vshll.u32 %v339, 16
      %v380 = vrot.slane %v378, 1
      %v381 = vsel %vm353, %v376, %v380
      %v382 = vshrl.u32 %v339, 16
      %v384 = vor.u32 %v382, %v380
      %v386 = vshll.u32 %v340, 16
      %v388 = vrot.slane %v386, 1
      %v389 = vsel %vm353, %v384, %v388
      %v390 = vshrl.u32 %v340, 16
      %v392 = vor.u32 %v390, %v388
      %v394 = vshll.u32 %v341, 16
      %v396 = vrot.slane %v394, 1
      %v397 = vsel %vm353, %v392, %v396
      %v398 = vshrl.u32 %v341, 16
      %v400 = vor.u32 %v398, %v396
      %v402 = vshll.u32 %v342, 16
      %v404 = vrot.slane %v402, 1
      %v405 = vsel %vm353, %v400, %v404
      %v406 = vshrl.u32 %v342, 16
      %v408 = vor.u32 %v406, %v404
      %v410 = vshll.u32 %v343, 16
      %v412 = vrot.slane %v410, 1
      %v413 = vsel %vm353, %v408, %v412
      %v414 = vshrl.u32 %v343, 16
      %v416 = vor.u32 %v414, %v412
      %v418 = vshll.u32 %v344, 16
      %v420 = vrot.slane %v418, 1
      %v421 = vsel %vm353, %v416, %v420
      %v422 = vshrl.u32 %v344, 16
      %v424 = vor.u32 %v422, %v420
      %v426 = vshll.u32 %v345, 16
      %v428 = vrot.slane %v426, 1
      %v429 = vsel %vm353, %v424, %v428
      %v430 = vshrl.u32 %v345, 16
      %v432 = vor.u32 %v430, %v428
      %v434 = vshll.u32 %v346, 16
      %v436 = vrot.slane %v434, 1
      %v437 = vsel %vm353, %v432, %v436
      %v438 = vshrl.u32 %v346, 16
      %v440 = vor.u32 %v438, %v436
      %v442 = vshll.u32 %v347, 16
      %v444 = vrot.slane %v442, 1
      %v445 = vsel %vm353, %v440, %v444
      %v446 = vshrl.u32 %v347, 16
      %v448 = vor.u32 %v446, %v444
      %v450 = vshll.u32 %v348, 16
      %v452 = vrot.slane %v450, 1
      %v453 = vsel %vm353, %v448, %v452
      %v454 = vshrl.u32 %v348, 16
      %v456 = vor.u32 %v454, %v452
      %v458 = vshll.u32 %v349, 16
      %v460 = vrot.slane %v458, 1
      %v461 = vsel %vm353, %v456, %v460
      %v462 = vshrl.u32 %v349, 16
      %v464 = vor.u32 %v462, %v460
      %v466 = vshll.u32 %v350, 16
      %v468 = vrot.slane %v466, 1
      %v469 = vsel %vm353, %v464, %v468
      %v470 = vshrl.u32 %v350, 16
      %v472 = vor.u32 %v470, %v468
      %v474 = vshll.u32 %v351, 16
      %v476 = vrot.slane %v474, 1
      %v477 = vsel %vm353, %v472, %v476
      %v478 = vshrl.u32 %v351, 16
      %v480 = vor.u32 %v478, %v476
      %v482 = vshll.u32 %v352, 16
      %v484 = vrot.slane %v482, 1
      %v485 = vsel %vm353, %v480, %v484
      %vm486 = vcmask 31744
      %v488 = vsel %vm486, %v365, 0
      %v491 = vsel %vm486, %v373, 0
      %v494 = vsel %vm486, %v381, 0
      %v497 = vsel %vm486, %v389, 0
      %v500 = vsel %vm486, %v397, 0
      %v503 = vsel %vm486, %v405, 0
      %v506 = vsel %vm486, %v413, 0
      %v509 = vsel %vm486, %v421, 0
      %v512 = vsel %vm486, %v429, 0
      %v515 = vsel %vm486, %v437, 0
      %v518 = vsel %vm486, %v445, 0
      %v521 = vsel %vm486, %v453, 0
      %v524 = vsel %vm486, %v461, 0
      %v527 = vsel %vm486, %v469, 0
      %v530 = vsel %vm486, %v477, 0
      %v533 = vsel %vm486, %v485, 0
      %vm535 = vcmask 1041408
      %v537 = vsel %vm535, %v269, 0
      %539 = vmatprep.subr.bf16.mxu0 0
      %540 = vmatpush1.bf16.msra.mxu0 %v537
      %541 = vmatprep.subr.bf16.mxu0 0
      %542 = vmatpush1.bf16.msra.mxu0 0
      %543 = vmatprep.subr.bf16.mxu0 0
      %544 = vmatpush1.bf16.msra.mxu0 0
      %545 = vmatprep.subr.bf16.mxu0 0
      %546 = vmatpush1.bf16.msra.mxu0 0
      %547 = vmatprep.subr.bf16.mxu0 0
      %548 = vmatpush1.bf16.msra.mxu0 0
      %549 = vmatprep.subr.bf16.mxu0 0
      %550 = vmatpush1.bf16.msra.mxu0 0
      %551 = vmatprep.subr.bf16.mxu0 0
      %552 = vmatpush1.bf16.msra.mxu0 0
      %553 = vmatprep.subr.bf16.mxu0 0
      %554 = vmatpush1.bf16.msra.mxu0 0
      %555 = vmatprep.subr.bf16.mxu0 0
      %556 = vmatpush1.bf16.msra.mxu0 0
      %557 = vmatprep.subr.bf16.mxu0 0
      %558 = vmatpush1.bf16.msra.mxu0 0
      %559 = vmatprep.subr.bf16.mxu0 0
      %560 = vmatpush1.bf16.msra.mxu0 0
      %561 = vmatprep.subr.bf16.mxu0 0
      %562 = vmatpush1.bf16.msra.mxu0 0
      %563 = vmatprep.subr.bf16.mxu0 0
      %564 = vmatpush1.bf16.msra.mxu0 0
      %565 = vmatprep.subr.bf16.mxu0 0
      %566 = vmatpush1.bf16.msra.mxu0 0
      %567 = vmatprep.subr.bf16.mxu0 0
      %568 = vmatpush1.bf16.msra.mxu0 0
      %569 = vmatprep.subr.bf16.mxu0 0
      %570 = vmatpush1.bf16.msra.mxu0 0
      %571 = vmatprep.mubr.bf16.mxu0 0
      %572 = vmatmul.mubr.bf16.gmra.mrb[0].mxu0 %v488
      %v573 = vpop.f32.mrb[0].mxu0
      %v574 = vadd.f32 0.0, %v573
      %v575 = vpop.f32.mrb[0].mxu0
      %v576 = vpop.f32.mrb[0].mxu0
      %v577 = vadd.f32 0.0, %v576
      %v578 = vpop.f32.mrb[0].mxu0
      %579 = vmatprep.mubr.bf16.mxu0 0
      %580 = vmatmul.mubr.bf16.gmra.mrb[0].mxu0 %v491
      %v581 = vpop.f32.mrb[0].mxu0
      %v582 = vadd.f32 0.0, %v581
      %v583 = vpop.f32.mrb[0].mxu0
      %v584 = vpop.f32.mrb[0].mxu0
      %v585 = vadd.f32 0.0, %v584
      %v586 = vpop.f32.mrb[0].mxu0
      %587 = vmatprep.mubr.bf16.mxu0 0
      %588 = vmatmul.mubr.bf16.gmra.mrb[0].mxu0 %v494
      %v589 = vpop.f32.mrb[0].mxu0
      %v590 = vadd.f32 0.0, %v589
      %v591 = vpop.f32.mrb[0].mxu0
      %v592 = vpop.f32.mrb[0].mxu0
      %v593 = vadd.f32 0.0, %v592
      %v594 = vpop.f32.mrb[0].mxu0
      %595 = vmatprep.mubr.bf16.mxu0 0
      %596 = vmatmul.mubr.bf16.gmra.mrb[0].mxu0 %v497
      %v597 = vpop.f32.mrb[0].mxu0
      %v598 = vadd.f32 0.0, %v597
      %v599 = vpop.f32.mrb[0].mxu0
      %v600 = vpop.f32.mrb[0].mxu0
      %v601 = vadd.f32 0.0, %v600
      %v602 = vpop.f32.mrb[0].mxu0
      %603 = vmatprep.mubr.bf16.mxu0 0
      %604 = vmatmul.mubr.bf16.gmra.mrb[0].mxu0 %v500
      %v605 = vpop.f32.mrb[0].mxu0
      %v606 = vadd.f32 0.0, %v605
      %v607 = vpop.f32.mrb[0].mxu0
      %v608 = vpop.f32.mrb[0].mxu0
      %v609 = vadd.f32 0.0, %v608
      %v610 = vpop.f32.mrb[0].mxu0
      %611 = vmatprep.mubr.bf16.mxu0 0
      %612 = vmatmul.mubr.bf16.gmra.mrb[0].mxu0 %v503
      %v613 = vpop.f32.mrb[0].mxu0
      %v614 = vadd.f32 0.0, %v613
      %v615 = vpop.f32.mrb[0].mxu0
      %v616 = vpop.f32.mrb[0].mxu0
      %v617 = vadd.f32 0.0, %v616
      %v618 = vpop.f32.mrb[0].mxu0
      %619 = vmatprep.mubr.bf16.mxu0 0
      %620 = vmatmul.mubr.bf16.gmra.mrb[0].mxu0 %v506
      %v621 = vpop.f32.mrb[0].mxu0
      %v622 = vadd.f32 0.0, %v621
      %v623 = vpop.f32.mrb[0].mxu0
      %v624 = vpop.f32.mrb[0].mxu0
      %v625 = vadd.f32 0.0, %v624
      %v626 = vpop.f32.mrb[0].mxu0
      %627 = vmatprep.mubr.bf16.mxu0 0
      %628 = vmatmul.mubr.bf16.gmra.mrb[0].mxu0 %v509
      %v629 = vpop.f32.mrb[0].mxu0
      %v630 = vadd.f32 0.0, %v629
      %v631 = vpop.f32.mrb[0].mxu0
      %v632 = vpop.f32.mrb[0].mxu0
      %v633 = vadd.f32 0.0, %v632
      %v634 = vpop.f32.mrb[0].mxu0
      %635 = vmatprep.mubr.bf16.mxu0 0
      %636 = vmatmul.mubr.bf16.gmra.mrb[0].mxu0 %v512
      %v637 = vpop.f32.mrb[0].mxu0
      %v638 = vadd.f32 0.0, %v637
      %v639 = vpop.f32.mrb[0].mxu0
      %v640 = vpop.f32.mrb[0].mxu0
      %v641 = vadd.f32 0.0, %v640
      %v642 = vpop.f32.mrb[0].mxu0
      %643 = vmatprep.mubr.bf16.mxu0 0
      %644 = vmatmul.mubr.bf16.gmra.mrb[0].mxu0 %v515
      %v645 = vpop.f32.mrb[0].mxu0
      %v646 = vadd.f32 0.0, %v645
      %v647 = vpop.f32.mrb[0].mxu0
      %v648 = vpop.f32.mrb[0].mxu0
      %v649 = vadd.f32 0.0, %v648
      %v650 = vpop.f32.mrb[0].mxu0
      %651 = vmatprep.mubr.bf16.mxu0 0
      %652 = vmatmul.mubr.bf16.gmra.mrb[0].mxu0 %v518
      %v653 = vpop.f32.mrb[0].mxu0
      %v654 = vadd.f32 0.0, %v653
      %v655 = vpop.f32.mrb[0].mxu0
      %v656 = vpop.f32.mrb[0].mxu0
      %v657 = vadd.f32 0.0, %v656
      %v658 = vpop.f32.mrb[0].mxu0
      %659 = vmatprep.mubr.bf16.mxu0 0
      %660 = vmatmul.mubr.bf16.gmra.mrb[0].mxu0 %v521
      %v661 = vpop.f32.mrb[0].mxu0
      %v662 = vadd.f32 0.0, %v661
      %v663 = vpop.f32.mrb[0].mxu0
      %v664 = vpop.f32.mrb[0].mxu0
      %v665 = vadd.f32 0.0, %v664
      %v666 = vpop.f32.mrb[0].mxu0
      %667 = vmatprep.mubr.bf16.mxu0 0
      %668 = vmatmul.mubr.bf16.gmra.mrb[0].mxu0 %v524
      %v669 = vpop.f32.mrb[0].mxu0
      %v670 = vadd.f32 0.0, %v669
      %v671 = vpop.f32.mrb[0].mxu0
      %v672 = vpop.f32.mrb[0].mxu0
      %v673 = vadd.f32 0.0, %v672
      %v674 = vpop.f32.mrb[0].mxu0
      %675 = vmatprep.mubr.bf16.mxu0 0
      %676 = vmatmul.mubr.bf16.gmra.mrb[0].mxu0 %v527
      %v677 = vpop.f32.mrb[0].mxu0
      %v678 = vadd.f32 0.0, %v677
      %v679 = vpop.f32.mrb[0].mxu0
      %v680 = vpop.f32.mrb[0].mxu0
      %v681 = vadd.f32 0.0, %v680
      %v682 = vpop.f32.mrb[0].mxu0
      %683 = vmatprep.mubr.bf16.mxu0 0
      %684 = vmatmul.mubr.bf16.gmra.mrb[0].mxu0 %v530
      %v685 = vpop.f32.mrb[0].mxu0
      %v686 = vadd.f32 0.0, %v685
      %v687 = vpop.f32.mrb[0].mxu0
      %v688 = vpop.f32.mrb[0].mxu0
      %v689 = vadd.f32 0.0, %v688
      %v690 = vpop.f32.mrb[0].mxu0
      %691 = vmatprep.mubr.bf16.mxu0 0
      %692 = vmatmul.mubr.bf16.gmra.mrb[0].mxu0 %v533
      %v693 = vpop.f32.mrb[0].mxu0
      %v694 = vadd.f32 0.0, %v693
      %v695 = vpop.f32.mrb[0].mxu0
      %v696 = vpop.f32.mrb[0].mxu0
      %v697 = vadd.f32 0.0, %v696
      %v698 = vpop.f32.mrb[0].mxu0
      %699 = vdwg.mxu0
      %v700 = vsel %vm486, %v336, 0
      %v702 = vsel %vm486, %v337, 0
      %v704 = vsel %vm486, %v338, 0
      %v706 = vsel %vm486, %v339, 0
      %v708 = vsel %vm486, %v340, 0
      %v710 = vsel %vm486, %v341, 0
      %v712 = vsel %vm486, %v342, 0
      %v714 = vsel %vm486, %v343, 0
      %v716 = vsel %vm486, %v344, 0
      %v718 = vsel %vm486, %v345, 0
      %v720 = vsel %vm486, %v346, 0
      %v722 = vsel %vm486, %v347, 0
      %v724 = vsel %vm486, %v348, 0
      %v726 = vsel %vm486, %v349, 0
      %v728 = vsel %vm486, %v350, 0
      %v730 = vsel %vm486, %v351, 0
      %v733 = vsel %vm535, %v267, 0
      %735 = vmatprep.subr.bf16.mxu0 0
      %736 = vmatpush1.bf16.msra.mxu0 %v733
      %737 = vmatprep.subr.bf16.mxu0 0
      %738 = vmatpush1.bf16.msra.mxu0 0
      %739 = vmatprep.subr.bf16.mxu0 0
      %740 = vmatpush1.bf16.msra.mxu0 0
      %741 = vmatprep.subr.bf16.mxu0 0
      %742 = vmatpush1.bf16.msra.mxu0 0
      %743 = vmatprep.subr.bf16.mxu0 0
      %744 = vmatpush1.bf16.msra.mxu0 0
      %745 = vmatprep.subr.bf16.mxu0 0
      %746 = vmatpush1.bf16.msra.mxu0 0
      %747 = vmatprep.subr.bf16.mxu0 0
      %748 = vmatpush1.bf16.msra.mxu0 0
      %749 = vmatprep.subr.bf16.mxu0 0
      %750 = vmatpush1.bf16.msra.mxu0 0
      %751 = vmatprep.subr.bf16.mxu0 0
      %752 = vmatpush1.bf16.msra.mxu0 0
      %753 = vmatprep.subr.bf16.mxu0 0
      %754 = vmatpush1.bf16.msra.mxu0 0
      %755 = vmatprep.subr.bf16.mxu0 0
      %756 = vmatpush1.bf16.msra.mxu0 0
      %757 = vmatprep.subr.bf16.mxu0 0
      %758 = vmatpush1.bf16.msra.mxu0 0
      %759 = vmatprep.subr.bf16.mxu0 0
      %760 = vmatpush1.bf16.msra.mxu0 0
      %761 = vmatprep.subr.bf16.mxu0 0
      %762 = vmatpush1.bf16.msra.mxu0 0
      %763 = vmatprep.subr.bf16.mxu0 0
      %764 = vmatpush1.bf16.msra.mxu0 0
      %765 = vmatprep.subr.bf16.mxu0 0
      %766 = vmatpush1.bf16.msra.mxu0 0
      %767 = vmatprep.mubr.bf16.mxu0 0
      %768 = vmatmul.mubr.bf16.gmra.mrb[0].mxu0 %v700
      %v769 = vpop.f32.mrb[0].mxu0
      %v770 = vadd.f32 %v574, %v769
      %v771 = vpop.f32.mrb[0].mxu0
      %v772 = vpop.f32.mrb[0].mxu0
      %v773 = vadd.f32 %v577, %v772
      %v774 = vpop.f32.mrb[0].mxu0
      %775 = vmatprep.mubr.bf16.mxu0 0
      %776 = vmatmul.mubr.bf16.gmra.mrb[0].mxu0 %v702
      %v777 = vpop.f32.mrb[0].mxu0
      %v778 = vadd.f32 %v582, %v777
      %v779 = vpop.f32.mrb[0].mxu0
      %v780 = vpop.f32.mrb[0].mxu0
      %v781 = vadd.f32 %v585, %v780
      %v782 = vpop.f32.mrb[0].mxu0
      %783 = vmatprep.mubr.bf16.mxu0 0
      %784 = vmatmul.mubr.bf16.gmra.mrb[0].mxu0 %v704
      %v785 = vpop.f32.mrb[0].mxu0
      %v786 = vadd.f32 %v590, %v785
      %v787 = vpop.f32.mrb[0].mxu0
      %v788 = vpop.f32.mrb[0].mxu0
      %v789 = vadd.f32 %v593, %v788
      %v790 = vpop.f32.mrb[0].mxu0
      %791 = vmatprep.mubr.bf16.mxu0 0
      %792 = vmatmul.mubr.bf16.gmra.mrb[0].mxu0 %v706
      %v793 = vpop.f32.mrb[0].mxu0
      %v794 = vadd.f32 %v598, %v793
      %v795 = vpop.f32.mrb[0].mxu0
      %v796 = vpop.f32.mrb[0].mxu0
      %v797 = vadd.f32 %v601, %v796
      %v798 = vpop.f32.mrb[0].mxu0
      %799 = vmatprep.mubr.bf16.mxu0 0
      %800 = vmatmul.mubr.bf16.gmra.mrb[0].mxu0 %v708
      %v801 = vpop.f32.mrb[0].mxu0
      %v802 = vadd.f32 %v606, %v801
      %v803 = vpop.f32.mrb[0].mxu0
      %v804 = vpop.f32.mrb[0].mxu0
      %v805 = vadd.f32 %v609, %v804
      %v806 = vpop.f32.mrb[0].mxu0
      %807 = vmatprep.mubr.bf16.mxu0 0
      %808 = vmatmul.mubr.bf16.gmra.mrb[0].mxu0 %v710
      %v809 = vpop.f32.mrb[0].mxu0
      %v810 = vadd.f32 %v614, %v809
      %v811 = vpop.f32.mrb[0].mxu0
      %v812 = vpop.f32.mrb[0].mxu0
      %v813 = vadd.f32 %v617, %v812
      %v814 = vpop.f32.mrb[0].mxu0
      %815 = vmatprep.mubr.bf16.mxu0 0
      %816 = vmatmul.mubr.bf16.gmra.mrb[0].mxu0 %v712
      %v817 = vpop.f32.mrb[0].mxu0
      %v818 = vadd.f32 %v622, %v817
      %v819 = vpop.f32.mrb[0].mxu0
      %v820 = vpop.f32.mrb[0].mxu0
      %v821 = vadd.f32 %v625, %v820
      %v822 = vpop.f32.mrb[0].mxu0
      %823 = vmatprep.mubr.bf16.mxu0 0
      %824 = vmatmul.mubr.bf16.gmra.mrb[0].mxu0 %v714
      %v825 = vpop.f32.mrb[0].mxu0
      %v826 = vadd.f32 %v630, %v825
      %v827 = vpop.f32.mrb[0].mxu0
      %v828 = vpop.f32.mrb[0].mxu0
      %v829 = vadd.f32 %v633, %v828
      %v830 = vpop.f32.mrb[0].mxu0
      %831 = vmatprep.mubr.bf16.mxu0 0
      %832 = vmatmul.mubr.bf16.gmra.mrb[0].mxu0 %v716
      %v833 = vpop.f32.mrb[0].mxu0
      %v834 = vadd.f32 %v638, %v833
      %v835 = vpop.f32.mrb[0].mxu0
      %v836 = vpop.f32.mrb[0].mxu0
      %v837 = vadd.f32 %v641, %v836
      %v838 = vpop.f32.mrb[0].mxu0
      %839 = vmatprep.mubr.bf16.mxu0 0
      %840 = vmatmul.mubr.bf16.gmra.mrb[0].mxu0 %v718
      %v841 = vpop.f32.mrb[0].mxu0
      %v842 = vadd.f32 %v646, %v841
      %v843 = vpop.f32.mrb[0].mxu0
      %v844 = vpop.f32.mrb[0].mxu0
      %v845 = vadd.f32 %v649, %v844
      %v846 = vpop.f32.mrb[0].mxu0
      %847 = vmatprep.mubr.bf16.mxu0 0
      %848 = vmatmul.mubr.bf16.gmra.mrb[0].mxu0 %v720
      %v849 = vpop.f32.mrb[0].mxu0
      %v850 = vadd.f32 %v654, %v849
      %v851 = vpop.f32.mrb[0].mxu0
      %v852 = vpop.f32.mrb[0].mxu0
      %v853 = vadd.f32 %v657, %v852
      %v854 = vpop.f32.mrb[0].mxu0
      %855 = vmatprep.mubr.bf16.mxu0 0
      %856 = vmatmul.mubr.bf16.gmra.mrb[0].mxu0 %v722
      %v857 = vpop.f32.mrb[0].mxu0
      %v858 = vadd.f32 %v662, %v857
      %v859 = vpop.f32.mrb[0].mxu0
      %v860 = vpop.f32.mrb[0].mxu0
      %v861 = vadd.f32 %v665, %v860
      %v862 = vpop.f32.mrb[0].mxu0
      %863 = vmatprep.mubr.bf16.mxu0 0
      %864 = vmatmul.mubr.bf16.gmra.mrb[0].mxu0 %v724
      %v865 = vpop.f32.mrb[0].mxu0
      %v866 = vadd.f32 %v670, %v865
      %v867 = vpop.f32.mrb[0].mxu0
      %v868 = vpop.f32.mrb[0].mxu0
      %v869 = vadd.f32 %v673, %v868
      %v870 = vpop.f32.mrb[0].mxu0
      %871 = vmatprep.mubr.bf16.mxu0 0
      %872 = vmatmul.mubr.bf16.gmra.mrb[0].mxu0 %v726
      %v873 = vpop.f32.mrb[0].mxu0
      %v874 = vadd.f32 %v678, %v873
      %v875 = vpop.f32.mrb[0].mxu0
      %v876 = vpop.f32.mrb[0].mxu0
      %v877 = vadd.f32 %v681, %v876
      %v878 = vpop.f32.mrb[0].mxu0
      %879 = vmatprep.mubr.bf16.mxu0 0
      %880 = vmatmul.mubr.bf16.gmra.mrb[0].mxu0 %v728
      %v881 = vpop.f32.mrb[0].mxu0
      %v882 = vadd.f32 %v686, %v881
      %v883 = vpop.f32.mrb[0].mxu0
      %v884 = vpop.f32.mrb[0].mxu0
      %v885 = vadd.f32 %v689, %v884
      %v886 = vpop.f32.mrb[0].mxu0
      %887 = vmatprep.mubr.bf16.mxu0 0
      %888 = vmatmul.mubr.bf16.gmra.mrb[0].mxu0 %v730
      %v889 = vpop.f32.mrb[0].mxu0
      %v890 = vadd.f32 %v694, %v889
      %v891 = vpop.f32.mrb[0].mxu0
      %v892 = vpop.f32.mrb[0].mxu0
      %v893 = vadd.f32 %v697, %v892
      %v894 = vpop.f32.mrb[0].mxu0
      %895 = vdwg.mxu0
      %s896 = scalar_lea.vmem %s1, 4
      %v897 = vld [vmem:[%s896] sm:$0x3]
      %vm898 = vcmask 1046528
      %v899 = vrot.slane %v336, 1
      %v900 = vrot.slane %v337, 1
      %v901 = vsel %vm898, %v899, %v900
      %v902 = vrot.slane %v338, 1
      %v903 = vsel %vm898, %v900, %v902
      %v904 = vrot.slane %v339, 1
      %v905 = vsel %vm898, %v902, %v904
      %v906 = vrot.slane %v340, 1
      %v907 = vsel %vm898, %v904, %v906
      %v908 = vrot.slane %v341, 1
      %v909 = vsel %vm898, %v906, %v908
      %v910 = vrot.slane %v342, 1
      %v911 = vsel %vm898, %v908, %v910
      %v912 = vrot.slane %v343, 1
      %v913 = vsel %vm898, %v910, %v912
      %v914 = vrot.slane %v344, 1
      %v915 = vsel %vm898, %v912, %v914
      %v916 = vrot.slane %v345, 1
      %v917 = vsel %vm898, %v914, %v916
      %v918 = vrot.slane %v346, 1
      %v919 = vsel %vm898, %v916, %v918
      %v920 = vrot.slane %v347, 1
      %v921 = vsel %vm898, %v918, %v920
      %v922 = vrot.slane %v348, 1
      %v923 = vsel %vm898, %v920, %v922
      %v924 = vrot.slane %v349, 1
      %v925 = vsel %vm898, %v922, %v924
      %v926 = vrot.slane %v350, 1
      %v927 = vsel %vm898, %v924, %v926
      %v928 = vrot.slane %v351, 1
      %v929 = vsel %vm898, %v926, %v928
      %v930 = vrot.slane %v352, 1
      %v931 = vsel %vm898, %v928, %v930
      %v933 = vsel %vm486, %v901, 0
      %v936 = vsel %vm486, %v903, 0
      %v939 = vsel %vm486, %v905, 0
      %v942 = vsel %vm486, %v907, 0
      %v945 = vsel %vm486, %v909, 0
      %v948 = vsel %vm486, %v911, 0
      %v951 = vsel %vm486, %v913, 0
      %v954 = vsel %vm486, %v915, 0
      %v957 = vsel %vm486, %v917, 0
      %v960 = vsel %vm486, %v919, 0
      %v963 = vsel %vm486, %v921, 0
      %v966 = vsel %vm486, %v923, 0
      %v969 = vsel %vm486, %v925, 0
      %v972 = vsel %vm486, %v927, 0
      %v975 = vsel %vm486, %v929, 0
      %v978 = vsel %vm486, %v931, 0
      %v981 = vsel %vm535, %v897, 0
      %983 = vmatprep.subr.bf16.mxu0 0
      %984 = vmatpush1.bf16.msra.mxu0 %v981
      %985 = vmatprep.subr.bf16.mxu0 0
      %986 = vmatpush1.bf16.msra.mxu0 0
      %987 = vmatprep.subr.bf16.mxu0 0
      %988 = vmatpush1.bf16.msra.mxu0 0
      %989 = vmatprep.subr.bf16.mxu0 0
      %990 = vmatpush1.bf16.msra.mxu0 0
      %991 = vmatprep.subr.bf16.mxu0 0
      %992 = vmatpush1.bf16.msra.mxu0 0
      %993 = vmatprep.subr.bf16.mxu0 0
      %994 = vmatpush1.bf16.msra.mxu0 0
      %995 = vmatprep.subr.bf16.mxu0 0
      %996 = vmatpush1.bf16.msra.mxu0 0
      %997 = vmatprep.subr.bf16.mxu0 0
      %998 = vmatpush1.bf16.msra.mxu0 0
      %999 = vmatprep.subr.bf16.mxu0 0
      %1000 = vmatpush1.bf16.msra.mxu0 0
      %1001 = vmatprep.subr.bf16.mxu0 0
      %1002 = vmatpush1.bf16.msra.mxu0 0
      %1003 = vmatprep.subr.bf16.mxu0 0
      %1004 = vmatpush1.bf16.msra.mxu0 0
      %1005 = vmatprep.subr.bf16.mxu0 0
      %1006 = vmatpush1.bf16.msra.mxu0 0
      %1007 = vmatprep.subr.bf16.mxu0 0
      %1008 = vmatpush1.bf16.msra.mxu0 0
      %1009 = vmatprep.subr.bf16.mxu0 0
      %1010 = vmatpush1.bf16.msra.mxu0 0
      %1011 = vmatprep.subr.bf16.mxu0 0
      %1012 = vmatpush1.bf16.msra.mxu0 0
      %1013 = vmatprep.subr.bf16.mxu0 0
      %1014 = vmatpush1.bf16.msra.mxu0 0
      %1015 = vmatprep.mubr.bf16.mxu0 0
      %1016 = vmatmul.mubr.bf16.gmra.mrb[0].mxu0 %v933
      %v1017 = vpop.f32.mrb[0].mxu0
      %v1018 = vadd.f32 0.0, %v1017
      %v1019 = vpop.f32.mrb[0].mxu0
      %v1020 = vpop.f32.mrb[0].mxu0
      %v1021 = vadd.f32 0.0, %v1020
      %v1022 = vpop.f32.mrb[0].mxu0
      %1023 = vmatprep.mubr.bf16.mxu0 0
      %1024 = vmatmul.mubr.bf16.gmra.mrb[0].mxu0 %v936
      %v1025 = vpop.f32.mrb[0].mxu0
      %v1026 = vadd.f32 0.0, %v1025
      %v1027 = vpop.f32.mrb[0].mxu0
      %v1028 = vpop.f32.mrb[0].mxu0
      %v1029 = vadd.f32 0.0, %v1028
      %v1030 = vpop.f32.mrb[0].mxu0
      %1031 = vmatprep.mubr.bf16.mxu0 0
      %1032 = vmatmul.mubr.bf16.gmra.mrb[0].mxu0 %v939
      %v1033 = vpop.f32.mrb[0].mxu0
      %v1034 = vadd.f32 0.0, %v1033
      %v1035 = vpop.f32.mrb[0].mxu0
      %v1036 = vpop.f32.mrb[0].mxu0
      %v1037 = vadd.f32 0.0, %v1036
      %v1038 = vpop.f32.mrb[0].mxu0
      %1039 = vmatprep.mubr.bf16.mxu0 0
      %1040 = vmatmul.mubr.bf16.gmra.mrb[0].mxu0 %v942
      %v1041 = vpop.f32.mrb[0].mxu0
      %v1042 = vadd.f32 0.0, %v1041
      %v1043 = vpop.f32.mrb[0].mxu0
      %v1044 = vpop.f32.mrb[0].mxu0
      %v1045 = vadd.f32 0.0, %v1044
      %v1046 = vpop.f32.mrb[0].mxu0
      %1047 = vmatprep.mubr.bf16.mxu0 0
      %1048 = vmatmul.mubr.bf16.gmra.mrb[0].mxu0 %v945
      %v1049 = vpop.f32.mrb[0].mxu0
      %v1050 = vadd.f32 0.0, %v1049
      %v1051 = vpop.f32.mrb[0].mxu0
      %v1052 = vpop.f32.mrb[0].mxu0
      %v1053 = vadd.f32 0.0, %v1052
      %v1054 = vpop.f32.mrb[0].mxu0
      %1055 = vmatprep.mubr.bf16.mxu0 0
      %1056 = vmatmul.mubr.bf16.gmra.mrb[0].mxu0 %v948
      %v1057 = vpop.f32.mrb[0].mxu0
      %v1058 = vadd.f32 0.0, %v1057
      %v1059 = vpop.f32.mrb[0].mxu0
      %v1060 = vpop.f32.mrb[0].mxu0
      %v1061 = vadd.f32 0.0, %v1060
      %v1062 = vpop.f32.mrb[0].mxu0
      %1063 = vmatprep.mubr.bf16.mxu0 0
      %1064 = vmatmul.mubr.bf16.gmra.mrb[0].mxu0 %v951
      %v1065 = vpop.f32.mrb[0].mxu0
      %v1066 = vadd.f32 0.0, %v1065
      %v1067 = vpop.f32.mrb[0].mxu0
      %v1068 = vpop.f32.mrb[0].mxu0
      %v1069 = vadd.f32 0.0, %v1068
      %v1070 = vpop.f32.mrb[0].mxu0
      %1071 = vmatprep.mubr.bf16.mxu0 0
      %1072 = vmatmul.mubr.bf16.gmra.mrb[0].mxu0 %v954
      %v1073 = vpop.f32.mrb[0].mxu0
      %v1074 = vadd.f32 0.0, %v1073
      %v1075 = vpop.f32.mrb[0].mxu0
      %v1076 = vpop.f32.mrb[0].mxu0
      %v1077 = vadd.f32 0.0, %v1076
      %v1078 = vpop.f32.mrb[0].mxu0
      %1079 = vmatprep.mubr.bf16.mxu0 0
      %1080 = vmatmul.mubr.bf16.gmra.mrb[0].mxu0 %v957
      %v1081 = vpop.f32.mrb[0].mxu0
      %v1082 = vadd.f32 0.0, %v1081
      %v1083 = vpop.f32.mrb[0].mxu0
      %v1084 = vpop.f32.mrb[0].mxu0
      %v1085 = vadd.f32 0.0, %v1084
      %v1086 = vpop.f32.mrb[0].mxu0
      %1087 = vmatprep.mubr.bf16.mxu0 0
      %1088 = vmatmul.mubr.bf16.gmra.mrb[0].mxu0 %v960
      %v1089 = vpop.f32.mrb[0].mxu0
      %v1090 = vadd.f32 0.0, %v1089
      %v1091 = vpop.f32.mrb[0].mxu0
      %v1092 = vpop.f32.mrb[0].mxu0
      %v1093 = vadd.f32 0.0, %v1092
      %v1094 = vpop.f32.mrb[0].mxu0
      %1095 = vmatprep.mubr.bf16.mxu0 0
      %1096 = vmatmul.mubr.bf16.gmra.mrb[0].mxu0 %v963
      %v1097 = vpop.f32.mrb[0].mxu0
      %v1098 = vadd.f32 0.0, %v1097
      %v1099 = vpop.f32.mrb[0].mxu0
      %v1100 = vpop.f32.mrb[0].mxu0
      %v1101 = vadd.f32 0.0, %v1100
      %v1102 = vpop.f32.mrb[0].mxu0
      %1103 = vmatprep.mubr.bf16.mxu0 0
      %1104 = vmatmul.mubr.bf16.gmra.mrb[0].mxu0 %v966
      %v1105 = vpop.f32.mrb[0].mxu0
      %v1106 = vadd.f32 0.0, %v1105
      %v1107 = vpop.f32.mrb[0].mxu0
      %v1108 = vpop.f32.mrb[0].mxu0
      %v1109 = vadd.f32 0.0, %v1108
      %v1110 = vpop.f32.mrb[0].mxu0
      %1111 = vmatprep.mubr.bf16.mxu0 0
      %1112 = vmatmul.mubr.bf16.gmra.mrb[0].mxu0 %v969
      %v1113 = vpop.f32.mrb[0].mxu0
      %v1114 = vadd.f32 0.0, %v1113
      %v1115 = vpop.f32.mrb[0].mxu0
      %v1116 = vpop.f32.mrb[0].mxu0
      %v1117 = vadd.f32 0.0, %v1116
      %v1118 = vpop.f32.mrb[0].mxu0
      %1119 = vmatprep.mubr.bf16.mxu0 0
      %1120 = vmatmul.mubr.bf16.gmra.mrb[0].mxu0 %v972
      %v1121 = vpop.f32.mrb[0].mxu0
      %v1122 = vadd.f32 0.0, %v1121
      %v1123 = vpop.f32.mrb[0].mxu0
      %v1124 = vpop.f32.mrb[0].mxu0
      %v1125 = vadd.f32 0.0, %v1124
      %v1126 = vpop.f32.mrb[0].mxu0
      %1127 = vmatprep.mubr.bf16.mxu0 0
      %1128 = vmatmul.mubr.bf16.gmra.mrb[0].mxu0 %v975
      %v1129 = vpop.f32.mrb[0].mxu0
      %v1130 = vadd.f32 0.0, %v1129
      %v1131 = vpop.f32.mrb[0].mxu0
      %v1132 = vpop.f32.mrb[0].mxu0
      %v1133 = vadd.f32 0.0, %v1132
      %v1134 = vpop.f32.mrb[0].mxu0
      %1135 = vmatprep.mubr.bf16.mxu0 0
      %1136 = vmatmul.mubr.bf16.gmra.mrb[0].mxu0 %v978
      %v1137 = vpop.f32.mrb[0].mxu0
      %v1138 = vadd.f32 0.0, %v1137
      %v1139 = vpop.f32.mrb[0].mxu0
      %v1140 = vpop.f32.mrb[0].mxu0
      %v1141 = vadd.f32 0.0, %v1140
      %v1142 = vpop.f32.mrb[0].mxu0
      %1143 = vdwg.mxu0
      %v1144 = vadd.f32 %v770, %v1018
      %v1145 = vadd.f32 %v773, %v1021
      %v1146 = vadd.f32 %v778, %v1026
      %v1147 = vadd.f32 %v781, %v1029
      %v1148 = vadd.f32 %v786, %v1034
      %v1149 = vadd.f32 %v789, %v1037
      %v1150 = vadd.f32 %v794, %v1042
      %v1151 = vadd.f32 %v797, %v1045
      %v1152 = vadd.f32 %v802, %v1050
      %v1153 = vadd.f32 %v805, %v1053
      %v1154 = vadd.f32 %v810, %v1058
      %v1155 = vadd.f32 %v813, %v1061
      %v1156 = vadd.f32 %v818, %v1066
      %v1157 = vadd.f32 %v821, %v1069
      %v1158 = vadd.f32 %v826, %v1074
      %v1159 = vadd.f32 %v829, %v1077
      %v1160 = vadd.f32 %v834, %v1082
      %v1161 = vadd.f32 %v837, %v1085
      %v1162 = vadd.f32 %v842, %v1090
      %v1163 = vadd.f32 %v845, %v1093
      %v1164 = vadd.f32 %v850, %v1098
      %v1165 = vadd.f32 %v853, %v1101
      %v1166 = vadd.f32 %v858, %v1106
      %v1167 = vadd.f32 %v861, %v1109
      %v1168 = vadd.f32 %v866, %v1114
      %v1169 = vadd.f32 %v869, %v1117
      %v1170 = vadd.f32 %v874, %v1122
      %v1171 = vadd.f32 %v877, %v1125
      %v1172 = vadd.f32 %v882, %v1130
      %v1173 = vadd.f32 %v885, %v1133
      %v1174 = vadd.f32 %v890, %v1138
      %v1175 = vadd.f32 %v893, %v1141
      %s1176 = sadd.s32 %s229, 16
      %s1177 = sshra.s32 %s1176, 3
      %s1178 = sand.u32 %s1176, 7
      %s1179 = smul.addr %s1177, 4
      %s1180 = scalar_lea.vmem %s0, %s1179
      %v1181 = vld [vmem:[%s1180] sm:$0xf]
      %v1182 = vld [vmem:[%s1180 + $0x4] sm:$0xf]
      %v1183 = vld [vmem:[%s1180 + $0x8] sm:$0xf]
      %v1184 = vld [vmem:[%s1180 + $0xc] sm:$0xf]
      %v1185 = vld [vmem:[%s1180 + $0x10] sm:$0xf]
      %v1186 = vld [vmem:[%s1180 + $0x14] sm:$0xf]
      %v1187 = vld [vmem:[%s1180 + $0x18] sm:$0xf]
      %v1188 = vld [vmem:[%s1180 + $0x1c] sm:$0xf]
      %v1189 = vld [vmem:[%s1180 + $0x20] sm:$0xf]
      %v1190 = vld [vmem:[%s1180 + $0x24] sm:$0xf]
      %v1191 = vld [vmem:[%s1180 + $0x28] sm:$0xf]
      %v1192 = vld [vmem:[%s1180 + $0x2c] sm:$0xf]
      %v1193 = vld [vmem:[%s1180 + $0x30] sm:$0xf]
      %v1194 = vld [vmem:[%s1180 + $0x34] sm:$0xf]
      %v1195 = vld [vmem:[%s1180 + $0x38] sm:$0xf]
      %v1196 = vld [vmem:[%s1180 + $0x3c] sm:$0xf]
      %v1197 = vld [vmem:[%s1180 + $0x40] sm:$0xf]
      %v1198 = vld [vmem:[%s1180 + $0x44] sm:$0xf]
      %v1199 = vld [vmem:[%s1180 + $0x48] sm:$0xf]
      %v1200 = vld [vmem:[%s1180 + $0x4c] sm:$0xf]
      %v1201 = vld [vmem:[%s1180 + $0x50] sm:$0xf]
      %v1202 = vld [vmem:[%s1180 + $0x54] sm:$0xf]
      %v1203 = vld [vmem:[%s1180 + $0x58] sm:$0xf]
      %v1204 = vld [vmem:[%s1180 + $0x5c] sm:$0xf]
      %v1205 = vld [vmem:[%s1180 + $0x60] sm:$0xf]
      %v1206 = vld [vmem:[%s1180 + $0x64] sm:$0xf]
      %v1207 = vld [vmem:[%s1180 + $0x68] sm:$0xf]
      %v1208 = vld [vmem:[%s1180 + $0x6c] sm:$0xf]
      %v1209 = vld [vmem:[%s1180 + $0x70] sm:$0xf]
      %v1210 = vld [vmem:[%s1180 + $0x74] sm:$0xf]
      %v1211 = vld [vmem:[%s1180 + $0x78] sm:$0xf]
      %v1212 = vld [vmem:[%s1180 + $0x7c] sm:$0xf]
      %v1213 = vld [vmem:[%s1180 + $0x80] sm:$0xf]
      %s1214 = scalar_lea.vmem %s1, 6
      %v1215 = vld [vmem:[%s1214] sm:$0x3]
      %v1249 = vunpack.c.l.b16 %v1181
      %v1250 = vunpack.c.l.b16 %v1182
      %v1251 = vunpack.c.l.b16 %v1183
      %v1252 = vunpack.c.l.b16 %v1184
      %v1253 = vunpack.c.l.b16 %v1185
      %v1254 = vunpack.c.l.b16 %v1186
      %v1255 = vunpack.c.l.b16 %v1187
      %v1256 = vunpack.c.l.b16 %v1188
      %v1257 = vunpack.c.l.b16 %v1189
      %v1258 = vunpack.c.l.b16 %v1190
      %v1259 = vunpack.c.l.b16 %v1191
      %v1260 = vunpack.c.l.b16 %v1192
      %v1261 = vunpack.c.l.b16 %v1193
      %v1262 = vunpack.c.l.b16 %v1194
      %v1263 = vunpack.c.l.b16 %v1195
      %v1264 = vunpack.c.l.b16 %v1196
      %v1265 = vunpack.c.l.b16 %v1197
      %v1266 = vunpack.c.l.b16 %v1198
      %v1267 = vunpack.c.l.b16 %v1199
      %v1268 = vunpack.c.l.b16 %v1200
      %v1269 = vunpack.c.l.b16 %v1201
      %v1270 = vunpack.c.l.b16 %v1202
      %v1271 = vunpack.c.l.b16 %v1203
      %v1272 = vunpack.c.l.b16 %v1204
      %v1273 = vunpack.c.l.b16 %v1205
      %v1274 = vunpack.c.l.b16 %v1206
      %v1275 = vunpack.c.l.b16 %v1207
      %v1276 = vunpack.c.l.b16 %v1208
      %v1277 = vunpack.c.l.b16 %v1209
      %v1278 = vunpack.c.l.b16 %v1210
      %v1279 = vunpack.c.l.b16 %v1211
      %v1280 = vunpack.c.l.b16 %v1212
      %v1281 = vunpack.c.l.b16 %v1213
      %v1282 = vpack.c.b16 %v1250, %v1249
      %v1283 = vpack.c.b16 %v1252, %v1251
      %v1284 = vpack.c.b16 %v1254, %v1253
      %v1285 = vpack.c.b16 %v1256, %v1255
      %v1286 = vpack.c.b16 %v1258, %v1257
      %v1287 = vpack.c.b16 %v1260, %v1259
      %v1288 = vpack.c.b16 %v1262, %v1261
      %v1289 = vpack.c.b16 %v1264, %v1263
      %v1290 = vpack.c.b16 %v1266, %v1265
      %v1291 = vpack.c.b16 %v1268, %v1267
      %v1292 = vpack.c.b16 %v1270, %v1269
      %v1293 = vpack.c.b16 %v1272, %v1271
      %v1294 = vpack.c.b16 %v1274, %v1273
      %v1295 = vpack.c.b16 %v1276, %v1275
      %v1296 = vpack.c.b16 %v1278, %v1277
      %v1297 = vpack.c.b16 %v1280, %v1279
      %v1298 = vpack.c.b16 %v1281, %v1281
      %v1299 = vrot.slane %v1282, 1
      %v1300 = vrot.slane %v1283, 1
      %v1301 = vsel %vm898, %v1299, %v1300
      %v1302 = vrot.slane %v1284, 1
      %v1303 = vsel %vm898, %v1300, %v1302
      %v1304 = vrot.slane %v1285, 1
      %v1305 = vsel %vm898, %v1302, %v1304
      %v1306 = vrot.slane %v1286, 1
      %v1307 = vsel %vm898, %v1304, %v1306
      %v1308 = vrot.slane %v1287, 1
      %v1309 = vsel %vm898, %v1306, %v1308
      %v1310 = vrot.slane %v1288, 1
      %v1311 = vsel %vm898, %v1308, %v1310
      %v1312 = vrot.slane %v1289, 1
      %v1313 = vsel %vm898, %v1310, %v1312
      %v1314 = vrot.slane %v1290, 1
      %v1315 = vsel %vm898, %v1312, %v1314
      %v1316 = vrot.slane %v1291, 1
      %v1317 = vsel %vm898, %v1314, %v1316
      %v1318 = vrot.slane %v1292, 1
      %v1319 = vsel %vm898, %v1316, %v1318
      %v1320 = vrot.slane %v1293, 1
      %v1321 = vsel %vm898, %v1318, %v1320
      %v1322 = vrot.slane %v1294, 1
      %v1323 = vsel %vm898, %v1320, %v1322
      %v1324 = vrot.slane %v1295, 1
      %v1325 = vsel %vm898, %v1322, %v1324
      %v1326 = vrot.slane %v1296, 1
      %v1327 = vsel %vm898, %v1324, %v1326
      %v1328 = vrot.slane %v1297, 1
      %v1329 = vsel %vm898, %v1326, %v1328
      %v1330 = vrot.slane %v1298, 1
      %v1331 = vsel %vm898, %v1328, %v1330
      %v1333 = vsel %vm486, %v1301, 0
      %v1336 = vsel %vm486, %v1303, 0
      %v1339 = vsel %vm486, %v1305, 0
      %v1342 = vsel %vm486, %v1307, 0
      %v1345 = vsel %vm486, %v1309, 0
      %v1348 = vsel %vm486, %v1311, 0
      %v1351 = vsel %vm486, %v1313, 0
      %v1354 = vsel %vm486, %v1315, 0
      %v1357 = vsel %vm486, %v1317, 0
      %v1360 = vsel %vm486, %v1319, 0
      %v1363 = vsel %vm486, %v1321, 0
      %v1366 = vsel %vm486, %v1323, 0
      %v1369 = vsel %vm486, %v1325, 0
      %v1372 = vsel %vm486, %v1327, 0
      %v1375 = vsel %vm486, %v1329, 0
      %v1378 = vsel %vm486, %v1331, 0
      %v1381 = vsel %vm535, %v1215, 0
      %1383 = vmatprep.subr.bf16.mxu0 0
      %1384 = vmatpush1.bf16.msra.mxu0 %v1381
      %1385 = vmatprep.subr.bf16.mxu0 0
      %1386 = vmatpush1.bf16.msra.mxu0 0
      %1387 = vmatprep.subr.bf16.mxu0 0
      %1388 = vmatpush1.bf16.msra.mxu0 0
      %1389 = vmatprep.subr.bf16.mxu0 0
      %1390 = vmatpush1.bf16.msra.mxu0 0
      %1391 = vmatprep.subr.bf16.mxu0 0
      %1392 = vmatpush1.bf16.msra.mxu0 0
      %1393 = vmatprep.subr.bf16.mxu0 0
      %1394 = vmatpush1.bf16.msra.mxu0 0
      %1395 = vmatprep.subr.bf16.mxu0 0
      %1396 = vmatpush1.bf16.msra.mxu0 0
      %1397 = vmatprep.subr.bf16.mxu0 0
      %1398 = vmatpush1.bf16.msra.mxu0 0
      %1399 = vmatprep.subr.bf16.mxu0 0
      %1400 = vmatpush1.bf16.msra.mxu0 0
      %1401 = vmatprep.subr.bf16.mxu0 0
      %1402 = vmatpush1.bf16.msra.mxu0 0
      %1403 = vmatprep.subr.bf16.mxu0 0
      %1404 = vmatpush1.bf16.msra.mxu0 0
      %1405 = vmatprep.subr.bf16.mxu0 0
      %1406 = vmatpush1.bf16.msra.mxu0 0
      %1407 = vmatprep.subr.bf16.mxu0 0
      %1408 = vmatpush1.bf16.msra.mxu0 0
      %1409 = vmatprep.subr.bf16.mxu0 0
      %1410 = vmatpush1.bf16.msra.mxu0 0
      %1411 = vmatprep.subr.bf16.mxu0 0
      %1412 = vmatpush1.bf16.msra.mxu0 0
      %1413 = vmatprep.subr.bf16.mxu0 0
      %1414 = vmatpush1.bf16.msra.mxu0 0
      %1415 = vmatprep.mubr.bf16.mxu0 0
      %1416 = vmatmul.mubr.bf16.gmra.mrb[0].mxu0 %v1333
      %v1417 = vpop.f32.mrb[0].mxu0
      %v1418 = vadd.f32 0.0, %v1417
      %v1419 = vpop.f32.mrb[0].mxu0
      %v1420 = vpop.f32.mrb[0].mxu0
      %v1421 = vadd.f32 0.0, %v1420
      %v1422 = vpop.f32.mrb[0].mxu0
      %1423 = vmatprep.mubr.bf16.mxu0 0
      %1424 = vmatmul.mubr.bf16.gmra.mrb[0].mxu0 %v1336
      %v1425 = vpop.f32.mrb[0].mxu0
      %v1426 = vadd.f32 0.0, %v1425
      %v1427 = vpop.f32.mrb[0].mxu0
      %v1428 = vpop.f32.mrb[0].mxu0
      %v1429 = vadd.f32 0.0, %v1428
      %v1430 = vpop.f32.mrb[0].mxu0
      %1431 = vmatprep.mubr.bf16.mxu0 0
      %1432 = vmatmul.mubr.bf16.gmra.mrb[0].mxu0 %v1339
      %v1433 = vpop.f32.mrb[0].mxu0
      %v1434 = vadd.f32 0.0, %v1433
      %v1435 = vpop.f32.mrb[0].mxu0
      %v1436 = vpop.f32.mrb[0].mxu0
      %v1437 = vadd.f32 0.0, %v1436
      %v1438 = vpop.f32.mrb[0].mxu0
      %1439 = vmatprep.mubr.bf16.mxu0 0
      %1440 = vmatmul.mubr.bf16.gmra.mrb[0].mxu0 %v1342
      %v1441 = vpop.f32.mrb[0].mxu0
      %v1442 = vadd.f32 0.0, %v1441
      %v1443 = vpop.f32.mrb[0].mxu0
      %v1444 = vpop.f32.mrb[0].mxu0
      %v1445 = vadd.f32 0.0, %v1444
      %v1446 = vpop.f32.mrb[0].mxu0
      %1447 = vmatprep.mubr.bf16.mxu0 0
      %1448 = vmatmul.mubr.bf16.gmra.mrb[0].mxu0 %v1345
      %v1449 = vpop.f32.mrb[0].mxu0
      %v1450 = vadd.f32 0.0, %v1449
      %v1451 = vpop.f32.mrb[0].mxu0
      %v1452 = vpop.f32.mrb[0].mxu0
      %v1453 = vadd.f32 0.0, %v1452
      %v1454 = vpop.f32.mrb[0].mxu0
      %1455 = vmatprep.mubr.bf16.mxu0 0
      %1456 = vmatmul.mubr.bf16.gmra.mrb[0].mxu0 %v1348
      %v1457 = vpop.f32.mrb[0].mxu0
      %v1458 = vadd.f32 0.0, %v1457
      %v1459 = vpop.f32.mrb[0].mxu0
      %v1460 = vpop.f32.mrb[0].mxu0
      %v1461 = vadd.f32 0.0, %v1460
      %v1462 = vpop.f32.mrb[0].mxu0
      %1463 = vmatprep.mubr.bf16.mxu0 0
      %1464 = vmatmul.mubr.bf16.gmra.mrb[0].mxu0 %v1351
      %v1465 = vpop.f32.mrb[0].mxu0
      %v1466 = vadd.f32 0.0, %v1465
      %v1467 = vpop.f32.mrb[0].mxu0
      %v1468 = vpop.f32.mrb[0].mxu0
      %v1469 = vadd.f32 0.0, %v1468
      %v1470 = vpop.f32.mrb[0].mxu0
      %1471 = vmatprep.mubr.bf16.mxu0 0
      %1472 = vmatmul.mubr.bf16.gmra.mrb[0].mxu0 %v1354
      %v1473 = vpop.f32.mrb[0].mxu0
      %v1474 = vadd.f32 0.0, %v1473
      %v1475 = vpop.f32.mrb[0].mxu0
      %v1476 = vpop.f32.mrb[0].mxu0
      %v1477 = vadd.f32 0.0, %v1476
      %v1478 = vpop.f32.mrb[0].mxu0
      %1479 = vmatprep.mubr.bf16.mxu0 0
      %1480 = vmatmul.mubr.bf16.gmra.mrb[0].mxu0 %v1357
      %v1481 = vpop.f32.mrb[0].mxu0
      %v1482 = vadd.f32 0.0, %v1481
      %v1483 = vpop.f32.mrb[0].mxu0
      %v1484 = vpop.f32.mrb[0].mxu0
      %v1485 = vadd.f32 0.0, %v1484
      %v1486 = vpop.f32.mrb[0].mxu0
      %1487 = vmatprep.mubr.bf16.mxu0 0
      %1488 = vmatmul.mubr.bf16.gmra.mrb[0].mxu0 %v1360
      %v1489 = vpop.f32.mrb[0].mxu0
      %v1490 = vadd.f32 0.0, %v1489
      %v1491 = vpop.f32.mrb[0].mxu0
      %v1492 = vpop.f32.mrb[0].mxu0
      %v1493 = vadd.f32 0.0, %v1492
      %v1494 = vpop.f32.mrb[0].mxu0
      %1495 = vmatprep.mubr.bf16.mxu0 0
      %1496 = vmatmul.mubr.bf16.gmra.mrb[0].mxu0 %v1363
      %v1497 = vpop.f32.mrb[0].mxu0
      %v1498 = vadd.f32 0.0, %v1497
      %v1499 = vpop.f32.mrb[0].mxu0
      %v1500 = vpop.f32.mrb[0].mxu0
      %v1501 = vadd.f32 0.0, %v1500
      %v1502 = vpop.f32.mrb[0].mxu0
      %1503 = vmatprep.mubr.bf16.mxu0 0
      %1504 = vmatmul.mubr.bf16.gmra.mrb[0].mxu0 %v1366
      %v1505 = vpop.f32.mrb[0].mxu0
      %v1506 = vadd.f32 0.0, %v1505
      %v1507 = vpop.f32.mrb[0].mxu0
      %v1508 = vpop.f32.mrb[0].mxu0
      %v1509 = vadd.f32 0.0, %v1508
      %v1510 = vpop.f32.mrb[0].mxu0
      %1511 = vmatprep.mubr.bf16.mxu0 0
      %1512 = vmatmul.mubr.bf16.gmra.mrb[0].mxu0 %v1369
      %v1513 = vpop.f32.mrb[0].mxu0
      %v1514 = vadd.f32 0.0, %v1513
      %v1515 = vpop.f32.mrb[0].mxu0
      %v1516 = vpop.f32.mrb[0].mxu0
      %v1517 = vadd.f32 0.0, %v1516
      %v1518 = vpop.f32.mrb[0].mxu0
      %1519 = vmatprep.mubr.bf16.mxu0 0
      %1520 = vmatmul.mubr.bf16.gmra.mrb[0].mxu0 %v1372
      %v1521 = vpop.f32.mrb[0].mxu0
      %v1522 = vadd.f32 0.0, %v1521
      %v1523 = vpop.f32.mrb[0].mxu0
      %v1524 = vpop.f32.mrb[0].mxu0
      %v1525 = vadd.f32 0.0, %v1524
      %v1526 = vpop.f32.mrb[0].mxu0
      %1527 = vmatprep.mubr.bf16.mxu0 0
      %1528 = vmatmul.mubr.bf16.gmra.mrb[0].mxu0 %v1375
      %v1529 = vpop.f32.mrb[0].mxu0
      %v1530 = vadd.f32 0.0, %v1529
      %v1531 = vpop.f32.mrb[0].mxu0
      %v1532 = vpop.f32.mrb[0].mxu0
      %v1533 = vadd.f32 0.0, %v1532
      %v1534 = vpop.f32.mrb[0].mxu0
      %1535 = vmatprep.mubr.bf16.mxu0 0
      %1536 = vmatmul.mubr.bf16.gmra.mrb[0].mxu0 %v1378
      %v1537 = vpop.f32.mrb[0].mxu0
      %v1538 = vadd.f32 0.0, %v1537
      %v1539 = vpop.f32.mrb[0].mxu0
      %v1540 = vpop.f32.mrb[0].mxu0
      %v1541 = vadd.f32 0.0, %v1540
      %v1542 = vpop.f32.mrb[0].mxu0
      %1543 = vdwg.mxu0
      %v1544 = vadd.f32 %v1144, %v1418
      %v1545 = vadd.f32 %v1145, %v1421
      %v1546 = vadd.f32 %v1146, %v1426
      %v1547 = vadd.f32 %v1147, %v1429
      %v1548 = vadd.f32 %v1148, %v1434
      %v1549 = vadd.f32 %v1149, %v1437
      %v1550 = vadd.f32 %v1150, %v1442
      %v1551 = vadd.f32 %v1151, %v1445
      %v1552 = vadd.f32 %v1152, %v1450
      %v1553 = vadd.f32 %v1153, %v1453
      %v1554 = vadd.f32 %v1154, %v1458
      %v1555 = vadd.f32 %v1155, %v1461
      %v1556 = vadd.f32 %v1156, %v1466
      %v1557 = vadd.f32 %v1157, %v1469
      %v1558 = vadd.f32 %v1158, %v1474
      %v1559 = vadd.f32 %v1159, %v1477
      %v1560 = vadd.f32 %v1160, %v1482
      %v1561 = vadd.f32 %v1161, %v1485
      %v1562 = vadd.f32 %v1162, %v1490
      %v1563 = vadd.f32 %v1163, %v1493
      %v1564 = vadd.f32 %v1164, %v1498
      %v1565 = vadd.f32 %v1165, %v1501
      %v1566 = vadd.f32 %v1166, %v1506
      %v1567 = vadd.f32 %v1167, %v1509
      %v1568 = vadd.f32 %v1168, %v1514
      %v1569 = vadd.f32 %v1169, %v1517
      %v1570 = vadd.f32 %v1170, %v1522
      %v1571 = vadd.f32 %v1171, %v1525
      %v1572 = vadd.f32 %v1172, %v1530
      %v1573 = vadd.f32 %v1173, %v1533
      %v1574 = vadd.f32 %v1174, %v1538
      %v1575 = vadd.f32 %v1175, %v1541
      %s1576 = scalar_lea.vmem %s1, 8
      %v1577 = vld [vmem:[%s1576] sm:$0x3]
      %vm1578 = vsmask.f32 6400
      %v1580 = vshrl.u32 %v1282, 16
      %v1582 = vrot.slane %v1580, 1
      %v1583 = vshll.u32 %v1282, 16
      %v1585 = vrot.slane %v1583, 2
      %v1586 = vor.u32 %v1582, %v1585
      %v1588 = vshrl.u32 %v1283, 16
      %v1590 = vrot.slane %v1588, 1
      %v1591 = vshll.u32 %v1283, 16
      %v1593 = vrot.slane %v1591, 2
      %v1594 = vor.u32 %v1590, %v1593
      %v1595 = vsel %vm1578, %v1586, %v1594
      %v1597 = vshrl.u32 %v1284, 16
      %v1599 = vrot.slane %v1597, 1
      %v1600 = vshll.u32 %v1284, 16
      %v1602 = vrot.slane %v1600, 2
      %v1603 = vor.u32 %v1599, %v1602
      %v1604 = vsel %vm1578, %v1594, %v1603
      %v1606 = vshrl.u32 %v1285, 16
      %v1608 = vrot.slane %v1606, 1
      %v1609 = vshll.u32 %v1285, 16
      %v1611 = vrot.slane %v1609, 2
      %v1612 = vor.u32 %v1608, %v1611
      %v1613 = vsel %vm1578, %v1603, %v1612
      %v1615 = vshrl.u32 %v1286, 16
      %v1617 = vrot.slane %v1615, 1
      %v1618 = vshll.u32 %v1286, 16
      %v1620 = vrot.slane %v1618, 2
      %v1621 = vor.u32 %v1617, %v1620
      %v1622 = vsel %vm1578, %v1612, %v1621
      %v1624 = vshrl.u32 %v1287, 16
      %v1626 = vrot.slane %v1624, 1
      %v1627 = vshll.u32 %v1287, 16
      %v1629 = vrot.slane %v1627, 2
      %v1630 = vor.u32 %v1626, %v1629
      %v1631 = vsel %vm1578, %v1621, %v1630
      %v1633 = vshrl.u32 %v1288, 16
      %v1635 = vrot.slane %v1633, 1
      %v1636 = vshll.u32 %v1288, 16
      %v1638 = vrot.slane %v1636, 2
      %v1639 = vor.u32 %v1635, %v1638
      %v1640 = vsel %vm1578, %v1630, %v1639
      %v1642 = vshrl.u32 %v1289, 16
      %v1644 = vrot.slane %v1642, 1
      %v1645 = vshll.u32 %v1289, 16
      %v1647 = vrot.slane %v1645, 2
      %v1648 = vor.u32 %v1644, %v1647
      %v1649 = vsel %vm1578, %v1639, %v1648
      %v1651 = vshrl.u32 %v1290, 16
      %v1653 = vrot.slane %v1651, 1
      %v1654 = vshll.u32 %v1290, 16
      %v1656 = vrot.slane %v1654, 2
      %v1657 = vor.u32 %v1653, %v1656
      %v1658 = vsel %vm1578, %v1648, %v1657
      %v1660 = vshrl.u32 %v1291, 16
      %v1662 = vrot.slane %v1660, 1
      %v1663 = vshll.u32 %v1291, 16
      %v1665 = vrot.slane %v1663, 2
      %v1666 = vor.u32 %v1662, %v1665
      %v1667 = vsel %vm1578, %v1657, %v1666
      %v1669 = vshrl.u32 %v1292, 16
      %v1671 = vrot.slane %v1669, 1
      %v1672 = vshll.u32 %v1292, 16
      %v1674 = vrot.slane %v1672, 2
      %v1675 = vor.u32 %v1671, %v1674
      %v1676 = vsel %vm1578, %v1666, %v1675
      %v1678 = vshrl.u32 %v1293, 16
      %v1680 = vrot.slane %v1678, 1
      %v1681 = vshll.u32 %v1293, 16
      %v1683 = vrot.slane %v1681, 2
      %v1684 = vor.u32 %v1680, %v1683
      %v1685 = vsel %vm1578, %v1675, %v1684
      %v1687 = vshrl.u32 %v1294, 16
      %v1689 = vrot.slane %v1687, 1
      %v1690 = vshll.u32 %v1294, 16
      %v1692 = vrot.slane %v1690, 2
      %v1693 = vor.u32 %v1689, %v1692
      %v1694 = vsel %vm1578, %v1684, %v1693
      %v1696 = vshrl.u32 %v1295, 16
      %v1698 = vrot.slane %v1696, 1
      %v1699 = vshll.u32 %v1295, 16
      %v1701 = vrot.slane %v1699, 2
      %v1702 = vor.u32 %v1698, %v1701
      %v1703 = vsel %vm1578, %v1693, %v1702
      %v1705 = vshrl.u32 %v1296, 16
      %v1707 = vrot.slane %v1705, 1
      %v1708 = vshll.u32 %v1296, 16
      %v1710 = vrot.slane %v1708, 2
      %v1711 = vor.u32 %v1707, %v1710
      %v1712 = vsel %vm1578, %v1702, %v1711
      %v1714 = vshrl.u32 %v1297, 16
      %v1716 = vrot.slane %v1714, 1
      %v1717 = vshll.u32 %v1297, 16
      %v1719 = vrot.slane %v1717, 2
      %v1720 = vor.u32 %v1716, %v1719
      %v1721 = vsel %vm1578, %v1711, %v1720
      %v1723 = vshrl.u32 %v1298, 16
      %v1725 = vrot.slane %v1723, 1
      %v1726 = vshll.u32 %v1298, 16
      %v1728 = vrot.slane %v1726, 2
      %v1729 = vor.u32 %v1725, %v1728
      %v1730 = vsel %vm1578, %v1720, %v1729
      %v1732 = vsel %vm486, %v1595, 0
      %v1735 = vsel %vm486, %v1604, 0
      %v1738 = vsel %vm486, %v1613, 0
      %v1741 = vsel %vm486, %v1622, 0
      %v1744 = vsel %vm486, %v1631, 0
      %v1747 = vsel %vm486, %v1640, 0
      %v1750 = vsel %vm486, %v1649, 0
      %v1753 = vsel %vm486, %v1658, 0
      %v1756 = vsel %vm486, %v1667, 0
      %v1759 = vsel %vm486, %v1676, 0
      %v1762 = vsel %vm486, %v1685, 0
      %v1765 = vsel %vm486, %v1694, 0
      %v1768 = vsel %vm486, %v1703, 0
      %v1771 = vsel %vm486, %v1712, 0
      %v1774 = vsel %vm486, %v1721, 0
      %v1777 = vsel %vm486, %v1730, 0
      %v1780 = vsel %vm535, %v1577, 0
      %1782 = vmatprep.subr.bf16.mxu0 0
      %1783 = vmatpush1.bf16.msra.mxu0 %v1780
      %1784 = vmatprep.subr.bf16.mxu0 0
      %1785 = vmatpush1.bf16.msra.mxu0 0
      %1786 = vmatprep.subr.bf16.mxu0 0
      %1787 = vmatpush1.bf16.msra.mxu0 0
      %1788 = vmatprep.subr.bf16.mxu0 0
      %1789 = vmatpush1.bf16.msra.mxu0 0
      %1790 = vmatprep.subr.bf16.mxu0 0
      %1791 = vmatpush1.bf16.msra.mxu0 0
      %1792 = vmatprep.subr.bf16.mxu0 0
      %1793 = vmatpush1.bf16.msra.mxu0 0
      %1794 = vmatprep.subr.bf16.mxu0 0
      %1795 = vmatpush1.bf16.msra.mxu0 0
      %1796 = vmatprep.subr.bf16.mxu0 0
      %1797 = vmatpush1.bf16.msra.mxu0 0
      %1798 = vmatprep.subr.bf16.mxu0 0
      %1799 = vmatpush1.bf16.msra.mxu0 0
      %1800 = vmatprep.subr.bf16.mxu0 0
      %1801 = vmatpush1.bf16.msra.mxu0 0
      %1802 = vmatprep.subr.bf16.mxu0 0
      %1803 = vmatpush1.bf16.msra.mxu0 0
      %1804 = vmatprep.subr.bf16.mxu0 0
      %1805 = vmatpush1.bf16.msra.mxu0 0
      %1806 = vmatprep.subr.bf16.mxu0 0
      %1807 = vmatpush1.bf16.msra.mxu0 0
      %1808 = vmatprep.subr.bf16.mxu0 0
      %1809 = vmatpush1.bf16.msra.mxu0 0
      %1810 = vmatprep.subr.bf16.mxu0 0
      %1811 = vmatpush1.bf16.msra.mxu0 0
      %1812 = vmatprep.subr.bf16.mxu0 0
      %1813 = vmatpush1.bf16.msra.mxu0 0
      %1814 = vmatprep.mubr.bf16.mxu0 0
      %1815 = vmatmul.mubr.bf16.gmra.mrb[0].mxu0 %v1732
      %v1816 = vpop.f32.mrb[0].mxu0
      %v1817 = vadd.f32 0.0, %v1816
      %v1818 = vpop.f32.mrb[0].mxu0
      %v1819 = vpop.f32.mrb[0].mxu0
      %v1820 = vadd.f32 0.0, %v1819
      %v1821 = vpop.f32.mrb[0].mxu0
      %1822 = vmatprep.mubr.bf16.mxu0 0
      %1823 = vmatmul.mubr.bf16.gmra.mrb[0].mxu0 %v1735
      %v1824 = vpop.f32.mrb[0].mxu0
      %v1825 = vadd.f32 0.0, %v1824
      %v1826 = vpop.f32.mrb[0].mxu0
      %v1827 = vpop.f32.mrb[0].mxu0
      %v1828 = vadd.f32 0.0, %v1827
      %v1829 = vpop.f32.mrb[0].mxu0
      %1830 = vmatprep.mubr.bf16.mxu0 0
      %1831 = vmatmul.mubr.bf16.gmra.mrb[0].mxu0 %v1738
      %v1832 = vpop.f32.mrb[0].mxu0
      %v1833 = vadd.f32 0.0, %v1832
      %v1834 = vpop.f32.mrb[0].mxu0
      %v1835 = vpop.f32.mrb[0].mxu0
      %v1836 = vadd.f32 0.0, %v1835
      %v1837 = vpop.f32.mrb[0].mxu0
      %1838 = vmatprep.mubr.bf16.mxu0 0
      %1839 = vmatmul.mubr.bf16.gmra.mrb[0].mxu0 %v1741
      %v1840 = vpop.f32.mrb[0].mxu0
      %v1841 = vadd.f32 0.0, %v1840
      %v1842 = vpop.f32.mrb[0].mxu0
      %v1843 = vpop.f32.mrb[0].mxu0
      %v1844 = vadd.f32 0.0, %v1843
      %v1845 = vpop.f32.mrb[0].mxu0
      %1846 = vmatprep.mubr.bf16.mxu0 0
      %1847 = vmatmul.mubr.bf16.gmra.mrb[0].mxu0 %v1744
      %v1848 = vpop.f32.mrb[0].mxu0
      %v1849 = vadd.f32 0.0, %v1848
      %v1850 = vpop.f32.mrb[0].mxu0
      %v1851 = vpop.f32.mrb[0].mxu0
      %v1852 = vadd.f32 0.0, %v1851
      %v1853 = vpop.f32.mrb[0].mxu0
      %1854 = vmatprep.mubr.bf16.mxu0 0
      %1855 = vmatmul.mubr.bf16.gmra.mrb[0].mxu0 %v1747
      %v1856 = vpop.f32.mrb[0].mxu0
      %v1857 = vadd.f32 0.0, %v1856
      %v1858 = vpop.f32.mrb[0].mxu0
      %v1859 = vpop.f32.mrb[0].mxu0
      %v1860 = vadd.f32 0.0, %v1859
      %v1861 = vpop.f32.mrb[0].mxu0
      %1862 = vmatprep.mubr.bf16.mxu0 0
      %1863 = vmatmul.mubr.bf16.gmra.mrb[0].mxu0 %v1750
      %v1864 = vpop.f32.mrb[0].mxu0
      %v1865 = vadd.f32 0.0, %v1864
      %v1866 = vpop.f32.mrb[0].mxu0
      %v1867 = vpop.f32.mrb[0].mxu0
      %v1868 = vadd.f32 0.0, %v1867
      %v1869 = vpop.f32.mrb[0].mxu0
      %1870 = vmatprep.mubr.bf16.mxu0 0
      %1871 = vmatmul.mubr.bf16.gmra.mrb[0].mxu0 %v1753
      %v1872 = vpop.f32.mrb[0].mxu0
      %v1873 = vadd.f32 0.0, %v1872
      %v1874 = vpop.f32.mrb[0].mxu0
      %v1875 = vpop.f32.mrb[0].mxu0
      %v1876 = vadd.f32 0.0, %v1875
      %v1877 = vpop.f32.mrb[0].mxu0
      %1878 = vmatprep.mubr.bf16.mxu0 0
      %1879 = vmatmul.mubr.bf16.gmra.mrb[0].mxu0 %v1756
      %v1880 = vpop.f32.mrb[0].mxu0
      %v1881 = vadd.f32 0.0, %v1880
      %v1882 = vpop.f32.mrb[0].mxu0
      %v1883 = vpop.f32.mrb[0].mxu0
      %v1884 = vadd.f32 0.0, %v1883
      %v1885 = vpop.f32.mrb[0].mxu0
      %1886 = vmatprep.mubr.bf16.mxu0 0
      %1887 = vmatmul.mubr.bf16.gmra.mrb[0].mxu0 %v1759
      %v1888 = vpop.f32.mrb[0].mxu0
      %v1889 = vadd.f32 0.0, %v1888
      %v1890 = vpop.f32.mrb[0].mxu0
      %v1891 = vpop.f32.mrb[0].mxu0
      %v1892 = vadd.f32 0.0, %v1891
      %v1893 = vpop.f32.mrb[0].mxu0
      %1894 = vmatprep.mubr.bf16.mxu0 0
      %1895 = vmatmul.mubr.bf16.gmra.mrb[0].mxu0 %v1762
      %v1896 = vpop.f32.mrb[0].mxu0
      %v1897 = vadd.f32 0.0, %v1896
      %v1898 = vpop.f32.mrb[0].mxu0
      %v1899 = vpop.f32.mrb[0].mxu0
      %v1900 = vadd.f32 0.0, %v1899
      %v1901 = vpop.f32.mrb[0].mxu0
      %1902 = vmatprep.mubr.bf16.mxu0 0
      %1903 = vmatmul.mubr.bf16.gmra.mrb[0].mxu0 %v1765
      %v1904 = vpop.f32.mrb[0].mxu0
      %v1905 = vadd.f32 0.0, %v1904
      %v1906 = vpop.f32.mrb[0].mxu0
      %v1907 = vpop.f32.mrb[0].mxu0
      %v1908 = vadd.f32 0.0, %v1907
      %v1909 = vpop.f32.mrb[0].mxu0
      %1910 = vmatprep.mubr.bf16.mxu0 0
      %1911 = vmatmul.mubr.bf16.gmra.mrb[0].mxu0 %v1768
      %v1912 = vpop.f32.mrb[0].mxu0
      %v1913 = vadd.f32 0.0, %v1912
      %v1914 = vpop.f32.mrb[0].mxu0
      %v1915 = vpop.f32.mrb[0].mxu0
      %v1916 = vadd.f32 0.0, %v1915
      %v1917 = vpop.f32.mrb[0].mxu0
      %1918 = vmatprep.mubr.bf16.mxu0 0
      %1919 = vmatmul.mubr.bf16.gmra.mrb[0].mxu0 %v1771
      %v1920 = vpop.f32.mrb[0].mxu0
      %v1921 = vadd.f32 0.0, %v1920
      %v1922 = vpop.f32.mrb[0].mxu0
      %v1923 = vpop.f32.mrb[0].mxu0
      %v1924 = vadd.f32 0.0, %v1923
      %v1925 = vpop.f32.mrb[0].mxu0
      %1926 = vmatprep.mubr.bf16.mxu0 0
      %1927 = vmatmul.mubr.bf16.gmra.mrb[0].mxu0 %v1774
      %v1928 = vpop.f32.mrb[0].mxu0
      %v1929 = vadd.f32 0.0, %v1928
      %v1930 = vpop.f32.mrb[0].mxu0
      %v1931 = vpop.f32.mrb[0].mxu0
      %v1932 = vadd.f32 0.0, %v1931
      %v1933 = vpop.f32.mrb[0].mxu0
      %1934 = vmatprep.mubr.bf16.mxu0 0
      %1935 = vmatmul.mubr.bf16.gmra.mrb[0].mxu0 %v1777
      %v1936 = vpop.f32.mrb[0].mxu0
      %v1937 = vadd.f32 0.0, %v1936
      %v1938 = vpop.f32.mrb[0].mxu0
      %v1939 = vpop.f32.mrb[0].mxu0
      %v1940 = vadd.f32 0.0, %v1939
      %v1941 = vpop.f32.mrb[0].mxu0
      %1942 = vdwg.mxu0
      %v1943 = vadd.f32 %v1544, %v1817
      %v1944 = vadd.f32 %v1545, %v1820
      %v1945 = vadd.f32 %v1546, %v1825
      %v1946 = vadd.f32 %v1547, %v1828
      %v1947 = vadd.f32 %v1548, %v1833
      %v1948 = vadd.f32 %v1549, %v1836
      %v1949 = vadd.f32 %v1550, %v1841
      %v1950 = vadd.f32 %v1551, %v1844
      %v1951 = vadd.f32 %v1552, %v1849
      %v1952 = vadd.f32 %v1553, %v1852
      %v1953 = vadd.f32 %v1554, %v1857
      %v1954 = vadd.f32 %v1555, %v1860
      %v1955 = vadd.f32 %v1556, %v1865
      %v1956 = vadd.f32 %v1557, %v1868
      %v1957 = vadd.f32 %v1558, %v1873
      %v1958 = vadd.f32 %v1559, %v1876
      %v1959 = vadd.f32 %v1560, %v1881
      %v1960 = vadd.f32 %v1561, %v1884
      %v1961 = vadd.f32 %v1562, %v1889
      %v1962 = vadd.f32 %v1563, %v1892
      %v1963 = vadd.f32 %v1564, %v1897
      %v1964 = vadd.f32 %v1565, %v1900
      %v1965 = vadd.f32 %v1566, %v1905
      %v1966 = vadd.f32 %v1567, %v1908
      %v1967 = vadd.f32 %v1568, %v1913
      %v1968 = vadd.f32 %v1569, %v1916
      %v1969 = vadd.f32 %v1570, %v1921
      %v1970 = vadd.f32 %v1571, %v1924
      %v1971 = vadd.f32 %v1572, %v1929
      %v1972 = vadd.f32 %v1573, %v1932
      %v1973 = vadd.f32 %v1574, %v1937
      %v1974 = vadd.f32 %v1575, %v1940
      %s1975 = scalar_lea.vmem %s1, 10
      %v1976 = vld [vmem:[%s1975] sm:$0x3]
      %vm1977 = vcmask 1045504
      %v1978 = vrot.slane %v1282, 2
      %v1979 = vrot.slane %v1283, 2
      %v1980 = vsel %vm1977, %v1978, %v1979
      %v1981 = vrot.slane %v1284, 2
      %v1982 = vsel %vm1977, %v1979, %v1981
      %v1983 = vrot.slane %v1285, 2
      %v1984 = vsel %vm1977, %v1981, %v1983
      %v1985 = vrot.slane %v1286, 2
      %v1986 = vsel %vm1977, %v1983, %v1985
      %v1987 = vrot.slane %v1287, 2
      %v1988 = vsel %vm1977, %v1985, %v1987
      %v1989 = vrot.slane %v1288, 2
      %v1990 = vsel %vm1977, %v1987, %v1989
      %v1991 = vrot.slane %v1289, 2
      %v1992 = vsel %vm1977, %v1989, %v1991
      %v1993 = vrot.slane %v1290, 2
      %v1994 = vsel %vm1977, %v1991, %v1993
      %v1995 = vrot.slane %v1291, 2
      %v1996 = vsel %vm1977, %v1993, %v1995
      %v1997 = vrot.slane %v1292, 2
      %v1998 = vsel %vm1977, %v1995, %v1997
      %v1999 = vrot.slane %v1293, 2
      %v2000 = vsel %vm1977, %v1997, %v1999
      %v2001 = vrot.slane %v1294, 2
      %v2002 = vsel %vm1977, %v1999, %v2001
      %v2003 = vrot.slane %v1295, 2
      %v2004 = vsel %vm1977, %v2001, %v2003
      %v2005 = vrot.slane %v1296, 2
      %v2006 = vsel %vm1977, %v2003, %v2005
      %v2007 = vrot.slane %v1297, 2
      %v2008 = vsel %vm1977, %v2005, %v2007
      %v2009 = vrot.slane %v1298, 2
      %v2010 = vsel %vm1977, %v2007, %v2009
      %v2012 = vsel %vm486, %v1980, 0
      %v2015 = vsel %vm486, %v1982, 0
      %v2018 = vsel %vm486, %v1984, 0
      %v2021 = vsel %vm486, %v1986, 0
      %v2024 = vsel %vm486, %v1988, 0
      %v2027 = vsel %vm486, %v1990, 0
      %v2030 = vsel %vm486, %v1992, 0
      %v2033 = vsel %vm486, %v1994, 0
      %v2036 = vsel %vm486, %v1996, 0
      %v2039 = vsel %vm486, %v1998, 0
      %v2042 = vsel %vm486, %v2000, 0
      %v2045 = vsel %vm486, %v2002, 0
      %v2048 = vsel %vm486, %v2004, 0
      %v2051 = vsel %vm486, %v2006, 0
      %v2054 = vsel %vm486, %v2008, 0
      %v2057 = vsel %vm486, %v2010, 0
      %v2060 = vsel %vm535, %v1976, 0
      %2062 = vmatprep.subr.bf16.mxu0 0
      %2063 = vmatpush1.bf16.msra.mxu0 %v2060
      %2064 = vmatprep.subr.bf16.mxu0 0
      %2065 = vmatpush1.bf16.msra.mxu0 0
      %2066 = vmatprep.subr.bf16.mxu0 0
      %2067 = vmatpush1.bf16.msra.mxu0 0
      %2068 = vmatprep.subr.bf16.mxu0 0
      %2069 = vmatpush1.bf16.msra.mxu0 0
      %2070 = vmatprep.subr.bf16.mxu0 0
      %2071 = vmatpush1.bf16.msra.mxu0 0
      %2072 = vmatprep.subr.bf16.mxu0 0
      %2073 = vmatpush1.bf16.msra.mxu0 0
      %2074 = vmatprep.subr.bf16.mxu0 0
      %2075 = vmatpush1.bf16.msra.mxu0 0
      %2076 = vmatprep.subr.bf16.mxu0 0
      %2077 = vmatpush1.bf16.msra.mxu0 0
      %2078 = vmatprep.subr.bf16.mxu0 0
      %2079 = vmatpush1.bf16.msra.mxu0 0
      %2080 = vmatprep.subr.bf16.mxu0 0
      %2081 = vmatpush1.bf16.msra.mxu0 0
      %2082 = vmatprep.subr.bf16.mxu0 0
      %2083 = vmatpush1.bf16.msra.mxu0 0
      %2084 = vmatprep.subr.bf16.mxu0 0
      %2085 = vmatpush1.bf16.msra.mxu0 0
      %2086 = vmatprep.subr.bf16.mxu0 0
      %2087 = vmatpush1.bf16.msra.mxu0 0
      %2088 = vmatprep.subr.bf16.mxu0 0
      %2089 = vmatpush1.bf16.msra.mxu0 0
      %2090 = vmatprep.subr.bf16.mxu0 0
      %2091 = vmatpush1.bf16.msra.mxu0 0
      %2092 = vmatprep.subr.bf16.mxu0 0
      %2093 = vmatpush1.bf16.msra.mxu0 0
      %2094 = vmatprep.mubr.bf16.mxu0 0
      %2095 = vmatmul.mubr.bf16.gmra.mrb[0].mxu0 %v2012
      %v2096 = vpop.f32.mrb[0].mxu0
      %v2097 = vadd.f32 0.0, %v2096
      %v2098 = vpop.f32.mrb[0].mxu0
      %v2099 = vpop.f32.mrb[0].mxu0
      %v2100 = vadd.f32 0.0, %v2099
      %v2101 = vpop.f32.mrb[0].mxu0
      %2102 = vmatprep.mubr.bf16.mxu0 0
      %2103 = vmatmul.mubr.bf16.gmra.mrb[0].mxu0 %v2015
      %v2104 = vpop.f32.mrb[0].mxu0
      %v2105 = vadd.f32 0.0, %v2104
      %v2106 = vpop.f32.mrb[0].mxu0
      %v2107 = vpop.f32.mrb[0].mxu0
      %v2108 = vadd.f32 0.0, %v2107
      %v2109 = vpop.f32.mrb[0].mxu0
      %2110 = vmatprep.mubr.bf16.mxu0 0
      %2111 = vmatmul.mubr.bf16.gmra.mrb[0].mxu0 %v2018
      %v2112 = vpop.f32.mrb[0].mxu0
      %v2113 = vadd.f32 0.0, %v2112
      %v2114 = vpop.f32.mrb[0].mxu0
      %v2115 = vpop.f32.mrb[0].mxu0
      %v2116 = vadd.f32 0.0, %v2115
      %v2117 = vpop.f32.mrb[0].mxu0
      %2118 = vmatprep.mubr.bf16.mxu0 0
      %2119 = vmatmul.mubr.bf16.gmra.mrb[0].mxu0 %v2021
      %v2120 = vpop.f32.mrb[0].mxu0
      %v2121 = vadd.f32 0.0, %v2120
      %v2122 = vpop.f32.mrb[0].mxu0
      %v2123 = vpop.f32.mrb[0].mxu0
      %v2124 = vadd.f32 0.0, %v2123
      %v2125 = vpop.f32.mrb[0].mxu0
      %2126 = vmatprep.mubr.bf16.mxu0 0
      %2127 = vmatmul.mubr.bf16.gmra.mrb[0].mxu0 %v2024
      %v2128 = vpop.f32.mrb[0].mxu0
      %v2129 = vadd.f32 0.0, %v2128
      %v2130 = vpop.f32.mrb[0].mxu0
      %v2131 = vpop.f32.mrb[0].mxu0
      %v2132 = vadd.f32 0.0, %v2131
      %v2133 = vpop.f32.mrb[0].mxu0
      %2134 = vmatprep.mubr.bf16.mxu0 0
      %2135 = vmatmul.mubr.bf16.gmra.mrb[0].mxu0 %v2027
      %v2136 = vpop.f32.mrb[0].mxu0
      %v2137 = vadd.f32 0.0, %v2136
      %v2138 = vpop.f32.mrb[0].mxu0
      %v2139 = vpop.f32.mrb[0].mxu0
      %v2140 = vadd.f32 0.0, %v2139
      %v2141 = vpop.f32.mrb[0].mxu0
      %2142 = vmatprep.mubr.bf16.mxu0 0
      %2143 = vmatmul.mubr.bf16.gmra.mrb[0].mxu0 %v2030
      %v2144 = vpop.f32.mrb[0].mxu0
      %v2145 = vadd.f32 0.0, %v2144
      %v2146 = vpop.f32.mrb[0].mxu0
      %v2147 = vpop.f32.mrb[0].mxu0
      %v2148 = vadd.f32 0.0, %v2147
      %v2149 = vpop.f32.mrb[0].mxu0
      %2150 = vmatprep.mubr.bf16.mxu0 0
      %2151 = vmatmul.mubr.bf16.gmra.mrb[0].mxu0 %v2033
      %v2152 = vpop.f32.mrb[0].mxu0
      %v2153 = vadd.f32 0.0, %v2152
      %v2154 = vpop.f32.mrb[0].mxu0
      %v2155 = vpop.f32.mrb[0].mxu0
      %v2156 = vadd.f32 0.0, %v2155
      %v2157 = vpop.f32.mrb[0].mxu0
      %2158 = vmatprep.mubr.bf16.mxu0 0
      %2159 = vmatmul.mubr.bf16.gmra.mrb[0].mxu0 %v2036
      %v2160 = vpop.f32.mrb[0].mxu0
      %v2161 = vadd.f32 0.0, %v2160
      %v2162 = vpop.f32.mrb[0].mxu0
      %v2163 = vpop.f32.mrb[0].mxu0
      %v2164 = vadd.f32 0.0, %v2163
      %v2165 = vpop.f32.mrb[0].mxu0
      %2166 = vmatprep.mubr.bf16.mxu0 0
      %2167 = vmatmul.mubr.bf16.gmra.mrb[0].mxu0 %v2039
      %v2168 = vpop.f32.mrb[0].mxu0
      %v2169 = vadd.f32 0.0, %v2168
      %v2170 = vpop.f32.mrb[0].mxu0
      %v2171 = vpop.f32.mrb[0].mxu0
      %v2172 = vadd.f32 0.0, %v2171
      %v2173 = vpop.f32.mrb[0].mxu0
      %2174 = vmatprep.mubr.bf16.mxu0 0
      %2175 = vmatmul.mubr.bf16.gmra.mrb[0].mxu0 %v2042
      %v2176 = vpop.f32.mrb[0].mxu0
      %v2177 = vadd.f32 0.0, %v2176
      %v2178 = vpop.f32.mrb[0].mxu0
      %v2179 = vpop.f32.mrb[0].mxu0
      %v2180 = vadd.f32 0.0, %v2179
      %v2181 = vpop.f32.mrb[0].mxu0
      %2182 = vmatprep.mubr.bf16.mxu0 0
      %2183 = vmatmul.mubr.bf16.gmra.mrb[0].mxu0 %v2045
      %v2184 = vpop.f32.mrb[0].mxu0
      %v2185 = vadd.f32 0.0, %v2184
      %v2186 = vpop.f32.mrb[0].mxu0
      %v2187 = vpop.f32.mrb[0].mxu0
      %v2188 = vadd.f32 0.0, %v2187
      %v2189 = vpop.f32.mrb[0].mxu0
      %2190 = vmatprep.mubr.bf16.mxu0 0
      %2191 = vmatmul.mubr.bf16.gmra.mrb[0].mxu0 %v2048
      %v2192 = vpop.f32.mrb[0].mxu0
      %v2193 = vadd.f32 0.0, %v2192
      %v2194 = vpop.f32.mrb[0].mxu0
      %v2195 = vpop.f32.mrb[0].mxu0
      %v2196 = vadd.f32 0.0, %v2195
      %v2197 = vpop.f32.mrb[0].mxu0
      %2198 = vmatprep.mubr.bf16.mxu0 0
      %2199 = vmatmul.mubr.bf16.gmra.mrb[0].mxu0 %v2051
      %v2200 = vpop.f32.mrb[0].mxu0
      %v2201 = vadd.f32 0.0, %v2200
      %v2202 = vpop.f32.mrb[0].mxu0
      %v2203 = vpop.f32.mrb[0].mxu0
      %v2204 = vadd.f32 0.0, %v2203
      %v2205 = vpop.f32.mrb[0].mxu0
      %2206 = vmatprep.mubr.bf16.mxu0 0
      %2207 = vmatmul.mubr.bf16.gmra.mrb[0].mxu0 %v2054
      %v2208 = vpop.f32.mrb[0].mxu0
      %v2209 = vadd.f32 0.0, %v2208
      %v2210 = vpop.f32.mrb[0].mxu0
      %v2211 = vpop.f32.mrb[0].mxu0
      %v2212 = vadd.f32 0.0, %v2211
      %v2213 = vpop.f32.mrb[0].mxu0
      %2214 = vmatprep.mubr.bf16.mxu0 0
      %2215 = vmatmul.mubr.bf16.gmra.mrb[0].mxu0 %v2057
      %v2216 = vpop.f32.mrb[0].mxu0
      %v2217 = vadd.f32 0.0, %v2216
      %v2218 = vpop.f32.mrb[0].mxu0
      %v2219 = vpop.f32.mrb[0].mxu0
      %v2220 = vadd.f32 0.0, %v2219
      %v2221 = vpop.f32.mrb[0].mxu0
      %2222 = vdwg.mxu0
      %v2223 = vadd.f32 %v1943, %v2097
      %v2224 = vadd.f32 %v1944, %v2100
      %v2225 = vadd.f32 %v1945, %v2105
      %v2226 = vadd.f32 %v1946, %v2108
      %v2227 = vadd.f32 %v1947, %v2113
      %v2228 = vadd.f32 %v1948, %v2116
      %v2229 = vadd.f32 %v1949, %v2121
      %v2230 = vadd.f32 %v1950, %v2124
      %v2231 = vadd.f32 %v1951, %v2129
      %v2232 = vadd.f32 %v1952, %v2132
      %v2233 = vadd.f32 %v1953, %v2137
      %v2234 = vadd.f32 %v1954, %v2140
      %v2235 = vadd.f32 %v1955, %v2145
      %v2236 = vadd.f32 %v1956, %v2148
      %v2237 = vadd.f32 %v1957, %v2153
      %v2238 = vadd.f32 %v1958, %v2156
      %v2239 = vadd.f32 %v1959, %v2161
      %v2240 = vadd.f32 %v1960, %v2164
      %v2241 = vadd.f32 %v1961, %v2169
      %v2242 = vadd.f32 %v1962, %v2172
      %v2243 = vadd.f32 %v1963, %v2177
      %v2244 = vadd.f32 %v1964, %v2180
      %v2245 = vadd.f32 %v1965, %v2185
      %v2246 = vadd.f32 %v1966, %v2188
      %v2247 = vadd.f32 %v1967, %v2193
      %v2248 = vadd.f32 %v1968, %v2196
      %v2249 = vadd.f32 %v1969, %v2201
      %v2250 = vadd.f32 %v1970, %v2204
      %v2251 = vadd.f32 %v1971, %v2209
      %v2252 = vadd.f32 %v1972, %v2212
      %v2253 = vadd.f32 %v1973, %v2217
      %v2254 = vadd.f32 %v1974, %v2220
      %s2255 = sadd.s32 %s229, 32
      %s2256 = sshra.s32 %s2255, 3
      %s2257 = sand.u32 %s2255, 7
      %s2258 = smul.addr %s2256, 4
      %s2259 = scalar_lea.vmem %s0, %s2258
      %v2260 = vld [vmem:[%s2259] sm:$0xf]
      %v2261 = vld [vmem:[%s2259 + $0x4] sm:$0xf]
      %v2262 = vld [vmem:[%s2259 + $0x8] sm:$0xf]
      %v2263 = vld [vmem:[%s2259 + $0xc] sm:$0xf]
      %v2264 = vld [vmem:[%s2259 + $0x10] sm:$0xf]
      %v2265 = vld [vmem:[%s2259 + $0x14] sm:$0xf]
      %v2266 = vld [vmem:[%s2259 + $0x18] sm:$0xf]
      %v2267 = vld [vmem:[%s2259 + $0x1c] sm:$0xf]
      %v2268 = vld [vmem:[%s2259 + $0x20] sm:$0xf]
      %v2269 = vld [vmem:[%s2259 + $0x24] sm:$0xf]
      %v2270 = vld [vmem:[%s2259 + $0x28] sm:$0xf]
      %v2271 = vld [vmem:[%s2259 + $0x2c] sm:$0xf]
      %v2272 = vld [vmem:[%s2259 + $0x30] sm:$0xf]
      %v2273 = vld [vmem:[%s2259 + $0x34] sm:$0xf]
      %v2274 = vld [vmem:[%s2259 + $0x38] sm:$0xf]
      %v2275 = vld [vmem:[%s2259 + $0x3c] sm:$0xf]
      %v2276 = vld [vmem:[%s2259 + $0x40] sm:$0xf]
      %v2277 = vld [vmem:[%s2259 + $0x44] sm:$0xf]
      %v2278 = vld [vmem:[%s2259 + $0x48] sm:$0xf]
      %v2279 = vld [vmem:[%s2259 + $0x4c] sm:$0xf]
      %v2280 = vld [vmem:[%s2259 + $0x50] sm:$0xf]
      %v2281 = vld [vmem:[%s2259 + $0x54] sm:$0xf]
      %v2282 = vld [vmem:[%s2259 + $0x58] sm:$0xf]
      %v2283 = vld [vmem:[%s2259 + $0x5c] sm:$0xf]
      %v2284 = vld [vmem:[%s2259 + $0x60] sm:$0xf]
      %v2285 = vld [vmem:[%s2259 + $0x64] sm:$0xf]
      %v2286 = vld [vmem:[%s2259 + $0x68] sm:$0xf]
      %v2287 = vld [vmem:[%s2259 + $0x6c] sm:$0xf]
      %v2288 = vld [vmem:[%s2259 + $0x70] sm:$0xf]
      %v2289 = vld [vmem:[%s2259 + $0x74] sm:$0xf]
      %v2290 = vld [vmem:[%s2259 + $0x78] sm:$0xf]
      %v2291 = vld [vmem:[%s2259 + $0x7c] sm:$0xf]
      %v2292 = vld [vmem:[%s2259 + $0x80] sm:$0xf]
      %s2293 = scalar_lea.vmem %s1, 12
      %v2294 = vld [vmem:[%s2293] sm:$0x3]
      %v2328 = vunpack.c.l.b16 %v2260
      %v2329 = vunpack.c.l.b16 %v2261
      %v2330 = vunpack.c.l.b16 %v2262
      %v2331 = vunpack.c.l.b16 %v2263
      %v2332 = vunpack.c.l.b16 %v2264
      %v2333 = vunpack.c.l.b16 %v2265
      %v2334 = vunpack.c.l.b16 %v2266
      %v2335 = vunpack.c.l.b16 %v2267
      %v2336 = vunpack.c.l.b16 %v2268
      %v2337 = vunpack.c.l.b16 %v2269
      %v2338 = vunpack.c.l.b16 %v2270
      %v2339 = vunpack.c.l.b16 %v2271
      %v2340 = vunpack.c.l.b16 %v2272
      %v2341 = vunpack.c.l.b16 %v2273
      %v2342 = vunpack.c.l.b16 %v2274
      %v2343 = vunpack.c.l.b16 %v2275
      %v2344 = vunpack.c.l.b16 %v2276
      %v2345 = vunpack.c.l.b16 %v2277
      %v2346 = vunpack.c.l.b16 %v2278
      %v2347 = vunpack.c.l.b16 %v2279
      %v2348 = vunpack.c.l.b16 %v2280
      %v2349 = vunpack.c.l.b16 %v2281
      %v2350 = vunpack.c.l.b16 %v2282
      %v2351 = vunpack.c.l.b16 %v2283
      %v2352 = vunpack.c.l.b16 %v2284
      %v2353 = vunpack.c.l.b16 %v2285
      %v2354 = vunpack.c.l.b16 %v2286
      %v2355 = vunpack.c.l.b16 %v2287
      %v2356 = vunpack.c.l.b16 %v2288
      %v2357 = vunpack.c.l.b16 %v2289
      %v2358 = vunpack.c.l.b16 %v2290
      %v2359 = vunpack.c.l.b16 %v2291
      %v2360 = vunpack.c.l.b16 %v2292
      %v2361 = vpack.c.b16 %v2329, %v2328
      %v2362 = vpack.c.b16 %v2331, %v2330
      %v2363 = vpack.c.b16 %v2333, %v2332
      %v2364 = vpack.c.b16 %v2335, %v2334
      %v2365 = vpack.c.b16 %v2337, %v2336
      %v2366 = vpack.c.b16 %v2339, %v2338
      %v2367 = vpack.c.b16 %v2341, %v2340
      %v2368 = vpack.c.b16 %v2343, %v2342
      %v2369 = vpack.c.b16 %v2345, %v2344
      %v2370 = vpack.c.b16 %v2347, %v2346
      %v2371 = vpack.c.b16 %v2349, %v2348
      %v2372 = vpack.c.b16 %v2351, %v2350
      %v2373 = vpack.c.b16 %v2353, %v2352
      %v2374 = vpack.c.b16 %v2355, %v2354
      %v2375 = vpack.c.b16 %v2357, %v2356
      %v2376 = vpack.c.b16 %v2359, %v2358
      %v2377 = vpack.c.b16 %v2360, %v2360
      %v2378 = vrot.slane %v2361, 2
      %v2379 = vrot.slane %v2362, 2
      %v2380 = vsel %vm1977, %v2378, %v2379
      %v2381 = vrot.slane %v2363, 2
      %v2382 = vsel %vm1977, %v2379, %v2381
      %v2383 = vrot.slane %v2364, 2
      %v2384 = vsel %vm1977, %v2381, %v2383
      %v2385 = vrot.slane %v2365, 2
      %v2386 = vsel %vm1977, %v2383, %v2385
      %v2387 = vrot.slane %v2366, 2
      %v2388 = vsel %vm1977, %v2385, %v2387
      %v2389 = vrot.slane %v2367, 2
      %v2390 = vsel %vm1977, %v2387, %v2389
      %v2391 = vrot.slane %v2368, 2
      %v2392 = vsel %vm1977, %v2389, %v2391
      %v2393 = vrot.slane %v2369, 2
      %v2394 = vsel %vm1977, %v2391, %v2393
      %v2395 = vrot.slane %v2370, 2
      %v2396 = vsel %vm1977, %v2393, %v2395
      %v2397 = vrot.slane %v2371, 2
      %v2398 = vsel %vm1977, %v2395, %v2397
      %v2399 = vrot.slane %v2372, 2
      %v2400 = vsel %vm1977, %v2397, %v2399
      %v2401 = vrot.slane %v2373, 2
      %v2402 = vsel %vm1977, %v2399, %v2401
      %v2403 = vrot.slane %v2374, 2
      %v2404 = vsel %vm1977, %v2401, %v2403
      %v2405 = vrot.slane %v2375, 2
      %v2406 = vsel %vm1977, %v2403, %v2405
      %v2407 = vrot.slane %v2376, 2
      %v2408 = vsel %vm1977, %v2405, %v2407
      %v2409 = vrot.slane %v2377, 2
      %v2410 = vsel %vm1977, %v2407, %v2409
      %v2412 = vsel %vm486, %v2380, 0
      %v2415 = vsel %vm486, %v2382, 0
      %v2418 = vsel %vm486, %v2384, 0
      %v2421 = vsel %vm486, %v2386, 0
      %v2424 = vsel %vm486, %v2388, 0
      %v2427 = vsel %vm486, %v2390, 0
      %v2430 = vsel %vm486, %v2392, 0
      %v2433 = vsel %vm486, %v2394, 0
      %v2436 = vsel %vm486, %v2396, 0
      %v2439 = vsel %vm486, %v2398, 0
      %v2442 = vsel %vm486, %v2400, 0
      %v2445 = vsel %vm486, %v2402, 0
      %v2448 = vsel %vm486, %v2404, 0
      %v2451 = vsel %vm486, %v2406, 0
      %v2454 = vsel %vm486, %v2408, 0
      %v2457 = vsel %vm486, %v2410, 0
      %v2460 = vsel %vm535, %v2294, 0
      %2462 = vmatprep.subr.bf16.mxu0 0
      %2463 = vmatpush1.bf16.msra.mxu0 %v2460
      %2464 = vmatprep.subr.bf16.mxu0 0
      %2465 = vmatpush1.bf16.msra.mxu0 0
      %2466 = vmatprep.subr.bf16.mxu0 0
      %2467 = vmatpush1.bf16.msra.mxu0 0
      %2468 = vmatprep.subr.bf16.mxu0 0
      %2469 = vmatpush1.bf16.msra.mxu0 0
      %2470 = vmatprep.subr.bf16.mxu0 0
      %2471 = vmatpush1.bf16.msra.mxu0 0
      %2472 = vmatprep.subr.bf16.mxu0 0
      %2473 = vmatpush1.bf16.msra.mxu0 0
      %2474 = vmatprep.subr.bf16.mxu0 0
      %2475 = vmatpush1.bf16.msra.mxu0 0
      %2476 = vmatprep.subr.bf16.mxu0 0
      %2477 = vmatpush1.bf16.msra.mxu0 0
      %2478 = vmatprep.subr.bf16.mxu0 0
      %2479 = vmatpush1.bf16.msra.mxu0 0
      %2480 = vmatprep.subr.bf16.mxu0 0
      %2481 = vmatpush1.bf16.msra.mxu0 0
      %2482 = vmatprep.subr.bf16.mxu0 0
      %2483 = vmatpush1.bf16.msra.mxu0 0
      %2484 = vmatprep.subr.bf16.mxu0 0
      %2485 = vmatpush1.bf16.msra.mxu0 0
      %2486 = vmatprep.subr.bf16.mxu0 0
      %2487 = vmatpush1.bf16.msra.mxu0 0
      %2488 = vmatprep.subr.bf16.mxu0 0
      %2489 = vmatpush1.bf16.msra.mxu0 0
      %2490 = vmatprep.subr.bf16.mxu0 0
      %2491 = vmatpush1.bf16.msra.mxu0 0
      %2492 = vmatprep.subr.bf16.mxu0 0
      %2493 = vmatpush1.bf16.msra.mxu0 0
      %2494 = vmatprep.mubr.bf16.mxu0 0
      %2495 = vmatmul.mubr.bf16.gmra.mrb[0].mxu0 %v2412
      %v2496 = vpop.f32.mrb[0].mxu0
      %v2497 = vadd.f32 0.0, %v2496
      %v2498 = vpop.f32.mrb[0].mxu0
      %v2499 = vpop.f32.mrb[0].mxu0
      %v2500 = vadd.f32 0.0, %v2499
      %v2501 = vpop.f32.mrb[0].mxu0
      %2502 = vmatprep.mubr.bf16.mxu0 0
      %2503 = vmatmul.mubr.bf16.gmra.mrb[0].mxu0 %v2415
      %v2504 = vpop.f32.mrb[0].mxu0
      %v2505 = vadd.f32 0.0, %v2504
      %v2506 = vpop.f32.mrb[0].mxu0
      %v2507 = vpop.f32.mrb[0].mxu0
      %v2508 = vadd.f32 0.0, %v2507
      %v2509 = vpop.f32.mrb[0].mxu0
      %2510 = vmatprep.mubr.bf16.mxu0 0
      %2511 = vmatmul.mubr.bf16.gmra.mrb[0].mxu0 %v2418
      %v2512 = vpop.f32.mrb[0].mxu0
      %v2513 = vadd.f32 0.0, %v2512
      %v2514 = vpop.f32.mrb[0].mxu0
      %v2515 = vpop.f32.mrb[0].mxu0
      %v2516 = vadd.f32 0.0, %v2515
      %v2517 = vpop.f32.mrb[0].mxu0
      %2518 = vmatprep.mubr.bf16.mxu0 0
      %2519 = vmatmul.mubr.bf16.gmra.mrb[0].mxu0 %v2421
      %v2520 = vpop.f32.mrb[0].mxu0
      %v2521 = vadd.f32 0.0, %v2520
      %v2522 = vpop.f32.mrb[0].mxu0
      %v2523 = vpop.f32.mrb[0].mxu0
      %v2524 = vadd.f32 0.0, %v2523
      %v2525 = vpop.f32.mrb[0].mxu0
      %2526 = vmatprep.mubr.bf16.mxu0 0
      %2527 = vmatmul.mubr.bf16.gmra.mrb[0].mxu0 %v2424
      %v2528 = vpop.f32.mrb[0].mxu0
      %v2529 = vadd.f32 0.0, %v2528
      %v2530 = vpop.f32.mrb[0].mxu0
      %v2531 = vpop.f32.mrb[0].mxu0
      %v2532 = vadd.f32 0.0, %v2531
      %v2533 = vpop.f32.mrb[0].mxu0
      %2534 = vmatprep.mubr.bf16.mxu0 0
      %2535 = vmatmul.mubr.bf16.gmra.mrb[0].mxu0 %v2427
      %v2536 = vpop.f32.mrb[0].mxu0
      %v2537 = vadd.f32 0.0, %v2536
      %v2538 = vpop.f32.mrb[0].mxu0
      %v2539 = vpop.f32.mrb[0].mxu0
      %v2540 = vadd.f32 0.0, %v2539
      %v2541 = vpop.f32.mrb[0].mxu0
      %2542 = vmatprep.mubr.bf16.mxu0 0
      %2543 = vmatmul.mubr.bf16.gmra.mrb[0].mxu0 %v2430
      %v2544 = vpop.f32.mrb[0].mxu0
      %v2545 = vadd.f32 0.0, %v2544
      %v2546 = vpop.f32.mrb[0].mxu0
      %v2547 = vpop.f32.mrb[0].mxu0
      %v2548 = vadd.f32 0.0, %v2547
      %v2549 = vpop.f32.mrb[0].mxu0
      %2550 = vmatprep.mubr.bf16.mxu0 0
      %2551 = vmatmul.mubr.bf16.gmra.mrb[0].mxu0 %v2433
      %v2552 = vpop.f32.mrb[0].mxu0
      %v2553 = vadd.f32 0.0, %v2552
      %v2554 = vpop.f32.mrb[0].mxu0
      %v2555 = vpop.f32.mrb[0].mxu0
      %v2556 = vadd.f32 0.0, %v2555
      %v2557 = vpop.f32.mrb[0].mxu0
      %2558 = vmatprep.mubr.bf16.mxu0 0
      %2559 = vmatmul.mubr.bf16.gmra.mrb[0].mxu0 %v2436
      %v2560 = vpop.f32.mrb[0].mxu0
      %v2561 = vadd.f32 0.0, %v2560
      %v2562 = vpop.f32.mrb[0].mxu0
      %v2563 = vpop.f32.mrb[0].mxu0
      %v2564 = vadd.f32 0.0, %v2563
      %v2565 = vpop.f32.mrb[0].mxu0
      %2566 = vmatprep.mubr.bf16.mxu0 0
      %2567 = vmatmul.mubr.bf16.gmra.mrb[0].mxu0 %v2439
      %v2568 = vpop.f32.mrb[0].mxu0
      %v2569 = vadd.f32 0.0, %v2568
      %v2570 = vpop.f32.mrb[0].mxu0
      %v2571 = vpop.f32.mrb[0].mxu0
      %v2572 = vadd.f32 0.0, %v2571
      %v2573 = vpop.f32.mrb[0].mxu0
      %2574 = vmatprep.mubr.bf16.mxu0 0
      %2575 = vmatmul.mubr.bf16.gmra.mrb[0].mxu0 %v2442
      %v2576 = vpop.f32.mrb[0].mxu0
      %v2577 = vadd.f32 0.0, %v2576
      %v2578 = vpop.f32.mrb[0].mxu0
      %v2579 = vpop.f32.mrb[0].mxu0
      %v2580 = vadd.f32 0.0, %v2579
      %v2581 = vpop.f32.mrb[0].mxu0
      %2582 = vmatprep.mubr.bf16.mxu0 0
      %2583 = vmatmul.mubr.bf16.gmra.mrb[0].mxu0 %v2445
      %v2584 = vpop.f32.mrb[0].mxu0
      %v2585 = vadd.f32 0.0, %v2584
      %v2586 = vpop.f32.mrb[0].mxu0
      %v2587 = vpop.f32.mrb[0].mxu0
      %v2588 = vadd.f32 0.0, %v2587
      %v2589 = vpop.f32.mrb[0].mxu0
      %2590 = vmatprep.mubr.bf16.mxu0 0
      %2591 = vmatmul.mubr.bf16.gmra.mrb[0].mxu0 %v2448
      %v2592 = vpop.f32.mrb[0].mxu0
      %v2593 = vadd.f32 0.0, %v2592
      %v2594 = vpop.f32.mrb[0].mxu0
      %v2595 = vpop.f32.mrb[0].mxu0
      %v2596 = vadd.f32 0.0, %v2595
      %v2597 = vpop.f32.mrb[0].mxu0
      %2598 = vmatprep.mubr.bf16.mxu0 0
      %2599 = vmatmul.mubr.bf16.gmra.mrb[0].mxu0 %v2451
      %v2600 = vpop.f32.mrb[0].mxu0
      %v2601 = vadd.f32 0.0, %v2600
      %v2602 = vpop.f32.mrb[0].mxu0
      %v2603 = vpop.f32.mrb[0].mxu0
      %v2604 = vadd.f32 0.0, %v2603
      %v2605 = vpop.f32.mrb[0].mxu0
      %2606 = vmatprep.mubr.bf16.mxu0 0
      %2607 = vmatmul.mubr.bf16.gmra.mrb[0].mxu0 %v2454
      %v2608 = vpop.f32.mrb[0].mxu0
      %v2609 = vadd.f32 0.0, %v2608
      %v2610 = vpop.f32.mrb[0].mxu0
      %v2611 = vpop.f32.mrb[0].mxu0
      %v2612 = vadd.f32 0.0, %v2611
      %v2613 = vpop.f32.mrb[0].mxu0
      %2614 = vmatprep.mubr.bf16.mxu0 0
      %2615 = vmatmul.mubr.bf16.gmra.mrb[0].mxu0 %v2457
      %v2616 = vpop.f32.mrb[0].mxu0
      %v2617 = vadd.f32 0.0, %v2616
      %v2618 = vpop.f32.mrb[0].mxu0
      %v2619 = vpop.f32.mrb[0].mxu0
      %v2620 = vadd.f32 0.0, %v2619
      %v2621 = vpop.f32.mrb[0].mxu0
      %2622 = vdwg.mxu0
      %v2623 = vadd.f32 %v2223, %v2497
      %v2624 = vadd.f32 %v2224, %v2500
      %v2625 = vadd.f32 %v2225, %v2505
      %v2626 = vadd.f32 %v2226, %v2508
      %v2627 = vadd.f32 %v2227, %v2513
      %v2628 = vadd.f32 %v2228, %v2516
      %v2629 = vadd.f32 %v2229, %v2521
      %v2630 = vadd.f32 %v2230, %v2524
      %v2631 = vadd.f32 %v2231, %v2529
      %v2632 = vadd.f32 %v2232, %v2532
      %v2633 = vadd.f32 %v2233, %v2537
      %v2634 = vadd.f32 %v2234, %v2540
      %v2635 = vadd.f32 %v2235, %v2545
      %v2636 = vadd.f32 %v2236, %v2548
      %v2637 = vadd.f32 %v2237, %v2553
      %v2638 = vadd.f32 %v2238, %v2556
      %v2639 = vadd.f32 %v2239, %v2561
      %v2640 = vadd.f32 %v2240, %v2564
      %v2641 = vadd.f32 %v2241, %v2569
      %v2642 = vadd.f32 %v2242, %v2572
      %v2643 = vadd.f32 %v2243, %v2577
      %v2644 = vadd.f32 %v2244, %v2580
      %v2645 = vadd.f32 %v2245, %v2585
      %v2646 = vadd.f32 %v2246, %v2588
      %v2647 = vadd.f32 %v2247, %v2593
      %v2648 = vadd.f32 %v2248, %v2596
      %v2649 = vadd.f32 %v2249, %v2601
      %v2650 = vadd.f32 %v2250, %v2604
      %v2651 = vadd.f32 %v2251, %v2609
      %v2652 = vadd.f32 %v2252, %v2612
      %v2653 = vadd.f32 %v2253, %v2617
      %v2654 = vadd.f32 %v2254, %v2620
      %s2655 = scalar_lea.vmem %s1, 14
      %v2656 = vld [vmem:[%s2655] sm:$0x3]
      %vm2657 = vsmask.f32 5376
      %v2659 = vshrl.u32 %v2361, 16
      %v2661 = vrot.slane %v2659, 2
      %v2662 = vshll.u32 %v2361, 16
      %v2664 = vrot.slane %v2662, 3
      %v2665 = vor.u32 %v2661, %v2664
      %v2667 = vshrl.u32 %v2362, 16
      %v2669 = vrot.slane %v2667, 2
      %v2670 = vshll.u32 %v2362, 16
      %v2672 = vrot.slane %v2670, 3
      %v2673 = vor.u32 %v2669, %v2672
      %v2674 = vsel %vm2657, %v2665, %v2673
      %v2676 = vshrl.u32 %v2363, 16
      %v2678 = vrot.slane %v2676, 2
      %v2679 = vshll.u32 %v2363, 16
      %v2681 = vrot.slane %v2679, 3
      %v2682 = vor.u32 %v2678, %v2681
      %v2683 = vsel %vm2657, %v2673, %v2682
      %v2685 = vshrl.u32 %v2364, 16
      %v2687 = vrot.slane %v2685, 2
      %v2688 = vshll.u32 %v2364, 16
      %v2690 = vrot.slane %v2688, 3
      %v2691 = vor.u32 %v2687, %v2690
      %v2692 = vsel %vm2657, %v2682, %v2691
      %v2694 = vshrl.u32 %v2365, 16
      %v2696 = vrot.slane %v2694, 2
      %v2697 = vshll.u32 %v2365, 16
      %v2699 = vrot.slane %v2697, 3
      %v2700 = vor.u32 %v2696, %v2699
      %v2701 = vsel %vm2657, %v2691, %v2700
      %v2703 = vshrl.u32 %v2366, 16
      %v2705 = vrot.slane %v2703, 2
      %v2706 = vshll.u32 %v2366, 16
      %v2708 = vrot.slane %v2706, 3
      %v2709 = vor.u32 %v2705, %v2708
      %v2710 = vsel %vm2657, %v2700, %v2709
      %v2712 = vshrl.u32 %v2367, 16
      %v2714 = vrot.slane %v2712, 2
      %v2715 = vshll.u32 %v2367, 16
      %v2717 = vrot.slane %v2715, 3
      %v2718 = vor.u32 %v2714, %v2717
      %v2719 = vsel %vm2657, %v2709, %v2718
      %v2721 = vshrl.u32 %v2368, 16
      %v2723 = vrot.slane %v2721, 2
      %v2724 = vshll.u32 %v2368, 16
      %v2726 = vrot.slane %v2724, 3
      %v2727 = vor.u32 %v2723, %v2726
      %v2728 = vsel %vm2657, %v2718, %v2727
      %v2730 = vshrl.u32 %v2369, 16
      %v2732 = vrot.slane %v2730, 2
      %v2733 = vshll.u32 %v2369, 16
      %v2735 = vrot.slane %v2733, 3
      %v2736 = vor.u32 %v2732, %v2735
      %v2737 = vsel %vm2657, %v2727, %v2736
      %v2739 = vshrl.u32 %v2370, 16
      %v2741 = vrot.slane %v2739, 2
      %v2742 = vshll.u32 %v2370, 16
      %v2744 = vrot.slane %v2742, 3
      %v2745 = vor.u32 %v2741, %v2744
      %v2746 = vsel %vm2657, %v2736, %v2745
      %v2748 = vshrl.u32 %v2371, 16
      %v2750 = vrot.slane %v2748, 2
      %v2751 = vshll.u32 %v2371, 16
      %v2753 = vrot.slane %v2751, 3
      %v2754 = vor.u32 %v2750, %v2753
      %v2755 = vsel %vm2657, %v2745, %v2754
      %v2757 = vshrl.u32 %v2372, 16
      %v2759 = vrot.slane %v2757, 2
      %v2760 = vshll.u32 %v2372, 16
      %v2762 = vrot.slane %v2760, 3
      %v2763 = vor.u32 %v2759, %v2762
      %v2764 = vsel %vm2657, %v2754, %v2763
      %v2766 = vshrl.u32 %v2373, 16
      %v2768 = vrot.slane %v2766, 2
      %v2769 = vshll.u32 %v2373, 16
      %v2771 = vrot.slane %v2769, 3
      %v2772 = vor.u32 %v2768, %v2771
      %v2773 = vsel %vm2657, %v2763, %v2772
      %v2775 = vshrl.u32 %v2374, 16
      %v2777 = vrot.slane %v2775, 2
      %v2778 = vshll.u32 %v2374, 16
      %v2780 = vrot.slane %v2778, 3
      %v2781 = vor.u32 %v2777, %v2780
      %v2782 = vsel %vm2657, %v2772, %v2781
      %v2784 = vshrl.u32 %v2375, 16
      %v2786 = vrot.slane %v2784, 2
      %v2787 = vshll.u32 %v2375, 16
      %v2789 = vrot.slane %v2787, 3
      %v2790 = vor.u32 %v2786, %v2789
      %v2791 = vsel %vm2657, %v2781, %v2790
      %v2793 = vshrl.u32 %v2376, 16
      %v2795 = vrot.slane %v2793, 2
      %v2796 = vshll.u32 %v2376, 16
      %v2798 = vrot.slane %v2796, 3
      %v2799 = vor.u32 %v2795, %v2798
      %v2800 = vsel %vm2657, %v2790, %v2799
      %v2802 = vshrl.u32 %v2377, 16
      %v2804 = vrot.slane %v2802, 2
      %v2805 = vshll.u32 %v2377, 16
      %v2807 = vrot.slane %v2805, 3
      %v2808 = vor.u32 %v2804, %v2807
      %v2809 = vsel %vm2657, %v2799, %v2808
      %v2811 = vsel %vm486, %v2674, 0
      %v2814 = vsel %vm486, %v2683, 0
      %v2817 = vsel %vm486, %v2692, 0
      %v2820 = vsel %vm486, %v2701, 0
      %v2823 = vsel %vm486, %v2710, 0
      %v2826 = vsel %vm486, %v2719, 0
      %v2829 = vsel %vm486, %v2728, 0
      %v2832 = vsel %vm486, %v2737, 0
      %v2835 = vsel %vm486, %v2746, 0
      %v2838 = vsel %vm486, %v2755, 0
      %v2841 = vsel %vm486, %v2764, 0
      %v2844 = vsel %vm486, %v2773, 0
      %v2847 = vsel %vm486, %v2782, 0
      %v2850 = vsel %vm486, %v2791, 0
      %v2853 = vsel %vm486, %v2800, 0
      %v2856 = vsel %vm486, %v2809, 0
      %v2859 = vsel %vm535, %v2656, 0
      %2861 = vmatprep.subr.bf16.mxu0 0
      %2862 = vmatpush1.bf16.msra.mxu0 %v2859
      %2863 = vmatprep.subr.bf16.mxu0 0
      %2864 = vmatpush1.bf16.msra.mxu0 0
      %2865 = vmatprep.subr.bf16.mxu0 0
      %2866 = vmatpush1.bf16.msra.mxu0 0
      %2867 = vmatprep.subr.bf16.mxu0 0
      %2868 = vmatpush1.bf16.msra.mxu0 0
      %2869 = vmatprep.subr.bf16.mxu0 0
      %2870 = vmatpush1.bf16.msra.mxu0 0
      %2871 = vmatprep.subr.bf16.mxu0 0
      %2872 = vmatpush1.bf16.msra.mxu0 0
      %2873 = vmatprep.subr.bf16.mxu0 0
      %2874 = vmatpush1.bf16.msra.mxu0 0
      %2875 = vmatprep.subr.bf16.mxu0 0
      %2876 = vmatpush1.bf16.msra.mxu0 0
      %2877 = vmatprep.subr.bf16.mxu0 0
      %2878 = vmatpush1.bf16.msra.mxu0 0
      %2879 = vmatprep.subr.bf16.mxu0 0
      %2880 = vmatpush1.bf16.msra.mxu0 0
      %2881 = vmatprep.subr.bf16.mxu0 0
      %2882 = vmatpush1.bf16.msra.mxu0 0
      %2883 = vmatprep.subr.bf16.mxu0 0
      %2884 = vmatpush1.bf16.msra.mxu0 0
      %2885 = vmatprep.subr.bf16.mxu0 0
      %2886 = vmatpush1.bf16.msra.mxu0 0
      %2887 = vmatprep.subr.bf16.mxu0 0
      %2888 = vmatpush1.bf16.msra.mxu0 0
      %2889 = vmatprep.subr.bf16.mxu0 0
      %2890 = vmatpush1.bf16.msra.mxu0 0
      %2891 = vmatprep.subr.bf16.mxu0 0
      %2892 = vmatpush1.bf16.msra.mxu0 0
      %2893 = vmatprep.mubr.bf16.mxu0 0
      %2894 = vmatmul.mubr.bf16.gmra.mrb[0].mxu0 %v2811
      %v2895 = vpop.f32.mrb[0].mxu0
      %v2896 = vadd.f32 0.0, %v2895
      %v2897 = vpop.f32.mrb[0].mxu0
      %v2898 = vpop.f32.mrb[0].mxu0
      %v2899 = vadd.f32 0.0, %v2898
      %v2900 = vpop.f32.mrb[0].mxu0
      %2901 = vmatprep.mubr.bf16.mxu0 0
      %2902 = vmatmul.mubr.bf16.gmra.mrb[0].mxu0 %v2814
      %v2903 = vpop.f32.mrb[0].mxu0
      %v2904 = vadd.f32 0.0, %v2903
      %v2905 = vpop.f32.mrb[0].mxu0
      %v2906 = vpop.f32.mrb[0].mxu0
      %v2907 = vadd.f32 0.0, %v2906
      %v2908 = vpop.f32.mrb[0].mxu0
      %2909 = vmatprep.mubr.bf16.mxu0 0
      %2910 = vmatmul.mubr.bf16.gmra.mrb[0].mxu0 %v2817
      %v2911 = vpop.f32.mrb[0].mxu0
      %v2912 = vadd.f32 0.0, %v2911
      %v2913 = vpop.f32.mrb[0].mxu0
      %v2914 = vpop.f32.mrb[0].mxu0
      %v2915 = vadd.f32 0.0, %v2914
      %v2916 = vpop.f32.mrb[0].mxu0
      %2917 = vmatprep.mubr.bf16.mxu0 0
      %2918 = vmatmul.mubr.bf16.gmra.mrb[0].mxu0 %v2820
      %v2919 = vpop.f32.mrb[0].mxu0
      %v2920 = vadd.f32 0.0, %v2919
      %v2921 = vpop.f32.mrb[0].mxu0
      %v2922 = vpop.f32.mrb[0].mxu0
      %v2923 = vadd.f32 0.0, %v2922
      %v2924 = vpop.f32.mrb[0].mxu0
      %2925 = vmatprep.mubr.bf16.mxu0 0
      %2926 = vmatmul.mubr.bf16.gmra.mrb[0].mxu0 %v2823
      %v2927 = vpop.f32.mrb[0].mxu0
      %v2928 = vadd.f32 0.0, %v2927
      %v2929 = vpop.f32.mrb[0].mxu0
      %v2930 = vpop.f32.mrb[0].mxu0
      %v2931 = vadd.f32 0.0, %v2930
      %v2932 = vpop.f32.mrb[0].mxu0
      %2933 = vmatprep.mubr.bf16.mxu0 0
      %2934 = vmatmul.mubr.bf16.gmra.mrb[0].mxu0 %v2826
      %v2935 = vpop.f32.mrb[0].mxu0
      %v2936 = vadd.f32 0.0, %v2935
      %v2937 = vpop.f32.mrb[0].mxu0
      %v2938 = vpop.f32.mrb[0].mxu0
      %v2939 = vadd.f32 0.0, %v2938
      %v2940 = vpop.f32.mrb[0].mxu0
      %2941 = vmatprep.mubr.bf16.mxu0 0
      %2942 = vmatmul.mubr.bf16.gmra.mrb[0].mxu0 %v2829
      %v2943 = vpop.f32.mrb[0].mxu0
      %v2944 = vadd.f32 0.0, %v2943
      %v2945 = vpop.f32.mrb[0].mxu0
      %v2946 = vpop.f32.mrb[0].mxu0
      %v2947 = vadd.f32 0.0, %v2946
      %v2948 = vpop.f32.mrb[0].mxu0
      %2949 = vmatprep.mubr.bf16.mxu0 0
      %2950 = vmatmul.mubr.bf16.gmra.mrb[0].mxu0 %v2832
      %v2951 = vpop.f32.mrb[0].mxu0
      %v2952 = vadd.f32 0.0, %v2951
      %v2953 = vpop.f32.mrb[0].mxu0
      %v2954 = vpop.f32.mrb[0].mxu0
      %v2955 = vadd.f32 0.0, %v2954
      %v2956 = vpop.f32.mrb[0].mxu0
      %2957 = vmatprep.mubr.bf16.mxu0 0
      %2958 = vmatmul.mubr.bf16.gmra.mrb[0].mxu0 %v2835
      %v2959 = vpop.f32.mrb[0].mxu0
      %v2960 = vadd.f32 0.0, %v2959
      %v2961 = vpop.f32.mrb[0].mxu0
      %v2962 = vpop.f32.mrb[0].mxu0
      %v2963 = vadd.f32 0.0, %v2962
      %v2964 = vpop.f32.mrb[0].mxu0
      %2965 = vmatprep.mubr.bf16.mxu0 0
      %2966 = vmatmul.mubr.bf16.gmra.mrb[0].mxu0 %v2838
      %v2967 = vpop.f32.mrb[0].mxu0
      %v2968 = vadd.f32 0.0, %v2967
      %v2969 = vpop.f32.mrb[0].mxu0
      %v2970 = vpop.f32.mrb[0].mxu0
      %v2971 = vadd.f32 0.0, %v2970
      %v2972 = vpop.f32.mrb[0].mxu0
      %2973 = vmatprep.mubr.bf16.mxu0 0
      %2974 = vmatmul.mubr.bf16.gmra.mrb[0].mxu0 %v2841
      %v2975 = vpop.f32.mrb[0].mxu0
      %v2976 = vadd.f32 0.0, %v2975
      %v2977 = vpop.f32.mrb[0].mxu0
      %v2978 = vpop.f32.mrb[0].mxu0
      %v2979 = vadd.f32 0.0, %v2978
      %v2980 = vpop.f32.mrb[0].mxu0
      %2981 = vmatprep.mubr.bf16.mxu0 0
      %2982 = vmatmul.mubr.bf16.gmra.mrb[0].mxu0 %v2844
      %v2983 = vpop.f32.mrb[0].mxu0
      %v2984 = vadd.f32 0.0, %v2983
      %v2985 = vpop.f32.mrb[0].mxu0
      %v2986 = vpop.f32.mrb[0].mxu0
      %v2987 = vadd.f32 0.0, %v2986
      %v2988 = vpop.f32.mrb[0].mxu0
      %2989 = vmatprep.mubr.bf16.mxu0 0
      %2990 = vmatmul.mubr.bf16.gmra.mrb[0].mxu0 %v2847
      %v2991 = vpop.f32.mrb[0].mxu0
      %v2992 = vadd.f32 0.0, %v2991
      %v2993 = vpop.f32.mrb[0].mxu0
      %v2994 = vpop.f32.mrb[0].mxu0
      %v2995 = vadd.f32 0.0, %v2994
      %v2996 = vpop.f32.mrb[0].mxu0
      %2997 = vmatprep.mubr.bf16.mxu0 0
      %2998 = vmatmul.mubr.bf16.gmra.mrb[0].mxu0 %v2850
      %v2999 = vpop.f32.mrb[0].mxu0
      %v3000 = vadd.f32 0.0, %v2999
      %v3001 = vpop.f32.mrb[0].mxu0
      %v3002 = vpop.f32.mrb[0].mxu0
      %v3003 = vadd.f32 0.0, %v3002
      %v3004 = vpop.f32.mrb[0].mxu0
      %3005 = vmatprep.mubr.bf16.mxu0 0
      %3006 = vmatmul.mubr.bf16.gmra.mrb[0].mxu0 %v2853
      %v3007 = vpop.f32.mrb[0].mxu0
      %v3008 = vadd.f32 0.0, %v3007
      %v3009 = vpop.f32.mrb[0].mxu0
      %v3010 = vpop.f32.mrb[0].mxu0
      %v3011 = vadd.f32 0.0, %v3010
      %v3012 = vpop.f32.mrb[0].mxu0
      %3013 = vmatprep.mubr.bf16.mxu0 0
      %3014 = vmatmul.mubr.bf16.gmra.mrb[0].mxu0 %v2856
      %v3015 = vpop.f32.mrb[0].mxu0
      %v3016 = vadd.f32 0.0, %v3015
      %v3017 = vpop.f32.mrb[0].mxu0
      %v3018 = vpop.f32.mrb[0].mxu0
      %v3019 = vadd.f32 0.0, %v3018
      %v3020 = vpop.f32.mrb[0].mxu0
      %3021 = vdwg.mxu0
      %v3022 = vadd.f32 %v2623, %v2896
      %v3023 = vadd.f32 %v2624, %v2899
      %v3024 = vadd.f32 %v2625, %v2904
      %v3025 = vadd.f32 %v2626, %v2907
      %v3026 = vadd.f32 %v2627, %v2912
      %v3027 = vadd.f32 %v2628, %v2915
      %v3028 = vadd.f32 %v2629, %v2920
      %v3029 = vadd.f32 %v2630, %v2923
      %v3030 = vadd.f32 %v2631, %v2928
      %v3031 = vadd.f32 %v2632, %v2931
      %v3032 = vadd.f32 %v2633, %v2936
      %v3033 = vadd.f32 %v2634, %v2939
      %v3034 = vadd.f32 %v2635, %v2944
      %v3035 = vadd.f32 %v2636, %v2947
      %v3036 = vadd.f32 %v2637, %v2952
      %v3037 = vadd.f32 %v2638, %v2955
      %v3038 = vadd.f32 %v2639, %v2960
      %v3039 = vadd.f32 %v2640, %v2963
      %v3040 = vadd.f32 %v2641, %v2968
      %v3041 = vadd.f32 %v2642, %v2971
      %v3042 = vadd.f32 %v2643, %v2976
      %v3043 = vadd.f32 %v2644, %v2979
      %v3044 = vadd.f32 %v2645, %v2984
      %v3045 = vadd.f32 %v2646, %v2987
      %v3046 = vadd.f32 %v2647, %v2992
      %v3047 = vadd.f32 %v2648, %v2995
      %v3048 = vadd.f32 %v2649, %v3000
      %v3049 = vadd.f32 %v2650, %v3003
      %v3050 = vadd.f32 %v2651, %v3008
      %v3051 = vadd.f32 %v2652, %v3011
      %v3052 = vadd.f32 %v2653, %v3016
      %v3053 = vadd.f32 %v2654, %v3019
      %s3054 = scalar_lea.vmem %s1, 16
      %v3055 = vld [vmem:[%s3054] sm:$0x3]
      %vm3056 = vcmask 1044480
      %v3057 = vrot.slane %v2361, 3
      %v3058 = vrot.slane %v2362, 3
      %v3059 = vsel %vm3056, %v3057, %v3058
      %v3060 = vrot.slane %v2363, 3
      %v3061 = vsel %vm3056, %v3058, %v3060
      %v3062 = vrot.slane %v2364, 3
      %v3063 = vsel %vm3056, %v3060, %v3062
      %v3064 = vrot.slane %v2365, 3
      %v3065 = vsel %vm3056, %v3062, %v3064
      %v3066 = vrot.slane %v2366, 3
      %v3067 = vsel %vm3056, %v3064, %v3066
      %v3068 = vrot.slane %v2367, 3
      %v3069 = vsel %vm3056, %v3066, %v3068
      %v3070 = vrot.slane %v2368, 3
      %v3071 = vsel %vm3056, %v3068, %v3070
      %v3072 = vrot.slane %v2369, 3
      %v3073 = vsel %vm3056, %v3070, %v3072
      %v3074 = vrot.slane %v2370, 3
      %v3075 = vsel %vm3056, %v3072, %v3074
      %v3076 = vrot.slane %v2371, 3
      %v3077 = vsel %vm3056, %v3074, %v3076
      %v3078 = vrot.slane %v2372, 3
      %v3079 = vsel %vm3056, %v3076, %v3078
      %v3080 = vrot.slane %v2373, 3
      %v3081 = vsel %vm3056, %v3078, %v3080
      %v3082 = vrot.slane %v2374, 3
      %v3083 = vsel %vm3056, %v3080, %v3082
      %v3084 = vrot.slane %v2375, 3
      %v3085 = vsel %vm3056, %v3082, %v3084
      %v3086 = vrot.slane %v2376, 3
      %v3087 = vsel %vm3056, %v3084, %v3086
      %v3088 = vrot.slane %v2377, 3
      %v3089 = vsel %vm3056, %v3086, %v3088
      %v3091 = vsel %vm486, %v3059, 0
      %v3094 = vsel %vm486, %v3061, 0
      %v3097 = vsel %vm486, %v3063, 0
      %v3100 = vsel %vm486, %v3065, 0
      %v3103 = vsel %vm486, %v3067, 0
      %v3106 = vsel %vm486, %v3069, 0
      %v3109 = vsel %vm486, %v3071, 0
      %v3112 = vsel %vm486, %v3073, 0
      %v3115 = vsel %vm486, %v3075, 0
      %v3118 = vsel %vm486, %v3077, 0
      %v3121 = vsel %vm486, %v3079, 0
      %v3124 = vsel %vm486, %v3081, 0
      %v3127 = vsel %vm486, %v3083, 0
      %v3130 = vsel %vm486, %v3085, 0
      %v3133 = vsel %vm486, %v3087, 0
      %v3136 = vsel %vm486, %v3089, 0
      %v3139 = vsel %vm535, %v3055, 0
      %3141 = vmatprep.subr.bf16.mxu0 0
      %3142 = vmatpush1.bf16.msra.mxu0 %v3139
      %3143 = vmatprep.subr.bf16.mxu0 0
      %3144 = vmatpush1.bf16.msra.mxu0 0
      %3145 = vmatprep.subr.bf16.mxu0 0
      %3146 = vmatpush1.bf16.msra.mxu0 0
      %3147 = vmatprep.subr.bf16.mxu0 0
      %3148 = vmatpush1.bf16.msra.mxu0 0
      %3149 = vmatprep.subr.bf16.mxu0 0
      %3150 = vmatpush1.bf16.msra.mxu0 0
      %3151 = vmatprep.subr.bf16.mxu0 0
      %3152 = vmatpush1.bf16.msra.mxu0 0
      %3153 = vmatprep.subr.bf16.mxu0 0
      %3154 = vmatpush1.bf16.msra.mxu0 0
      %3155 = vmatprep.subr.bf16.mxu0 0
      %3156 = vmatpush1.bf16.msra.mxu0 0
      %3157 = vmatprep.subr.bf16.mxu0 0
      %3158 = vmatpush1.bf16.msra.mxu0 0
      %3159 = vmatprep.subr.bf16.mxu0 0
      %3160 = vmatpush1.bf16.msra.mxu0 0
      %3161 = vmatprep.subr.bf16.mxu0 0
      %3162 = vmatpush1.bf16.msra.mxu0 0
      %3163 = vmatprep.subr.bf16.mxu0 0
      %3164 = vmatpush1.bf16.msra.mxu0 0
      %3165 = vmatprep.subr.bf16.mxu0 0
      %3166 = vmatpush1.bf16.msra.mxu0 0
      %3167 = vmatprep.subr.bf16.mxu0 0
      %3168 = vmatpush1.bf16.msra.mxu0 0
      %3169 = vmatprep.subr.bf16.mxu0 0
      %3170 = vmatpush1.bf16.msra.mxu0 0
      %3171 = vmatprep.subr.bf16.mxu0 0
      %3172 = vmatpush1.bf16.msra.mxu0 0
      %3173 = vmatprep.mubr.bf16.mxu0 0
      %3174 = vmatmul.mubr.bf16.gmra.mrb[0].mxu0 %v3091
      %v3175 = vpop.f32.mrb[0].mxu0
      %v3176 = vadd.f32 0.0, %v3175
      %v3177 = vpop.f32.mrb[0].mxu0
      %v3178 = vpop.f32.mrb[0].mxu0
      %v3179 = vadd.f32 0.0, %v3178
      %v3180 = vpop.f32.mrb[0].mxu0
      %3181 = vmatprep.mubr.bf16.mxu0 0
      %3182 = vmatmul.mubr.bf16.gmra.mrb[0].mxu0 %v3094
      %v3183 = vpop.f32.mrb[0].mxu0
      %v3184 = vadd.f32 0.0, %v3183
      %v3185 = vpop.f32.mrb[0].mxu0
      %v3186 = vpop.f32.mrb[0].mxu0
      %v3187 = vadd.f32 0.0, %v3186
      %v3188 = vpop.f32.mrb[0].mxu0
      %3189 = vmatprep.mubr.bf16.mxu0 0
      %3190 = vmatmul.mubr.bf16.gmra.mrb[0].mxu0 %v3097
      %v3191 = vpop.f32.mrb[0].mxu0
      %v3192 = vadd.f32 0.0, %v3191
      %v3193 = vpop.f32.mrb[0].mxu0
      %v3194 = vpop.f32.mrb[0].mxu0
      %v3195 = vadd.f32 0.0, %v3194
      %v3196 = vpop.f32.mrb[0].mxu0
      %3197 = vmatprep.mubr.bf16.mxu0 0
      %3198 = vmatmul.mubr.bf16.gmra.mrb[0].mxu0 %v3100
      %v3199 = vpop.f32.mrb[0].mxu0
      %v3200 = vadd.f32 0.0, %v3199
      %v3201 = vpop.f32.mrb[0].mxu0
      %v3202 = vpop.f32.mrb[0].mxu0
      %v3203 = vadd.f32 0.0, %v3202
      %v3204 = vpop.f32.mrb[0].mxu0
      %3205 = vmatprep.mubr.bf16.mxu0 0
      %3206 = vmatmul.mubr.bf16.gmra.mrb[0].mxu0 %v3103
      %v3207 = vpop.f32.mrb[0].mxu0
      %v3208 = vadd.f32 0.0, %v3207
      %v3209 = vpop.f32.mrb[0].mxu0
      %v3210 = vpop.f32.mrb[0].mxu0
      %v3211 = vadd.f32 0.0, %v3210
      %v3212 = vpop.f32.mrb[0].mxu0
      %3213 = vmatprep.mubr.bf16.mxu0 0
      %3214 = vmatmul.mubr.bf16.gmra.mrb[0].mxu0 %v3106
      %v3215 = vpop.f32.mrb[0].mxu0
      %v3216 = vadd.f32 0.0, %v3215
      %v3217 = vpop.f32.mrb[0].mxu0
      %v3218 = vpop.f32.mrb[0].mxu0
      %v3219 = vadd.f32 0.0, %v3218
      %v3220 = vpop.f32.mrb[0].mxu0
      %3221 = vmatprep.mubr.bf16.mxu0 0
      %3222 = vmatmul.mubr.bf16.gmra.mrb[0].mxu0 %v3109
      %v3223 = vpop.f32.mrb[0].mxu0
      %v3224 = vadd.f32 0.0, %v3223
      %v3225 = vpop.f32.mrb[0].mxu0
      %v3226 = vpop.f32.mrb[0].mxu0
      %v3227 = vadd.f32 0.0, %v3226
      %v3228 = vpop.f32.mrb[0].mxu0
      %3229 = vmatprep.mubr.bf16.mxu0 0
      %3230 = vmatmul.mubr.bf16.gmra.mrb[0].mxu0 %v3112
      %v3231 = vpop.f32.mrb[0].mxu0
      %v3232 = vadd.f32 0.0, %v3231
      %v3233 = vpop.f32.mrb[0].mxu0
      %v3234 = vpop.f32.mrb[0].mxu0
      %v3235 = vadd.f32 0.0, %v3234
      %v3236 = vpop.f32.mrb[0].mxu0
      %3237 = vmatprep.mubr.bf16.mxu0 0
      %3238 = vmatmul.mubr.bf16.gmra.mrb[0].mxu0 %v3115
      %v3239 = vpop.f32.mrb[0].mxu0
      %v3240 = vadd.f32 0.0, %v3239
      %v3241 = vpop.f32.mrb[0].mxu0
      %v3242 = vpop.f32.mrb[0].mxu0
      %v3243 = vadd.f32 0.0, %v3242
      %v3244 = vpop.f32.mrb[0].mxu0
      %3245 = vmatprep.mubr.bf16.mxu0 0
      %3246 = vmatmul.mubr.bf16.gmra.mrb[0].mxu0 %v3118
      %v3247 = vpop.f32.mrb[0].mxu0
      %v3248 = vadd.f32 0.0, %v3247
      %v3249 = vpop.f32.mrb[0].mxu0
      %v3250 = vpop.f32.mrb[0].mxu0
      %v3251 = vadd.f32 0.0, %v3250
      %v3252 = vpop.f32.mrb[0].mxu0
      %3253 = vmatprep.mubr.bf16.mxu0 0
      %3254 = vmatmul.mubr.bf16.gmra.mrb[0].mxu0 %v3121
      %v3255 = vpop.f32.mrb[0].mxu0
      %v3256 = vadd.f32 0.0, %v3255
      %v3257 = vpop.f32.mrb[0].mxu0
      %v3258 = vpop.f32.mrb[0].mxu0
      %v3259 = vadd.f32 0.0, %v3258
      %v3260 = vpop.f32.mrb[0].mxu0
      %3261 = vmatprep.mubr.bf16.mxu0 0
      %3262 = vmatmul.mubr.bf16.gmra.mrb[0].mxu0 %v3124
      %v3263 = vpop.f32.mrb[0].mxu0
      %v3264 = vadd.f32 0.0, %v3263
      %v3265 = vpop.f32.mrb[0].mxu0
      %v3266 = vpop.f32.mrb[0].mxu0
      %v3267 = vadd.f32 0.0, %v3266
      %v3268 = vpop.f32.mrb[0].mxu0
      %3269 = vmatprep.mubr.bf16.mxu0 0
      %3270 = vmatmul.mubr.bf16.gmra.mrb[0].mxu0 %v3127
      %v3271 = vpop.f32.mrb[0].mxu0
      %v3272 = vadd.f32 0.0, %v3271
      %v3273 = vpop.f32.mrb[0].mxu0
      %v3274 = vpop.f32.mrb[0].mxu0
      %v3275 = vadd.f32 0.0, %v3274
      %v3276 = vpop.f32.mrb[0].mxu0
      %3277 = vmatprep.mubr.bf16.mxu0 0
      %3278 = vmatmul.mubr.bf16.gmra.mrb[0].mxu0 %v3130
      %v3279 = vpop.f32.mrb[0].mxu0
      %v3280 = vadd.f32 0.0, %v3279
      %v3281 = vpop.f32.mrb[0].mxu0
      %v3282 = vpop.f32.mrb[0].mxu0
      %v3283 = vadd.f32 0.0, %v3282
      %v3284 = vpop.f32.mrb[0].mxu0
      %3285 = vmatprep.mubr.bf16.mxu0 0
      %3286 = vmatmul.mubr.bf16.gmra.mrb[0].mxu0 %v3133
      %v3287 = vpop.f32.mrb[0].mxu0
      %v3288 = vadd.f32 0.0, %v3287
      %v3289 = vpop.f32.mrb[0].mxu0
      %v3290 = vpop.f32.mrb[0].mxu0
      %v3291 = vadd.f32 0.0, %v3290
      %v3292 = vpop.f32.mrb[0].mxu0
      %3293 = vmatprep.mubr.bf16.mxu0 0
      %3294 = vmatmul.mubr.bf16.gmra.mrb[0].mxu0 %v3136
      %v3295 = vpop.f32.mrb[0].mxu0
      %v3296 = vadd.f32 0.0, %v3295
      %v3297 = vpop.f32.mrb[0].mxu0
      %v3298 = vpop.f32.mrb[0].mxu0
      %v3299 = vadd.f32 0.0, %v3298
      %v3300 = vpop.f32.mrb[0].mxu0
      %3301 = vdwg.mxu0
      %v3302 = vadd.f32 %v3022, %v3176
      %v3303 = vadd.f32 %v3023, %v3179
      %v3304 = vadd.f32 %v3024, %v3184
      %v3305 = vadd.f32 %v3025, %v3187
      %v3306 = vadd.f32 %v3026, %v3192
      %v3307 = vadd.f32 %v3027, %v3195
      %v3308 = vadd.f32 %v3028, %v3200
      %v3309 = vadd.f32 %v3029, %v3203
      %v3310 = vadd.f32 %v3030, %v3208
      %v3311 = vadd.f32 %v3031, %v3211
      %v3312 = vadd.f32 %v3032, %v3216
      %v3313 = vadd.f32 %v3033, %v3219
      %v3314 = vadd.f32 %v3034, %v3224
      %v3315 = vadd.f32 %v3035, %v3227
      %v3316 = vadd.f32 %v3036, %v3232
      %v3317 = vadd.f32 %v3037, %v3235
      %v3318 = vadd.f32 %v3038, %v3240
      %v3319 = vadd.f32 %v3039, %v3243
      %v3320 = vadd.f32 %v3040, %v3248
      %v3321 = vadd.f32 %v3041, %v3251
      %v3322 = vadd.f32 %v3042, %v3256
      %v3323 = vadd.f32 %v3043, %v3259
      %v3324 = vadd.f32 %v3044, %v3264
      %v3325 = vadd.f32 %v3045, %v3267
      %v3326 = vadd.f32 %v3046, %v3272
      %v3327 = vadd.f32 %v3047, %v3275
      %v3328 = vadd.f32 %v3048, %v3280
      %v3329 = vadd.f32 %v3049, %v3283
      %v3330 = vadd.f32 %v3050, %v3288
      %v3331 = vadd.f32 %v3051, %v3291
      %v3332 = vadd.f32 %v3052, %v3296
      %v3333 = vadd.f32 %v3053, %v3299
      %s3334 = sadd.s32 %s229, 320
      %s3335 = sshra.s32 %s3334, 3
      %s3336 = sand.u32 %s3334, 7
      %s3337 = smul.addr %s3335, 4
      %s3338 = scalar_lea.vmem %s0, %s3337
      %v3339 = vld [vmem:[%s3338] sm:$0xf]
      %v3340 = vld [vmem:[%s3338 + $0x4] sm:$0xf]
      %v3341 = vld [vmem:[%s3338 + $0x8] sm:$0xf]
      %v3342 = vld [vmem:[%s3338 + $0xc] sm:$0xf]
      %v3343 = vld [vmem:[%s3338 + $0x10] sm:$0xf]
      %v3344 = vld [vmem:[%s3338 + $0x14] sm:$0xf]
      %v3345 = vld [vmem:[%s3338 + $0x18] sm:$0xf]
      %v3346 = vld [vmem:[%s3338 + $0x1c] sm:$0xf]
      %v3347 = vld [vmem:[%s3338 + $0x20] sm:$0xf]
      %v3348 = vld [vmem:[%s3338 + $0x24] sm:$0xf]
      %v3349 = vld [vmem:[%s3338 + $0x28] sm:$0xf]
      %v3350 = vld [vmem:[%s3338 + $0x2c] sm:$0xf]
      %v3351 = vld [vmem:[%s3338 + $0x30] sm:$0xf]
      %v3352 = vld [vmem:[%s3338 + $0x34] sm:$0xf]
      %v3353 = vld [vmem:[%s3338 + $0x38] sm:$0xf]
      %v3354 = vld [vmem:[%s3338 + $0x3c] sm:$0xf]
      %v3355 = vld [vmem:[%s3338 + $0x40] sm:$0xf]
      %v3356 = vld [vmem:[%s3338 + $0x44] sm:$0xf]
      %v3357 = vld [vmem:[%s3338 + $0x48] sm:$0xf]
      %v3358 = vld [vmem:[%s3338 + $0x4c] sm:$0xf]
      %v3359 = vld [vmem:[%s3338 + $0x50] sm:$0xf]
      %v3360 = vld [vmem:[%s3338 + $0x54] sm:$0xf]
      %v3361 = vld [vmem:[%s3338 + $0x58] sm:$0xf]
      %v3362 = vld [vmem:[%s3338 + $0x5c] sm:$0xf]
      %v3363 = vld [vmem:[%s3338 + $0x60] sm:$0xf]
      %v3364 = vld [vmem:[%s3338 + $0x64] sm:$0xf]
      %v3365 = vld [vmem:[%s3338 + $0x68] sm:$0xf]
      %v3366 = vld [vmem:[%s3338 + $0x6c] sm:$0xf]
      %v3367 = vld [vmem:[%s3338 + $0x70] sm:$0xf]
      %v3368 = vld [vmem:[%s3338 + $0x74] sm:$0xf]
      %v3369 = vld [vmem:[%s3338 + $0x78] sm:$0xf]
      %v3370 = vld [vmem:[%s3338 + $0x7c] sm:$0xf]
      %v3371 = vld [vmem:[%s3338 + $0x80] sm:$0xf]
      %s3372 = scalar_lea.vmem %s1, 18
      %v3373 = vld [vmem:[%s3372] sm:$0x3]
      %v3407 = vunpack.c.l.b16 %v3339
      %v3408 = vunpack.c.l.b16 %v3340
      %v3409 = vunpack.c.l.b16 %v3341
      %v3410 = vunpack.c.l.b16 %v3342
      %v3411 = vunpack.c.l.b16 %v3343
      %v3412 = vunpack.c.l.b16 %v3344
      %v3413 = vunpack.c.l.b16 %v3345
      %v3414 = vunpack.c.l.b16 %v3346
      %v3415 = vunpack.c.l.b16 %v3347
      %v3416 = vunpack.c.l.b16 %v3348
      %v3417 = vunpack.c.l.b16 %v3349
      %v3418 = vunpack.c.l.b16 %v3350
      %v3419 = vunpack.c.l.b16 %v3351
      %v3420 = vunpack.c.l.b16 %v3352
      %v3421 = vunpack.c.l.b16 %v3353
      %v3422 = vunpack.c.l.b16 %v3354
      %v3423 = vunpack.c.l.b16 %v3355
      %v3424 = vunpack.c.l.b16 %v3356
      %v3425 = vunpack.c.l.b16 %v3357
      %v3426 = vunpack.c.l.b16 %v3358
      %v3427 = vunpack.c.l.b16 %v3359
      %v3428 = vunpack.c.l.b16 %v3360
      %v3429 = vunpack.c.l.b16 %v3361
      %v3430 = vunpack.c.l.b16 %v3362
      %v3431 = vunpack.c.l.b16 %v3363
      %v3432 = vunpack.c.l.b16 %v3364
      %v3433 = vunpack.c.l.b16 %v3365
      %v3434 = vunpack.c.l.b16 %v3366
      %v3435 = vunpack.c.l.b16 %v3367
      %v3436 = vunpack.c.l.b16 %v3368
      %v3437 = vunpack.c.l.b16 %v3369
      %v3438 = vunpack.c.l.b16 %v3370
      %v3439 = vunpack.c.l.b16 %v3371
      %v3440 = vpack.c.b16 %v3408, %v3407
      %v3441 = vpack.c.b16 %v3410, %v3409
      %v3442 = vpack.c.b16 %v3412, %v3411
      %v3443 = vpack.c.b16 %v3414, %v3413
      %v3444 = vpack.c.b16 %v3416, %v3415
      %v3445 = vpack.c.b16 %v3418, %v3417
      %v3446 = vpack.c.b16 %v3420, %v3419
      %v3447 = vpack.c.b16 %v3422, %v3421
      %v3448 = vpack.c.b16 %v3424, %v3423
      %v3449 = vpack.c.b16 %v3426, %v3425
      %v3450 = vpack.c.b16 %v3428, %v3427
      %v3451 = vpack.c.b16 %v3430, %v3429
      %v3452 = vpack.c.b16 %v3432, %v3431
      %v3453 = vpack.c.b16 %v3434, %v3433
      %v3454 = vpack.c.b16 %v3436, %v3435
      %v3455 = vpack.c.b16 %v3438, %v3437
      %v3456 = vpack.c.b16 %v3439, %v3439
      %v3457 = vrot.slane %v3440, 2
      %v3458 = vrot.slane %v3441, 2
      %v3459 = vsel %vm1977, %v3457, %v3458
      %v3460 = vrot.slane %v3442, 2
      %v3461 = vsel %vm1977, %v3458, %v3460
      %v3462 = vrot.slane %v3443, 2
      %v3463 = vsel %vm1977, %v3460, %v3462
      %v3464 = vrot.slane %v3444, 2
      %v3465 = vsel %vm1977, %v3462, %v3464
      %v3466 = vrot.slane %v3445, 2
      %v3467 = vsel %vm1977, %v3464, %v3466
      %v3468 = vrot.slane %v3446, 2
      %v3469 = vsel %vm1977, %v3466, %v3468
      %v3470 = vrot.slane %v3447, 2
      %v3471 = vsel %vm1977, %v3468, %v3470
      %v3472 = vrot.slane %v3448, 2
      %v3473 = vsel %vm1977, %v3470, %v3472
      %v3474 = vrot.slane %v3449, 2
      %v3475 = vsel %vm1977, %v3472, %v3474
      %v3476 = vrot.slane %v3450, 2
      %v3477 = vsel %vm1977, %v3474, %v3476
      %v3478 = vrot.slane %v3451, 2
      %v3479 = vsel %vm1977, %v3476, %v3478
      %v3480 = vrot.slane %v3452, 2
      %v3481 = vsel %vm1977, %v3478, %v3480
      %v3482 = vrot.slane %v3453, 2
      %v3483 = vsel %vm1977, %v3480, %v3482
      %v3484 = vrot.slane %v3454, 2
      %v3485 = vsel %vm1977, %v3482, %v3484
      %v3486 = vrot.slane %v3455, 2
      %v3487 = vsel %vm1977, %v3484, %v3486
      %v3488 = vrot.slane %v3456, 2
      %v3489 = vsel %vm1977, %v3486, %v3488
      %v3491 = vsel %vm486, %v3459, 0
      %v3494 = vsel %vm486, %v3461, 0
      %v3497 = vsel %vm486, %v3463, 0
      %v3500 = vsel %vm486, %v3465, 0
      %v3503 = vsel %vm486, %v3467, 0
      %v3506 = vsel %vm486, %v3469, 0
      %v3509 = vsel %vm486, %v3471, 0
      %v3512 = vsel %vm486, %v3473, 0
      %v3515 = vsel %vm486, %v3475, 0
      %v3518 = vsel %vm486, %v3477, 0
      %v3521 = vsel %vm486, %v3479, 0
      %v3524 = vsel %vm486, %v3481, 0
      %v3527 = vsel %vm486, %v3483, 0
      %v3530 = vsel %vm486, %v3485, 0
      %v3533 = vsel %vm486, %v3487, 0
      %v3536 = vsel %vm486, %v3489, 0
      %v3539 = vsel %vm535, %v3373, 0
      %3541 = vmatprep.subr.bf16.mxu0 0
      %3542 = vmatpush1.bf16.msra.mxu0 %v3539
      %3543 = vmatprep.subr.bf16.mxu0 0
      %3544 = vmatpush1.bf16.msra.mxu0 0
      %3545 = vmatprep.subr.bf16.mxu0 0
      %3546 = vmatpush1.bf16.msra.mxu0 0
      %3547 = vmatprep.subr.bf16.mxu0 0
      %3548 = vmatpush1.bf16.msra.mxu0 0
      %3549 = vmatprep.subr.bf16.mxu0 0
      %3550 = vmatpush1.bf16.msra.mxu0 0
      %3551 = vmatprep.subr.bf16.mxu0 0
      %3552 = vmatpush1.bf16.msra.mxu0 0
      %3553 = vmatprep.subr.bf16.mxu0 0
      %3554 = vmatpush1.bf16.msra.mxu0 0
      %3555 = vmatprep.subr.bf16.mxu0 0
      %3556 = vmatpush1.bf16.msra.mxu0 0
      %3557 = vmatprep.subr.bf16.mxu0 0
      %3558 = vmatpush1.bf16.msra.mxu0 0
      %3559 = vmatprep.subr.bf16.mxu0 0
      %3560 = vmatpush1.bf16.msra.mxu0 0
      %3561 = vmatprep.subr.bf16.mxu0 0
      %3562 = vmatpush1.bf16.msra.mxu0 0
      %3563 = vmatprep.subr.bf16.mxu0 0
      %3564 = vmatpush1.bf16.msra.mxu0 0
      %3565 = vmatprep.subr.bf16.mxu0 0
      %3566 = vmatpush1.bf16.msra.mxu0 0
      %3567 = vmatprep.subr.bf16.mxu0 0
      %3568 = vmatpush1.bf16.msra.mxu0 0
      %3569 = vmatprep.subr.bf16.mxu0 0
      %3570 = vmatpush1.bf16.msra.mxu0 0
      %3571 = vmatprep.subr.bf16.mxu0 0
      %3572 = vmatpush1.bf16.msra.mxu0 0
      %3573 = vmatprep.mubr.bf16.mxu0 0
      %3574 = vmatmul.mubr.bf16.gmra.mrb[0].mxu0 %v3491
      %v3575 = vpop.f32.mrb[0].mxu0
      %v3576 = vadd.f32 0.0, %v3575
      %v3577 = vpop.f32.mrb[0].mxu0
      %v3578 = vpop.f32.mrb[0].mxu0
      %v3579 = vadd.f32 0.0, %v3578
      %v3580 = vpop.f32.mrb[0].mxu0
      %3581 = vmatprep.mubr.bf16.mxu0 0
      %3582 = vmatmul.mubr.bf16.gmra.mrb[0].mxu0 %v3494
      %v3583 = vpop.f32.mrb[0].mxu0
      %v3584 = vadd.f32 0.0, %v3583
      %v3585 = vpop.f32.mrb[0].mxu0
      %v3586 = vpop.f32.mrb[0].mxu0
      %v3587 = vadd.f32 0.0, %v3586
      %v3588 = vpop.f32.mrb[0].mxu0
      %3589 = vmatprep.mubr.bf16.mxu0 0
      %3590 = vmatmul.mubr.bf16.gmra.mrb[0].mxu0 %v3497
      %v3591 = vpop.f32.mrb[0].mxu0
      %v3592 = vadd.f32 0.0, %v3591
      %v3593 = vpop.f32.mrb[0].mxu0
      %v3594 = vpop.f32.mrb[0].mxu0
      %v3595 = vadd.f32 0.0, %v3594
      %v3596 = vpop.f32.mrb[0].mxu0
      %3597 = vmatprep.mubr.bf16.mxu0 0
      %3598 = vmatmul.mubr.bf16.gmra.mrb[0].mxu0 %v3500
      %v3599 = vpop.f32.mrb[0].mxu0
      %v3600 = vadd.f32 0.0, %v3599
      %v3601 = vpop.f32.mrb[0].mxu0
      %v3602 = vpop.f32.mrb[0].mxu0
      %v3603 = vadd.f32 0.0, %v3602
      %v3604 = vpop.f32.mrb[0].mxu0
      %3605 = vmatprep.mubr.bf16.mxu0 0
      %3606 = vmatmul.mubr.bf16.gmra.mrb[0].mxu0 %v3503
      %v3607 = vpop.f32.mrb[0].mxu0
      %v3608 = vadd.f32 0.0, %v3607
      %v3609 = vpop.f32.mrb[0].mxu0
      %v3610 = vpop.f32.mrb[0].mxu0
      %v3611 = vadd.f32 0.0, %v3610
      %v3612 = vpop.f32.mrb[0].mxu0
      %3613 = vmatprep.mubr.bf16.mxu0 0
      %3614 = vmatmul.mubr.bf16.gmra.mrb[0].mxu0 %v3506
      %v3615 = vpop.f32.mrb[0].mxu0
      %v3616 = vadd.f32 0.0, %v3615
      %v3617 = vpop.f32.mrb[0].mxu0
      %v3618 = vpop.f32.mrb[0].mxu0
      %v3619 = vadd.f32 0.0, %v3618
      %v3620 = vpop.f32.mrb[0].mxu0
      %3621 = vmatprep.mubr.bf16.mxu0 0
      %3622 = vmatmul.mubr.bf16.gmra.mrb[0].mxu0 %v3509
      %v3623 = vpop.f32.mrb[0].mxu0
      %v3624 = vadd.f32 0.0, %v3623
      %v3625 = vpop.f32.mrb[0].mxu0
      %v3626 = vpop.f32.mrb[0].mxu0
      %v3627 = vadd.f32 0.0, %v3626
      %v3628 = vpop.f32.mrb[0].mxu0
      %3629 = vmatprep.mubr.bf16.mxu0 0
      %3630 = vmatmul.mubr.bf16.gmra.mrb[0].mxu0 %v3512
      %v3631 = vpop.f32.mrb[0].mxu0
      %v3632 = vadd.f32 0.0, %v3631
      %v3633 = vpop.f32.mrb[0].mxu0
      %v3634 = vpop.f32.mrb[0].mxu0
      %v3635 = vadd.f32 0.0, %v3634
      %v3636 = vpop.f32.mrb[0].mxu0
      %3637 = vmatprep.mubr.bf16.mxu0 0
      %3638 = vmatmul.mubr.bf16.gmra.mrb[0].mxu0 %v3515
      %v3639 = vpop.f32.mrb[0].mxu0
      %v3640 = vadd.f32 0.0, %v3639
      %v3641 = vpop.f32.mrb[0].mxu0
      %v3642 = vpop.f32.mrb[0].mxu0
      %v3643 = vadd.f32 0.0, %v3642
      %v3644 = vpop.f32.mrb[0].mxu0
      %3645 = vmatprep.mubr.bf16.mxu0 0
      %3646 = vmatmul.mubr.bf16.gmra.mrb[0].mxu0 %v3518
      %v3647 = vpop.f32.mrb[0].mxu0
      %v3648 = vadd.f32 0.0, %v3647
      %v3649 = vpop.f32.mrb[0].mxu0
      %v3650 = vpop.f32.mrb[0].mxu0
      %v3651 = vadd.f32 0.0, %v3650
      %v3652 = vpop.f32.mrb[0].mxu0
      %3653 = vmatprep.mubr.bf16.mxu0 0
      %3654 = vmatmul.mubr.bf16.gmra.mrb[0].mxu0 %v3521
      %v3655 = vpop.f32.mrb[0].mxu0
      %v3656 = vadd.f32 0.0, %v3655
      %v3657 = vpop.f32.mrb[0].mxu0
      %v3658 = vpop.f32.mrb[0].mxu0
      %v3659 = vadd.f32 0.0, %v3658
      %v3660 = vpop.f32.mrb[0].mxu0
      %3661 = vmatprep.mubr.bf16.mxu0 0
      %3662 = vmatmul.mubr.bf16.gmra.mrb[0].mxu0 %v3524
      %v3663 = vpop.f32.mrb[0].mxu0
      %v3664 = vadd.f32 0.0, %v3663
      %v3665 = vpop.f32.mrb[0].mxu0
      %v3666 = vpop.f32.mrb[0].mxu0
      %v3667 = vadd.f32 0.0, %v3666
      %v3668 = vpop.f32.mrb[0].mxu0
      %3669 = vmatprep.mubr.bf16.mxu0 0
      %3670 = vmatmul.mubr.bf16.gmra.mrb[0].mxu0 %v3527
      %v3671 = vpop.f32.mrb[0].mxu0
      %v3672 = vadd.f32 0.0, %v3671
      %v3673 = vpop.f32.mrb[0].mxu0
      %v3674 = vpop.f32.mrb[0].mxu0
      %v3675 = vadd.f32 0.0, %v3674
      %v3676 = vpop.f32.mrb[0].mxu0
      %3677 = vmatprep.mubr.bf16.mxu0 0
      %3678 = vmatmul.mubr.bf16.gmra.mrb[0].mxu0 %v3530
      %v3679 = vpop.f32.mrb[0].mxu0
      %v3680 = vadd.f32 0.0, %v3679
      %v3681 = vpop.f32.mrb[0].mxu0
      %v3682 = vpop.f32.mrb[0].mxu0
      %v3683 = vadd.f32 0.0, %v3682
      %v3684 = vpop.f32.mrb[0].mxu0
      %3685 = vmatprep.mubr.bf16.mxu0 0
      %3686 = vmatmul.mubr.bf16.gmra.mrb[0].mxu0 %v3533
      %v3687 = vpop.f32.mrb[0].mxu0
      %v3688 = vadd.f32 0.0, %v3687
      %v3689 = vpop.f32.mrb[0].mxu0
      %v3690 = vpop.f32.mrb[0].mxu0
      %v3691 = vadd.f32 0.0, %v3690
      %v3692 = vpop.f32.mrb[0].mxu0
      %3693 = vmatprep.mubr.bf16.mxu0 0
      %3694 = vmatmul.mubr.bf16.gmra.mrb[0].mxu0 %v3536
      %v3695 = vpop.f32.mrb[0].mxu0
      %v3696 = vadd.f32 0.0, %v3695
      %v3697 = vpop.f32.mrb[0].mxu0
      %v3698 = vpop.f32.mrb[0].mxu0
      %v3699 = vadd.f32 0.0, %v3698
      %v3700 = vpop.f32.mrb[0].mxu0
      %3701 = vdwg.mxu0
      %v3702 = vadd.f32 %v3302, %v3576
      %v3703 = vadd.f32 %v3303, %v3579
      %v3704 = vadd.f32 %v3304, %v3584
      %v3705 = vadd.f32 %v3305, %v3587
      %v3706 = vadd.f32 %v3306, %v3592
      %v3707 = vadd.f32 %v3307, %v3595
      %v3708 = vadd.f32 %v3308, %v3600
      %v3709 = vadd.f32 %v3309, %v3603
      %v3710 = vadd.f32 %v3310, %v3608
      %v3711 = vadd.f32 %v3311, %v3611
      %v3712 = vadd.f32 %v3312, %v3616
      %v3713 = vadd.f32 %v3313, %v3619
      %v3714 = vadd.f32 %v3314, %v3624
      %v3715 = vadd.f32 %v3315, %v3627
      %v3716 = vadd.f32 %v3316, %v3632
      %v3717 = vadd.f32 %v3317, %v3635
      %v3718 = vadd.f32 %v3318, %v3640
      %v3719 = vadd.f32 %v3319, %v3643
      %v3720 = vadd.f32 %v3320, %v3648
      %v3721 = vadd.f32 %v3321, %v3651
      %v3722 = vadd.f32 %v3322, %v3656
      %v3723 = vadd.f32 %v3323, %v3659
      %v3724 = vadd.f32 %v3324, %v3664
      %v3725 = vadd.f32 %v3325, %v3667
      %v3726 = vadd.f32 %v3326, %v3672
      %v3727 = vadd.f32 %v3327, %v3675
      %v3728 = vadd.f32 %v3328, %v3680
      %v3729 = vadd.f32 %v3329, %v3683
      %v3730 = vadd.f32 %v3330, %v3688
      %v3731 = vadd.f32 %v3331, %v3691
      %v3732 = vadd.f32 %v3332, %v3696
      %v3733 = vadd.f32 %v3333, %v3699
      %s3734 = scalar_lea.vmem %s1, 20
      %v3735 = vld [vmem:[%s3734] sm:$0x3]
      %v3737 = vshrl.u32 %v3440, 16
      %v3739 = vrot.slane %v3737, 2
      %v3740 = vshll.u32 %v3440, 16
      %v3742 = vrot.slane %v3740, 3
      %v3743 = vor.u32 %v3739, %v3742
      %v3745 = vshrl.u32 %v3441, 16
      %v3747 = vrot.slane %v3745, 2
      %v3748 = vshll.u32 %v3441, 16
      %v3750 = vrot.slane %v3748, 3
      %v3751 = vor.u32 %v3747, %v3750
      %v3752 = vsel %vm2657, %v3743, %v3751
      %v3754 = vshrl.u32 %v3442, 16
      %v3756 = vrot.slane %v3754, 2
      %v3757 = vshll.u32 %v3442, 16
      %v3759 = vrot.slane %v3757, 3
      %v3760 = vor.u32 %v3756, %v3759
      %v3761 = vsel %vm2657, %v3751, %v3760
      %v3763 = vshrl.u32 %v3443, 16
      %v3765 = vrot.slane %v3763, 2
      %v3766 = vshll.u32 %v3443, 16
      %v3768 = vrot.slane %v3766, 3
      %v3769 = vor.u32 %v3765, %v3768
      %v3770 = vsel %vm2657, %v3760, %v3769
      %v3772 = vshrl.u32 %v3444, 16
      %v3774 = vrot.slane %v3772, 2
      %v3775 = vshll.u32 %v3444, 16
      %v3777 = vrot.slane %v3775, 3
      %v3778 = vor.u32 %v3774, %v3777
      %v3779 = vsel %vm2657, %v3769, %v3778
      %v3781 = vshrl.u32 %v3445, 16
      %v3783 = vrot.slane %v3781, 2
      %v3784 = vshll.u32 %v3445, 16
      %v3786 = vrot.slane %v3784, 3
      %v3787 = vor.u32 %v3783, %v3786
      %v3788 = vsel %vm2657, %v3778, %v3787
      %v3790 = vshrl.u32 %v3446, 16
      %v3792 = vrot.slane %v3790, 2
      %v3793 = vshll.u32 %v3446, 16
      %v3795 = vrot.slane %v3793, 3
      %v3796 = vor.u32 %v3792, %v3795
      %v3797 = vsel %vm2657, %v3787, %v3796
      %v3799 = vshrl.u32 %v3447, 16
      %v3801 = vrot.slane %v3799, 2
      %v3802 = vshll.u32 %v3447, 16
      %v3804 = vrot.slane %v3802, 3
      %v3805 = vor.u32 %v3801, %v3804
      %v3806 = vsel %vm2657, %v3796, %v3805
      %v3808 = vshrl.u32 %v3448, 16
      %v3810 = vrot.slane %v3808, 2
      %v3811 = vshll.u32 %v3448, 16
      %v3813 = vrot.slane %v3811, 3
      %v3814 = vor.u32 %v3810, %v3813
      %v3815 = vsel %vm2657, %v3805, %v3814
      %v3817 = vshrl.u32 %v3449, 16
      %v3819 = vrot.slane %v3817, 2
      %v3820 = vshll.u32 %v3449, 16
      %v3822 = vrot.slane %v3820, 3
      %v3823 = vor.u32 %v3819, %v3822
      %v3824 = vsel %vm2657, %v3814, %v3823
      %v3826 = vshrl.u32 %v3450, 16
      %v3828 = vrot.slane %v3826, 2
      %v3829 = vshll.u32 %v3450, 16
      %v3831 = vrot.slane %v3829, 3
      %v3832 = vor.u32 %v3828, %v3831
      %v3833 = vsel %vm2657, %v3823, %v3832
      %v3835 = vshrl.u32 %v3451, 16
      %v3837 = vrot.slane %v3835, 2
      %v3838 = vshll.u32 %v3451, 16
      %v3840 = vrot.slane %v3838, 3
      %v3841 = vor.u32 %v3837, %v3840
      %v3842 = vsel %vm2657, %v3832, %v3841
      %v3844 = vshrl.u32 %v3452, 16
      %v3846 = vrot.slane %v3844, 2
      %v3847 = vshll.u32 %v3452, 16
      %v3849 = vrot.slane %v3847, 3
      %v3850 = vor.u32 %v3846, %v3849
      %v3851 = vsel %vm2657, %v3841, %v3850
      %v3853 = vshrl.u32 %v3453, 16
      %v3855 = vrot.slane %v3853, 2
      %v3856 = vshll.u32 %v3453, 16
      %v3858 = vrot.slane %v3856, 3
      %v3859 = vor.u32 %v3855, %v3858
      %v3860 = vsel %vm2657, %v3850, %v3859
      %v3862 = vshrl.u32 %v3454, 16
      %v3864 = vrot.slane %v3862, 2
      %v3865 = vshll.u32 %v3454, 16
      %v3867 = vrot.slane %v3865, 3
      %v3868 = vor.u32 %v3864, %v3867
      %v3869 = vsel %vm2657, %v3859, %v3868
      %v3871 = vshrl.u32 %v3455, 16
      %v3873 = vrot.slane %v3871, 2
      %v3874 = vshll.u32 %v3455, 16
      %v3876 = vrot.slane %v3874, 3
      %v3877 = vor.u32 %v3873, %v3876
      %v3878 = vsel %vm2657, %v3868, %v3877
      %v3880 = vshrl.u32 %v3456, 16
      %v3882 = vrot.slane %v3880, 2
      %v3883 = vshll.u32 %v3456, 16
      %v3885 = vrot.slane %v3883, 3
      %v3886 = vor.u32 %v3882, %v3885
      %v3887 = vsel %vm2657, %v3877, %v3886
      %v3889 = vsel %vm486, %v3752, 0
      %v3892 = vsel %vm486, %v3761, 0
      %v3895 = vsel %vm486, %v3770, 0
      %v3898 = vsel %vm486, %v3779, 0
      %v3901 = vsel %vm486, %v3788, 0
      %v3904 = vsel %vm486, %v3797, 0
      %v3907 = vsel %vm486, %v3806, 0
      %v3910 = vsel %vm486, %v3815, 0
      %v3913 = vsel %vm486, %v3824, 0
      %v3916 = vsel %vm486, %v3833, 0
      %v3919 = vsel %vm486, %v3842, 0
      %v3922 = vsel %vm486, %v3851, 0
      %v3925 = vsel %vm486, %v3860, 0
      %v3928 = vsel %vm486, %v3869, 0
      %v3931 = vsel %vm486, %v3878, 0
      %v3934 = vsel %vm486, %v3887, 0
      %v3937 = vsel %vm535, %v3735, 0
      %3939 = vmatprep.subr.bf16.mxu0 0
      %3940 = vmatpush1.bf16.msra.mxu0 %v3937
      %3941 = vmatprep.subr.bf16.mxu0 0
      %3942 = vmatpush1.bf16.msra.mxu0 0
      %3943 = vmatprep.subr.bf16.mxu0 0
      %3944 = vmatpush1.bf16.msra.mxu0 0
      %3945 = vmatprep.subr.bf16.mxu0 0
      %3946 = vmatpush1.bf16.msra.mxu0 0
      %3947 = vmatprep.subr.bf16.mxu0 0
      %3948 = vmatpush1.bf16.msra.mxu0 0
      %3949 = vmatprep.subr.bf16.mxu0 0
      %3950 = vmatpush1.bf16.msra.mxu0 0
      %3951 = vmatprep.subr.bf16.mxu0 0
      %3952 = vmatpush1.bf16.msra.mxu0 0
      %3953 = vmatprep.subr.bf16.mxu0 0
      %3954 = vmatpush1.bf16.msra.mxu0 0
      %3955 = vmatprep.subr.bf16.mxu0 0
      %3956 = vmatpush1.bf16.msra.mxu0 0
      %3957 = vmatprep.subr.bf16.mxu0 0
      %3958 = vmatpush1.bf16.msra.mxu0 0
      %3959 = vmatprep.subr.bf16.mxu0 0
      %3960 = vmatpush1.bf16.msra.mxu0 0
      %3961 = vmatprep.subr.bf16.mxu0 0
      %3962 = vmatpush1.bf16.msra.mxu0 0
      %3963 = vmatprep.subr.bf16.mxu0 0
      %3964 = vmatpush1.bf16.msra.mxu0 0
      %3965 = vmatprep.subr.bf16.mxu0 0
      %3966 = vmatpush1.bf16.msra.mxu0 0
      %3967 = vmatprep.subr.bf16.mxu0 0
      %3968 = vmatpush1.bf16.msra.mxu0 0
      %3969 = vmatprep.subr.bf16.mxu0 0
      %3970 = vmatpush1.bf16.msra.mxu0 0
      %3971 = vmatprep.mubr.bf16.mxu0 0
      %3972 = vmatmul.mubr.bf16.gmra.mrb[0].mxu0 %v3889
      %v3973 = vpop.f32.mrb[0].mxu0
      %v3974 = vadd.f32 0.0, %v3973
      %v3975 = vpop.f32.mrb[0].mxu0
      %v3976 = vpop.f32.mrb[0].mxu0
      %v3977 = vadd.f32 0.0, %v3976
      %v3978 = vpop.f32.mrb[0].mxu0
      %3979 = vmatprep.mubr.bf16.mxu0 0
      %3980 = vmatmul.mubr.bf16.gmra.mrb[0].mxu0 %v3892
      %v3981 = vpop.f32.mrb[0].mxu0
      %v3982 = vadd.f32 0.0, %v3981
      %v3983 = vpop.f32.mrb[0].mxu0
      %v3984 = vpop.f32.mrb[0].mxu0
      %v3985 = vadd.f32 0.0, %v3984
      %v3986 = vpop.f32.mrb[0].mxu0
      %3987 = vmatprep.mubr.bf16.mxu0 0
      %3988 = vmatmul.mubr.bf16.gmra.mrb[0].mxu0 %v3895
      %v3989 = vpop.f32.mrb[0].mxu0
      %v3990 = vadd.f32 0.0, %v3989
      %v3991 = vpop.f32.mrb[0].mxu0
      %v3992 = vpop.f32.mrb[0].mxu0
      %v3993 = vadd.f32 0.0, %v3992
      %v3994 = vpop.f32.mrb[0].mxu0
      %3995 = vmatprep.mubr.bf16.mxu0 0
      %3996 = vmatmul.mubr.bf16.gmra.mrb[0].mxu0 %v3898
      %v3997 = vpop.f32.mrb[0].mxu0
      %v3998 = vadd.f32 0.0, %v3997
      %v3999 = vpop.f32.mrb[0].mxu0
      %v4000 = vpop.f32.mrb[0].mxu0
      %v4001 = vadd.f32 0.0, %v4000
      %v4002 = vpop.f32.mrb[0].mxu0
      %4003 = vmatprep.mubr.bf16.mxu0 0
      %4004 = vmatmul.mubr.bf16.gmra.mrb[0].mxu0 %v3901
      %v4005 = vpop.f32.mrb[0].mxu0
      %v4006 = vadd.f32 0.0, %v4005
      %v4007 = vpop.f32.mrb[0].mxu0
      %v4008 = vpop.f32.mrb[0].mxu0
      %v4009 = vadd.f32 0.0, %v4008
      %v4010 = vpop.f32.mrb[0].mxu0
      %4011 = vmatprep.mubr.bf16.mxu0 0
      %4012 = vmatmul.mubr.bf16.gmra.mrb[0].mxu0 %v3904
      %v4013 = vpop.f32.mrb[0].mxu0
      %v4014 = vadd.f32 0.0, %v4013
      %v4015 = vpop.f32.mrb[0].mxu0
      %v4016 = vpop.f32.mrb[0].mxu0
      %v4017 = vadd.f32 0.0, %v4016
      %v4018 = vpop.f32.mrb[0].mxu0
      %4019 = vmatprep.mubr.bf16.mxu0 0
      %4020 = vmatmul.mubr.bf16.gmra.mrb[0].mxu0 %v3907
      %v4021 = vpop.f32.mrb[0].mxu0
      %v4022 = vadd.f32 0.0, %v4021
      %v4023 = vpop.f32.mrb[0].mxu0
      %v4024 = vpop.f32.mrb[0].mxu0
      %v4025 = vadd.f32 0.0, %v4024
      %v4026 = vpop.f32.mrb[0].mxu0
      %4027 = vmatprep.mubr.bf16.mxu0 0
      %4028 = vmatmul.mubr.bf16.gmra.mrb[0].mxu0 %v3910
      %v4029 = vpop.f32.mrb[0].mxu0
      %v4030 = vadd.f32 0.0, %v4029
      %v4031 = vpop.f32.mrb[0].mxu0
      %v4032 = vpop.f32.mrb[0].mxu0
      %v4033 = vadd.f32 0.0, %v4032
      %v4034 = vpop.f32.mrb[0].mxu0
      %4035 = vmatprep.mubr.bf16.mxu0 0
      %4036 = vmatmul.mubr.bf16.gmra.mrb[0].mxu0 %v3913
      %v4037 = vpop.f32.mrb[0].mxu0
      %v4038 = vadd.f32 0.0, %v4037
      %v4039 = vpop.f32.mrb[0].mxu0
      %v4040 = vpop.f32.mrb[0].mxu0
      %v4041 = vadd.f32 0.0, %v4040
      %v4042 = vpop.f32.mrb[0].mxu0
      %4043 = vmatprep.mubr.bf16.mxu0 0
      %4044 = vmatmul.mubr.bf16.gmra.mrb[0].mxu0 %v3916
      %v4045 = vpop.f32.mrb[0].mxu0
      %v4046 = vadd.f32 0.0, %v4045
      %v4047 = vpop.f32.mrb[0].mxu0
      %v4048 = vpop.f32.mrb[0].mxu0
      %v4049 = vadd.f32 0.0, %v4048
      %v4050 = vpop.f32.mrb[0].mxu0
      %4051 = vmatprep.mubr.bf16.mxu0 0
      %4052 = vmatmul.mubr.bf16.gmra.mrb[0].mxu0 %v3919
      %v4053 = vpop.f32.mrb[0].mxu0
      %v4054 = vadd.f32 0.0, %v4053
      %v4055 = vpop.f32.mrb[0].mxu0
      %v4056 = vpop.f32.mrb[0].mxu0
      %v4057 = vadd.f32 0.0, %v4056
      %v4058 = vpop.f32.mrb[0].mxu0
      %4059 = vmatprep.mubr.bf16.mxu0 0
      %4060 = vmatmul.mubr.bf16.gmra.mrb[0].mxu0 %v3922
      %v4061 = vpop.f32.mrb[0].mxu0
      %v4062 = vadd.f32 0.0, %v4061
      %v4063 = vpop.f32.mrb[0].mxu0
      %v4064 = vpop.f32.mrb[0].mxu0
      %v4065 = vadd.f32 0.0, %v4064
      %v4066 = vpop.f32.mrb[0].mxu0
      %4067 = vmatprep.mubr.bf16.mxu0 0
      %4068 = vmatmul.mubr.bf16.gmra.mrb[0].mxu0 %v3925
      %v4069 = vpop.f32.mrb[0].mxu0
      %v4070 = vadd.f32 0.0, %v4069
      %v4071 = vpop.f32.mrb[0].mxu0
      %v4072 = vpop.f32.mrb[0].mxu0
      %v4073 = vadd.f32 0.0, %v4072
      %v4074 = vpop.f32.mrb[0].mxu0
      %4075 = vmatprep.mubr.bf16.mxu0 0
      %4076 = vmatmul.mubr.bf16.gmra.mrb[0].mxu0 %v3928
      %v4077 = vpop.f32.mrb[0].mxu0
      %v4078 = vadd.f32 0.0, %v4077
      %v4079 = vpop.f32.mrb[0].mxu0
      %v4080 = vpop.f32.mrb[0].mxu0
      %v4081 = vadd.f32 0.0, %v4080
      %v4082 = vpop.f32.mrb[0].mxu0
      %4083 = vmatprep.mubr.bf16.mxu0 0
      %4084 = vmatmul.mubr.bf16.gmra.mrb[0].mxu0 %v3931
      %v4085 = vpop.f32.mrb[0].mxu0
      %v4086 = vadd.f32 0.0, %v4085
      %v4087 = vpop.f32.mrb[0].mxu0
      %v4088 = vpop.f32.mrb[0].mxu0
      %v4089 = vadd.f32 0.0, %v4088
      %v4090 = vpop.f32.mrb[0].mxu0
      %4091 = vmatprep.mubr.bf16.mxu0 0
      %4092 = vmatmul.mubr.bf16.gmra.mrb[0].mxu0 %v3934
      %v4093 = vpop.f32.mrb[0].mxu0
      %v4094 = vadd.f32 0.0, %v4093
      %v4095 = vpop.f32.mrb[0].mxu0
      %v4096 = vpop.f32.mrb[0].mxu0
      %v4097 = vadd.f32 0.0, %v4096
      %v4098 = vpop.f32.mrb[0].mxu0
      %4099 = vdwg.mxu0
      %v4100 = vadd.f32 %v3702, %v3974
      %v4101 = vadd.f32 %v3703, %v3977
      %v4102 = vadd.f32 %v3704, %v3982
      %v4103 = vadd.f32 %v3705, %v3985
      %v4104 = vadd.f32 %v3706, %v3990
      %v4105 = vadd.f32 %v3707, %v3993
      %v4106 = vadd.f32 %v3708, %v3998
      %v4107 = vadd.f32 %v3709, %v4001
      %v4108 = vadd.f32 %v3710, %v4006
      %v4109 = vadd.f32 %v3711, %v4009
      %v4110 = vadd.f32 %v3712, %v4014
      %v4111 = vadd.f32 %v3713, %v4017
      %v4112 = vadd.f32 %v3714, %v4022
      %v4113 = vadd.f32 %v3715, %v4025
      %v4114 = vadd.f32 %v3716, %v4030
      %v4115 = vadd.f32 %v3717, %v4033
      %v4116 = vadd.f32 %v3718, %v4038
      %v4117 = vadd.f32 %v3719, %v4041
      %v4118 = vadd.f32 %v3720, %v4046
      %v4119 = vadd.f32 %v3721, %v4049
      %v4120 = vadd.f32 %v3722, %v4054
      %v4121 = vadd.f32 %v3723, %v4057
      %v4122 = vadd.f32 %v3724, %v4062
      %v4123 = vadd.f32 %v3725, %v4065
      %v4124 = vadd.f32 %v3726, %v4070
      %v4125 = vadd.f32 %v3727, %v4073
      %v4126 = vadd.f32 %v3728, %v4078
      %v4127 = vadd.f32 %v3729, %v4081
      %v4128 = vadd.f32 %v3730, %v4086
      %v4129 = vadd.f32 %v3731, %v4089
      %v4130 = vadd.f32 %v3732, %v4094
      %v4131 = vadd.f32 %v3733, %v4097
      %s4132 = scalar_lea.vmem %s1, 22
      %v4133 = vld [vmem:[%s4132] sm:$0x3]
      %v4134 = vrot.slane %v3440, 3
      %v4135 = vrot.slane %v3441, 3
      %v4136 = vsel %vm3056, %v4134, %v4135
      %v4137 = vrot.slane %v3442, 3
      %v4138 = vsel %vm3056, %v4135, %v4137
      %v4139 = vrot.slane %v3443, 3
      %v4140 = vsel %vm3056, %v4137, %v4139
      %v4141 = vrot.slane %v3444, 3
      %v4142 = vsel %vm3056, %v4139, %v4141
      %v4143 = vrot.slane %v3445, 3
      %v4144 = vsel %vm3056, %v4141, %v4143
      %v4145 = vrot.slane %v3446, 3
      %v4146 = vsel %vm3056, %v4143, %v4145
      %v4147 = vrot.slane %v3447, 3
      %v4148 = vsel %vm3056, %v4145, %v4147
      %v4149 = vrot.slane %v3448, 3
      %v4150 = vsel %vm3056, %v4147, %v4149
      %v4151 = vrot.slane %v3449, 3
      %v4152 = vsel %vm3056, %v4149, %v4151
      %v4153 = vrot.slane %v3450, 3
      %v4154 = vsel %vm3056, %v4151, %v4153
      %v4155 = vrot.slane %v3451, 3
      %v4156 = vsel %vm3056, %v4153, %v4155
      %v4157 = vrot.slane %v3452, 3
      %v4158 = vsel %vm3056, %v4155, %v4157
      %v4159 = vrot.slane %v3453, 3
      %v4160 = vsel %vm3056, %v4157, %v4159
      %v4161 = vrot.slane %v3454, 3
      %v4162 = vsel %vm3056, %v4159, %v4161
      %v4163 = vrot.slane %v3455, 3
      %v4164 = vsel %vm3056, %v4161, %v4163
      %v4165 = vrot.slane %v3456, 3
      %v4166 = vsel %vm3056, %v4163, %v4165
      %v4168 = vsel %vm486, %v4136, 0
      %v4171 = vsel %vm486, %v4138, 0
      %v4174 = vsel %vm486, %v4140, 0
      %v4177 = vsel %vm486, %v4142, 0
      %v4180 = vsel %vm486, %v4144, 0
      %v4183 = vsel %vm486, %v4146, 0
      %v4186 = vsel %vm486, %v4148, 0
      %v4189 = vsel %vm486, %v4150, 0
      %v4192 = vsel %vm486, %v4152, 0
      %v4195 = vsel %vm486, %v4154, 0
      %v4198 = vsel %vm486, %v4156, 0
      %v4201 = vsel %vm486, %v4158, 0
      %v4204 = vsel %vm486, %v4160, 0
      %v4207 = vsel %vm486, %v4162, 0
      %v4210 = vsel %vm486, %v4164, 0
      %v4213 = vsel %vm486, %v4166, 0
      %v4216 = vsel %vm535, %v4133, 0
      %4218 = vmatprep.subr.bf16.mxu0 0
      %4219 = vmatpush1.bf16.msra.mxu0 %v4216
      %4220 = vmatprep.subr.bf16.mxu0 0
      %4221 = vmatpush1.bf16.msra.mxu0 0
      %4222 = vmatprep.subr.bf16.mxu0 0
      %4223 = vmatpush1.bf16.msra.mxu0 0
      %4224 = vmatprep.subr.bf16.mxu0 0
      %4225 = vmatpush1.bf16.msra.mxu0 0
      %4226 = vmatprep.subr.bf16.mxu0 0
      %4227 = vmatpush1.bf16.msra.mxu0 0
      %4228 = vmatprep.subr.bf16.mxu0 0
      %4229 = vmatpush1.bf16.msra.mxu0 0
      %4230 = vmatprep.subr.bf16.mxu0 0
      %4231 = vmatpush1.bf16.msra.mxu0 0
      %4232 = vmatprep.subr.bf16.mxu0 0
      %4233 = vmatpush1.bf16.msra.mxu0 0
      %4234 = vmatprep.subr.bf16.mxu0 0
      %4235 = vmatpush1.bf16.msra.mxu0 0
      %4236 = vmatprep.subr.bf16.mxu0 0
      %4237 = vmatpush1.bf16.msra.mxu0 0
      %4238 = vmatprep.subr.bf16.mxu0 0
      %4239 = vmatpush1.bf16.msra.mxu0 0
      %4240 = vmatprep.subr.bf16.mxu0 0
      %4241 = vmatpush1.bf16.msra.mxu0 0
      %4242 = vmatprep.subr.bf16.mxu0 0
      %4243 = vmatpush1.bf16.msra.mxu0 0
      %4244 = vmatprep.subr.bf16.mxu0 0
      %4245 = vmatpush1.bf16.msra.mxu0 0
      %4246 = vmatprep.subr.bf16.mxu0 0
      %4247 = vmatpush1.bf16.msra.mxu0 0
      %4248 = vmatprep.subr.bf16.mxu0 0
      %4249 = vmatpush1.bf16.msra.mxu0 0
      %4250 = vmatprep.mubr.bf16.mxu0 0
      %4251 = vmatmul.mubr.bf16.gmra.mrb[0].mxu0 %v4168
      %v4252 = vpop.f32.mrb[0].mxu0
      %v4253 = vadd.f32 0.0, %v4252
      %v4254 = vpop.f32.mrb[0].mxu0
      %v4255 = vpop.f32.mrb[0].mxu0
      %v4256 = vadd.f32 0.0, %v4255
      %v4257 = vpop.f32.mrb[0].mxu0
      %4258 = vmatprep.mubr.bf16.mxu0 0
      %4259 = vmatmul.mubr.bf16.gmra.mrb[0].mxu0 %v4171
      %v4260 = vpop.f32.mrb[0].mxu0
      %v4261 = vadd.f32 0.0, %v4260
      %v4262 = vpop.f32.mrb[0].mxu0
      %v4263 = vpop.f32.mrb[0].mxu0
      %v4264 = vadd.f32 0.0, %v4263
      %v4265 = vpop.f32.mrb[0].mxu0
      %4266 = vmatprep.mubr.bf16.mxu0 0
      %4267 = vmatmul.mubr.bf16.gmra.mrb[0].mxu0 %v4174
      %v4268 = vpop.f32.mrb[0].mxu0
      %v4269 = vadd.f32 0.0, %v4268
      %v4270 = vpop.f32.mrb[0].mxu0
      %v4271 = vpop.f32.mrb[0].mxu0
      %v4272 = vadd.f32 0.0, %v4271
      %v4273 = vpop.f32.mrb[0].mxu0
      %4274 = vmatprep.mubr.bf16.mxu0 0
      %4275 = vmatmul.mubr.bf16.gmra.mrb[0].mxu0 %v4177
      %v4276 = vpop.f32.mrb[0].mxu0
      %v4277 = vadd.f32 0.0, %v4276
      %v4278 = vpop.f32.mrb[0].mxu0
      %v4279 = vpop.f32.mrb[0].mxu0
      %v4280 = vadd.f32 0.0, %v4279
      %v4281 = vpop.f32.mrb[0].mxu0
      %4282 = vmatprep.mubr.bf16.mxu0 0
      %4283 = vmatmul.mubr.bf16.gmra.mrb[0].mxu0 %v4180
      %v4284 = vpop.f32.mrb[0].mxu0
      %v4285 = vadd.f32 0.0, %v4284
      %v4286 = vpop.f32.mrb[0].mxu0
      %v4287 = vpop.f32.mrb[0].mxu0
      %v4288 = vadd.f32 0.0, %v4287
      %v4289 = vpop.f32.mrb[0].mxu0
      %4290 = vmatprep.mubr.bf16.mxu0 0
      %4291 = vmatmul.mubr.bf16.gmra.mrb[0].mxu0 %v4183
      %v4292 = vpop.f32.mrb[0].mxu0
      %v4293 = vadd.f32 0.0, %v4292
      %v4294 = vpop.f32.mrb[0].mxu0
      %v4295 = vpop.f32.mrb[0].mxu0
      %v4296 = vadd.f32 0.0, %v4295
      %v4297 = vpop.f32.mrb[0].mxu0
      %4298 = vmatprep.mubr.bf16.mxu0 0
      %4299 = vmatmul.mubr.bf16.gmra.mrb[0].mxu0 %v4186
      %v4300 = vpop.f32.mrb[0].mxu0
      %v4301 = vadd.f32 0.0, %v4300
      %v4302 = vpop.f32.mrb[0].mxu0
      %v4303 = vpop.f32.mrb[0].mxu0
      %v4304 = vadd.f32 0.0, %v4303
      %v4305 = vpop.f32.mrb[0].mxu0
      %4306 = vmatprep.mubr.bf16.mxu0 0
      %4307 = vmatmul.mubr.bf16.gmra.mrb[0].mxu0 %v4189
      %v4308 = vpop.f32.mrb[0].mxu0
      %v4309 = vadd.f32 0.0, %v4308
      %v4310 = vpop.f32.mrb[0].mxu0
      %v4311 = vpop.f32.mrb[0].mxu0
      %v4312 = vadd.f32 0.0, %v4311
      %v4313 = vpop.f32.mrb[0].mxu0
      %4314 = vmatprep.mubr.bf16.mxu0 0
      %4315 = vmatmul.mubr.bf16.gmra.mrb[0].mxu0 %v4192
      %v4316 = vpop.f32.mrb[0].mxu0
      %v4317 = vadd.f32 0.0, %v4316
      %v4318 = vpop.f32.mrb[0].mxu0
      %v4319 = vpop.f32.mrb[0].mxu0
      %v4320 = vadd.f32 0.0, %v4319
      %v4321 = vpop.f32.mrb[0].mxu0
      %4322 = vmatprep.mubr.bf16.mxu0 0
      %4323 = vmatmul.mubr.bf16.gmra.mrb[0].mxu0 %v4195
      %v4324 = vpop.f32.mrb[0].mxu0
      %v4325 = vadd.f32 0.0, %v4324
      %v4326 = vpop.f32.mrb[0].mxu0
      %v4327 = vpop.f32.mrb[0].mxu0
      %v4328 = vadd.f32 0.0, %v4327
      %v4329 = vpop.f32.mrb[0].mxu0
      %4330 = vmatprep.mubr.bf16.mxu0 0
      %4331 = vmatmul.mubr.bf16.gmra.mrb[0].mxu0 %v4198
      %v4332 = vpop.f32.mrb[0].mxu0
      %v4333 = vadd.f32 0.0, %v4332
      %v4334 = vpop.f32.mrb[0].mxu0
      %v4335 = vpop.f32.mrb[0].mxu0
      %v4336 = vadd.f32 0.0, %v4335
      %v4337 = vpop.f32.mrb[0].mxu0
      %4338 = vmatprep.mubr.bf16.mxu0 0
      %4339 = vmatmul.mubr.bf16.gmra.mrb[0].mxu0 %v4201
      %v4340 = vpop.f32.mrb[0].mxu0
      %v4341 = vadd.f32 0.0, %v4340
      %v4342 = vpop.f32.mrb[0].mxu0
      %v4343 = vpop.f32.mrb[0].mxu0
      %v4344 = vadd.f32 0.0, %v4343
      %v4345 = vpop.f32.mrb[0].mxu0
      %4346 = vmatprep.mubr.bf16.mxu0 0
      %4347 = vmatmul.mubr.bf16.gmra.mrb[0].mxu0 %v4204
      %v4348 = vpop.f32.mrb[0].mxu0
      %v4349 = vadd.f32 0.0, %v4348
      %v4350 = vpop.f32.mrb[0].mxu0
      %v4351 = vpop.f32.mrb[0].mxu0
      %v4352 = vadd.f32 0.0, %v4351
      %v4353 = vpop.f32.mrb[0].mxu0
      %4354 = vmatprep.mubr.bf16.mxu0 0
      %4355 = vmatmul.mubr.bf16.gmra.mrb[0].mxu0 %v4207
      %v4356 = vpop.f32.mrb[0].mxu0
      %v4357 = vadd.f32 0.0, %v4356
      %v4358 = vpop.f32.mrb[0].mxu0
      %v4359 = vpop.f32.mrb[0].mxu0
      %v4360 = vadd.f32 0.0, %v4359
      %v4361 = vpop.f32.mrb[0].mxu0
      %4362 = vmatprep.mubr.bf16.mxu0 0
      %4363 = vmatmul.mubr.bf16.gmra.mrb[0].mxu0 %v4210
      %v4364 = vpop.f32.mrb[0].mxu0
      %v4365 = vadd.f32 0.0, %v4364
      %v4366 = vpop.f32.mrb[0].mxu0
      %v4367 = vpop.f32.mrb[0].mxu0
      %v4368 = vadd.f32 0.0, %v4367
      %v4369 = vpop.f32.mrb[0].mxu0
      %4370 = vmatprep.mubr.bf16.mxu0 0
      %4371 = vmatmul.mubr.bf16.gmra.mrb[0].mxu0 %v4213
      %v4372 = vpop.f32.mrb[0].mxu0
      %v4373 = vadd.f32 0.0, %v4372
      %v4374 = vpop.f32.mrb[0].mxu0
      %v4375 = vpop.f32.mrb[0].mxu0
      %v4376 = vadd.f32 0.0, %v4375
      %v4377 = vpop.f32.mrb[0].mxu0
      %4378 = vdwg.mxu0
      %v4379 = vadd.f32 %v4100, %v4253
      %v4380 = vadd.f32 %v4101, %v4256
      %v4381 = vadd.f32 %v4102, %v4261
      %v4382 = vadd.f32 %v4103, %v4264
      %v4383 = vadd.f32 %v4104, %v4269
      %v4384 = vadd.f32 %v4105, %v4272
      %v4385 = vadd.f32 %v4106, %v4277
      %v4386 = vadd.f32 %v4107, %v4280
      %v4387 = vadd.f32 %v4108, %v4285
      %v4388 = vadd.f32 %v4109, %v4288
      %v4389 = vadd.f32 %v4110, %v4293
      %v4390 = vadd.f32 %v4111, %v4296
      %v4391 = vadd.f32 %v4112, %v4301
      %v4392 = vadd.f32 %v4113, %v4304
      %v4393 = vadd.f32 %v4114, %v4309
      %v4394 = vadd.f32 %v4115, %v4312
      %v4395 = vadd.f32 %v4116, %v4317
      %v4396 = vadd.f32 %v4117, %v4320
      %v4397 = vadd.f32 %v4118, %v4325
      %v4398 = vadd.f32 %v4119, %v4328
      %v4399 = vadd.f32 %v4120, %v4333
      %v4400 = vadd.f32 %v4121, %v4336
      %v4401 = vadd.f32 %v4122, %v4341
      %v4402 = vadd.f32 %v4123, %v4344
      %v4403 = vadd.f32 %v4124, %v4349
      %v4404 = vadd.f32 %v4125, %v4352
      %v4405 = vadd.f32 %v4126, %v4357
      %v4406 = vadd.f32 %v4127, %v4360
      %v4407 = vadd.f32 %v4128, %v4365
      %v4408 = vadd.f32 %v4129, %v4368
      %v4409 = vadd.f32 %v4130, %v4373
      %v4410 = vadd.f32 %v4131, %v4376
      %s4411 = sadd.s32 %s229, 336
      %s4412 = sshra.s32 %s4411, 3
      %s4413 = sand.u32 %s4411, 7
      %s4414 = smul.addr %s4412, 4
      %s4415 = scalar_lea.vmem %s0, %s4414
      %v4416 = vld [vmem:[%s4415] sm:$0xf]
      %v4417 = vld [vmem:[%s4415 + $0x4] sm:$0xf]
      %v4418 = vld [vmem:[%s4415 + $0x8] sm:$0xf]
      %v4419 = vld [vmem:[%s4415 + $0xc] sm:$0xf]
      %v4420 = vld [vmem:[%s4415 + $0x10] sm:$0xf]
      %v4421 = vld [vmem:[%s4415 + $0x14] sm:$0xf]
      %v4422 = vld [vmem:[%s4415 + $0x18] sm:$0xf]
      %v4423 = vld [vmem:[%s4415 + $0x1c] sm:$0xf]
      %v4424 = vld [vmem:[%s4415 + $0x20] sm:$0xf]
      %v4425 = vld [vmem:[%s4415 + $0x24] sm:$0xf]
      %v4426 = vld [vmem:[%s4415 + $0x28] sm:$0xf]
      %v4427 = vld [vmem:[%s4415 + $0x2c] sm:$0xf]
      %v4428 = vld [vmem:[%s4415 + $0x30] sm:$0xf]
      %v4429 = vld [vmem:[%s4415 + $0x34] sm:$0xf]
      %v4430 = vld [vmem:[%s4415 + $0x38] sm:$0xf]
      %v4431 = vld [vmem:[%s4415 + $0x3c] sm:$0xf]
      %v4432 = vld [vmem:[%s4415 + $0x40] sm:$0xf]
      %v4433 = vld [vmem:[%s4415 + $0x44] sm:$0xf]
      %v4434 = vld [vmem:[%s4415 + $0x48] sm:$0xf]
      %v4435 = vld [vmem:[%s4415 + $0x4c] sm:$0xf]
      %v4436 = vld [vmem:[%s4415 + $0x50] sm:$0xf]
      %v4437 = vld [vmem:[%s4415 + $0x54] sm:$0xf]
      %v4438 = vld [vmem:[%s4415 + $0x58] sm:$0xf]
      %v4439 = vld [vmem:[%s4415 + $0x5c] sm:$0xf]
      %v4440 = vld [vmem:[%s4415 + $0x60] sm:$0xf]
      %v4441 = vld [vmem:[%s4415 + $0x64] sm:$0xf]
      %v4442 = vld [vmem:[%s4415 + $0x68] sm:$0xf]
      %v4443 = vld [vmem:[%s4415 + $0x6c] sm:$0xf]
      %v4444 = vld [vmem:[%s4415 + $0x70] sm:$0xf]
      %v4445 = vld [vmem:[%s4415 + $0x74] sm:$0xf]
      %v4446 = vld [vmem:[%s4415 + $0x78] sm:$0xf]
      %v4447 = vld [vmem:[%s4415 + $0x7c] sm:$0xf]
      %v4448 = vld [vmem:[%s4415 + $0x80] sm:$0xf]
      %s4449 = scalar_lea.vmem %s1, 24
      %v4450 = vld [vmem:[%s4449] sm:$0x3]
      %v4484 = vunpack.c.l.b16 %v4416
      %v4485 = vunpack.c.l.b16 %v4417
      %v4486 = vunpack.c.l.b16 %v4418
      %v4487 = vunpack.c.l.b16 %v4419
      %v4488 = vunpack.c.l.b16 %v4420
      %v4489 = vunpack.c.l.b16 %v4421
      %v4490 = vunpack.c.l.b16 %v4422
      %v4491 = vunpack.c.l.b16 %v4423
      %v4492 = vunpack.c.l.b16 %v4424
      %v4493 = vunpack.c.l.b16 %v4425
      %v4494 = vunpack.c.l.b16 %v4426
      %v4495 = vunpack.c.l.b16 %v4427
      %v4496 = vunpack.c.l.b16 %v4428
      %v4497 = vunpack.c.l.b16 %v4429
      %v4498 = vunpack.c.l.b16 %v4430
      %v4499 = vunpack.c.l.b16 %v4431
      %v4500 = vunpack.c.l.b16 %v4432
      %v4501 = vunpack.c.l.b16 %v4433
      %v4502 = vunpack.c.l.b16 %v4434
      %v4503 = vunpack.c.l.b16 %v4435
      %v4504 = vunpack.c.l.b16 %v4436
      %v4505 = vunpack.c.l.b16 %v4437
      %v4506 = vunpack.c.l.b16 %v4438
      %v4507 = vunpack.c.l.b16 %v4439
      %v4508 = vunpack.c.l.b16 %v4440
      %v4509 = vunpack.c.l.b16 %v4441
      %v4510 = vunpack.c.l.b16 %v4442
      %v4511 = vunpack.c.l.b16 %v4443
      %v4512 = vunpack.c.l.b16 %v4444
      %v4513 = vunpack.c.l.b16 %v4445
      %v4514 = vunpack.c.l.b16 %v4446
      %v4515 = vunpack.c.l.b16 %v4447
      %v4516 = vunpack.c.l.b16 %v4448
      %v4517 = vpack.c.b16 %v4485, %v4484
      %v4518 = vpack.c.b16 %v4487, %v4486
      %v4519 = vpack.c.b16 %v4489, %v4488
      %v4520 = vpack.c.b16 %v4491, %v4490
      %v4521 = vpack.c.b16 %v4493, %v4492
      %v4522 = vpack.c.b16 %v4495, %v4494
      %v4523 = vpack.c.b16 %v4497, %v4496
      %v4524 = vpack.c.b16 %v4499, %v4498
      %v4525 = vpack.c.b16 %v4501, %v4500
      %v4526 = vpack.c.b16 %v4503, %v4502
      %v4527 = vpack.c.b16 %v4505, %v4504
      %v4528 = vpack.c.b16 %v4507, %v4506
      %v4529 = vpack.c.b16 %v4509, %v4508
      %v4530 = vpack.c.b16 %v4511, %v4510
      %v4531 = vpack.c.b16 %v4513, %v4512
      %v4532 = vpack.c.b16 %v4515, %v4514
      %v4533 = vpack.c.b16 %v4516, %v4516
      %v4534 = vrot.slane %v4517, 3
      %v4535 = vrot.slane %v4518, 3
      %v4536 = vsel %vm3056, %v4534, %v4535
      %v4537 = vrot.slane %v4519, 3
      %v4538 = vsel %vm3056, %v4535, %v4537
      %v4539 = vrot.slane %v4520, 3
      %v4540 = vsel %vm3056, %v4537, %v4539
      %v4541 = vrot.slane %v4521, 3
      %v4542 = vsel %vm3056, %v4539, %v4541
      %v4543 = vrot.slane %v4522, 3
      %v4544 = vsel %vm3056, %v4541, %v4543
      %v4545 = vrot.slane %v4523, 3
      %v4546 = vsel %vm3056, %v4543, %v4545
      %v4547 = vrot.slane %v4524, 3
      %v4548 = vsel %vm3056, %v4545, %v4547
      %v4549 = vrot.slane %v4525, 3
      %v4550 = vsel %vm3056, %v4547, %v4549
      %v4551 = vrot.slane %v4526, 3
      %v4552 = vsel %vm3056, %v4549, %v4551
      %v4553 = vrot.slane %v4527, 3
      %v4554 = vsel %vm3056, %v4551, %v4553
      %v4555 = vrot.slane %v4528, 3
      %v4556 = vsel %vm3056, %v4553, %v4555
      %v4557 = vrot.slane %v4529, 3
      %v4558 = vsel %vm3056, %v4555, %v4557
      %v4559 = vrot.slane %v4530, 3
      %v4560 = vsel %vm3056, %v4557, %v4559
      %v4561 = vrot.slane %v4531, 3
      %v4562 = vsel %vm3056, %v4559, %v4561
      %v4563 = vrot.slane %v4532, 3
      %v4564 = vsel %vm3056, %v4561, %v4563
      %v4565 = vrot.slane %v4533, 3
      %v4566 = vsel %vm3056, %v4563, %v4565
      %v4568 = vsel %vm486, %v4536, 0
      %v4571 = vsel %vm486, %v4538, 0
      %v4574 = vsel %vm486, %v4540, 0
      %v4577 = vsel %vm486, %v4542, 0
      %v4580 = vsel %vm486, %v4544, 0
      %v4583 = vsel %vm486, %v4546, 0
      %v4586 = vsel %vm486, %v4548, 0
      %v4589 = vsel %vm486, %v4550, 0
      %v4592 = vsel %vm486, %v4552, 0
      %v4595 = vsel %vm486, %v4554, 0
      %v4598 = vsel %vm486, %v4556, 0
      %v4601 = vsel %vm486, %v4558, 0
      %v4604 = vsel %vm486, %v4560, 0
      %v4607 = vsel %vm486, %v4562, 0
      %v4610 = vsel %vm486, %v4564, 0
      %v4613 = vsel %vm486, %v4566, 0
      %v4616 = vsel %vm535, %v4450, 0
      %4618 = vmatprep.subr.bf16.mxu0 0
      %4619 = vmatpush1.bf16.msra.mxu0 %v4616
      %4620 = vmatprep.subr.bf16.mxu0 0
      %4621 = vmatpush1.bf16.msra.mxu0 0
      %4622 = vmatprep.subr.bf16.mxu0 0
      %4623 = vmatpush1.bf16.msra.mxu0 0
      %4624 = vmatprep.subr.bf16.mxu0 0
      %4625 = vmatpush1.bf16.msra.mxu0 0
      %4626 = vmatprep.subr.bf16.mxu0 0
      %4627 = vmatpush1.bf16.msra.mxu0 0
      %4628 = vmatprep.subr.bf16.mxu0 0
      %4629 = vmatpush1.bf16.msra.mxu0 0
      %4630 = vmatprep.subr.bf16.mxu0 0
      %4631 = vmatpush1.bf16.msra.mxu0 0
      %4632 = vmatprep.subr.bf16.mxu0 0
      %4633 = vmatpush1.bf16.msra.mxu0 0
      %4634 = vmatprep.subr.bf16.mxu0 0
      %4635 = vmatpush1.bf16.msra.mxu0 0
      %4636 = vmatprep.subr.bf16.mxu0 0
      %4637 = vmatpush1.bf16.msra.mxu0 0
      %4638 = vmatprep.subr.bf16.mxu0 0
      %4639 = vmatpush1.bf16.msra.mxu0 0
      %4640 = vmatprep.subr.bf16.mxu0 0
      %4641 = vmatpush1.bf16.msra.mxu0 0
      %4642 = vmatprep.subr.bf16.mxu0 0
      %4643 = vmatpush1.bf16.msra.mxu0 0
      %4644 = vmatprep.subr.bf16.mxu0 0
      %4645 = vmatpush1.bf16.msra.mxu0 0
      %4646 = vmatprep.subr.bf16.mxu0 0
      %4647 = vmatpush1.bf16.msra.mxu0 0
      %4648 = vmatprep.subr.bf16.mxu0 0
      %4649 = vmatpush1.bf16.msra.mxu0 0
      %4650 = vmatprep.mubr.bf16.mxu0 0
      %4651 = vmatmul.mubr.bf16.gmra.mrb[0].mxu0 %v4568
      %v4652 = vpop.f32.mrb[0].mxu0
      %v4653 = vadd.f32 0.0, %v4652
      %v4654 = vpop.f32.mrb[0].mxu0
      %v4655 = vpop.f32.mrb[0].mxu0
      %v4656 = vadd.f32 0.0, %v4655
      %v4657 = vpop.f32.mrb[0].mxu0
      %4658 = vmatprep.mubr.bf16.mxu0 0
      %4659 = vmatmul.mubr.bf16.gmra.mrb[0].mxu0 %v4571
      %v4660 = vpop.f32.mrb[0].mxu0
      %v4661 = vadd.f32 0.0, %v4660
      %v4662 = vpop.f32.mrb[0].mxu0
      %v4663 = vpop.f32.mrb[0].mxu0
      %v4664 = vadd.f32 0.0, %v4663
      %v4665 = vpop.f32.mrb[0].mxu0
      %4666 = vmatprep.mubr.bf16.mxu0 0
      %4667 = vmatmul.mubr.bf16.gmra.mrb[0].mxu0 %v4574
      %v4668 = vpop.f32.mrb[0].mxu0
      %v4669 = vadd.f32 0.0, %v4668
      %v4670 = vpop.f32.mrb[0].mxu0
      %v4671 = vpop.f32.mrb[0].mxu0
      %v4672 = vadd.f32 0.0, %v4671
      %v4673 = vpop.f32.mrb[0].mxu0
      %4674 = vmatprep.mubr.bf16.mxu0 0
      %4675 = vmatmul.mubr.bf16.gmra.mrb[0].mxu0 %v4577
      %v4676 = vpop.f32.mrb[0].mxu0
      %v4677 = vadd.f32 0.0, %v4676
      %v4678 = vpop.f32.mrb[0].mxu0
      %v4679 = vpop.f32.mrb[0].mxu0
      %v4680 = vadd.f32 0.0, %v4679
      %v4681 = vpop.f32.mrb[0].mxu0
      %4682 = vmatprep.mubr.bf16.mxu0 0
      %4683 = vmatmul.mubr.bf16.gmra.mrb[0].mxu0 %v4580
      %v4684 = vpop.f32.mrb[0].mxu0
      %v4685 = vadd.f32 0.0, %v4684
      %v4686 = vpop.f32.mrb[0].mxu0
      %v4687 = vpop.f32.mrb[0].mxu0
      %v4688 = vadd.f32 0.0, %v4687
      %v4689 = vpop.f32.mrb[0].mxu0
      %4690 = vmatprep.mubr.bf16.mxu0 0
      %4691 = vmatmul.mubr.bf16.gmra.mrb[0].mxu0 %v4583
      %v4692 = vpop.f32.mrb[0].mxu0
      %v4693 = vadd.f32 0.0, %v4692
      %v4694 = vpop.f32.mrb[0].mxu0
      %v4695 = vpop.f32.mrb[0].mxu0
      %v4696 = vadd.f32 0.0, %v4695
      %v4697 = vpop.f32.mrb[0].mxu0
      %4698 = vmatprep.mubr.bf16.mxu0 0
      %4699 = vmatmul.mubr.bf16.gmra.mrb[0].mxu0 %v4586
      %v4700 = vpop.f32.mrb[0].mxu0
      %v4701 = vadd.f32 0.0, %v4700
      %v4702 = vpop.f32.mrb[0].mxu0
      %v4703 = vpop.f32.mrb[0].mxu0
      %v4704 = vadd.f32 0.0, %v4703
      %v4705 = vpop.f32.mrb[0].mxu0
      %4706 = vmatprep.mubr.bf16.mxu0 0
      %4707 = vmatmul.mubr.bf16.gmra.mrb[0].mxu0 %v4589
      %v4708 = vpop.f32.mrb[0].mxu0
      %v4709 = vadd.f32 0.0, %v4708
      %v4710 = vpop.f32.mrb[0].mxu0
      %v4711 = vpop.f32.mrb[0].mxu0
      %v4712 = vadd.f32 0.0, %v4711
      %v4713 = vpop.f32.mrb[0].mxu0
      %4714 = vmatprep.mubr.bf16.mxu0 0
      %4715 = vmatmul.mubr.bf16.gmra.mrb[0].mxu0 %v4592
      %v4716 = vpop.f32.mrb[0].mxu0
      %v4717 = vadd.f32 0.0, %v4716
      %v4718 = vpop.f32.mrb[0].mxu0
      %v4719 = vpop.f32.mrb[0].mxu0
      %v4720 = vadd.f32 0.0, %v4719
      %v4721 = vpop.f32.mrb[0].mxu0
      %4722 = vmatprep.mubr.bf16.mxu0 0
      %4723 = vmatmul.mubr.bf16.gmra.mrb[0].mxu0 %v4595
      %v4724 = vpop.f32.mrb[0].mxu0
      %v4725 = vadd.f32 0.0, %v4724
      %v4726 = vpop.f32.mrb[0].mxu0
      %v4727 = vpop.f32.mrb[0].mxu0
      %v4728 = vadd.f32 0.0, %v4727
      %v4729 = vpop.f32.mrb[0].mxu0
      %4730 = vmatprep.mubr.bf16.mxu0 0
      %4731 = vmatmul.mubr.bf16.gmra.mrb[0].mxu0 %v4598
      %v4732 = vpop.f32.mrb[0].mxu0
      %v4733 = vadd.f32 0.0, %v4732
      %v4734 = vpop.f32.mrb[0].mxu0
      %v4735 = vpop.f32.mrb[0].mxu0
      %v4736 = vadd.f32 0.0, %v4735
      %v4737 = vpop.f32.mrb[0].mxu0
      %4738 = vmatprep.mubr.bf16.mxu0 0
      %4739 = vmatmul.mubr.bf16.gmra.mrb[0].mxu0 %v4601
      %v4740 = vpop.f32.mrb[0].mxu0
      %v4741 = vadd.f32 0.0, %v4740
      %v4742 = vpop.f32.mrb[0].mxu0
      %v4743 = vpop.f32.mrb[0].mxu0
      %v4744 = vadd.f32 0.0, %v4743
      %v4745 = vpop.f32.mrb[0].mxu0
      %4746 = vmatprep.mubr.bf16.mxu0 0
      %4747 = vmatmul.mubr.bf16.gmra.mrb[0].mxu0 %v4604
      %v4748 = vpop.f32.mrb[0].mxu0
      %v4749 = vadd.f32 0.0, %v4748
      %v4750 = vpop.f32.mrb[0].mxu0
      %v4751 = vpop.f32.mrb[0].mxu0
      %v4752 = vadd.f32 0.0, %v4751
      %v4753 = vpop.f32.mrb[0].mxu0
      %4754 = vmatprep.mubr.bf16.mxu0 0
      %4755 = vmatmul.mubr.bf16.gmra.mrb[0].mxu0 %v4607
      %v4756 = vpop.f32.mrb[0].mxu0
      %v4757 = vadd.f32 0.0, %v4756
      %v4758 = vpop.f32.mrb[0].mxu0
      %v4759 = vpop.f32.mrb[0].mxu0
      %v4760 = vadd.f32 0.0, %v4759
      %v4761 = vpop.f32.mrb[0].mxu0
      %4762 = vmatprep.mubr.bf16.mxu0 0
      %4763 = vmatmul.mubr.bf16.gmra.mrb[0].mxu0 %v4610
      %v4764 = vpop.f32.mrb[0].mxu0
      %v4765 = vadd.f32 0.0, %v4764
      %v4766 = vpop.f32.mrb[0].mxu0
      %v4767 = vpop.f32.mrb[0].mxu0
      %v4768 = vadd.f32 0.0, %v4767
      %v4769 = vpop.f32.mrb[0].mxu0
      %4770 = vmatprep.mubr.bf16.mxu0 0
      %4771 = vmatmul.mubr.bf16.gmra.mrb[0].mxu0 %v4613
      %v4772 = vpop.f32.mrb[0].mxu0
      %v4773 = vadd.f32 0.0, %v4772
      %v4774 = vpop.f32.mrb[0].mxu0
      %v4775 = vpop.f32.mrb[0].mxu0
      %v4776 = vadd.f32 0.0, %v4775
      %v4777 = vpop.f32.mrb[0].mxu0
      %4778 = vdwg.mxu0
      %v4779 = vadd.f32 %v4379, %v4653
      %v4780 = vadd.f32 %v4380, %v4656
      %v4781 = vadd.f32 %v4381, %v4661
      %v4782 = vadd.f32 %v4382, %v4664
      %v4783 = vadd.f32 %v4383, %v4669
      %v4784 = vadd.f32 %v4384, %v4672
      %v4785 = vadd.f32 %v4385, %v4677
      %v4786 = vadd.f32 %v4386, %v4680
      %v4787 = vadd.f32 %v4387, %v4685
      %v4788 = vadd.f32 %v4388, %v4688
      %v4789 = vadd.f32 %v4389, %v4693
      %v4790 = vadd.f32 %v4390, %v4696
      %v4791 = vadd.f32 %v4391, %v4701
      %v4792 = vadd.f32 %v4392, %v4704
      %v4793 = vadd.f32 %v4393, %v4709
      %v4794 = vadd.f32 %v4394, %v4712
      %v4795 = vadd.f32 %v4395, %v4717
      %v4796 = vadd.f32 %v4396, %v4720
      %v4797 = vadd.f32 %v4397, %v4725
      %v4798 = vadd.f32 %v4398, %v4728
      %v4799 = vadd.f32 %v4399, %v4733
      %v4800 = vadd.f32 %v4400, %v4736
      %v4801 = vadd.f32 %v4401, %v4741
      %v4802 = vadd.f32 %v4402, %v4744
      %v4803 = vadd.f32 %v4403, %v4749
      %v4804 = vadd.f32 %v4404, %v4752
      %v4805 = vadd.f32 %v4405, %v4757
      %v4806 = vadd.f32 %v4406, %v4760
      %v4807 = vadd.f32 %v4407, %v4765
      %v4808 = vadd.f32 %v4408, %v4768
      %v4809 = vadd.f32 %v4409, %v4773
      %v4810 = vadd.f32 %v4410, %v4776
      %s4811 = scalar_lea.vmem %s1, 26
      %v4812 = vld [vmem:[%s4811] sm:$0x3]
      %vm4813 = vsmask.f32 4352
      %v4815 = vshrl.u32 %v4517, 16
      %v4817 = vrot.slane %v4815, 3
      %v4818 = vshll.u32 %v4517, 16
      %v4820 = vrot.slane %v4818, 4
      %v4821 = vor.u32 %v4817, %v4820
      %v4823 = vshrl.u32 %v4518, 16
      %v4825 = vrot.slane %v4823, 3
      %v4826 = vshll.u32 %v4518, 16
      %v4828 = vrot.slane %v4826, 4
      %v4829 = vor.u32 %v4825, %v4828
      %v4830 = vsel %vm4813, %v4821, %v4829
      %v4832 = vshrl.u32 %v4519, 16
      %v4834 = vrot.slane %v4832, 3
      %v4835 = vshll.u32 %v4519, 16
      %v4837 = vrot.slane %v4835, 4
      %v4838 = vor.u32 %v4834, %v4837
      %v4839 = vsel %vm4813, %v4829, %v4838
      %v4841 = vshrl.u32 %v4520, 16
      %v4843 = vrot.slane %v4841, 3
      %v4844 = vshll.u32 %v4520, 16
      %v4846 = vrot.slane %v4844, 4
      %v4847 = vor.u32 %v4843, %v4846
      %v4848 = vsel %vm4813, %v4838, %v4847
      %v4850 = vshrl.u32 %v4521, 16
      %v4852 = vrot.slane %v4850, 3
      %v4853 = vshll.u32 %v4521, 16
      %v4855 = vrot.slane %v4853, 4
      %v4856 = vor.u32 %v4852, %v4855
      %v4857 = vsel %vm4813, %v4847, %v4856
      %v4859 = vshrl.u32 %v4522, 16
      %v4861 = vrot.slane %v4859, 3
      %v4862 = vshll.u32 %v4522, 16
      %v4864 = vrot.slane %v4862, 4
      %v4865 = vor.u32 %v4861, %v4864
      %v4866 = vsel %vm4813, %v4856, %v4865
      %v4868 = vshrl.u32 %v4523, 16
      %v4870 = vrot.slane %v4868, 3
      %v4871 = vshll.u32 %v4523, 16
      %v4873 = vrot.slane %v4871, 4
      %v4874 = vor.u32 %v4870, %v4873
      %v4875 = vsel %vm4813, %v4865, %v4874
      %v4877 = vshrl.u32 %v4524, 16
      %v4879 = vrot.slane %v4877, 3
      %v4880 = vshll.u32 %v4524, 16
      %v4882 = vrot.slane %v4880, 4
      %v4883 = vor.u32 %v4879, %v4882
      %v4884 = vsel %vm4813, %v4874, %v4883
      %v4886 = vshrl.u32 %v4525, 16
      %v4888 = vrot.slane %v4886, 3
      %v4889 = vshll.u32 %v4525, 16
      %v4891 = vrot.slane %v4889, 4
      %v4892 = vor.u32 %v4888, %v4891
      %v4893 = vsel %vm4813, %v4883, %v4892
      %v4895 = vshrl.u32 %v4526, 16
      %v4897 = vrot.slane %v4895, 3
      %v4898 = vshll.u32 %v4526, 16
      %v4900 = vrot.slane %v4898, 4
      %v4901 = vor.u32 %v4897, %v4900
      %v4902 = vsel %vm4813, %v4892, %v4901
      %v4904 = vshrl.u32 %v4527, 16
      %v4906 = vrot.slane %v4904, 3
      %v4907 = vshll.u32 %v4527, 16
      %v4909 = vrot.slane %v4907, 4
      %v4910 = vor.u32 %v4906, %v4909
      %v4911 = vsel %vm4813, %v4901, %v4910
      %v4913 = vshrl.u32 %v4528, 16
      %v4915 = vrot.slane %v4913, 3
      %v4916 = vshll.u32 %v4528, 16
      %v4918 = vrot.slane %v4916, 4
      %v4919 = vor.u32 %v4915, %v4918
      %v4920 = vsel %vm4813, %v4910, %v4919
      %v4922 = vshrl.u32 %v4529, 16
      %v4924 = vrot.slane %v4922, 3
      %v4925 = vshll.u32 %v4529, 16
      %v4927 = vrot.slane %v4925, 4
      %v4928 = vor.u32 %v4924, %v4927
      %v4929 = vsel %vm4813, %v4919, %v4928
      %v4931 = vshrl.u32 %v4530, 16
      %v4933 = vrot.slane %v4931, 3
      %v4934 = vshll.u32 %v4530, 16
      %v4936 = vrot.slane %v4934, 4
      %v4937 = vor.u32 %v4933, %v4936
      %v4938 = vsel %vm4813, %v4928, %v4937
      %v4940 = vshrl.u32 %v4531, 16
      %v4942 = vrot.slane %v4940, 3
      %v4943 = vshll.u32 %v4531, 16
      %v4945 = vrot.slane %v4943, 4
      %v4946 = vor.u32 %v4942, %v4945
      %v4947 = vsel %vm4813, %v4937, %v4946
      %v4949 = vshrl.u32 %v4532, 16
      %v4951 = vrot.slane %v4949, 3
      %v4952 = vshll.u32 %v4532, 16
      %v4954 = vrot.slane %v4952, 4
      %v4955 = vor.u32 %v4951, %v4954
      %v4956 = vsel %vm4813, %v4946, %v4955
      %v4958 = vshrl.u32 %v4533, 16
      %v4960 = vrot.slane %v4958, 3
      %v4961 = vshll.u32 %v4533, 16
      %v4963 = vrot.slane %v4961, 4
      %v4964 = vor.u32 %v4960, %v4963
      %v4965 = vsel %vm4813, %v4955, %v4964
      %v4967 = vsel %vm486, %v4830, 0
      %v4970 = vsel %vm486, %v4839, 0
      %v4973 = vsel %vm486, %v4848, 0
      %v4976 = vsel %vm486, %v4857, 0
      %v4979 = vsel %vm486, %v4866, 0
      %v4982 = vsel %vm486, %v4875, 0
      %v4985 = vsel %vm486, %v4884, 0
      %v4988 = vsel %vm486, %v4893, 0
      %v4991 = vsel %vm486, %v4902, 0
      %v4994 = vsel %vm486, %v4911, 0
      %v4997 = vsel %vm486, %v4920, 0
      %v5000 = vsel %vm486, %v4929, 0
      %v5003 = vsel %vm486, %v4938, 0
      %v5006 = vsel %vm486, %v4947, 0
      %v5009 = vsel %vm486, %v4956, 0
      %v5012 = vsel %vm486, %v4965, 0
      %v5015 = vsel %vm535, %v4812, 0
      %5017 = vmatprep.subr.bf16.mxu0 0
      %5018 = vmatpush1.bf16.msra.mxu0 %v5015
      %5019 = vmatprep.subr.bf16.mxu0 0
      %5020 = vmatpush1.bf16.msra.mxu0 0
      %5021 = vmatprep.subr.bf16.mxu0 0
      %5022 = vmatpush1.bf16.msra.mxu0 0
      %5023 = vmatprep.subr.bf16.mxu0 0
      %5024 = vmatpush1.bf16.msra.mxu0 0
      %5025 = vmatprep.subr.bf16.mxu0 0
      %5026 = vmatpush1.bf16.msra.mxu0 0
      %5027 = vmatprep.subr.bf16.mxu0 0
      %5028 = vmatpush1.bf16.msra.mxu0 0
      %5029 = vmatprep.subr.bf16.mxu0 0
      %5030 = vmatpush1.bf16.msra.mxu0 0
      %5031 = vmatprep.subr.bf16.mxu0 0
      %5032 = vmatpush1.bf16.msra.mxu0 0
      %5033 = vmatprep.subr.bf16.mxu0 0
      %5034 = vmatpush1.bf16.msra.mxu0 0
      %5035 = vmatprep.subr.bf16.mxu0 0
      %5036 = vmatpush1.bf16.msra.mxu0 0
      %5037 = vmatprep.subr.bf16.mxu0 0
      %5038 = vmatpush1.bf16.msra.mxu0 0
      %5039 = vmatprep.subr.bf16.mxu0 0
      %5040 = vmatpush1.bf16.msra.mxu0 0
      %5041 = vmatprep.subr.bf16.mxu0 0
      %5042 = vmatpush1.bf16.msra.mxu0 0
      %5043 = vmatprep.subr.bf16.mxu0 0
      %5044 = vmatpush1.bf16.msra.mxu0 0
      %5045 = vmatprep.subr.bf16.mxu0 0
      %5046 = vmatpush1.bf16.msra.mxu0 0
      %5047 = vmatprep.subr.bf16.mxu0 0
      %5048 = vmatpush1.bf16.msra.mxu0 0
      %5049 = vmatprep.mubr.bf16.mxu0 0
      %5050 = vmatmul.mubr.bf16.gmra.mrb[0].mxu0 %v4967
      %v5051 = vpop.f32.mrb[0].mxu0
      %v5052 = vadd.f32 0.0, %v5051
      %v5053 = vpop.f32.mrb[0].mxu0
      %v5054 = vpop.f32.mrb[0].mxu0
      %v5055 = vadd.f32 0.0, %v5054
      %v5056 = vpop.f32.mrb[0].mxu0
      %5057 = vmatprep.mubr.bf16.mxu0 0
      %5058 = vmatmul.mubr.bf16.gmra.mrb[0].mxu0 %v4970
      %v5059 = vpop.f32.mrb[0].mxu0
      %v5060 = vadd.f32 0.0, %v5059
      %v5061 = vpop.f32.mrb[0].mxu0
      %v5062 = vpop.f32.mrb[0].mxu0
      %v5063 = vadd.f32 0.0, %v5062
      %v5064 = vpop.f32.mrb[0].mxu0
      %5065 = vmatprep.mubr.bf16.mxu0 0
      %5066 = vmatmul.mubr.bf16.gmra.mrb[0].mxu0 %v4973
      %v5067 = vpop.f32.mrb[0].mxu0
      %v5068 = vadd.f32 0.0, %v5067
      %v5069 = vpop.f32.mrb[0].mxu0
      %v5070 = vpop.f32.mrb[0].mxu0
      %v5071 = vadd.f32 0.0, %v5070
      %v5072 = vpop.f32.mrb[0].mxu0
      %5073 = vmatprep.mubr.bf16.mxu0 0
      %5074 = vmatmul.mubr.bf16.gmra.mrb[0].mxu0 %v4976
      %v5075 = vpop.f32.mrb[0].mxu0
      %v5076 = vadd.f32 0.0, %v5075
      %v5077 = vpop.f32.mrb[0].mxu0
      %v5078 = vpop.f32.mrb[0].mxu0
      %v5079 = vadd.f32 0.0, %v5078
      %v5080 = vpop.f32.mrb[0].mxu0
      %5081 = vmatprep.mubr.bf16.mxu0 0
      %5082 = vmatmul.mubr.bf16.gmra.mrb[0].mxu0 %v4979
      %v5083 = vpop.f32.mrb[0].mxu0
      %v5084 = vadd.f32 0.0, %v5083
      %v5085 = vpop.f32.mrb[0].mxu0
      %v5086 = vpop.f32.mrb[0].mxu0
      %v5087 = vadd.f32 0.0, %v5086
      %v5088 = vpop.f32.mrb[0].mxu0
      %5089 = vmatprep.mubr.bf16.mxu0 0
      %5090 = vmatmul.mubr.bf16.gmra.mrb[0].mxu0 %v4982
      %v5091 = vpop.f32.mrb[0].mxu0
      %v5092 = vadd.f32 0.0, %v5091
      %v5093 = vpop.f32.mrb[0].mxu0
      %v5094 = vpop.f32.mrb[0].mxu0
      %v5095 = vadd.f32 0.0, %v5094
      %v5096 = vpop.f32.mrb[0].mxu0
      %5097 = vmatprep.mubr.bf16.mxu0 0
      %5098 = vmatmul.mubr.bf16.gmra.mrb[0].mxu0 %v4985
      %v5099 = vpop.f32.mrb[0].mxu0
      %v5100 = vadd.f32 0.0, %v5099
      %v5101 = vpop.f32.mrb[0].mxu0
      %v5102 = vpop.f32.mrb[0].mxu0
      %v5103 = vadd.f32 0.0, %v5102
      %v5104 = vpop.f32.mrb[0].mxu0
      %5105 = vmatprep.mubr.bf16.mxu0 0
      %5106 = vmatmul.mubr.bf16.gmra.mrb[0].mxu0 %v4988
      %v5107 = vpop.f32.mrb[0].mxu0
      %v5108 = vadd.f32 0.0, %v5107
      %v5109 = vpop.f32.mrb[0].mxu0
      %v5110 = vpop.f32.mrb[0].mxu0
      %v5111 = vadd.f32 0.0, %v5110
      %v5112 = vpop.f32.mrb[0].mxu0
      %5113 = vmatprep.mubr.bf16.mxu0 0
      %5114 = vmatmul.mubr.bf16.gmra.mrb[0].mxu0 %v4991
      %v5115 = vpop.f32.mrb[0].mxu0
      %v5116 = vadd.f32 0.0, %v5115
      %v5117 = vpop.f32.mrb[0].mxu0
      %v5118 = vpop.f32.mrb[0].mxu0
      %v5119 = vadd.f32 0.0, %v5118
      %v5120 = vpop.f32.mrb[0].mxu0
      %5121 = vmatprep.mubr.bf16.mxu0 0
      %5122 = vmatmul.mubr.bf16.gmra.mrb[0].mxu0 %v4994
      %v5123 = vpop.f32.mrb[0].mxu0
      %v5124 = vadd.f32 0.0, %v5123
      %v5125 = vpop.f32.mrb[0].mxu0
      %v5126 = vpop.f32.mrb[0].mxu0
      %v5127 = vadd.f32 0.0, %v5126
      %v5128 = vpop.f32.mrb[0].mxu0
      %5129 = vmatprep.mubr.bf16.mxu0 0
      %5130 = vmatmul.mubr.bf16.gmra.mrb[0].mxu0 %v4997
      %v5131 = vpop.f32.mrb[0].mxu0
      %v5132 = vadd.f32 0.0, %v5131
      %v5133 = vpop.f32.mrb[0].mxu0
      %v5134 = vpop.f32.mrb[0].mxu0
      %v5135 = vadd.f32 0.0, %v5134
      %v5136 = vpop.f32.mrb[0].mxu0
      %5137 = vmatprep.mubr.bf16.mxu0 0
      %5138 = vmatmul.mubr.bf16.gmra.mrb[0].mxu0 %v5000
      %v5139 = vpop.f32.mrb[0].mxu0
      %v5140 = vadd.f32 0.0, %v5139
      %v5141 = vpop.f32.mrb[0].mxu0
      %v5142 = vpop.f32.mrb[0].mxu0
      %v5143 = vadd.f32 0.0, %v5142
      %v5144 = vpop.f32.mrb[0].mxu0
      %5145 = vmatprep.mubr.bf16.mxu0 0
      %5146 = vmatmul.mubr.bf16.gmra.mrb[0].mxu0 %v5003
      %v5147 = vpop.f32.mrb[0].mxu0
      %v5148 = vadd.f32 0.0, %v5147
      %v5149 = vpop.f32.mrb[0].mxu0
      %v5150 = vpop.f32.mrb[0].mxu0
      %v5151 = vadd.f32 0.0, %v5150
      %v5152 = vpop.f32.mrb[0].mxu0
      %5153 = vmatprep.mubr.bf16.mxu0 0
      %5154 = vmatmul.mubr.bf16.gmra.mrb[0].mxu0 %v5006
      %v5155 = vpop.f32.mrb[0].mxu0
      %v5156 = vadd.f32 0.0, %v5155
      %v5157 = vpop.f32.mrb[0].mxu0
      %v5158 = vpop.f32.mrb[0].mxu0
      %v5159 = vadd.f32 0.0, %v5158
      %v5160 = vpop.f32.mrb[0].mxu0
      %5161 = vmatprep.mubr.bf16.mxu0 0
      %5162 = vmatmul.mubr.bf16.gmra.mrb[0].mxu0 %v5009
      %v5163 = vpop.f32.mrb[0].mxu0
      %v5164 = vadd.f32 0.0, %v5163
      %v5165 = vpop.f32.mrb[0].mxu0
      %v5166 = vpop.f32.mrb[0].mxu0
      %v5167 = vadd.f32 0.0, %v5166
      %v5168 = vpop.f32.mrb[0].mxu0
      %5169 = vmatprep.mubr.bf16.mxu0 0
      %5170 = vmatmul.mubr.bf16.gmra.mrb[0].mxu0 %v5012
      %v5171 = vpop.f32.mrb[0].mxu0
      %v5172 = vadd.f32 0.0, %v5171
      %v5173 = vpop.f32.mrb[0].mxu0
      %v5174 = vpop.f32.mrb[0].mxu0
      %v5175 = vadd.f32 0.0, %v5174
      %v5176 = vpop.f32.mrb[0].mxu0
      %5177 = vdwg.mxu0
      %v5178 = vadd.f32 %v4779, %v5052
      %v5179 = vadd.f32 %v4780, %v5055
      %v5180 = vadd.f32 %v4781, %v5060
      %v5181 = vadd.f32 %v4782, %v5063
      %v5182 = vadd.f32 %v4783, %v5068
      %v5183 = vadd.f32 %v4784, %v5071
      %v5184 = vadd.f32 %v4785, %v5076
      %v5185 = vadd.f32 %v4786, %v5079
      %v5186 = vadd.f32 %v4787, %v5084
      %v5187 = vadd.f32 %v4788, %v5087
      %v5188 = vadd.f32 %v4789, %v5092
      %v5189 = vadd.f32 %v4790, %v5095
      %v5190 = vadd.f32 %v4791, %v5100
      %v5191 = vadd.f32 %v4792, %v5103
      %v5192 = vadd.f32 %v4793, %v5108
      %v5193 = vadd.f32 %v4794, %v5111
      %v5194 = vadd.f32 %v4795, %v5116
      %v5195 = vadd.f32 %v4796, %v5119
      %v5196 = vadd.f32 %v4797, %v5124
      %v5197 = vadd.f32 %v4798, %v5127
      %v5198 = vadd.f32 %v4799, %v5132
      %v5199 = vadd.f32 %v4800, %v5135
      %v5200 = vadd.f32 %v4801, %v5140
      %v5201 = vadd.f32 %v4802, %v5143
      %v5202 = vadd.f32 %v4803, %v5148
      %v5203 = vadd.f32 %v4804, %v5151
      %v5204 = vadd.f32 %v4805, %v5156
      %v5205 = vadd.f32 %v4806, %v5159
      %v5206 = vadd.f32 %v4807, %v5164
      %v5207 = vadd.f32 %v4808, %v5167
      %v5208 = vadd.f32 %v4809, %v5172
      %v5209 = vadd.f32 %v4810, %v5175
      %s5210 = scalar_lea.vmem %s1, 28
      %v5211 = vld [vmem:[%s5210] sm:$0x3]
      %v5212 = vpack.c.b16 %v4486, %v4485
      %v5213 = vpack.c.b16 %v4488, %v4487
      %v5214 = vpack.c.b16 %v4490, %v4489
      %v5215 = vpack.c.b16 %v4492, %v4491
      %v5216 = vpack.c.b16 %v4494, %v4493
      %v5217 = vpack.c.b16 %v4496, %v4495
      %v5218 = vpack.c.b16 %v4498, %v4497
      %v5219 = vpack.c.b16 %v4500, %v4499
      %v5220 = vpack.c.b16 %v4502, %v4501
      %v5221 = vpack.c.b16 %v4504, %v4503
      %v5222 = vpack.c.b16 %v4506, %v4505
      %v5223 = vpack.c.b16 %v4508, %v4507
      %v5224 = vpack.c.b16 %v4510, %v4509
      %v5225 = vpack.c.b16 %v4512, %v4511
      %v5226 = vpack.c.b16 %v4514, %v4513
      %v5227 = vpack.c.b16 %v4516, %v4515
      %v5229 = vsel %vm486, %v5212, 0
      %v5232 = vsel %vm486, %v5213, 0
      %v5235 = vsel %vm486, %v5214, 0
      %v5238 = vsel %vm486, %v5215, 0
      %v5241 = vsel %vm486, %v5216, 0
      %v5244 = vsel %vm486, %v5217, 0
      %v5247 = vsel %vm486, %v5218, 0
      %v5250 = vsel %vm486, %v5219, 0
      %v5253 = vsel %vm486, %v5220, 0
      %v5256 = vsel %vm486, %v5221, 0
      %v5259 = vsel %vm486, %v5222, 0
      %v5262 = vsel %vm486, %v5223, 0
      %v5265 = vsel %vm486, %v5224, 0
      %v5268 = vsel %vm486, %v5225, 0
      %v5271 = vsel %vm486, %v5226, 0
      %v5274 = vsel %vm486, %v5227, 0
      %v5277 = vsel %vm535, %v5211, 0
      %5279 = vmatprep.subr.bf16.mxu0 0
      %5280 = vmatpush1.bf16.msra.mxu0 %v5277
      %5281 = vmatprep.subr.bf16.mxu0 0
      %5282 = vmatpush1.bf16.msra.mxu0 0
      %5283 = vmatprep.subr.bf16.mxu0 0
      %5284 = vmatpush1.bf16.msra.mxu0 0
      %5285 = vmatprep.subr.bf16.mxu0 0
      %5286 = vmatpush1.bf16.msra.mxu0 0
      %5287 = vmatprep.subr.bf16.mxu0 0
      %5288 = vmatpush1.bf16.msra.mxu0 0
      %5289 = vmatprep.subr.bf16.mxu0 0
      %5290 = vmatpush1.bf16.msra.mxu0 0
      %5291 = vmatprep.subr.bf16.mxu0 0
      %5292 = vmatpush1.bf16.msra.mxu0 0
      %5293 = vmatprep.subr.bf16.mxu0 0
      %5294 = vmatpush1.bf16.msra.mxu0 0
      %5295 = vmatprep.subr.bf16.mxu0 0
      %5296 = vmatpush1.bf16.msra.mxu0 0
      %5297 = vmatprep.subr.bf16.mxu0 0
      %5298 = vmatpush1.bf16.msra.mxu0 0
      %5299 = vmatprep.subr.bf16.mxu0 0
      %5300 = vmatpush1.bf16.msra.mxu0 0
      %5301 = vmatprep.subr.bf16.mxu0 0
      %5302 = vmatpush1.bf16.msra.mxu0 0
      %5303 = vmatprep.subr.bf16.mxu0 0
      %5304 = vmatpush1.bf16.msra.mxu0 0
      %5305 = vmatprep.subr.bf16.mxu0 0
      %5306 = vmatpush1.bf16.msra.mxu0 0
      %5307 = vmatprep.subr.bf16.mxu0 0
      %5308 = vmatpush1.bf16.msra.mxu0 0
      %5309 = vmatprep.subr.bf16.mxu0 0
      %5310 = vmatpush1.bf16.msra.mxu0 0
      %5311 = vmatprep.mubr.bf16.mxu0 0
      %5312 = vmatmul.mubr.bf16.gmra.mrb[0].mxu0 %v5229
      %v5313 = vpop.f32.mrb[0].mxu0
      %v5314 = vadd.f32 0.0, %v5313
      %v5315 = vpop.f32.mrb[0].mxu0
      %v5316 = vpop.f32.mrb[0].mxu0
      %v5317 = vadd.f32 0.0, %v5316
      %v5318 = vpop.f32.mrb[0].mxu0
      %5319 = vmatprep.mubr.bf16.mxu0 0
      %5320 = vmatmul.mubr.bf16.gmra.mrb[0].mxu0 %v5232
      %v5321 = vpop.f32.mrb[0].mxu0
      %v5322 = vadd.f32 0.0, %v5321
      %v5323 = vpop.f32.mrb[0].mxu0
      %v5324 = vpop.f32.mrb[0].mxu0
      %v5325 = vadd.f32 0.0, %v5324
      %v5326 = vpop.f32.mrb[0].mxu0
      %5327 = vmatprep.mubr.bf16.mxu0 0
      %5328 = vmatmul.mubr.bf16.gmra.mrb[0].mxu0 %v5235
      %v5329 = vpop.f32.mrb[0].mxu0
      %v5330 = vadd.f32 0.0, %v5329
      %v5331 = vpop.f32.mrb[0].mxu0
      %v5332 = vpop.f32.mrb[0].mxu0
      %v5333 = vadd.f32 0.0, %v5332
      %v5334 = vpop.f32.mrb[0].mxu0
      %5335 = vmatprep.mubr.bf16.mxu0 0
      %5336 = vmatmul.mubr.bf16.gmra.mrb[0].mxu0 %v5238
      %v5337 = vpop.f32.mrb[0].mxu0
      %v5338 = vadd.f32 0.0, %v5337
      %v5339 = vpop.f32.mrb[0].mxu0
      %v5340 = vpop.f32.mrb[0].mxu0
      %v5341 = vadd.f32 0.0, %v5340
      %v5342 = vpop.f32.mrb[0].mxu0
      %5343 = vmatprep.mubr.bf16.mxu0 0
      %5344 = vmatmul.mubr.bf16.gmra.mrb[0].mxu0 %v5241
      %v5345 = vpop.f32.mrb[0].mxu0
      %v5346 = vadd.f32 0.0, %v5345
      %v5347 = vpop.f32.mrb[0].mxu0
      %v5348 = vpop.f32.mrb[0].mxu0
      %v5349 = vadd.f32 0.0, %v5348
      %v5350 = vpop.f32.mrb[0].mxu0
      %5351 = vmatprep.mubr.bf16.mxu0 0
      %5352 = vmatmul.mubr.bf16.gmra.mrb[0].mxu0 %v5244
      %v5353 = vpop.f32.mrb[0].mxu0
      %v5354 = vadd.f32 0.0, %v5353
      %v5355 = vpop.f32.mrb[0].mxu0
      %v5356 = vpop.f32.mrb[0].mxu0
      %v5357 = vadd.f32 0.0, %v5356
      %v5358 = vpop.f32.mrb[0].mxu0
      %5359 = vmatprep.mubr.bf16.mxu0 0
      %5360 = vmatmul.mubr.bf16.gmra.mrb[0].mxu0 %v5247
      %v5361 = vpop.f32.mrb[0].mxu0
      %v5362 = vadd.f32 0.0, %v5361
      %v5363 = vpop.f32.mrb[0].mxu0
      %v5364 = vpop.f32.mrb[0].mxu0
      %v5365 = vadd.f32 0.0, %v5364
      %v5366 = vpop.f32.mrb[0].mxu0
      %5367 = vmatprep.mubr.bf16.mxu0 0
      %5368 = vmatmul.mubr.bf16.gmra.mrb[0].mxu0 %v5250
      %v5369 = vpop.f32.mrb[0].mxu0
      %v5370 = vadd.f32 0.0, %v5369
      %v5371 = vpop.f32.mrb[0].mxu0
      %v5372 = vpop.f32.mrb[0].mxu0
      %v5373 = vadd.f32 0.0, %v5372
      %v5374 = vpop.f32.mrb[0].mxu0
      %5375 = vmatprep.mubr.bf16.mxu0 0
      %5376 = vmatmul.mubr.bf16.gmra.mrb[0].mxu0 %v5253
      %v5377 = vpop.f32.mrb[0].mxu0
      %v5378 = vadd.f32 0.0, %v5377
      %v5379 = vpop.f32.mrb[0].mxu0
      %v5380 = vpop.f32.mrb[0].mxu0
      %v5381 = vadd.f32 0.0, %v5380
      %v5382 = vpop.f32.mrb[0].mxu0
      %5383 = vmatprep.mubr.bf16.mxu0 0
      %5384 = vmatmul.mubr.bf16.gmra.mrb[0].mxu0 %v5256
      %v5385 = vpop.f32.mrb[0].mxu0
      %v5386 = vadd.f32 0.0, %v5385
      %v5387 = vpop.f32.mrb[0].mxu0
      %v5388 = vpop.f32.mrb[0].mxu0
      %v5389 = vadd.f32 0.0, %v5388
      %v5390 = vpop.f32.mrb[0].mxu0
      %5391 = vmatprep.mubr.bf16.mxu0 0
      %5392 = vmatmul.mubr.bf16.gmra.mrb[0].mxu0 %v5259
      %v5393 = vpop.f32.mrb[0].mxu0
      %v5394 = vadd.f32 0.0, %v5393
      %v5395 = vpop.f32.mrb[0].mxu0
      %v5396 = vpop.f32.mrb[0].mxu0
      %v5397 = vadd.f32 0.0, %v5396
      %v5398 = vpop.f32.mrb[0].mxu0
      %5399 = vmatprep.mubr.bf16.mxu0 0
      %5400 = vmatmul.mubr.bf16.gmra.mrb[0].mxu0 %v5262
      %v5401 = vpop.f32.mrb[0].mxu0
      %v5402 = vadd.f32 0.0, %v5401
      %v5403 = vpop.f32.mrb[0].mxu0
      %v5404 = vpop.f32.mrb[0].mxu0
      %v5405 = vadd.f32 0.0, %v5404
      %v5406 = vpop.f32.mrb[0].mxu0
      %5407 = vmatprep.mubr.bf16.mxu0 0
      %5408 = vmatmul.mubr.bf16.gmra.mrb[0].mxu0 %v5265
      %v5409 = vpop.f32.mrb[0].mxu0
      %v5410 = vadd.f32 0.0, %v5409
      %v5411 = vpop.f32.mrb[0].mxu0
      %v5412 = vpop.f32.mrb[0].mxu0
      %v5413 = vadd.f32 0.0, %v5412
      %v5414 = vpop.f32.mrb[0].mxu0
      %5415 = vmatprep.mubr.bf16.mxu0 0
      %5416 = vmatmul.mubr.bf16.gmra.mrb[0].mxu0 %v5268
      %v5417 = vpop.f32.mrb[0].mxu0
      %v5418 = vadd.f32 0.0, %v5417
      %v5419 = vpop.f32.mrb[0].mxu0
      %v5420 = vpop.f32.mrb[0].mxu0
      %v5421 = vadd.f32 0.0, %v5420
      %v5422 = vpop.f32.mrb[0].mxu0
      %5423 = vmatprep.mubr.bf16.mxu0 0
      %5424 = vmatmul.mubr.bf16.gmra.mrb[0].mxu0 %v5271
      %v5425 = vpop.f32.mrb[0].mxu0
      %v5426 = vadd.f32 0.0, %v5425
      %v5427 = vpop.f32.mrb[0].mxu0
      %v5428 = vpop.f32.mrb[0].mxu0
      %v5429 = vadd.f32 0.0, %v5428
      %v5430 = vpop.f32.mrb[0].mxu0
      %5431 = vmatprep.mubr.bf16.mxu0 0
      %5432 = vmatmul.mubr.bf16.gmra.mrb[0].mxu0 %v5274
      %v5433 = vpop.f32.mrb[0].mxu0
      %v5434 = vadd.f32 0.0, %v5433
      %v5435 = vpop.f32.mrb[0].mxu0
      %v5436 = vpop.f32.mrb[0].mxu0
      %v5437 = vadd.f32 0.0, %v5436
      %v5438 = vpop.f32.mrb[0].mxu0
      %5439 = vdwg.mxu0
      %v5440 = vadd.f32 %v5178, %v5314
      %v5441 = vadd.f32 %v5179, %v5317
      %v5442 = vadd.f32 %v5180, %v5322
      %v5443 = vadd.f32 %v5181, %v5325
      %v5444 = vadd.f32 %v5182, %v5330
      %v5445 = vadd.f32 %v5183, %v5333
      %v5446 = vadd.f32 %v5184, %v5338
      %v5447 = vadd.f32 %v5185, %v5341
      %v5448 = vadd.f32 %v5186, %v5346
      %v5449 = vadd.f32 %v5187, %v5349
      %v5450 = vadd.f32 %v5188, %v5354
      %v5451 = vadd.f32 %v5189, %v5357
      %v5452 = vadd.f32 %v5190, %v5362
      %v5453 = vadd.f32 %v5191, %v5365
      %v5454 = vadd.f32 %v5192, %v5370
      %v5455 = vadd.f32 %v5193, %v5373
      %v5456 = vadd.f32 %v5194, %v5378
      %v5457 = vadd.f32 %v5195, %v5381
      %v5458 = vadd.f32 %v5196, %v5386
      %v5459 = vadd.f32 %v5197, %v5389
      %v5460 = vadd.f32 %v5198, %v5394
      %v5461 = vadd.f32 %v5199, %v5397
      %v5462 = vadd.f32 %v5200, %v5402
      %v5463 = vadd.f32 %v5201, %v5405
      %v5464 = vadd.f32 %v5202, %v5410
      %v5465 = vadd.f32 %v5203, %v5413
      %v5466 = vadd.f32 %v5204, %v5418
      %v5467 = vadd.f32 %v5205, %v5421
      %v5468 = vadd.f32 %v5206, %v5426
      %v5469 = vadd.f32 %v5207, %v5429
      %v5470 = vadd.f32 %v5208, %v5434
      %v5471 = vadd.f32 %v5209, %v5437
      %s5472 = sadd.s32 %s229, 352
      %s5473 = sshra.s32 %s5472, 3
      %s5474 = sand.u32 %s5472, 7
      %s5475 = smul.addr %s5473, 4
      %s5476 = scalar_lea.vmem %s0, %s5475
      %v5477 = vld [vmem:[%s5476 + $0x4] sm:$0xf]
      %v5478 = vld [vmem:[%s5476 + $0x8] sm:$0xf]
      %v5479 = vld [vmem:[%s5476 + $0xc] sm:$0xf]
      %v5480 = vld [vmem:[%s5476 + $0x10] sm:$0xf]
      %v5481 = vld [vmem:[%s5476 + $0x14] sm:$0xf]
      %v5482 = vld [vmem:[%s5476 + $0x18] sm:$0xf]
      %v5483 = vld [vmem:[%s5476 + $0x1c] sm:$0xf]
      %v5484 = vld [vmem:[%s5476 + $0x20] sm:$0xf]
      %v5485 = vld [vmem:[%s5476 + $0x24] sm:$0xf]
      %v5486 = vld [vmem:[%s5476 + $0x28] sm:$0xf]
      %v5487 = vld [vmem:[%s5476 + $0x2c] sm:$0xf]
      %v5488 = vld [vmem:[%s5476 + $0x30] sm:$0xf]
      %v5489 = vld [vmem:[%s5476 + $0x34] sm:$0xf]
      %v5490 = vld [vmem:[%s5476 + $0x38] sm:$0xf]
      %v5491 = vld [vmem:[%s5476 + $0x3c] sm:$0xf]
      %v5492 = vld [vmem:[%s5476 + $0x40] sm:$0xf]
      %v5493 = vld [vmem:[%s5476 + $0x44] sm:$0xf]
      %v5494 = vld [vmem:[%s5476 + $0x48] sm:$0xf]
      %v5495 = vld [vmem:[%s5476 + $0x4c] sm:$0xf]
      %v5496 = vld [vmem:[%s5476 + $0x50] sm:$0xf]
      %v5497 = vld [vmem:[%s5476 + $0x54] sm:$0xf]
      %v5498 = vld [vmem:[%s5476 + $0x58] sm:$0xf]
      %v5499 = vld [vmem:[%s5476 + $0x5c] sm:$0xf]
      %v5500 = vld [vmem:[%s5476 + $0x60] sm:$0xf]
      %v5501 = vld [vmem:[%s5476 + $0x64] sm:$0xf]
      %v5502 = vld [vmem:[%s5476 + $0x68] sm:$0xf]
      %v5503 = vld [vmem:[%s5476 + $0x6c] sm:$0xf]
      %v5504 = vld [vmem:[%s5476 + $0x70] sm:$0xf]
      %v5505 = vld [vmem:[%s5476 + $0x74] sm:$0xf]
      %v5506 = vld [vmem:[%s5476 + $0x78] sm:$0xf]
      %v5507 = vld [vmem:[%s5476 + $0x7c] sm:$0xf]
      %v5508 = vld [vmem:[%s5476 + $0x80] sm:$0xf]
      %v5509 = vld [vmem:[%s5476 + $0x84] sm:$0xf]
      %s5510 = scalar_lea.vmem %s1, 30
      %v5511 = vld [vmem:[%s5510] sm:$0x3]
      %v5544 = vunpack.c.l.b16 %v5477
      %v5545 = vunpack.c.l.b16 %v5478
      %v5546 = vunpack.c.l.b16 %v5479
      %v5547 = vunpack.c.l.b16 %v5480
      %v5548 = vunpack.c.l.b16 %v5481
      %v5549 = vunpack.c.l.b16 %v5482
      %v5550 = vunpack.c.l.b16 %v5483
      %v5551 = vunpack.c.l.b16 %v5484
      %v5552 = vunpack.c.l.b16 %v5485
      %v5553 = vunpack.c.l.b16 %v5486
      %v5554 = vunpack.c.l.b16 %v5487
      %v5555 = vunpack.c.l.b16 %v5488
      %v5556 = vunpack.c.l.b16 %v5489
      %v5557 = vunpack.c.l.b16 %v5490
      %v5558 = vunpack.c.l.b16 %v5491
      %v5559 = vunpack.c.l.b16 %v5492
      %v5560 = vunpack.c.l.b16 %v5493
      %v5561 = vunpack.c.l.b16 %v5494
      %v5562 = vunpack.c.l.b16 %v5495
      %v5563 = vunpack.c.l.b16 %v5496
      %v5564 = vunpack.c.l.b16 %v5497
      %v5565 = vunpack.c.l.b16 %v5498
      %v5566 = vunpack.c.l.b16 %v5499
      %v5567 = vunpack.c.l.b16 %v5500
      %v5568 = vunpack.c.l.b16 %v5501
      %v5569 = vunpack.c.l.b16 %v5502
      %v5570 = vunpack.c.l.b16 %v5503
      %v5571 = vunpack.c.l.b16 %v5504
      %v5572 = vunpack.c.l.b16 %v5505
      %v5573 = vunpack.c.l.b16 %v5506
      %v5574 = vunpack.c.l.b16 %v5507
      %v5575 = vunpack.c.l.b16 %v5508
      %v5576 = vpack.c.b16 %v5545, %v5544
      %v5577 = vpack.c.b16 %v5547, %v5546
      %v5578 = vpack.c.b16 %v5549, %v5548
      %v5579 = vpack.c.b16 %v5551, %v5550
      %v5580 = vpack.c.b16 %v5553, %v5552
      %v5581 = vpack.c.b16 %v5555, %v5554
      %v5582 = vpack.c.b16 %v5557, %v5556
      %v5583 = vpack.c.b16 %v5559, %v5558
      %v5584 = vpack.c.b16 %v5561, %v5560
      %v5585 = vpack.c.b16 %v5563, %v5562
      %v5586 = vpack.c.b16 %v5565, %v5564
      %v5587 = vpack.c.b16 %v5567, %v5566
      %v5588 = vpack.c.b16 %v5569, %v5568
      %v5589 = vpack.c.b16 %v5571, %v5570
      %v5590 = vpack.c.b16 %v5573, %v5572
      %v5591 = vpack.c.b16 %v5575, %v5574
      %v5593 = vsel %vm486, %v5576, 0
      %v5596 = vsel %vm486, %v5577, 0
      %v5599 = vsel %vm486, %v5578, 0
      %v5602 = vsel %vm486, %v5579, 0
      %v5605 = vsel %vm486, %v5580, 0
      %v5608 = vsel %vm486, %v5581, 0
      %v5611 = vsel %vm486, %v5582, 0
      %v5614 = vsel %vm486, %v5583, 0
      %v5617 = vsel %vm486, %v5584, 0
      %v5620 = vsel %vm486, %v5585, 0
      %v5623 = vsel %vm486, %v5586, 0
      %v5626 = vsel %vm486, %v5587, 0
      %v5629 = vsel %vm486, %v5588, 0
      %v5632 = vsel %vm486, %v5589, 0
      %v5635 = vsel %vm486, %v5590, 0
      %v5638 = vsel %vm486, %v5591, 0
      %v5641 = vsel %vm535, %v5511, 0
      %5643 = vmatprep.subr.bf16.mxu0 0
      %5644 = vmatpush1.bf16.msra.mxu0 %v5641
      %5645 = vmatprep.subr.bf16.mxu0 0
      %5646 = vmatpush1.bf16.msra.mxu0 0
      %5647 = vmatprep.subr.bf16.mxu0 0
      %5648 = vmatpush1.bf16.msra.mxu0 0
      %5649 = vmatprep.subr.bf16.mxu0 0
      %5650 = vmatpush1.bf16.msra.mxu0 0
      %5651 = vmatprep.subr.bf16.mxu0 0
      %5652 = vmatpush1.bf16.msra.mxu0 0
      %5653 = vmatprep.subr.bf16.mxu0 0
      %5654 = vmatpush1.bf16.msra.mxu0 0
      %5655 = vmatprep.subr.bf16.mxu0 0
      %5656 = vmatpush1.bf16.msra.mxu0 0
      %5657 = vmatprep.subr.bf16.mxu0 0
      %5658 = vmatpush1.bf16.msra.mxu0 0
      %5659 = vmatprep.subr.bf16.mxu0 0
      %5660 = vmatpush1.bf16.msra.mxu0 0
      %5661 = vmatprep.subr.bf16.mxu0 0
      %5662 = vmatpush1.bf16.msra.mxu0 0
      %5663 = vmatprep.subr.bf16.mxu0 0
      %5664 = vmatpush1.bf16.msra.mxu0 0
      %5665 = vmatprep.subr.bf16.mxu0 0
      %5666 = vmatpush1.bf16.msra.mxu0 0
      %5667 = vmatprep.subr.bf16.mxu0 0
      %5668 = vmatpush1.bf16.msra.mxu0 0
      %5669 = vmatprep.subr.bf16.mxu0 0
      %5670 = vmatpush1.bf16.msra.mxu0 0
      %5671 = vmatprep.subr.bf16.mxu0 0
      %5672 = vmatpush1.bf16.msra.mxu0 0
      %5673 = vmatprep.subr.bf16.mxu0 0
      %5674 = vmatpush1.bf16.msra.mxu0 0
      %5675 = vmatprep.mubr.bf16.mxu0 0
      %5676 = vmatmul.mubr.bf16.gmra.mrb[0].mxu0 %v5593
      %v5677 = vpop.f32.mrb[0].mxu0
      %v5678 = vadd.f32 0.0, %v5677
      %v5679 = vpop.f32.mrb[0].mxu0
      %v5680 = vpop.f32.mrb[0].mxu0
      %v5681 = vadd.f32 0.0, %v5680
      %v5682 = vpop.f32.mrb[0].mxu0
      %5683 = vmatprep.mubr.bf16.mxu0 0
      %5684 = vmatmul.mubr.bf16.gmra.mrb[0].mxu0 %v5596
      %v5685 = vpop.f32.mrb[0].mxu0
      %v5686 = vadd.f32 0.0, %v5685
      %v5687 = vpop.f32.mrb[0].mxu0
      %v5688 = vpop.f32.mrb[0].mxu0
      %v5689 = vadd.f32 0.0, %v5688
      %v5690 = vpop.f32.mrb[0].mxu0
      %5691 = vmatprep.mubr.bf16.mxu0 0
      %5692 = vmatmul.mubr.bf16.gmra.mrb[0].mxu0 %v5599
      %v5693 = vpop.f32.mrb[0].mxu0
      %v5694 = vadd.f32 0.0, %v5693
      %v5695 = vpop.f32.mrb[0].mxu0
      %v5696 = vpop.f32.mrb[0].mxu0
      %v5697 = vadd.f32 0.0, %v5696
      %v5698 = vpop.f32.mrb[0].mxu0
      %5699 = vmatprep.mubr.bf16.mxu0 0
      %5700 = vmatmul.mubr.bf16.gmra.mrb[0].mxu0 %v5602
      %v5701 = vpop.f32.mrb[0].mxu0
      %v5702 = vadd.f32 0.0, %v5701
      %v5703 = vpop.f32.mrb[0].mxu0
      %v5704 = vpop.f32.mrb[0].mxu0
      %v5705 = vadd.f32 0.0, %v5704
      %v5706 = vpop.f32.mrb[0].mxu0
      %5707 = vmatprep.mubr.bf16.mxu0 0
      %5708 = vmatmul.mubr.bf16.gmra.mrb[0].mxu0 %v5605
      %v5709 = vpop.f32.mrb[0].mxu0
      %v5710 = vadd.f32 0.0, %v5709
      %v5711 = vpop.f32.mrb[0].mxu0
      %v5712 = vpop.f32.mrb[0].mxu0
      %v5713 = vadd.f32 0.0, %v5712
      %v5714 = vpop.f32.mrb[0].mxu0
      %5715 = vmatprep.mubr.bf16.mxu0 0
      %5716 = vmatmul.mubr.bf16.gmra.mrb[0].mxu0 %v5608
      %v5717 = vpop.f32.mrb[0].mxu0
      %v5718 = vadd.f32 0.0, %v5717
      %v5719 = vpop.f32.mrb[0].mxu0
      %v5720 = vpop.f32.mrb[0].mxu0
      %v5721 = vadd.f32 0.0, %v5720
      %v5722 = vpop.f32.mrb[0].mxu0
      %5723 = vmatprep.mubr.bf16.mxu0 0
      %5724 = vmatmul.mubr.bf16.gmra.mrb[0].mxu0 %v5611
      %v5725 = vpop.f32.mrb[0].mxu0
      %v5726 = vadd.f32 0.0, %v5725
      %v5727 = vpop.f32.mrb[0].mxu0
      %v5728 = vpop.f32.mrb[0].mxu0
      %v5729 = vadd.f32 0.0, %v5728
      %v5730 = vpop.f32.mrb[0].mxu0
      %5731 = vmatprep.mubr.bf16.mxu0 0
      %5732 = vmatmul.mubr.bf16.gmra.mrb[0].mxu0 %v5614
      %v5733 = vpop.f32.mrb[0].mxu0
      %v5734 = vadd.f32 0.0, %v5733
      %v5735 = vpop.f32.mrb[0].mxu0
      %v5736 = vpop.f32.mrb[0].mxu0
      %v5737 = vadd.f32 0.0, %v5736
      %v5738 = vpop.f32.mrb[0].mxu0
      %5739 = vmatprep.mubr.bf16.mxu0 0
      %5740 = vmatmul.mubr.bf16.gmra.mrb[0].mxu0 %v5617
      %v5741 = vpop.f32.mrb[0].mxu0
      %v5742 = vadd.f32 0.0, %v5741
      %v5743 = vpop.f32.mrb[0].mxu0
      %v5744 = vpop.f32.mrb[0].mxu0
      %v5745 = vadd.f32 0.0, %v5744
      %v5746 = vpop.f32.mrb[0].mxu0
      %5747 = vmatprep.mubr.bf16.mxu0 0
      %5748 = vmatmul.mubr.bf16.gmra.mrb[0].mxu0 %v5620
      %v5749 = vpop.f32.mrb[0].mxu0
      %v5750 = vadd.f32 0.0, %v5749
      %v5751 = vpop.f32.mrb[0].mxu0
      %v5752 = vpop.f32.mrb[0].mxu0
      %v5753 = vadd.f32 0.0, %v5752
      %v5754 = vpop.f32.mrb[0].mxu0
      %5755 = vmatprep.mubr.bf16.mxu0 0
      %5756 = vmatmul.mubr.bf16.gmra.mrb[0].mxu0 %v5623
      %v5757 = vpop.f32.mrb[0].mxu0
      %v5758 = vadd.f32 0.0, %v5757
      %v5759 = vpop.f32.mrb[0].mxu0
      %v5760 = vpop.f32.mrb[0].mxu0
      %v5761 = vadd.f32 0.0, %v5760
      %v5762 = vpop.f32.mrb[0].mxu0
      %5763 = vmatprep.mubr.bf16.mxu0 0
      %5764 = vmatmul.mubr.bf16.gmra.mrb[0].mxu0 %v5626
      %v5765 = vpop.f32.mrb[0].mxu0
      %v5766 = vadd.f32 0.0, %v5765
      %v5767 = vpop.f32.mrb[0].mxu0
      %v5768 = vpop.f32.mrb[0].mxu0
      %v5769 = vadd.f32 0.0, %v5768
      %v5770 = vpop.f32.mrb[0].mxu0
      %5771 = vmatprep.mubr.bf16.mxu0 0
      %5772 = vmatmul.mubr.bf16.gmra.mrb[0].mxu0 %v5629
      %v5773 = vpop.f32.mrb[0].mxu0
      %v5774 = vadd.f32 0.0, %v5773
      %v5775 = vpop.f32.mrb[0].mxu0
      %v5776 = vpop.f32.mrb[0].mxu0
      %v5777 = vadd.f32 0.0, %v5776
      %v5778 = vpop.f32.mrb[0].mxu0
      %5779 = vmatprep.mubr.bf16.mxu0 0
      %5780 = vmatmul.mubr.bf16.gmra.mrb[0].mxu0 %v5632
      %v5781 = vpop.f32.mrb[0].mxu0
      %v5782 = vadd.f32 0.0, %v5781
      %v5783 = vpop.f32.mrb[0].mxu0
      %v5784 = vpop.f32.mrb[0].mxu0
      %v5785 = vadd.f32 0.0, %v5784
      %v5786 = vpop.f32.mrb[0].mxu0
      %5787 = vmatprep.mubr.bf16.mxu0 0
      %5788 = vmatmul.mubr.bf16.gmra.mrb[0].mxu0 %v5635
      %v5789 = vpop.f32.mrb[0].mxu0
      %v5790 = vadd.f32 0.0, %v5789
      %v5791 = vpop.f32.mrb[0].mxu0
      %v5792 = vpop.f32.mrb[0].mxu0
      %v5793 = vadd.f32 0.0, %v5792
      %v5794 = vpop.f32.mrb[0].mxu0
      %5795 = vmatprep.mubr.bf16.mxu0 0
      %5796 = vmatmul.mubr.bf16.gmra.mrb[0].mxu0 %v5638
      %v5797 = vpop.f32.mrb[0].mxu0
      %v5798 = vadd.f32 0.0, %v5797
      %v5799 = vpop.f32.mrb[0].mxu0
      %v5800 = vpop.f32.mrb[0].mxu0
      %v5801 = vadd.f32 0.0, %v5800
      %v5802 = vpop.f32.mrb[0].mxu0
      %5803 = vdwg.mxu0
      %v5804 = vadd.f32 %v5440, %v5678
      %v5805 = vadd.f32 %v5441, %v5681
      %v5806 = vadd.f32 %v5442, %v5686
      %v5807 = vadd.f32 %v5443, %v5689
      %v5808 = vadd.f32 %v5444, %v5694
      %v5809 = vadd.f32 %v5445, %v5697
      %v5810 = vadd.f32 %v5446, %v5702
      %v5811 = vadd.f32 %v5447, %v5705
      %v5812 = vadd.f32 %v5448, %v5710
      %v5813 = vadd.f32 %v5449, %v5713
      %v5814 = vadd.f32 %v5450, %v5718
      %v5815 = vadd.f32 %v5451, %v5721
      %v5816 = vadd.f32 %v5452, %v5726
      %v5817 = vadd.f32 %v5453, %v5729
      %v5818 = vadd.f32 %v5454, %v5734
      %v5819 = vadd.f32 %v5455, %v5737
      %v5820 = vadd.f32 %v5456, %v5742
      %v5821 = vadd.f32 %v5457, %v5745
      %v5822 = vadd.f32 %v5458, %v5750
      %v5823 = vadd.f32 %v5459, %v5753
      %v5824 = vadd.f32 %v5460, %v5758
      %v5825 = vadd.f32 %v5461, %v5761
      %v5826 = vadd.f32 %v5462, %v5766
      %v5827 = vadd.f32 %v5463, %v5769
      %v5828 = vadd.f32 %v5464, %v5774
      %v5829 = vadd.f32 %v5465, %v5777
      %v5830 = vadd.f32 %v5466, %v5782
      %v5831 = vadd.f32 %v5467, %v5785
      %v5832 = vadd.f32 %v5468, %v5790
      %v5833 = vadd.f32 %v5469, %v5793
      %v5834 = vadd.f32 %v5470, %v5798
      %v5835 = vadd.f32 %v5471, %v5801
      %s5836 = scalar_lea.vmem %s1, 32
      %v5837 = vld [vmem:[%s5836] sm:$0x3]
      %v5839 = vunpack.c.l.b16 %v5509
      %v5840 = vpack.c.b16 %v5839, %v5839
      %v5841 = vshrl.u32 %v5576, 16
      %v5843 = vshll.u32 %v5576, 16
      %v5845 = vrot.slane %v5843, 1
      %v5846 = vor.u32 %v5841, %v5845
      %v5847 = vshll.u32 %v5577, 16
      %v5849 = vrot.slane %v5847, 1
      %v5850 = vsel %vm353, %v5846, %v5849
      %v5851 = vshrl.u32 %v5577, 16
      %v5853 = vor.u32 %v5851, %v5849
      %v5854 = vshll.u32 %v5578, 16
      %v5856 = vrot.slane %v5854, 1
      %v5857 = vsel %vm353, %v5853, %v5856
      %v5858 = vshrl.u32 %v5578, 16
      %v5860 = vor.u32 %v5858, %v5856
      %v5861 = vshll.u32 %v5579, 16
      %v5863 = vrot.slane %v5861, 1
      %v5864 = vsel %vm353, %v5860, %v5863
      %v5865 = vshrl.u32 %v5579, 16
      %v5867 = vor.u32 %v5865, %v5863
      %v5868 = vshll.u32 %v5580, 16
      %v5870 = vrot.slane %v5868, 1
      %v5871 = vsel %vm353, %v5867, %v5870
      %v5872 = vshrl.u32 %v5580, 16
      %v5874 = vor.u32 %v5872, %v5870
      %v5875 = vshll.u32 %v5581, 16
      %v5877 = vrot.slane %v5875, 1
      %v5878 = vsel %vm353, %v5874, %v5877
      %v5879 = vshrl.u32 %v5581, 16
      %v5881 = vor.u32 %v5879, %v5877
      %v5882 = vshll.u32 %v5582, 16
      %v5884 = vrot.slane %v5882, 1
      %v5885 = vsel %vm353, %v5881, %v5884
      %v5886 = vshrl.u32 %v5582, 16
      %v5888 = vor.u32 %v5886, %v5884
      %v5889 = vshll.u32 %v5583, 16
      %v5891 = vrot.slane %v5889, 1
      %v5892 = vsel %vm353, %v5888, %v5891
      %v5893 = vshrl.u32 %v5583, 16
      %v5895 = vor.u32 %v5893, %v5891
      %v5896 = vshll.u32 %v5584, 16
      %v5898 = vrot.slane %v5896, 1
      %v5899 = vsel %vm353, %v5895, %v5898
      %v5900 = vshrl.u32 %v5584, 16
      %v5902 = vor.u32 %v5900, %v5898
      %v5903 = vshll.u32 %v5585, 16
      %v5905 = vrot.slane %v5903, 1
      %v5906 = vsel %vm353, %v5902, %v5905
      %v5907 = vshrl.u32 %v5585, 16
      %v5909 = vor.u32 %v5907, %v5905
      %v5910 = vshll.u32 %v5586, 16
      %v5912 = vrot.slane %v5910, 1
      %v5913 = vsel %vm353, %v5909, %v5912
      %v5914 = vshrl.u32 %v5586, 16
      %v5916 = vor.u32 %v5914, %v5912
      %v5917 = vshll.u32 %v5587, 16
      %v5919 = vrot.slane %v5917, 1
      %v5920 = vsel %vm353, %v5916, %v5919
      %v5921 = vshrl.u32 %v5587, 16
      %v5923 = vor.u32 %v5921, %v5919
      %v5924 = vshll.u32 %v5588, 16
      %v5926 = vrot.slane %v5924, 1
      %v5927 = vsel %vm353, %v5923, %v5926
      %v5928 = vshrl.u32 %v5588, 16
      %v5930 = vor.u32 %v5928, %v5926
      %v5931 = vshll.u32 %v5589, 16
      %v5933 = vrot.slane %v5931, 1
      %v5934 = vsel %vm353, %v5930, %v5933
      %v5935 = vshrl.u32 %v5589, 16
      %v5937 = vor.u32 %v5935, %v5933
      %v5938 = vshll.u32 %v5590, 16
      %v5940 = vrot.slane %v5938, 1
      %v5941 = vsel %vm353, %v5937, %v5940
      %v5942 = vshrl.u32 %v5590, 16
      %v5944 = vor.u32 %v5942, %v5940
      %v5945 = vshll.u32 %v5591, 16
      %v5947 = vrot.slane %v5945, 1
      %v5948 = vsel %vm353, %v5944, %v5947
      %v5949 = vshrl.u32 %v5591, 16
      %v5951 = vor.u32 %v5949, %v5947
      %v5953 = vshll.u32 %v5840, 16
      %v5955 = vrot.slane %v5953, 1
      %v5956 = vsel %vm353, %v5951, %v5955
      %v5958 = vsel %vm486, %v5850, 0
      %v5961 = vsel %vm486, %v5857, 0
      %v5964 = vsel %vm486, %v5864, 0
      %v5967 = vsel %vm486, %v5871, 0
      %v5970 = vsel %vm486, %v5878, 0
      %v5973 = vsel %vm486, %v5885, 0
      %v5976 = vsel %vm486, %v5892, 0
      %v5979 = vsel %vm486, %v5899, 0
      %v5982 = vsel %vm486, %v5906, 0
      %v5985 = vsel %vm486, %v5913, 0
      %v5988 = vsel %vm486, %v5920, 0
      %v5991 = vsel %vm486, %v5927, 0
      %v5994 = vsel %vm486, %v5934, 0
      %v5997 = vsel %vm486, %v5941, 0
      %v6000 = vsel %vm486, %v5948, 0
      %v6003 = vsel %vm486, %v5956, 0
      %v6006 = vsel %vm535, %v5837, 0
      %6008 = vmatprep.subr.bf16.mxu0 0
      %6009 = vmatpush1.bf16.msra.mxu0 %v6006
      %6010 = vmatprep.subr.bf16.mxu0 0
      %6011 = vmatpush1.bf16.msra.mxu0 0
      %6012 = vmatprep.subr.bf16.mxu0 0
      %6013 = vmatpush1.bf16.msra.mxu0 0
      %6014 = vmatprep.subr.bf16.mxu0 0
      %6015 = vmatpush1.bf16.msra.mxu0 0
      %6016 = vmatprep.subr.bf16.mxu0 0
      %6017 = vmatpush1.bf16.msra.mxu0 0
      %6018 = vmatprep.subr.bf16.mxu0 0
      %6019 = vmatpush1.bf16.msra.mxu0 0
      %6020 = vmatprep.subr.bf16.mxu0 0
      %6021 = vmatpush1.bf16.msra.mxu0 0
      %6022 = vmatprep.subr.bf16.mxu0 0
      %6023 = vmatpush1.bf16.msra.mxu0 0
      %6024 = vmatprep.subr.bf16.mxu0 0
      %6025 = vmatpush1.bf16.msra.mxu0 0
      %6026 = vmatprep.subr.bf16.mxu0 0
      %6027 = vmatpush1.bf16.msra.mxu0 0
      %6028 = vmatprep.subr.bf16.mxu0 0
      %6029 = vmatpush1.bf16.msra.mxu0 0
      %6030 = vmatprep.subr.bf16.mxu0 0
      %6031 = vmatpush1.bf16.msra.mxu0 0
      %6032 = vmatprep.subr.bf16.mxu0 0
      %6033 = vmatpush1.bf16.msra.mxu0 0
      %6034 = vmatprep.subr.bf16.mxu0 0
      %6035 = vmatpush1.bf16.msra.mxu0 0
      %6036 = vmatprep.subr.bf16.mxu0 0
      %6037 = vmatpush1.bf16.msra.mxu0 0
      %6038 = vmatprep.subr.bf16.mxu0 0
      %6039 = vmatpush1.bf16.msra.mxu0 0
      %6040 = vmatprep.mubr.bf16.mxu0 0
      %6041 = vmatmul.mubr.bf16.gmra.mrb[0].mxu0 %v5958
      %v6042 = vpop.f32.mrb[0].mxu0
      %v6043 = vadd.f32 0.0, %v6042
      %v6044 = vpop.f32.mrb[0].mxu0
      %v6045 = vpop.f32.mrb[0].mxu0
      %v6046 = vadd.f32 0.0, %v6045
      %v6047 = vpop.f32.mrb[0].mxu0
      %6048 = vmatprep.mubr.bf16.mxu0 0
      %6049 = vmatmul.mubr.bf16.gmra.mrb[0].mxu0 %v5961
      %v6050 = vpop.f32.mrb[0].mxu0
      %v6051 = vadd.f32 0.0, %v6050
      %v6052 = vpop.f32.mrb[0].mxu0
      %v6053 = vpop.f32.mrb[0].mxu0
      %v6054 = vadd.f32 0.0, %v6053
      %v6055 = vpop.f32.mrb[0].mxu0
      %6056 = vmatprep.mubr.bf16.mxu0 0
      %6057 = vmatmul.mubr.bf16.gmra.mrb[0].mxu0 %v5964
      %v6058 = vpop.f32.mrb[0].mxu0
      %v6059 = vadd.f32 0.0, %v6058
      %v6060 = vpop.f32.mrb[0].mxu0
      %v6061 = vpop.f32.mrb[0].mxu0
      %v6062 = vadd.f32 0.0, %v6061
      %v6063 = vpop.f32.mrb[0].mxu0
      %6064 = vmatprep.mubr.bf16.mxu0 0
      %6065 = vmatmul.mubr.bf16.gmra.mrb[0].mxu0 %v5967
      %v6066 = vpop.f32.mrb[0].mxu0
      %v6067 = vadd.f32 0.0, %v6066
      %v6068 = vpop.f32.mrb[0].mxu0
      %v6069 = vpop.f32.mrb[0].mxu0
      %v6070 = vadd.f32 0.0, %v6069
      %v6071 = vpop.f32.mrb[0].mxu0
      %6072 = vmatprep.mubr.bf16.mxu0 0
      %6073 = vmatmul.mubr.bf16.gmra.mrb[0].mxu0 %v5970
      %v6074 = vpop.f32.mrb[0].mxu0
      %v6075 = vadd.f32 0.0, %v6074
      %v6076 = vpop.f32.mrb[0].mxu0
      %v6077 = vpop.f32.mrb[0].mxu0
      %v6078 = vadd.f32 0.0, %v6077
      %v6079 = vpop.f32.mrb[0].mxu0
      %6080 = vmatprep.mubr.bf16.mxu0 0
      %6081 = vmatmul.mubr.bf16.gmra.mrb[0].mxu0 %v5973
      %v6082 = vpop.f32.mrb[0].mxu0
      %v6083 = vadd.f32 0.0, %v6082
      %v6084 = vpop.f32.mrb[0].mxu0
      %v6085 = vpop.f32.mrb[0].mxu0
      %v6086 = vadd.f32 0.0, %v6085
      %v6087 = vpop.f32.mrb[0].mxu0
      %6088 = vmatprep.mubr.bf16.mxu0 0
      %6089 = vmatmul.mubr.bf16.gmra.mrb[0].mxu0 %v5976
      %v6090 = vpop.f32.mrb[0].mxu0
      %v6091 = vadd.f32 0.0, %v6090
      %v6092 = vpop.f32.mrb[0].mxu0
      %v6093 = vpop.f32.mrb[0].mxu0
      %v6094 = vadd.f32 0.0, %v6093
      %v6095 = vpop.f32.mrb[0].mxu0
      %6096 = vmatprep.mubr.bf16.mxu0 0
      %6097 = vmatmul.mubr.bf16.gmra.mrb[0].mxu0 %v5979
      %v6098 = vpop.f32.mrb[0].mxu0
      %v6099 = vadd.f32 0.0, %v6098
      %v6100 = vpop.f32.mrb[0].mxu0
      %v6101 = vpop.f32.mrb[0].mxu0
      %v6102 = vadd.f32 0.0, %v6101
      %v6103 = vpop.f32.mrb[0].mxu0
      %6104 = vmatprep.mubr.bf16.mxu0 0
      %6105 = vmatmul.mubr.bf16.gmra.mrb[0].mxu0 %v5982
      %v6106 = vpop.f32.mrb[0].mxu0
      %v6107 = vadd.f32 0.0, %v6106
      %v6108 = vpop.f32.mrb[0].mxu0
      %v6109 = vpop.f32.mrb[0].mxu0
      %v6110 = vadd.f32 0.0, %v6109
      %v6111 = vpop.f32.mrb[0].mxu0
      %6112 = vmatprep.mubr.bf16.mxu0 0
      %6113 = vmatmul.mubr.bf16.gmra.mrb[0].mxu0 %v5985
      %v6114 = vpop.f32.mrb[0].mxu0
      %v6115 = vadd.f32 0.0, %v6114
      %v6116 = vpop.f32.mrb[0].mxu0
      %v6117 = vpop.f32.mrb[0].mxu0
      %v6118 = vadd.f32 0.0, %v6117
      %v6119 = vpop.f32.mrb[0].mxu0
      %6120 = vmatprep.mubr.bf16.mxu0 0
      %6121 = vmatmul.mubr.bf16.gmra.mrb[0].mxu0 %v5988
      %v6122 = vpop.f32.mrb[0].mxu0
      %v6123 = vadd.f32 0.0, %v6122
      %v6124 = vpop.f32.mrb[0].mxu0
      %v6125 = vpop.f32.mrb[0].mxu0
      %v6126 = vadd.f32 0.0, %v6125
      %v6127 = vpop.f32.mrb[0].mxu0
      %6128 = vmatprep.mubr.bf16.mxu0 0
      %6129 = vmatmul.mubr.bf16.gmra.mrb[0].mxu0 %v5991
      %v6130 = vpop.f32.mrb[0].mxu0
      %v6131 = vadd.f32 0.0, %v6130
      %v6132 = vpop.f32.mrb[0].mxu0
      %v6133 = vpop.f32.mrb[0].mxu0
      %v6134 = vadd.f32 0.0, %v6133
      %v6135 = vpop.f32.mrb[0].mxu0
      %6136 = vmatprep.mubr.bf16.mxu0 0
      %6137 = vmatmul.mubr.bf16.gmra.mrb[0].mxu0 %v5994
      %v6138 = vpop.f32.mrb[0].mxu0
      %v6139 = vadd.f32 0.0, %v6138
      %v6140 = vpop.f32.mrb[0].mxu0
      %v6141 = vpop.f32.mrb[0].mxu0
      %v6142 = vadd.f32 0.0, %v6141
      %v6143 = vpop.f32.mrb[0].mxu0
      %6144 = vmatprep.mubr.bf16.mxu0 0
      %6145 = vmatmul.mubr.bf16.gmra.mrb[0].mxu0 %v5997
      %v6146 = vpop.f32.mrb[0].mxu0
      %v6147 = vadd.f32 0.0, %v6146
      %v6148 = vpop.f32.mrb[0].mxu0
      %v6149 = vpop.f32.mrb[0].mxu0
      %v6150 = vadd.f32 0.0, %v6149
      %v6151 = vpop.f32.mrb[0].mxu0
      %6152 = vmatprep.mubr.bf16.mxu0 0
      %6153 = vmatmul.mubr.bf16.gmra.mrb[0].mxu0 %v6000
      %v6154 = vpop.f32.mrb[0].mxu0
      %v6155 = vadd.f32 0.0, %v6154
      %v6156 = vpop.f32.mrb[0].mxu0
      %v6157 = vpop.f32.mrb[0].mxu0
      %v6158 = vadd.f32 0.0, %v6157
      %v6159 = vpop.f32.mrb[0].mxu0
      %6160 = vmatprep.mubr.bf16.mxu0 0
      %6161 = vmatmul.mubr.bf16.gmra.mrb[0].mxu0 %v6003
      %v6162 = vpop.f32.mrb[0].mxu0
      %v6163 = vadd.f32 0.0, %v6162
      %v6164 = vpop.f32.mrb[0].mxu0
      %v6165 = vpop.f32.mrb[0].mxu0
      %v6166 = vadd.f32 0.0, %v6165
      %v6167 = vpop.f32.mrb[0].mxu0
      %6168 = vdwg.mxu0
      %v6169 = vadd.f32 %v5804, %v6043
      %v6170 = vadd.f32 %v5805, %v6046
      %v6171 = vadd.f32 %v5806, %v6051
      %v6172 = vadd.f32 %v5807, %v6054
      %v6173 = vadd.f32 %v5808, %v6059
      %v6174 = vadd.f32 %v5809, %v6062
      %v6175 = vadd.f32 %v5810, %v6067
      %v6176 = vadd.f32 %v5811, %v6070
      %v6177 = vadd.f32 %v5812, %v6075
      %v6178 = vadd.f32 %v5813, %v6078
      %v6179 = vadd.f32 %v5814, %v6083
      %v6180 = vadd.f32 %v5815, %v6086
      %v6181 = vadd.f32 %v5816, %v6091
      %v6182 = vadd.f32 %v5817, %v6094
      %v6183 = vadd.f32 %v5818, %v6099
      %v6184 = vadd.f32 %v5819, %v6102
      %v6185 = vadd.f32 %v5820, %v6107
      %v6186 = vadd.f32 %v5821, %v6110
      %v6187 = vadd.f32 %v5822, %v6115
      %v6188 = vadd.f32 %v5823, %v6118
      %v6189 = vadd.f32 %v5824, %v6123
      %v6190 = vadd.f32 %v5825, %v6126
      %v6191 = vadd.f32 %v5826, %v6131
      %v6192 = vadd.f32 %v5827, %v6134
      %v6193 = vadd.f32 %v5828, %v6139
      %v6194 = vadd.f32 %v5829, %v6142
      %v6195 = vadd.f32 %v5830, %v6147
      %v6196 = vadd.f32 %v5831, %v6150
      %v6197 = vadd.f32 %v5832, %v6155
      %v6198 = vadd.f32 %v5833, %v6158
      %v6199 = vadd.f32 %v5834, %v6163
      %v6200 = vadd.f32 %v5835, %v6166
      %s6201 = scalar_lea.vmem %s1, 34
      %v6202 = vld [vmem:[%s6201] sm:$0x3]
      %v6203 = vrot.slane %v5576, 1
      %v6204 = vrot.slane %v5577, 1
      %v6205 = vsel %vm898, %v6203, %v6204
      %v6206 = vrot.slane %v5578, 1
      %v6207 = vsel %vm898, %v6204, %v6206
      %v6208 = vrot.slane %v5579, 1
      %v6209 = vsel %vm898, %v6206, %v6208
      %v6210 = vrot.slane %v5580, 1
      %v6211 = vsel %vm898, %v6208, %v6210
      %v6212 = vrot.slane %v5581, 1
      %v6213 = vsel %vm898, %v6210, %v6212
      %v6214 = vrot.slane %v5582, 1
      %v6215 = vsel %vm898, %v6212, %v6214
      %v6216 = vrot.slane %v5583, 1
      %v6217 = vsel %vm898, %v6214, %v6216
      %v6218 = vrot.slane %v5584, 1
      %v6219 = vsel %vm898, %v6216, %v6218
      %v6220 = vrot.slane %v5585, 1
      %v6221 = vsel %vm898, %v6218, %v6220
      %v6222 = vrot.slane %v5586, 1
      %v6223 = vsel %vm898, %v6220, %v6222
      %v6224 = vrot.slane %v5587, 1
      %v6225 = vsel %vm898, %v6222, %v6224
      %v6226 = vrot.slane %v5588, 1
      %v6227 = vsel %vm898, %v6224, %v6226
      %v6228 = vrot.slane %v5589, 1
      %v6229 = vsel %vm898, %v6226, %v6228
      %v6230 = vrot.slane %v5590, 1
      %v6231 = vsel %vm898, %v6228, %v6230
      %v6232 = vrot.slane %v5591, 1
      %v6233 = vsel %vm898, %v6230, %v6232
      %v6234 = vrot.slane %v5840, 1
      %v6235 = vsel %vm898, %v6232, %v6234
      %v6237 = vsel %vm486, %v6205, 0
      %v6240 = vsel %vm486, %v6207, 0
      %v6243 = vsel %vm486, %v6209, 0
      %v6246 = vsel %vm486, %v6211, 0
      %v6249 = vsel %vm486, %v6213, 0
      %v6252 = vsel %vm486, %v6215, 0
      %v6255 = vsel %vm486, %v6217, 0
      %v6258 = vsel %vm486, %v6219, 0
      %v6261 = vsel %vm486, %v6221, 0
      %v6264 = vsel %vm486, %v6223, 0
      %v6267 = vsel %vm486, %v6225, 0
      %v6270 = vsel %vm486, %v6227, 0
      %v6273 = vsel %vm486, %v6229, 0
      %v6276 = vsel %vm486, %v6231, 0
      %v6279 = vsel %vm486, %v6233, 0
      %v6282 = vsel %vm486, %v6235, 0
      %v6285 = vsel %vm535, %v6202, 0
      %6287 = vmatprep.subr.bf16.mxu0 0
      %6288 = vmatpush1.bf16.msra.mxu0 %v6285
      %6289 = vmatprep.subr.bf16.mxu0 0
      %6290 = vmatpush1.bf16.msra.mxu0 0
      %6291 = vmatprep.subr.bf16.mxu0 0
      %6292 = vmatpush1.bf16.msra.mxu0 0
      %6293 = vmatprep.subr.bf16.mxu0 0
      %6294 = vmatpush1.bf16.msra.mxu0 0
      %6295 = vmatprep.subr.bf16.mxu0 0
      %6296 = vmatpush1.bf16.msra.mxu0 0
      %6297 = vmatprep.subr.bf16.mxu0 0
      %6298 = vmatpush1.bf16.msra.mxu0 0
      %6299 = vmatprep.subr.bf16.mxu0 0
      %6300 = vmatpush1.bf16.msra.mxu0 0
      %6301 = vmatprep.subr.bf16.mxu0 0
      %6302 = vmatpush1.bf16.msra.mxu0 0
      %6303 = vmatprep.subr.bf16.mxu0 0
      %6304 = vmatpush1.bf16.msra.mxu0 0
      %6305 = vmatprep.subr.bf16.mxu0 0
      %6306 = vmatpush1.bf16.msra.mxu0 0
      %6307 = vmatprep.subr.bf16.mxu0 0
      %6308 = vmatpush1.bf16.msra.mxu0 0
      %6309 = vmatprep.subr.bf16.mxu0 0
      %6310 = vmatpush1.bf16.msra.mxu0 0
      %6311 = vmatprep.subr.bf16.mxu0 0
      %6312 = vmatpush1.bf16.msra.mxu0 0
      %6313 = vmatprep.subr.bf16.mxu0 0
      %6314 = vmatpush1.bf16.msra.mxu0 0
      %6315 = vmatprep.subr.bf16.mxu0 0
      %6316 = vmatpush1.bf16.msra.mxu0 0
      %6317 = vmatprep.subr.bf16.mxu0 0
      %6318 = vmatpush1.bf16.msra.mxu0 0
      %6319 = vmatprep.mubr.bf16.mxu0 0
      %6320 = vmatmul.mubr.bf16.gmra.mrb[0].mxu0 %v6237
      %v6321 = vpop.f32.mrb[0].mxu0
      %v6322 = vadd.f32 0.0, %v6321
      %v6323 = vpop.f32.mrb[0].mxu0
      %v6324 = vpop.f32.mrb[0].mxu0
      %v6325 = vadd.f32 0.0, %v6324
      %v6326 = vpop.f32.mrb[0].mxu0
      %6327 = vmatprep.mubr.bf16.mxu0 0
      %6328 = vmatmul.mubr.bf16.gmra.mrb[0].mxu0 %v6240
      %v6329 = vpop.f32.mrb[0].mxu0
      %v6330 = vadd.f32 0.0, %v6329
      %v6331 = vpop.f32.mrb[0].mxu0
      %v6332 = vpop.f32.mrb[0].mxu0
      %v6333 = vadd.f32 0.0, %v6332
      %v6334 = vpop.f32.mrb[0].mxu0
      %6335 = vmatprep.mubr.bf16.mxu0 0
      %6336 = vmatmul.mubr.bf16.gmra.mrb[0].mxu0 %v6243
      %v6337 = vpop.f32.mrb[0].mxu0
      %v6338 = vadd.f32 0.0, %v6337
      %v6339 = vpop.f32.mrb[0].mxu0
      %v6340 = vpop.f32.mrb[0].mxu0
      %v6341 = vadd.f32 0.0, %v6340
      %v6342 = vpop.f32.mrb[0].mxu0
      %6343 = vmatprep.mubr.bf16.mxu0 0
      %6344 = vmatmul.mubr.bf16.gmra.mrb[0].mxu0 %v6246
      %v6345 = vpop.f32.mrb[0].mxu0
      %v6346 = vadd.f32 0.0, %v6345
      %v6347 = vpop.f32.mrb[0].mxu0
      %v6348 = vpop.f32.mrb[0].mxu0
      %v6349 = vadd.f32 0.0, %v6348
      %v6350 = vpop.f32.mrb[0].mxu0
      %6351 = vmatprep.mubr.bf16.mxu0 0
      %6352 = vmatmul.mubr.bf16.gmra.mrb[0].mxu0 %v6249
      %v6353 = vpop.f32.mrb[0].mxu0
      %v6354 = vadd.f32 0.0, %v6353
      %v6355 = vpop.f32.mrb[0].mxu0
      %v6356 = vpop.f32.mrb[0].mxu0
      %v6357 = vadd.f32 0.0, %v6356
      %v6358 = vpop.f32.mrb[0].mxu0
      %6359 = vmatprep.mubr.bf16.mxu0 0
      %6360 = vmatmul.mubr.bf16.gmra.mrb[0].mxu0 %v6252
      %v6361 = vpop.f32.mrb[0].mxu0
      %v6362 = vadd.f32 0.0, %v6361
      %v6363 = vpop.f32.mrb[0].mxu0
      %v6364 = vpop.f32.mrb[0].mxu0
      %v6365 = vadd.f32 0.0, %v6364
      %v6366 = vpop.f32.mrb[0].mxu0
      %6367 = vmatprep.mubr.bf16.mxu0 0
      %6368 = vmatmul.mubr.bf16.gmra.mrb[0].mxu0 %v6255
      %v6369 = vpop.f32.mrb[0].mxu0
      %v6370 = vadd.f32 0.0, %v6369
      %v6371 = vpop.f32.mrb[0].mxu0
      %v6372 = vpop.f32.mrb[0].mxu0
      %v6373 = vadd.f32 0.0, %v6372
      %v6374 = vpop.f32.mrb[0].mxu0
      %6375 = vmatprep.mubr.bf16.mxu0 0
      %6376 = vmatmul.mubr.bf16.gmra.mrb[0].mxu0 %v6258
      %v6377 = vpop.f32.mrb[0].mxu0
      %v6378 = vadd.f32 0.0, %v6377
      %v6379 = vpop.f32.mrb[0].mxu0
      %v6380 = vpop.f32.mrb[0].mxu0
      %v6381 = vadd.f32 0.0, %v6380
      %v6382 = vpop.f32.mrb[0].mxu0
      %6383 = vmatprep.mubr.bf16.mxu0 0
      %6384 = vmatmul.mubr.bf16.gmra.mrb[0].mxu0 %v6261
      %v6385 = vpop.f32.mrb[0].mxu0
      %v6386 = vadd.f32 0.0, %v6385
      %v6387 = vpop.f32.mrb[0].mxu0
      %v6388 = vpop.f32.mrb[0].mxu0
      %v6389 = vadd.f32 0.0, %v6388
      %v6390 = vpop.f32.mrb[0].mxu0
      %6391 = vmatprep.mubr.bf16.mxu0 0
      %6392 = vmatmul.mubr.bf16.gmra.mrb[0].mxu0 %v6264
      %v6393 = vpop.f32.mrb[0].mxu0
      %v6394 = vadd.f32 0.0, %v6393
      %v6395 = vpop.f32.mrb[0].mxu0
      %v6396 = vpop.f32.mrb[0].mxu0
      %v6397 = vadd.f32 0.0, %v6396
      %v6398 = vpop.f32.mrb[0].mxu0
      %6399 = vmatprep.mubr.bf16.mxu0 0
      %6400 = vmatmul.mubr.bf16.gmra.mrb[0].mxu0 %v6267
      %v6401 = vpop.f32.mrb[0].mxu0
      %v6402 = vadd.f32 0.0, %v6401
      %v6403 = vpop.f32.mrb[0].mxu0
      %v6404 = vpop.f32.mrb[0].mxu0
      %v6405 = vadd.f32 0.0, %v6404
      %v6406 = vpop.f32.mrb[0].mxu0
      %6407 = vmatprep.mubr.bf16.mxu0 0
      %6408 = vmatmul.mubr.bf16.gmra.mrb[0].mxu0 %v6270
      %v6409 = vpop.f32.mrb[0].mxu0
      %v6410 = vadd.f32 0.0, %v6409
      %v6411 = vpop.f32.mrb[0].mxu0
      %v6412 = vpop.f32.mrb[0].mxu0
      %v6413 = vadd.f32 0.0, %v6412
      %v6414 = vpop.f32.mrb[0].mxu0
      %6415 = vmatprep.mubr.bf16.mxu0 0
      %6416 = vmatmul.mubr.bf16.gmra.mrb[0].mxu0 %v6273
      %v6417 = vpop.f32.mrb[0].mxu0
      %v6418 = vadd.f32 0.0, %v6417
      %v6419 = vpop.f32.mrb[0].mxu0
      %v6420 = vpop.f32.mrb[0].mxu0
      %v6421 = vadd.f32 0.0, %v6420
      %v6422 = vpop.f32.mrb[0].mxu0
      %6423 = vmatprep.mubr.bf16.mxu0 0
      %6424 = vmatmul.mubr.bf16.gmra.mrb[0].mxu0 %v6276
      %v6425 = vpop.f32.mrb[0].mxu0
      %v6426 = vadd.f32 0.0, %v6425
      %v6427 = vpop.f32.mrb[0].mxu0
      %v6428 = vpop.f32.mrb[0].mxu0
      %v6429 = vadd.f32 0.0, %v6428
      %v6430 = vpop.f32.mrb[0].mxu0
      %6431 = vmatprep.mubr.bf16.mxu0 0
      %6432 = vmatmul.mubr.bf16.gmra.mrb[0].mxu0 %v6279
      %v6433 = vpop.f32.mrb[0].mxu0
      %v6434 = vadd.f32 0.0, %v6433
      %v6435 = vpop.f32.mrb[0].mxu0
      %v6436 = vpop.f32.mrb[0].mxu0
      %v6437 = vadd.f32 0.0, %v6436
      %v6438 = vpop.f32.mrb[0].mxu0
      %6439 = vmatprep.mubr.bf16.mxu0 0
      %6440 = vmatmul.mubr.bf16.gmra.mrb[0].mxu0 %v6282
      %v6441 = vpop.f32.mrb[0].mxu0
      %v6442 = vadd.f32 0.0, %v6441
      %v6443 = vpop.f32.mrb[0].mxu0
      %v6444 = vpop.f32.mrb[0].mxu0
      %v6445 = vadd.f32 0.0, %v6444
      %v6446 = vpop.f32.mrb[0].mxu0
      %6447 = vdwg.mxu0
      %v6448 = vadd.f32 %v6169, %v6322
      %v6449 = vadd.f32 %v6170, %v6325
      %v6450 = vadd.f32 %v6171, %v6330
      %v6451 = vadd.f32 %v6172, %v6333
      %v6452 = vadd.f32 %v6173, %v6338
      %v6453 = vadd.f32 %v6174, %v6341
      %v6454 = vadd.f32 %v6175, %v6346
      %v6455 = vadd.f32 %v6176, %v6349
      %v6456 = vadd.f32 %v6177, %v6354
      %v6457 = vadd.f32 %v6178, %v6357
      %v6458 = vadd.f32 %v6179, %v6362
      %v6459 = vadd.f32 %v6180, %v6365
      %v6460 = vadd.f32 %v6181, %v6370
      %v6461 = vadd.f32 %v6182, %v6373
      %v6462 = vadd.f32 %v6183, %v6378
      %v6463 = vadd.f32 %v6184, %v6381
      %v6464 = vadd.f32 %v6185, %v6386
      %v6465 = vadd.f32 %v6186, %v6389
      %v6466 = vadd.f32 %v6187, %v6394
      %v6467 = vadd.f32 %v6188, %v6397
      %v6468 = vadd.f32 %v6189, %v6402
      %v6469 = vadd.f32 %v6190, %v6405
      %v6470 = vadd.f32 %v6191, %v6410
      %v6471 = vadd.f32 %v6192, %v6413
      %v6472 = vadd.f32 %v6193, %v6418
      %v6473 = vadd.f32 %v6194, %v6421
      %v6474 = vadd.f32 %v6195, %v6426
      %v6475 = vadd.f32 %v6196, %v6429
      %v6476 = vadd.f32 %v6197, %v6434
      %v6477 = vadd.f32 %v6198, %v6437
      %v6478 = vadd.f32 %v6199, %v6442
      %v6479 = vadd.f32 %v6200, %v6445
      %s6480 = sadd.s32 %s229, 640
      %s6481 = sshra.s32 %s6480, 3
      %s6482 = sand.u32 %s6480, 7
      %s6483 = smul.addr %s6481, 4
      %s6484 = scalar_lea.vmem %s0, %s6483
      %v6485 = vld [vmem:[%s6484 + $0x4] sm:$0xf]
      %v6486 = vld [vmem:[%s6484 + $0x8] sm:$0xf]
      %v6487 = vld [vmem:[%s6484 + $0xc] sm:$0xf]
      %v6488 = vld [vmem:[%s6484 + $0x10] sm:$0xf]
      %v6489 = vld [vmem:[%s6484 + $0x14] sm:$0xf]
      %v6490 = vld [vmem:[%s6484 + $0x18] sm:$0xf]
      %v6491 = vld [vmem:[%s6484 + $0x1c] sm:$0xf]
      %v6492 = vld [vmem:[%s6484 + $0x20] sm:$0xf]
      %v6493 = vld [vmem:[%s6484 + $0x24] sm:$0xf]
      %v6494 = vld [vmem:[%s6484 + $0x28] sm:$0xf]
      %v6495 = vld [vmem:[%s6484 + $0x2c] sm:$0xf]
      %v6496 = vld [vmem:[%s6484 + $0x30] sm:$0xf]
      %v6497 = vld [vmem:[%s6484 + $0x34] sm:$0xf]
      %v6498 = vld [vmem:[%s6484 + $0x38] sm:$0xf]
      %v6499 = vld [vmem:[%s6484 + $0x3c] sm:$0xf]
      %v6500 = vld [vmem:[%s6484 + $0x40] sm:$0xf]
      %v6501 = vld [vmem:[%s6484 + $0x44] sm:$0xf]
      %v6502 = vld [vmem:[%s6484 + $0x48] sm:$0xf]
      %v6503 = vld [vmem:[%s6484 + $0x4c] sm:$0xf]
      %v6504 = vld [vmem:[%s6484 + $0x50] sm:$0xf]
      %v6505 = vld [vmem:[%s6484 + $0x54] sm:$0xf]
      %v6506 = vld [vmem:[%s6484 + $0x58] sm:$0xf]
      %v6507 = vld [vmem:[%s6484 + $0x5c] sm:$0xf]
      %v6508 = vld [vmem:[%s6484 + $0x60] sm:$0xf]
      %v6509 = vld [vmem:[%s6484 + $0x64] sm:$0xf]
      %v6510 = vld [vmem:[%s6484 + $0x68] sm:$0xf]
      %v6511 = vld [vmem:[%s6484 + $0x6c] sm:$0xf]
      %v6512 = vld [vmem:[%s6484 + $0x70] sm:$0xf]
      %v6513 = vld [vmem:[%s6484 + $0x74] sm:$0xf]
      %v6514 = vld [vmem:[%s6484 + $0x78] sm:$0xf]
      %v6515 = vld [vmem:[%s6484 + $0x7c] sm:$0xf]
      %v6516 = vld [vmem:[%s6484 + $0x80] sm:$0xf]
      %v6517 = vld [vmem:[%s6484 + $0x84] sm:$0xf]
      %s6518 = scalar_lea.vmem %s1, 36
      %v6519 = vld [vmem:[%s6518] sm:$0x3]
      %v6552 = vunpack.c.l.b16 %v6485
      %v6553 = vunpack.c.l.b16 %v6486
      %v6554 = vunpack.c.l.b16 %v6487
      %v6555 = vunpack.c.l.b16 %v6488
      %v6556 = vunpack.c.l.b16 %v6489
      %v6557 = vunpack.c.l.b16 %v6490
      %v6558 = vunpack.c.l.b16 %v6491
      %v6559 = vunpack.c.l.b16 %v6492
      %v6560 = vunpack.c.l.b16 %v6493
      %v6561 = vunpack.c.l.b16 %v6494
      %v6562 = vunpack.c.l.b16 %v6495
      %v6563 = vunpack.c.l.b16 %v6496
      %v6564 = vunpack.c.l.b16 %v6497
      %v6565 = vunpack.c.l.b16 %v6498
      %v6566 = vunpack.c.l.b16 %v6499
      %v6567 = vunpack.c.l.b16 %v6500
      %v6568 = vunpack.c.l.b16 %v6501
      %v6569 = vunpack.c.l.b16 %v6502
      %v6570 = vunpack.c.l.b16 %v6503
      %v6571 = vunpack.c.l.b16 %v6504
      %v6572 = vunpack.c.l.b16 %v6505
      %v6573 = vunpack.c.l.b16 %v6506
      %v6574 = vunpack.c.l.b16 %v6507
      %v6575 = vunpack.c.l.b16 %v6508
      %v6576 = vunpack.c.l.b16 %v6509
      %v6577 = vunpack.c.l.b16 %v6510
      %v6578 = vunpack.c.l.b16 %v6511
      %v6579 = vunpack.c.l.b16 %v6512
      %v6580 = vunpack.c.l.b16 %v6513
      %v6581 = vunpack.c.l.b16 %v6514
      %v6582 = vunpack.c.l.b16 %v6515
      %v6583 = vunpack.c.l.b16 %v6516
      %v6584 = vpack.c.b16 %v6553, %v6552
      %v6585 = vpack.c.b16 %v6555, %v6554
      %v6586 = vpack.c.b16 %v6557, %v6556
      %v6587 = vpack.c.b16 %v6559, %v6558
      %v6588 = vpack.c.b16 %v6561, %v6560
      %v6589 = vpack.c.b16 %v6563, %v6562
      %v6590 = vpack.c.b16 %v6565, %v6564
      %v6591 = vpack.c.b16 %v6567, %v6566
      %v6592 = vpack.c.b16 %v6569, %v6568
      %v6593 = vpack.c.b16 %v6571, %v6570
      %v6594 = vpack.c.b16 %v6573, %v6572
      %v6595 = vpack.c.b16 %v6575, %v6574
      %v6596 = vpack.c.b16 %v6577, %v6576
      %v6597 = vpack.c.b16 %v6579, %v6578
      %v6598 = vpack.c.b16 %v6581, %v6580
      %v6599 = vpack.c.b16 %v6583, %v6582
      %v6601 = vsel %vm486, %v6584, 0
      %v6604 = vsel %vm486, %v6585, 0
      %v6607 = vsel %vm486, %v6586, 0
      %v6610 = vsel %vm486, %v6587, 0
      %v6613 = vsel %vm486, %v6588, 0
      %v6616 = vsel %vm486, %v6589, 0
      %v6619 = vsel %vm486, %v6590, 0
      %v6622 = vsel %vm486, %v6591, 0
      %v6625 = vsel %vm486, %v6592, 0
      %v6628 = vsel %vm486, %v6593, 0
      %v6631 = vsel %vm486, %v6594, 0
      %v6634 = vsel %vm486, %v6595, 0
      %v6637 = vsel %vm486, %v6596, 0
      %v6640 = vsel %vm486, %v6597, 0
      %v6643 = vsel %vm486, %v6598, 0
      %v6646 = vsel %vm486, %v6599, 0
      %v6649 = vsel %vm535, %v6519, 0
      %6651 = vmatprep.subr.bf16.mxu0 0
      %6652 = vmatpush1.bf16.msra.mxu0 %v6649
      %6653 = vmatprep.subr.bf16.mxu0 0
      %6654 = vmatpush1.bf16.msra.mxu0 0
      %6655 = vmatprep.subr.bf16.mxu0 0
      %6656 = vmatpush1.bf16.msra.mxu0 0
      %6657 = vmatprep.subr.bf16.mxu0 0
      %6658 = vmatpush1.bf16.msra.mxu0 0
      %6659 = vmatprep.subr.bf16.mxu0 0
      %6660 = vmatpush1.bf16.msra.mxu0 0
      %6661 = vmatprep.subr.bf16.mxu0 0
      %6662 = vmatpush1.bf16.msra.mxu0 0
      %6663 = vmatprep.subr.bf16.mxu0 0
      %6664 = vmatpush1.bf16.msra.mxu0 0
      %6665 = vmatprep.subr.bf16.mxu0 0
      %6666 = vmatpush1.bf16.msra.mxu0 0
      %6667 = vmatprep.subr.bf16.mxu0 0
      %6668 = vmatpush1.bf16.msra.mxu0 0
      %6669 = vmatprep.subr.bf16.mxu0 0
      %6670 = vmatpush1.bf16.msra.mxu0 0
      %6671 = vmatprep.subr.bf16.mxu0 0
      %6672 = vmatpush1.bf16.msra.mxu0 0
      %6673 = vmatprep.subr.bf16.mxu0 0
      %6674 = vmatpush1.bf16.msra.mxu0 0
      %6675 = vmatprep.subr.bf16.mxu0 0
      %6676 = vmatpush1.bf16.msra.mxu0 0
      %6677 = vmatprep.subr.bf16.mxu0 0
      %6678 = vmatpush1.bf16.msra.mxu0 0
      %6679 = vmatprep.subr.bf16.mxu0 0
      %6680 = vmatpush1.bf16.msra.mxu0 0
      %6681 = vmatprep.subr.bf16.mxu0 0
      %6682 = vmatpush1.bf16.msra.mxu0 0
      %6683 = vmatprep.mubr.bf16.mxu0 0
      %6684 = vmatmul.mubr.bf16.gmra.mrb[0].mxu0 %v6601
      %v6685 = vpop.f32.mrb[0].mxu0
      %v6686 = vadd.f32 0.0, %v6685
      %v6687 = vpop.f32.mrb[0].mxu0
      %v6688 = vpop.f32.mrb[0].mxu0
      %v6689 = vadd.f32 0.0, %v6688
      %v6690 = vpop.f32.mrb[0].mxu0
      %6691 = vmatprep.mubr.bf16.mxu0 0
      %6692 = vmatmul.mubr.bf16.gmra.mrb[0].mxu0 %v6604
      %v6693 = vpop.f32.mrb[0].mxu0
      %v6694 = vadd.f32 0.0, %v6693
      %v6695 = vpop.f32.mrb[0].mxu0
      %v6696 = vpop.f32.mrb[0].mxu0
      %v6697 = vadd.f32 0.0, %v6696
      %v6698 = vpop.f32.mrb[0].mxu0
      %6699 = vmatprep.mubr.bf16.mxu0 0
      %6700 = vmatmul.mubr.bf16.gmra.mrb[0].mxu0 %v6607
      %v6701 = vpop.f32.mrb[0].mxu0
      %v6702 = vadd.f32 0.0, %v6701
      %v6703 = vpop.f32.mrb[0].mxu0
      %v6704 = vpop.f32.mrb[0].mxu0
      %v6705 = vadd.f32 0.0, %v6704
      %v6706 = vpop.f32.mrb[0].mxu0
      %6707 = vmatprep.mubr.bf16.mxu0 0
      %6708 = vmatmul.mubr.bf16.gmra.mrb[0].mxu0 %v6610
      %v6709 = vpop.f32.mrb[0].mxu0
      %v6710 = vadd.f32 0.0, %v6709
      %v6711 = vpop.f32.mrb[0].mxu0
      %v6712 = vpop.f32.mrb[0].mxu0
      %v6713 = vadd.f32 0.0, %v6712
      %v6714 = vpop.f32.mrb[0].mxu0
      %6715 = vmatprep.mubr.bf16.mxu0 0
      %6716 = vmatmul.mubr.bf16.gmra.mrb[0].mxu0 %v6613
      %v6717 = vpop.f32.mrb[0].mxu0
      %v6718 = vadd.f32 0.0, %v6717
      %v6719 = vpop.f32.mrb[0].mxu0
      %v6720 = vpop.f32.mrb[0].mxu0
      %v6721 = vadd.f32 0.0, %v6720
      %v6722 = vpop.f32.mrb[0].mxu0
      %6723 = vmatprep.mubr.bf16.mxu0 0
      %6724 = vmatmul.mubr.bf16.gmra.mrb[0].mxu0 %v6616
      %v6725 = vpop.f32.mrb[0].mxu0
      %v6726 = vadd.f32 0.0, %v6725
      %v6727 = vpop.f32.mrb[0].mxu0
      %v6728 = vpop.f32.mrb[0].mxu0
      %v6729 = vadd.f32 0.0, %v6728
      %v6730 = vpop.f32.mrb[0].mxu0
      %6731 = vmatprep.mubr.bf16.mxu0 0
      %6732 = vmatmul.mubr.bf16.gmra.mrb[0].mxu0 %v6619
      %v6733 = vpop.f32.mrb[0].mxu0
      %v6734 = vadd.f32 0.0, %v6733
      %v6735 = vpop.f32.mrb[0].mxu0
      %v6736 = vpop.f32.mrb[0].mxu0
      %v6737 = vadd.f32 0.0, %v6736
      %v6738 = vpop.f32.mrb[0].mxu0
      %6739 = vmatprep.mubr.bf16.mxu0 0
      %6740 = vmatmul.mubr.bf16.gmra.mrb[0].mxu0 %v6622
      %v6741 = vpop.f32.mrb[0].mxu0
      %v6742 = vadd.f32 0.0, %v6741
      %v6743 = vpop.f32.mrb[0].mxu0
      %v6744 = vpop.f32.mrb[0].mxu0
      %v6745 = vadd.f32 0.0, %v6744
      %v6746 = vpop.f32.mrb[0].mxu0
      %6747 = vmatprep.mubr.bf16.mxu0 0
      %6748 = vmatmul.mubr.bf16.gmra.mrb[0].mxu0 %v6625
      %v6749 = vpop.f32.mrb[0].mxu0
      %v6750 = vadd.f32 0.0, %v6749
      %v6751 = vpop.f32.mrb[0].mxu0
      %v6752 = vpop.f32.mrb[0].mxu0
      %v6753 = vadd.f32 0.0, %v6752
      %v6754 = vpop.f32.mrb[0].mxu0
      %6755 = vmatprep.mubr.bf16.mxu0 0
      %6756 = vmatmul.mubr.bf16.gmra.mrb[0].mxu0 %v6628
      %v6757 = vpop.f32.mrb[0].mxu0
      %v6758 = vadd.f32 0.0, %v6757
      %v6759 = vpop.f32.mrb[0].mxu0
      %v6760 = vpop.f32.mrb[0].mxu0
      %v6761 = vadd.f32 0.0, %v6760
      %v6762 = vpop.f32.mrb[0].mxu0
      %6763 = vmatprep.mubr.bf16.mxu0 0
      %6764 = vmatmul.mubr.bf16.gmra.mrb[0].mxu0 %v6631
      %v6765 = vpop.f32.mrb[0].mxu0
      %v6766 = vadd.f32 0.0, %v6765
      %v6767 = vpop.f32.mrb[0].mxu0
      %v6768 = vpop.f32.mrb[0].mxu0
      %v6769 = vadd.f32 0.0, %v6768
      %v6770 = vpop.f32.mrb[0].mxu0
      %6771 = vmatprep.mubr.bf16.mxu0 0
      %6772 = vmatmul.mubr.bf16.gmra.mrb[0].mxu0 %v6634
      %v6773 = vpop.f32.mrb[0].mxu0
      %v6774 = vadd.f32 0.0, %v6773
      %v6775 = vpop.f32.mrb[0].mxu0
      %v6776 = vpop.f32.mrb[0].mxu0
      %v6777 = vadd.f32 0.0, %v6776
      %v6778 = vpop.f32.mrb[0].mxu0
      %6779 = vmatprep.mubr.bf16.mxu0 0
      %6780 = vmatmul.mubr.bf16.gmra.mrb[0].mxu0 %v6637
      %v6781 = vpop.f32.mrb[0].mxu0
      %v6782 = vadd.f32 0.0, %v6781
      %v6783 = vpop.f32.mrb[0].mxu0
      %v6784 = vpop.f32.mrb[0].mxu0
      %v6785 = vadd.f32 0.0, %v6784
      %v6786 = vpop.f32.mrb[0].mxu0
      %6787 = vmatprep.mubr.bf16.mxu0 0
      %6788 = vmatmul.mubr.bf16.gmra.mrb[0].mxu0 %v6640
      %v6789 = vpop.f32.mrb[0].mxu0
      %v6790 = vadd.f32 0.0, %v6789
      %v6791 = vpop.f32.mrb[0].mxu0
      %v6792 = vpop.f32.mrb[0].mxu0
      %v6793 = vadd.f32 0.0, %v6792
      %v6794 = vpop.f32.mrb[0].mxu0
      %6795 = vmatprep.mubr.bf16.mxu0 0
      %6796 = vmatmul.mubr.bf16.gmra.mrb[0].mxu0 %v6643
      %v6797 = vpop.f32.mrb[0].mxu0
      %v6798 = vadd.f32 0.0, %v6797
      %v6799 = vpop.f32.mrb[0].mxu0
      %v6800 = vpop.f32.mrb[0].mxu0
      %v6801 = vadd.f32 0.0, %v6800
      %v6802 = vpop.f32.mrb[0].mxu0
      %6803 = vmatprep.mubr.bf16.mxu0 0
      %6804 = vmatmul.mubr.bf16.gmra.mrb[0].mxu0 %v6646
      %v6805 = vpop.f32.mrb[0].mxu0
      %v6806 = vadd.f32 0.0, %v6805
      %v6807 = vpop.f32.mrb[0].mxu0
      %v6808 = vpop.f32.mrb[0].mxu0
      %v6809 = vadd.f32 0.0, %v6808
      %v6810 = vpop.f32.mrb[0].mxu0
      %6811 = vdwg.mxu0
      %v6812 = vadd.f32 %v6448, %v6686
      %v6813 = vadd.f32 %v6449, %v6689
      %v6814 = vadd.f32 %v6450, %v6694
      %v6815 = vadd.f32 %v6451, %v6697
      %v6816 = vadd.f32 %v6452, %v6702
      %v6817 = vadd.f32 %v6453, %v6705
      %v6818 = vadd.f32 %v6454, %v6710
      %v6819 = vadd.f32 %v6455, %v6713
      %v6820 = vadd.f32 %v6456, %v6718
      %v6821 = vadd.f32 %v6457, %v6721
      %v6822 = vadd.f32 %v6458, %v6726
      %v6823 = vadd.f32 %v6459, %v6729
      %v6824 = vadd.f32 %v6460, %v6734
      %v6825 = vadd.f32 %v6461, %v6737
      %v6826 = vadd.f32 %v6462, %v6742
      %v6827 = vadd.f32 %v6463, %v6745
      %v6828 = vadd.f32 %v6464, %v6750
      %v6829 = vadd.f32 %v6465, %v6753
      %v6830 = vadd.f32 %v6466, %v6758
      %v6831 = vadd.f32 %v6467, %v6761
      %v6832 = vadd.f32 %v6468, %v6766
      %v6833 = vadd.f32 %v6469, %v6769
      %v6834 = vadd.f32 %v6470, %v6774
      %v6835 = vadd.f32 %v6471, %v6777
      %v6836 = vadd.f32 %v6472, %v6782
      %v6837 = vadd.f32 %v6473, %v6785
      %v6838 = vadd.f32 %v6474, %v6790
      %v6839 = vadd.f32 %v6475, %v6793
      %v6840 = vadd.f32 %v6476, %v6798
      %v6841 = vadd.f32 %v6477, %v6801
      %v6842 = vadd.f32 %v6478, %v6806
      %v6843 = vadd.f32 %v6479, %v6809
      %s6844 = scalar_lea.vmem %s1, 38
      %v6845 = vld [vmem:[%s6844] sm:$0x3]
      %v6847 = vunpack.c.l.b16 %v6517
      %v6848 = vpack.c.b16 %v6847, %v6847
      %v6849 = vshrl.u32 %v6584, 16
      %v6851 = vshll.u32 %v6584, 16
      %v6853 = vrot.slane %v6851, 1
      %v6854 = vor.u32 %v6849, %v6853
      %v6855 = vshll.u32 %v6585, 16
      %v6857 = vrot.slane %v6855, 1
      %v6858 = vsel %vm353, %v6854, %v6857
      %v6859 = vshrl.u32 %v6585, 16
      %v6861 = vor.u32 %v6859, %v6857
      %v6862 = vshll.u32 %v6586, 16
      %v6864 = vrot.slane %v6862, 1
      %v6865 = vsel %vm353, %v6861, %v6864
      %v6866 = vshrl.u32 %v6586, 16
      %v6868 = vor.u32 %v6866, %v6864
      %v6869 = vshll.u32 %v6587, 16
      %v6871 = vrot.slane %v6869, 1
      %v6872 = vsel %vm353, %v6868, %v6871
      %v6873 = vshrl.u32 %v6587, 16
      %v6875 = vor.u32 %v6873, %v6871
      %v6876 = vshll.u32 %v6588, 16
      %v6878 = vrot.slane %v6876, 1
      %v6879 = vsel %vm353, %v6875, %v6878
      %v6880 = vshrl.u32 %v6588, 16
      %v6882 = vor.u32 %v6880, %v6878
      %v6883 = vshll.u32 %v6589, 16
      %v6885 = vrot.slane %v6883, 1
      %v6886 = vsel %vm353, %v6882, %v6885
      %v6887 = vshrl.u32 %v6589, 16
      %v6889 = vor.u32 %v6887, %v6885
      %v6890 = vshll.u32 %v6590, 16
      %v6892 = vrot.slane %v6890, 1
      %v6893 = vsel %vm353, %v6889, %v6892
      %v6894 = vshrl.u32 %v6590, 16
      %v6896 = vor.u32 %v6894, %v6892
      %v6897 = vshll.u32 %v6591, 16
      %v6899 = vrot.slane %v6897, 1
      %v6900 = vsel %vm353, %v6896, %v6899
      %v6901 = vshrl.u32 %v6591, 16
      %v6903 = vor.u32 %v6901, %v6899
      %v6904 = vshll.u32 %v6592, 16
      %v6906 = vrot.slane %v6904, 1
      %v6907 = vsel %vm353, %v6903, %v6906
      %v6908 = vshrl.u32 %v6592, 16
      %v6910 = vor.u32 %v6908, %v6906
      %v6911 = vshll.u32 %v6593, 16
      %v6913 = vrot.slane %v6911, 1
      %v6914 = vsel %vm353, %v6910, %v6913
      %v6915 = vshrl.u32 %v6593, 16
      %v6917 = vor.u32 %v6915, %v6913
      %v6918 = vshll.u32 %v6594, 16
      %v6920 = vrot.slane %v6918, 1
      %v6921 = vsel %vm353, %v6917, %v6920
      %v6922 = vshrl.u32 %v6594, 16
      %v6924 = vor.u32 %v6922, %v6920
      %v6925 = vshll.u32 %v6595, 16
      %v6927 = vrot.slane %v6925, 1
      %v6928 = vsel %vm353, %v6924, %v6927
      %v6929 = vshrl.u32 %v6595, 16
      %v6931 = vor.u32 %v6929, %v6927
      %v6932 = vshll.u32 %v6596, 16
      %v6934 = vrot.slane %v6932, 1
      %v6935 = vsel %vm353, %v6931, %v6934
      %v6936 = vshrl.u32 %v6596, 16
      %v6938 = vor.u32 %v6936, %v6934
      %v6939 = vshll.u32 %v6597, 16
      %v6941 = vrot.slane %v6939, 1
      %v6942 = vsel %vm353, %v6938, %v6941
      %v6943 = vshrl.u32 %v6597, 16
      %v6945 = vor.u32 %v6943, %v6941
      %v6946 = vshll.u32 %v6598, 16
      %v6948 = vrot.slane %v6946, 1
      %v6949 = vsel %vm353, %v6945, %v6948
      %v6950 = vshrl.u32 %v6598, 16
      %v6952 = vor.u32 %v6950, %v6948
      %v6953 = vshll.u32 %v6599, 16
      %v6955 = vrot.slane %v6953, 1
      %v6956 = vsel %vm353, %v6952, %v6955
      %v6957 = vshrl.u32 %v6599, 16
      %v6959 = vor.u32 %v6957, %v6955
      %v6961 = vshll.u32 %v6848, 16
      %v6963 = vrot.slane %v6961, 1
      %v6964 = vsel %vm353, %v6959, %v6963
      %v6966 = vsel %vm486, %v6858, 0
      %v6969 = vsel %vm486, %v6865, 0
      %v6972 = vsel %vm486, %v6872, 0
      %v6975 = vsel %vm486, %v6879, 0
      %v6978 = vsel %vm486, %v6886, 0
      %v6981 = vsel %vm486, %v6893, 0
      %v6984 = vsel %vm486, %v6900, 0
      %v6987 = vsel %vm486, %v6907, 0
      %v6990 = vsel %vm486, %v6914, 0
      %v6993 = vsel %vm486, %v6921, 0
      %v6996 = vsel %vm486, %v6928, 0
      %v6999 = vsel %vm486, %v6935, 0
      %v7002 = vsel %vm486, %v6942, 0
      %v7005 = vsel %vm486, %v6949, 0
      %v7008 = vsel %vm486, %v6956, 0
      %v7011 = vsel %vm486, %v6964, 0
      %v7014 = vsel %vm535, %v6845, 0
      %7016 = vmatprep.subr.bf16.mxu0 0
      %7017 = vmatpush1.bf16.msra.mxu0 %v7014
      %7018 = vmatprep.subr.bf16.mxu0 0
      %7019 = vmatpush1.bf16.msra.mxu0 0
      %7020 = vmatprep.subr.bf16.mxu0 0
      %7021 = vmatpush1.bf16.msra.mxu0 0
      %7022 = vmatprep.subr.bf16.mxu0 0
      %7023 = vmatpush1.bf16.msra.mxu0 0
      %7024 = vmatprep.subr.bf16.mxu0 0
      %7025 = vmatpush1.bf16.msra.mxu0 0
      %7026 = vmatprep.subr.bf16.mxu0 0
      %7027 = vmatpush1.bf16.msra.mxu0 0
      %7028 = vmatprep.subr.bf16.mxu0 0
      %7029 = vmatpush1.bf16.msra.mxu0 0
      %7030 = vmatprep.subr.bf16.mxu0 0
      %7031 = vmatpush1.bf16.msra.mxu0 0
      %7032 = vmatprep.subr.bf16.mxu0 0
      %7033 = vmatpush1.bf16.msra.mxu0 0
      %7034 = vmatprep.subr.bf16.mxu0 0
      %7035 = vmatpush1.bf16.msra.mxu0 0
      %7036 = vmatprep.subr.bf16.mxu0 0
      %7037 = vmatpush1.bf16.msra.mxu0 0
      %7038 = vmatprep.subr.bf16.mxu0 0
      %7039 = vmatpush1.bf16.msra.mxu0 0
      %7040 = vmatprep.subr.bf16.mxu0 0
      %7041 = vmatpush1.bf16.msra.mxu0 0
      %7042 = vmatprep.subr.bf16.mxu0 0
      %7043 = vmatpush1.bf16.msra.mxu0 0
      %7044 = vmatprep.subr.bf16.mxu0 0
      %7045 = vmatpush1.bf16.msra.mxu0 0
      %7046 = vmatprep.subr.bf16.mxu0 0
      %7047 = vmatpush1.bf16.msra.mxu0 0
      %7048 = vmatprep.mubr.bf16.mxu0 0
      %7049 = vmatmul.mubr.bf16.gmra.mrb[0].mxu0 %v6966
      %v7050 = vpop.f32.mrb[0].mxu0
      %v7051 = vadd.f32 0.0, %v7050
      %v7052 = vpop.f32.mrb[0].mxu0
      %v7053 = vpop.f32.mrb[0].mxu0
      %v7054 = vadd.f32 0.0, %v7053
      %v7055 = vpop.f32.mrb[0].mxu0
      %7056 = vmatprep.mubr.bf16.mxu0 0
      %7057 = vmatmul.mubr.bf16.gmra.mrb[0].mxu0 %v6969
      %v7058 = vpop.f32.mrb[0].mxu0
      %v7059 = vadd.f32 0.0, %v7058
      %v7060 = vpop.f32.mrb[0].mxu0
      %v7061 = vpop.f32.mrb[0].mxu0
      %v7062 = vadd.f32 0.0, %v7061
      %v7063 = vpop.f32.mrb[0].mxu0
      %7064 = vmatprep.mubr.bf16.mxu0 0
      %7065 = vmatmul.mubr.bf16.gmra.mrb[0].mxu0 %v6972
      %v7066 = vpop.f32.mrb[0].mxu0
      %v7067 = vadd.f32 0.0, %v7066
      %v7068 = vpop.f32.mrb[0].mxu0
      %v7069 = vpop.f32.mrb[0].mxu0
      %v7070 = vadd.f32 0.0, %v7069
      %v7071 = vpop.f32.mrb[0].mxu0
      %7072 = vmatprep.mubr.bf16.mxu0 0
      %7073 = vmatmul.mubr.bf16.gmra.mrb[0].mxu0 %v6975
      %v7074 = vpop.f32.mrb[0].mxu0
      %v7075 = vadd.f32 0.0, %v7074
      %v7076 = vpop.f32.mrb[0].mxu0
      %v7077 = vpop.f32.mrb[0].mxu0
      %v7078 = vadd.f32 0.0, %v7077
      %v7079 = vpop.f32.mrb[0].mxu0
      %7080 = vmatprep.mubr.bf16.mxu0 0
      %7081 = vmatmul.mubr.bf16.gmra.mrb[0].mxu0 %v6978
      %v7082 = vpop.f32.mrb[0].mxu0
      %v7083 = vadd.f32 0.0, %v7082
      %v7084 = vpop.f32.mrb[0].mxu0
      %v7085 = vpop.f32.mrb[0].mxu0
      %v7086 = vadd.f32 0.0, %v7085
      %v7087 = vpop.f32.mrb[0].mxu0
      %7088 = vmatprep.mubr.bf16.mxu0 0
      %7089 = vmatmul.mubr.bf16.gmra.mrb[0].mxu0 %v6981
      %v7090 = vpop.f32.mrb[0].mxu0
      %v7091 = vadd.f32 0.0, %v7090
      %v7092 = vpop.f32.mrb[0].mxu0
      %v7093 = vpop.f32.mrb[0].mxu0
      %v7094 = vadd.f32 0.0, %v7093
      %v7095 = vpop.f32.mrb[0].mxu0
      %7096 = vmatprep.mubr.bf16.mxu0 0
      %7097 = vmatmul.mubr.bf16.gmra.mrb[0].mxu0 %v6984
      %v7098 = vpop.f32.mrb[0].mxu0
      %v7099 = vadd.f32 0.0, %v7098
      %v7100 = vpop.f32.mrb[0].mxu0
      %v7101 = vpop.f32.mrb[0].mxu0
      %v7102 = vadd.f32 0.0, %v7101
      %v7103 = vpop.f32.mrb[0].mxu0
      %7104 = vmatprep.mubr.bf16.mxu0 0
      %7105 = vmatmul.mubr.bf16.gmra.mrb[0].mxu0 %v6987
      %v7106 = vpop.f32.mrb[0].mxu0
      %v7107 = vadd.f32 0.0, %v7106
      %v7108 = vpop.f32.mrb[0].mxu0
      %v7109 = vpop.f32.mrb[0].mxu0
      %v7110 = vadd.f32 0.0, %v7109
      %v7111 = vpop.f32.mrb[0].mxu0
      %7112 = vmatprep.mubr.bf16.mxu0 0
      %7113 = vmatmul.mubr.bf16.gmra.mrb[0].mxu0 %v6990
      %v7114 = vpop.f32.mrb[0].mxu0
      %v7115 = vadd.f32 0.0, %v7114
      %v7116 = vpop.f32.mrb[0].mxu0
      %v7117 = vpop.f32.mrb[0].mxu0
      %v7118 = vadd.f32 0.0, %v7117
      %v7119 = vpop.f32.mrb[0].mxu0
      %7120 = vmatprep.mubr.bf16.mxu0 0
      %7121 = vmatmul.mubr.bf16.gmra.mrb[0].mxu0 %v6993
      %v7122 = vpop.f32.mrb[0].mxu0
      %v7123 = vadd.f32 0.0, %v7122
      %v7124 = vpop.f32.mrb[0].mxu0
      %v7125 = vpop.f32.mrb[0].mxu0
      %v7126 = vadd.f32 0.0, %v7125
      %v7127 = vpop.f32.mrb[0].mxu0
      %7128 = vmatprep.mubr.bf16.mxu0 0
      %7129 = vmatmul.mubr.bf16.gmra.mrb[0].mxu0 %v6996
      %v7130 = vpop.f32.mrb[0].mxu0
      %v7131 = vadd.f32 0.0, %v7130
      %v7132 = vpop.f32.mrb[0].mxu0
      %v7133 = vpop.f32.mrb[0].mxu0
      %v7134 = vadd.f32 0.0, %v7133
      %v7135 = vpop.f32.mrb[0].mxu0
      %7136 = vmatprep.mubr.bf16.mxu0 0
      %7137 = vmatmul.mubr.bf16.gmra.mrb[0].mxu0 %v6999
      %v7138 = vpop.f32.mrb[0].mxu0
      %v7139 = vadd.f32 0.0, %v7138
      %v7140 = vpop.f32.mrb[0].mxu0
      %v7141 = vpop.f32.mrb[0].mxu0
      %v7142 = vadd.f32 0.0, %v7141
      %v7143 = vpop.f32.mrb[0].mxu0
      %7144 = vmatprep.mubr.bf16.mxu0 0
      %7145 = vmatmul.mubr.bf16.gmra.mrb[0].mxu0 %v7002
      %v7146 = vpop.f32.mrb[0].mxu0
      %v7147 = vadd.f32 0.0, %v7146
      %v7148 = vpop.f32.mrb[0].mxu0
      %v7149 = vpop.f32.mrb[0].mxu0
      %v7150 = vadd.f32 0.0, %v7149
      %v7151 = vpop.f32.mrb[0].mxu0
      %7152 = vmatprep.mubr.bf16.mxu0 0
      %7153 = vmatmul.mubr.bf16.gmra.mrb[0].mxu0 %v7005
      %v7154 = vpop.f32.mrb[0].mxu0
      %v7155 = vadd.f32 0.0, %v7154
      %v7156 = vpop.f32.mrb[0].mxu0
      %v7157 = vpop.f32.mrb[0].mxu0
      %v7158 = vadd.f32 0.0, %v7157
      %v7159 = vpop.f32.mrb[0].mxu0
      %7160 = vmatprep.mubr.bf16.mxu0 0
      %7161 = vmatmul.mubr.bf16.gmra.mrb[0].mxu0 %v7008
      %v7162 = vpop.f32.mrb[0].mxu0
      %v7163 = vadd.f32 0.0, %v7162
      %v7164 = vpop.f32.mrb[0].mxu0
      %v7165 = vpop.f32.mrb[0].mxu0
      %v7166 = vadd.f32 0.0, %v7165
      %v7167 = vpop.f32.mrb[0].mxu0
      %7168 = vmatprep.mubr.bf16.mxu0 0
      %7169 = vmatmul.mubr.bf16.gmra.mrb[0].mxu0 %v7011
      %v7170 = vpop.f32.mrb[0].mxu0
      %v7171 = vadd.f32 0.0, %v7170
      %v7172 = vpop.f32.mrb[0].mxu0
      %v7173 = vpop.f32.mrb[0].mxu0
      %v7174 = vadd.f32 0.0, %v7173
      %v7175 = vpop.f32.mrb[0].mxu0
      %7176 = vdwg.mxu0
      %v7177 = vadd.f32 %v6812, %v7051
      %v7178 = vadd.f32 %v6813, %v7054
      %v7179 = vadd.f32 %v6814, %v7059
      %v7180 = vadd.f32 %v6815, %v7062
      %v7181 = vadd.f32 %v6816, %v7067
      %v7182 = vadd.f32 %v6817, %v7070
      %v7183 = vadd.f32 %v6818, %v7075
      %v7184 = vadd.f32 %v6819, %v7078
      %v7185 = vadd.f32 %v6820, %v7083
      %v7186 = vadd.f32 %v6821, %v7086
      %v7187 = vadd.f32 %v6822, %v7091
      %v7188 = vadd.f32 %v6823, %v7094
      %v7189 = vadd.f32 %v6824, %v7099
      %v7190 = vadd.f32 %v6825, %v7102
      %v7191 = vadd.f32 %v6826, %v7107
      %v7192 = vadd.f32 %v6827, %v7110
      %v7193 = vadd.f32 %v6828, %v7115
      %v7194 = vadd.f32 %v6829, %v7118
      %v7195 = vadd.f32 %v6830, %v7123
      %v7196 = vadd.f32 %v6831, %v7126
      %v7197 = vadd.f32 %v6832, %v7131
      %v7198 = vadd.f32 %v6833, %v7134
      %v7199 = vadd.f32 %v6834, %v7139
      %v7200 = vadd.f32 %v6835, %v7142
      %v7201 = vadd.f32 %v6836, %v7147
      %v7202 = vadd.f32 %v6837, %v7150
      %v7203 = vadd.f32 %v6838, %v7155
      %v7204 = vadd.f32 %v6839, %v7158
      %v7205 = vadd.f32 %v6840, %v7163
      %v7206 = vadd.f32 %v6841, %v7166
      %v7207 = vadd.f32 %v6842, %v7171
      %v7208 = vadd.f32 %v6843, %v7174
      %s7209 = scalar_lea.vmem %s1, 40
      %v7210 = vld [vmem:[%s7209] sm:$0x3]
      %v7211 = vrot.slane %v6584, 1
      %v7212 = vrot.slane %v6585, 1
      %v7213 = vsel %vm898, %v7211, %v7212
      %v7214 = vrot.slane %v6586, 1
      %v7215 = vsel %vm898, %v7212, %v7214
      %v7216 = vrot.slane %v6587, 1
      %v7217 = vsel %vm898, %v7214, %v7216
      %v7218 = vrot.slane %v6588, 1
      %v7219 = vsel %vm898, %v7216, %v7218
      %v7220 = vrot.slane %v6589, 1
      %v7221 = vsel %vm898, %v7218, %v7220
      %v7222 = vrot.slane %v6590, 1
      %v7223 = vsel %vm898, %v7220, %v7222
      %v7224 = vrot.slane %v6591, 1
      %v7225 = vsel %vm898, %v7222, %v7224
      %v7226 = vrot.slane %v6592, 1
      %v7227 = vsel %vm898, %v7224, %v7226
      %v7228 = vrot.slane %v6593, 1
      %v7229 = vsel %vm898, %v7226, %v7228
      %v7230 = vrot.slane %v6594, 1
      %v7231 = vsel %vm898, %v7228, %v7230
      %v7232 = vrot.slane %v6595, 1
      %v7233 = vsel %vm898, %v7230, %v7232
      %v7234 = vrot.slane %v6596, 1
      %v7235 = vsel %vm898, %v7232, %v7234
      %v7236 = vrot.slane %v6597, 1
      %v7237 = vsel %vm898, %v7234, %v7236
      %v7238 = vrot.slane %v6598, 1
      %v7239 = vsel %vm898, %v7236, %v7238
      %v7240 = vrot.slane %v6599, 1
      %v7241 = vsel %vm898, %v7238, %v7240
      %v7242 = vrot.slane %v6848, 1
      %v7243 = vsel %vm898, %v7240, %v7242
      %v7245 = vsel %vm486, %v7213, 0
      %v7248 = vsel %vm486, %v7215, 0
      %v7251 = vsel %vm486, %v7217, 0
      %v7254 = vsel %vm486, %v7219, 0
      %v7257 = vsel %vm486, %v7221, 0
      %v7260 = vsel %vm486, %v7223, 0
      %v7263 = vsel %vm486, %v7225, 0
      %v7266 = vsel %vm486, %v7227, 0
      %v7269 = vsel %vm486, %v7229, 0
      %v7272 = vsel %vm486, %v7231, 0
      %v7275 = vsel %vm486, %v7233, 0
      %v7278 = vsel %vm486, %v7235, 0
      %v7281 = vsel %vm486, %v7237, 0
      %v7284 = vsel %vm486, %v7239, 0
      %v7287 = vsel %vm486, %v7241, 0
      %v7290 = vsel %vm486, %v7243, 0
      %v7293 = vsel %vm535, %v7210, 0
      %7295 = vmatprep.subr.bf16.mxu0 0
      %7296 = vmatpush1.bf16.msra.mxu0 %v7293
      %7297 = vmatprep.subr.bf16.mxu0 0
      %7298 = vmatpush1.bf16.msra.mxu0 0
      %7299 = vmatprep.subr.bf16.mxu0 0
      %7300 = vmatpush1.bf16.msra.mxu0 0
      %7301 = vmatprep.subr.bf16.mxu0 0
      %7302 = vmatpush1.bf16.msra.mxu0 0
      %7303 = vmatprep.subr.bf16.mxu0 0
      %7304 = vmatpush1.bf16.msra.mxu0 0
      %7305 = vmatprep.subr.bf16.mxu0 0
      %7306 = vmatpush1.bf16.msra.mxu0 0
      %7307 = vmatprep.subr.bf16.mxu0 0
      %7308 = vmatpush1.bf16.msra.mxu0 0
      %7309 = vmatprep.subr.bf16.mxu0 0
      %7310 = vmatpush1.bf16.msra.mxu0 0
      %7311 = vmatprep.subr.bf16.mxu0 0
      %7312 = vmatpush1.bf16.msra.mxu0 0
      %7313 = vmatprep.subr.bf16.mxu0 0
      %7314 = vmatpush1.bf16.msra.mxu0 0
      %7315 = vmatprep.subr.bf16.mxu0 0
      %7316 = vmatpush1.bf16.msra.mxu0 0
      %7317 = vmatprep.subr.bf16.mxu0 0
      %7318 = vmatpush1.bf16.msra.mxu0 0
      %7319 = vmatprep.subr.bf16.mxu0 0
      %7320 = vmatpush1.bf16.msra.mxu0 0
      %7321 = vmatprep.subr.bf16.mxu0 0
      %7322 = vmatpush1.bf16.msra.mxu0 0
      %7323 = vmatprep.subr.bf16.mxu0 0
      %7324 = vmatpush1.bf16.msra.mxu0 0
      %7325 = vmatprep.subr.bf16.mxu0 0
      %7326 = vmatpush1.bf16.msra.mxu0 0
      %7327 = vmatprep.mubr.bf16.mxu0 0
      %7328 = vmatmul.mubr.bf16.gmra.mrb[0].mxu0 %v7245
      %v7329 = vpop.f32.mrb[0].mxu0
      %v7330 = vadd.f32 0.0, %v7329
      %v7331 = vpop.f32.mrb[0].mxu0
      %v7332 = vpop.f32.mrb[0].mxu0
      %v7333 = vadd.f32 0.0, %v7332
      %v7334 = vpop.f32.mrb[0].mxu0
      %7335 = vmatprep.mubr.bf16.mxu0 0
      %7336 = vmatmul.mubr.bf16.gmra.mrb[0].mxu0 %v7248
      %v7337 = vpop.f32.mrb[0].mxu0
      %v7338 = vadd.f32 0.0, %v7337
      %v7339 = vpop.f32.mrb[0].mxu0
      %v7340 = vpop.f32.mrb[0].mxu0
      %v7341 = vadd.f32 0.0, %v7340
      %v7342 = vpop.f32.mrb[0].mxu0
      %7343 = vmatprep.mubr.bf16.mxu0 0
      %7344 = vmatmul.mubr.bf16.gmra.mrb[0].mxu0 %v7251
      %v7345 = vpop.f32.mrb[0].mxu0
      %v7346 = vadd.f32 0.0, %v7345
      %v7347 = vpop.f32.mrb[0].mxu0
      %v7348 = vpop.f32.mrb[0].mxu0
      %v7349 = vadd.f32 0.0, %v7348
      %v7350 = vpop.f32.mrb[0].mxu0
      %7351 = vmatprep.mubr.bf16.mxu0 0
      %7352 = vmatmul.mubr.bf16.gmra.mrb[0].mxu0 %v7254
      %v7353 = vpop.f32.mrb[0].mxu0
      %v7354 = vadd.f32 0.0, %v7353
      %v7355 = vpop.f32.mrb[0].mxu0
      %v7356 = vpop.f32.mrb[0].mxu0
      %v7357 = vadd.f32 0.0, %v7356
      %v7358 = vpop.f32.mrb[0].mxu0
      %7359 = vmatprep.mubr.bf16.mxu0 0
      %7360 = vmatmul.mubr.bf16.gmra.mrb[0].mxu0 %v7257
      %v7361 = vpop.f32.mrb[0].mxu0
      %v7362 = vadd.f32 0.0, %v7361
      %v7363 = vpop.f32.mrb[0].mxu0
      %v7364 = vpop.f32.mrb[0].mxu0
      %v7365 = vadd.f32 0.0, %v7364
      %v7366 = vpop.f32.mrb[0].mxu0
      %7367 = vmatprep.mubr.bf16.mxu0 0
      %7368 = vmatmul.mubr.bf16.gmra.mrb[0].mxu0 %v7260
      %v7369 = vpop.f32.mrb[0].mxu0
      %v7370 = vadd.f32 0.0, %v7369
      %v7371 = vpop.f32.mrb[0].mxu0
      %v7372 = vpop.f32.mrb[0].mxu0
      %v7373 = vadd.f32 0.0, %v7372
      %v7374 = vpop.f32.mrb[0].mxu0
      %7375 = vmatprep.mubr.bf16.mxu0 0
      %7376 = vmatmul.mubr.bf16.gmra.mrb[0].mxu0 %v7263
      %v7377 = vpop.f32.mrb[0].mxu0
      %v7378 = vadd.f32 0.0, %v7377
      %v7379 = vpop.f32.mrb[0].mxu0
      %v7380 = vpop.f32.mrb[0].mxu0
      %v7381 = vadd.f32 0.0, %v7380
      %v7382 = vpop.f32.mrb[0].mxu0
      %7383 = vmatprep.mubr.bf16.mxu0 0
      %7384 = vmatmul.mubr.bf16.gmra.mrb[0].mxu0 %v7266
      %v7385 = vpop.f32.mrb[0].mxu0
      %v7386 = vadd.f32 0.0, %v7385
      %v7387 = vpop.f32.mrb[0].mxu0
      %v7388 = vpop.f32.mrb[0].mxu0
      %v7389 = vadd.f32 0.0, %v7388
      %v7390 = vpop.f32.mrb[0].mxu0
      %7391 = vmatprep.mubr.bf16.mxu0 0
      %7392 = vmatmul.mubr.bf16.gmra.mrb[0].mxu0 %v7269
      %v7393 = vpop.f32.mrb[0].mxu0
      %v7394 = vadd.f32 0.0, %v7393
      %v7395 = vpop.f32.mrb[0].mxu0
      %v7396 = vpop.f32.mrb[0].mxu0
      %v7397 = vadd.f32 0.0, %v7396
      %v7398 = vpop.f32.mrb[0].mxu0
      %7399 = vmatprep.mubr.bf16.mxu0 0
      %7400 = vmatmul.mubr.bf16.gmra.mrb[0].mxu0 %v7272
      %v7401 = vpop.f32.mrb[0].mxu0
      %v7402 = vadd.f32 0.0, %v7401
      %v7403 = vpop.f32.mrb[0].mxu0
      %v7404 = vpop.f32.mrb[0].mxu0
      %v7405 = vadd.f32 0.0, %v7404
      %v7406 = vpop.f32.mrb[0].mxu0
      %7407 = vmatprep.mubr.bf16.mxu0 0
      %7408 = vmatmul.mubr.bf16.gmra.mrb[0].mxu0 %v7275
      %v7409 = vpop.f32.mrb[0].mxu0
      %v7410 = vadd.f32 0.0, %v7409
      %v7411 = vpop.f32.mrb[0].mxu0
      %v7412 = vpop.f32.mrb[0].mxu0
      %v7413 = vadd.f32 0.0, %v7412
      %v7414 = vpop.f32.mrb[0].mxu0
      %7415 = vmatprep.mubr.bf16.mxu0 0
      %7416 = vmatmul.mubr.bf16.gmra.mrb[0].mxu0 %v7278
      %v7417 = vpop.f32.mrb[0].mxu0
      %v7418 = vadd.f32 0.0, %v7417
      %v7419 = vpop.f32.mrb[0].mxu0
      %v7420 = vpop.f32.mrb[0].mxu0
      %v7421 = vadd.f32 0.0, %v7420
      %v7422 = vpop.f32.mrb[0].mxu0
      %7423 = vmatprep.mubr.bf16.mxu0 0
      %7424 = vmatmul.mubr.bf16.gmra.mrb[0].mxu0 %v7281
      %v7425 = vpop.f32.mrb[0].mxu0
      %v7426 = vadd.f32 0.0, %v7425
      %v7427 = vpop.f32.mrb[0].mxu0
      %v7428 = vpop.f32.mrb[0].mxu0
      %v7429 = vadd.f32 0.0, %v7428
      %v7430 = vpop.f32.mrb[0].mxu0
      %7431 = vmatprep.mubr.bf16.mxu0 0
      %7432 = vmatmul.mubr.bf16.gmra.mrb[0].mxu0 %v7284
      %v7433 = vpop.f32.mrb[0].mxu0
      %v7434 = vadd.f32 0.0, %v7433
      %v7435 = vpop.f32.mrb[0].mxu0
      %v7436 = vpop.f32.mrb[0].mxu0
      %v7437 = vadd.f32 0.0, %v7436
      %v7438 = vpop.f32.mrb[0].mxu0
      %7439 = vmatprep.mubr.bf16.mxu0 0
      %7440 = vmatmul.mubr.bf16.gmra.mrb[0].mxu0 %v7287
      %v7441 = vpop.f32.mrb[0].mxu0
      %v7442 = vadd.f32 0.0, %v7441
      %v7443 = vpop.f32.mrb[0].mxu0
      %v7444 = vpop.f32.mrb[0].mxu0
      %v7445 = vadd.f32 0.0, %v7444
      %v7446 = vpop.f32.mrb[0].mxu0
      %7447 = vmatprep.mubr.bf16.mxu0 0
      %7448 = vmatmul.mubr.bf16.gmra.mrb[0].mxu0 %v7290
      %v7449 = vpop.f32.mrb[0].mxu0
      %v7450 = vadd.f32 0.0, %v7449
      %v7451 = vpop.f32.mrb[0].mxu0
      %v7452 = vpop.f32.mrb[0].mxu0
      %v7453 = vadd.f32 0.0, %v7452
      %v7454 = vpop.f32.mrb[0].mxu0
      %7455 = vdwg.mxu0
      %v7456 = vadd.f32 %v7177, %v7330
      %v7457 = vadd.f32 %v7178, %v7333
      %v7458 = vadd.f32 %v7179, %v7338
      %v7459 = vadd.f32 %v7180, %v7341
      %v7460 = vadd.f32 %v7181, %v7346
      %v7461 = vadd.f32 %v7182, %v7349
      %v7462 = vadd.f32 %v7183, %v7354
      %v7463 = vadd.f32 %v7184, %v7357
      %v7464 = vadd.f32 %v7185, %v7362
      %v7465 = vadd.f32 %v7186, %v7365
      %v7466 = vadd.f32 %v7187, %v7370
      %v7467 = vadd.f32 %v7188, %v7373
      %v7468 = vadd.f32 %v7189, %v7378
      %v7469 = vadd.f32 %v7190, %v7381
      %v7470 = vadd.f32 %v7191, %v7386
      %v7471 = vadd.f32 %v7192, %v7389
      %v7472 = vadd.f32 %v7193, %v7394
      %v7473 = vadd.f32 %v7194, %v7397
      %v7474 = vadd.f32 %v7195, %v7402
      %v7475 = vadd.f32 %v7196, %v7405
      %v7476 = vadd.f32 %v7197, %v7410
      %v7477 = vadd.f32 %v7198, %v7413
      %v7478 = vadd.f32 %v7199, %v7418
      %v7479 = vadd.f32 %v7200, %v7421
      %v7480 = vadd.f32 %v7201, %v7426
      %v7481 = vadd.f32 %v7202, %v7429
      %v7482 = vadd.f32 %v7203, %v7434
      %v7483 = vadd.f32 %v7204, %v7437
      %v7484 = vadd.f32 %v7205, %v7442
      %v7485 = vadd.f32 %v7206, %v7445
      %v7486 = vadd.f32 %v7207, %v7450
      %v7487 = vadd.f32 %v7208, %v7453
      %s7488 = sadd.s32 %s229, 656
      %s7489 = sshra.s32 %s7488, 3
      %s7490 = sand.u32 %s7488, 7
      %s7491 = smul.addr %s7489, 4
      %s7492 = scalar_lea.vmem %s0, %s7491
      %v7493 = vld [vmem:[%s7492 + $0x4] sm:$0xf]
      %v7494 = vld [vmem:[%s7492 + $0x8] sm:$0xf]
      %v7495 = vld [vmem:[%s7492 + $0xc] sm:$0xf]
      %v7496 = vld [vmem:[%s7492 + $0x10] sm:$0xf]
      %v7497 = vld [vmem:[%s7492 + $0x14] sm:$0xf]
      %v7498 = vld [vmem:[%s7492 + $0x18] sm:$0xf]
      %v7499 = vld [vmem:[%s7492 + $0x1c] sm:$0xf]
      %v7500 = vld [vmem:[%s7492 + $0x20] sm:$0xf]
      %v7501 = vld [vmem:[%s7492 + $0x24] sm:$0xf]
      %v7502 = vld [vmem:[%s7492 + $0x28] sm:$0xf]
      %v7503 = vld [vmem:[%s7492 + $0x2c] sm:$0xf]
      %v7504 = vld [vmem:[%s7492 + $0x30] sm:$0xf]
      %v7505 = vld [vmem:[%s7492 + $0x34] sm:$0xf]
      %v7506 = vld [vmem:[%s7492 + $0x38] sm:$0xf]
      %v7507 = vld [vmem:[%s7492 + $0x3c] sm:$0xf]
      %v7508 = vld [vmem:[%s7492 + $0x40] sm:$0xf]
      %v7509 = vld [vmem:[%s7492 + $0x44] sm:$0xf]
      %v7510 = vld [vmem:[%s7492 + $0x48] sm:$0xf]
      %v7511 = vld [vmem:[%s7492 + $0x4c] sm:$0xf]
      %v7512 = vld [vmem:[%s7492 + $0x50] sm:$0xf]
      %v7513 = vld [vmem:[%s7492 + $0x54] sm:$0xf]
      %v7514 = vld [vmem:[%s7492 + $0x58] sm:$0xf]
      %v7515 = vld [vmem:[%s7492 + $0x5c] sm:$0xf]
      %v7516 = vld [vmem:[%s7492 + $0x60] sm:$0xf]
      %v7517 = vld [vmem:[%s7492 + $0x64] sm:$0xf]
      %v7518 = vld [vmem:[%s7492 + $0x68] sm:$0xf]
      %v7519 = vld [vmem:[%s7492 + $0x6c] sm:$0xf]
      %v7520 = vld [vmem:[%s7492 + $0x70] sm:$0xf]
      %v7521 = vld [vmem:[%s7492 + $0x74] sm:$0xf]
      %v7522 = vld [vmem:[%s7492 + $0x78] sm:$0xf]
      %v7523 = vld [vmem:[%s7492 + $0x7c] sm:$0xf]
      %v7524 = vld [vmem:[%s7492 + $0x80] sm:$0xf]
      %v7525 = vld [vmem:[%s7492 + $0x84] sm:$0xf]
      %s7526 = scalar_lea.vmem %s1, 42
      %v7527 = vld [vmem:[%s7526] sm:$0x3]
      %v7561 = vunpack.c.l.b16 %v7493
      %v7562 = vunpack.c.l.b16 %v7494
      %v7563 = vunpack.c.l.b16 %v7495
      %v7564 = vunpack.c.l.b16 %v7496
      %v7565 = vunpack.c.l.b16 %v7497
      %v7566 = vunpack.c.l.b16 %v7498
      %v7567 = vunpack.c.l.b16 %v7499
      %v7568 = vunpack.c.l.b16 %v7500
      %v7569 = vunpack.c.l.b16 %v7501
      %v7570 = vunpack.c.l.b16 %v7502
      %v7571 = vunpack.c.l.b16 %v7503
      %v7572 = vunpack.c.l.b16 %v7504
      %v7573 = vunpack.c.l.b16 %v7505
      %v7574 = vunpack.c.l.b16 %v7506
      %v7575 = vunpack.c.l.b16 %v7507
      %v7576 = vunpack.c.l.b16 %v7508
      %v7577 = vunpack.c.l.b16 %v7509
      %v7578 = vunpack.c.l.b16 %v7510
      %v7579 = vunpack.c.l.b16 %v7511
      %v7580 = vunpack.c.l.b16 %v7512
      %v7581 = vunpack.c.l.b16 %v7513
      %v7582 = vunpack.c.l.b16 %v7514
      %v7583 = vunpack.c.l.b16 %v7515
      %v7584 = vunpack.c.l.b16 %v7516
      %v7585 = vunpack.c.l.b16 %v7517
      %v7586 = vunpack.c.l.b16 %v7518
      %v7587 = vunpack.c.l.b16 %v7519
      %v7588 = vunpack.c.l.b16 %v7520
      %v7589 = vunpack.c.l.b16 %v7521
      %v7590 = vunpack.c.l.b16 %v7522
      %v7591 = vunpack.c.l.b16 %v7523
      %v7592 = vunpack.c.l.b16 %v7524
      %v7593 = vunpack.c.l.b16 %v7525
      %v7594 = vpack.c.b16 %v7562, %v7561
      %v7595 = vpack.c.b16 %v7564, %v7563
      %v7596 = vpack.c.b16 %v7566, %v7565
      %v7597 = vpack.c.b16 %v7568, %v7567
      %v7598 = vpack.c.b16 %v7570, %v7569
      %v7599 = vpack.c.b16 %v7572, %v7571
      %v7600 = vpack.c.b16 %v7574, %v7573
      %v7601 = vpack.c.b16 %v7576, %v7575
      %v7602 = vpack.c.b16 %v7578, %v7577
      %v7603 = vpack.c.b16 %v7580, %v7579
      %v7604 = vpack.c.b16 %v7582, %v7581
      %v7605 = vpack.c.b16 %v7584, %v7583
      %v7606 = vpack.c.b16 %v7586, %v7585
      %v7607 = vpack.c.b16 %v7588, %v7587
      %v7608 = vpack.c.b16 %v7590, %v7589
      %v7609 = vpack.c.b16 %v7592, %v7591
      %v7610 = vpack.c.b16 %v7593, %v7593
      %v7611 = vrot.slane %v7594, 1
      %v7612 = vrot.slane %v7595, 1
      %v7613 = vsel %vm898, %v7611, %v7612
      %v7614 = vrot.slane %v7596, 1
      %v7615 = vsel %vm898, %v7612, %v7614
      %v7616 = vrot.slane %v7597, 1
      %v7617 = vsel %vm898, %v7614, %v7616
      %v7618 = vrot.slane %v7598, 1
      %v7619 = vsel %vm898, %v7616, %v7618
      %v7620 = vrot.slane %v7599, 1
      %v7621 = vsel %vm898, %v7618, %v7620
      %v7622 = vrot.slane %v7600, 1
      %v7623 = vsel %vm898, %v7620, %v7622
      %v7624 = vrot.slane %v7601, 1
      %v7625 = vsel %vm898, %v7622, %v7624
      %v7626 = vrot.slane %v7602, 1
      %v7627 = vsel %vm898, %v7624, %v7626
      %v7628 = vrot.slane %v7603, 1
      %v7629 = vsel %vm898, %v7626, %v7628
      %v7630 = vrot.slane %v7604, 1
      %v7631 = vsel %vm898, %v7628, %v7630
      %v7632 = vrot.slane %v7605, 1
      %v7633 = vsel %vm898, %v7630, %v7632
      %v7634 = vrot.slane %v7606, 1
      %v7635 = vsel %vm898, %v7632, %v7634
      %v7636 = vrot.slane %v7607, 1
      %v7637 = vsel %vm898, %v7634, %v7636
      %v7638 = vrot.slane %v7608, 1
      %v7639 = vsel %vm898, %v7636, %v7638
      %v7640 = vrot.slane %v7609, 1
      %v7641 = vsel %vm898, %v7638, %v7640
      %v7642 = vrot.slane %v7610, 1
      %v7643 = vsel %vm898, %v7640, %v7642
      %v7645 = vsel %vm486, %v7613, 0
      %v7648 = vsel %vm486, %v7615, 0
      %v7651 = vsel %vm486, %v7617, 0
      %v7654 = vsel %vm486, %v7619, 0
      %v7657 = vsel %vm486, %v7621, 0
      %v7660 = vsel %vm486, %v7623, 0
      %v7663 = vsel %vm486, %v7625, 0
      %v7666 = vsel %vm486, %v7627, 0
      %v7669 = vsel %vm486, %v7629, 0
      %v7672 = vsel %vm486, %v7631, 0
      %v7675 = vsel %vm486, %v7633, 0
      %v7678 = vsel %vm486, %v7635, 0
      %v7681 = vsel %vm486, %v7637, 0
      %v7684 = vsel %vm486, %v7639, 0
      %v7687 = vsel %vm486, %v7641, 0
      %v7690 = vsel %vm486, %v7643, 0
      %v7693 = vsel %vm535, %v7527, 0
      %7695 = vmatprep.subr.bf16.mxu0 0
      %7696 = vmatpush1.bf16.msra.mxu0 %v7693
      %7697 = vmatprep.subr.bf16.mxu0 0
      %7698 = vmatpush1.bf16.msra.mxu0 0
      %7699 = vmatprep.subr.bf16.mxu0 0
      %7700 = vmatpush1.bf16.msra.mxu0 0
      %7701 = vmatprep.subr.bf16.mxu0 0
      %7702 = vmatpush1.bf16.msra.mxu0 0
      %7703 = vmatprep.subr.bf16.mxu0 0
      %7704 = vmatpush1.bf16.msra.mxu0 0
      %7705 = vmatprep.subr.bf16.mxu0 0
      %7706 = vmatpush1.bf16.msra.mxu0 0
      %7707 = vmatprep.subr.bf16.mxu0 0
      %7708 = vmatpush1.bf16.msra.mxu0 0
      %7709 = vmatprep.subr.bf16.mxu0 0
      %7710 = vmatpush1.bf16.msra.mxu0 0
      %7711 = vmatprep.subr.bf16.mxu0 0
      %7712 = vmatpush1.bf16.msra.mxu0 0
      %7713 = vmatprep.subr.bf16.mxu0 0
      %7714 = vmatpush1.bf16.msra.mxu0 0
      %7715 = vmatprep.subr.bf16.mxu0 0
      %7716 = vmatpush1.bf16.msra.mxu0 0
      %7717 = vmatprep.subr.bf16.mxu0 0
      %7718 = vmatpush1.bf16.msra.mxu0 0
      %7719 = vmatprep.subr.bf16.mxu0 0
      %7720 = vmatpush1.bf16.msra.mxu0 0
      %7721 = vmatprep.subr.bf16.mxu0 0
      %7722 = vmatpush1.bf16.msra.mxu0 0
      %7723 = vmatprep.subr.bf16.mxu0 0
      %7724 = vmatpush1.bf16.msra.mxu0 0
      %7725 = vmatprep.subr.bf16.mxu0 0
      %7726 = vmatpush1.bf16.msra.mxu0 0
      %7727 = vmatprep.mubr.bf16.mxu0 0
      %7728 = vmatmul.mubr.bf16.gmra.mrb[0].mxu0 %v7645
      %v7729 = vpop.f32.mrb[0].mxu0
      %v7730 = vadd.f32 0.0, %v7729
      %v7731 = vpop.f32.mrb[0].mxu0
      %v7732 = vpop.f32.mrb[0].mxu0
      %v7733 = vadd.f32 0.0, %v7732
      %v7734 = vpop.f32.mrb[0].mxu0
      %7735 = vmatprep.mubr.bf16.mxu0 0
      %7736 = vmatmul.mubr.bf16.gmra.mrb[0].mxu0 %v7648
      %v7737 = vpop.f32.mrb[0].mxu0
      %v7738 = vadd.f32 0.0, %v7737
      %v7739 = vpop.f32.mrb[0].mxu0
      %v7740 = vpop.f32.mrb[0].mxu0
      %v7741 = vadd.f32 0.0, %v7740
      %v7742 = vpop.f32.mrb[0].mxu0
      %7743 = vmatprep.mubr.bf16.mxu0 0
      %7744 = vmatmul.mubr.bf16.gmra.mrb[0].mxu0 %v7651
      %v7745 = vpop.f32.mrb[0].mxu0
      %v7746 = vadd.f32 0.0, %v7745
      %v7747 = vpop.f32.mrb[0].mxu0
      %v7748 = vpop.f32.mrb[0].mxu0
      %v7749 = vadd.f32 0.0, %v7748
      %v7750 = vpop.f32.mrb[0].mxu0
      %7751 = vmatprep.mubr.bf16.mxu0 0
      %7752 = vmatmul.mubr.bf16.gmra.mrb[0].mxu0 %v7654
      %v7753 = vpop.f32.mrb[0].mxu0
      %v7754 = vadd.f32 0.0, %v7753
      %v7755 = vpop.f32.mrb[0].mxu0
      %v7756 = vpop.f32.mrb[0].mxu0
      %v7757 = vadd.f32 0.0, %v7756
      %v7758 = vpop.f32.mrb[0].mxu0
      %7759 = vmatprep.mubr.bf16.mxu0 0
      %7760 = vmatmul.mubr.bf16.gmra.mrb[0].mxu0 %v7657
      %v7761 = vpop.f32.mrb[0].mxu0
      %v7762 = vadd.f32 0.0, %v7761
      %v7763 = vpop.f32.mrb[0].mxu0
      %v7764 = vpop.f32.mrb[0].mxu0
      %v7765 = vadd.f32 0.0, %v7764
      %v7766 = vpop.f32.mrb[0].mxu0
      %7767 = vmatprep.mubr.bf16.mxu0 0
      %7768 = vmatmul.mubr.bf16.gmra.mrb[0].mxu0 %v7660
      %v7769 = vpop.f32.mrb[0].mxu0
      %v7770 = vadd.f32 0.0, %v7769
      %v7771 = vpop.f32.mrb[0].mxu0
      %v7772 = vpop.f32.mrb[0].mxu0
      %v7773 = vadd.f32 0.0, %v7772
      %v7774 = vpop.f32.mrb[0].mxu0
      %7775 = vmatprep.mubr.bf16.mxu0 0
      %7776 = vmatmul.mubr.bf16.gmra.mrb[0].mxu0 %v7663
      %v7777 = vpop.f32.mrb[0].mxu0
      %v7778 = vadd.f32 0.0, %v7777
      %v7779 = vpop.f32.mrb[0].mxu0
      %v7780 = vpop.f32.mrb[0].mxu0
      %v7781 = vadd.f32 0.0, %v7780
      %v7782 = vpop.f32.mrb[0].mxu0
      %7783 = vmatprep.mubr.bf16.mxu0 0
      %7784 = vmatmul.mubr.bf16.gmra.mrb[0].mxu0 %v7666
      %v7785 = vpop.f32.mrb[0].mxu0
      %v7786 = vadd.f32 0.0, %v7785
      %v7787 = vpop.f32.mrb[0].mxu0
      %v7788 = vpop.f32.mrb[0].mxu0
      %v7789 = vadd.f32 0.0, %v7788
      %v7790 = vpop.f32.mrb[0].mxu0
      %7791 = vmatprep.mubr.bf16.mxu0 0
      %7792 = vmatmul.mubr.bf16.gmra.mrb[0].mxu0 %v7669
      %v7793 = vpop.f32.mrb[0].mxu0
      %v7794 = vadd.f32 0.0, %v7793
      %v7795 = vpop.f32.mrb[0].mxu0
      %v7796 = vpop.f32.mrb[0].mxu0
      %v7797 = vadd.f32 0.0, %v7796
      %v7798 = vpop.f32.mrb[0].mxu0
      %7799 = vmatprep.mubr.bf16.mxu0 0
      %7800 = vmatmul.mubr.bf16.gmra.mrb[0].mxu0 %v7672
      %v7801 = vpop.f32.mrb[0].mxu0
      %v7802 = vadd.f32 0.0, %v7801
      %v7803 = vpop.f32.mrb[0].mxu0
      %v7804 = vpop.f32.mrb[0].mxu0
      %v7805 = vadd.f32 0.0, %v7804
      %v7806 = vpop.f32.mrb[0].mxu0
      %7807 = vmatprep.mubr.bf16.mxu0 0
      %7808 = vmatmul.mubr.bf16.gmra.mrb[0].mxu0 %v7675
      %v7809 = vpop.f32.mrb[0].mxu0
      %v7810 = vadd.f32 0.0, %v7809
      %v7811 = vpop.f32.mrb[0].mxu0
      %v7812 = vpop.f32.mrb[0].mxu0
      %v7813 = vadd.f32 0.0, %v7812
      %v7814 = vpop.f32.mrb[0].mxu0
      %7815 = vmatprep.mubr.bf16.mxu0 0
      %7816 = vmatmul.mubr.bf16.gmra.mrb[0].mxu0 %v7678
      %v7817 = vpop.f32.mrb[0].mxu0
      %v7818 = vadd.f32 0.0, %v7817
      %v7819 = vpop.f32.mrb[0].mxu0
      %v7820 = vpop.f32.mrb[0].mxu0
      %v7821 = vadd.f32 0.0, %v7820
      %v7822 = vpop.f32.mrb[0].mxu0
      %7823 = vmatprep.mubr.bf16.mxu0 0
      %7824 = vmatmul.mubr.bf16.gmra.mrb[0].mxu0 %v7681
      %v7825 = vpop.f32.mrb[0].mxu0
      %v7826 = vadd.f32 0.0, %v7825
      %v7827 = vpop.f32.mrb[0].mxu0
      %v7828 = vpop.f32.mrb[0].mxu0
      %v7829 = vadd.f32 0.0, %v7828
      %v7830 = vpop.f32.mrb[0].mxu0
      %7831 = vmatprep.mubr.bf16.mxu0 0
      %7832 = vmatmul.mubr.bf16.gmra.mrb[0].mxu0 %v7684
      %v7833 = vpop.f32.mrb[0].mxu0
      %v7834 = vadd.f32 0.0, %v7833
      %v7835 = vpop.f32.mrb[0].mxu0
      %v7836 = vpop.f32.mrb[0].mxu0
      %v7837 = vadd.f32 0.0, %v7836
      %v7838 = vpop.f32.mrb[0].mxu0
      %7839 = vmatprep.mubr.bf16.mxu0 0
      %7840 = vmatmul.mubr.bf16.gmra.mrb[0].mxu0 %v7687
      %v7841 = vpop.f32.mrb[0].mxu0
      %v7842 = vadd.f32 0.0, %v7841
      %v7843 = vpop.f32.mrb[0].mxu0
      %v7844 = vpop.f32.mrb[0].mxu0
      %v7845 = vadd.f32 0.0, %v7844
      %v7846 = vpop.f32.mrb[0].mxu0
      %7847 = vmatprep.mubr.bf16.mxu0 0
      %7848 = vmatmul.mubr.bf16.gmra.mrb[0].mxu0 %v7690
      %v7849 = vpop.f32.mrb[0].mxu0
      %v7850 = vadd.f32 0.0, %v7849
      %v7851 = vpop.f32.mrb[0].mxu0
      %v7852 = vpop.f32.mrb[0].mxu0
      %v7853 = vadd.f32 0.0, %v7852
      %v7854 = vpop.f32.mrb[0].mxu0
      %7855 = vdwg.mxu0
      %v7856 = vadd.f32 %v7456, %v7730
      %v7857 = vadd.f32 %v7457, %v7733
      %v7858 = vadd.f32 %v7458, %v7738
      %v7859 = vadd.f32 %v7459, %v7741
      %v7860 = vadd.f32 %v7460, %v7746
      %v7861 = vadd.f32 %v7461, %v7749
      %v7862 = vadd.f32 %v7462, %v7754
      %v7863 = vadd.f32 %v7463, %v7757
      %v7864 = vadd.f32 %v7464, %v7762
      %v7865 = vadd.f32 %v7465, %v7765
      %v7866 = vadd.f32 %v7466, %v7770
      %v7867 = vadd.f32 %v7467, %v7773
      %v7868 = vadd.f32 %v7468, %v7778
      %v7869 = vadd.f32 %v7469, %v7781
      %v7870 = vadd.f32 %v7470, %v7786
      %v7871 = vadd.f32 %v7471, %v7789
      %v7872 = vadd.f32 %v7472, %v7794
      %v7873 = vadd.f32 %v7473, %v7797
      %v7874 = vadd.f32 %v7474, %v7802
      %v7875 = vadd.f32 %v7475, %v7805
      %v7876 = vadd.f32 %v7476, %v7810
      %v7877 = vadd.f32 %v7477, %v7813
      %v7878 = vadd.f32 %v7478, %v7818
      %v7879 = vadd.f32 %v7479, %v7821
      %v7880 = vadd.f32 %v7480, %v7826
      %v7881 = vadd.f32 %v7481, %v7829
      %v7882 = vadd.f32 %v7482, %v7834
      %v7883 = vadd.f32 %v7483, %v7837
      %v7884 = vadd.f32 %v7484, %v7842
      %v7885 = vadd.f32 %v7485, %v7845
      %v7886 = vadd.f32 %v7486, %v7850
      %v7887 = vadd.f32 %v7487, %v7853
      %s7888 = scalar_lea.vmem %s1, 44
      %v7889 = vld [vmem:[%s7888] sm:$0x3]
      %v7891 = vshrl.u32 %v7594, 16
      %v7893 = vrot.slane %v7891, 1
      %v7894 = vshll.u32 %v7594, 16
      %v7896 = vrot.slane %v7894, 2
      %v7897 = vor.u32 %v7893, %v7896
      %v7899 = vshrl.u32 %v7595, 16
      %v7901 = vrot.slane %v7899, 1
      %v7902 = vshll.u32 %v7595, 16
      %v7904 = vrot.slane %v7902, 2
      %v7905 = vor.u32 %v7901, %v7904
      %v7906 = vsel %vm1578, %v7897, %v7905
      %v7908 = vshrl.u32 %v7596, 16
      %v7910 = vrot.slane %v7908, 1
      %v7911 = vshll.u32 %v7596, 16
      %v7913 = vrot.slane %v7911, 2
      %v7914 = vor.u32 %v7910, %v7913
      %v7915 = vsel %vm1578, %v7905, %v7914
      %v7917 = vshrl.u32 %v7597, 16
      %v7919 = vrot.slane %v7917, 1
      %v7920 = vshll.u32 %v7597, 16
      %v7922 = vrot.slane %v7920, 2
      %v7923 = vor.u32 %v7919, %v7922
      %v7924 = vsel %vm1578, %v7914, %v7923
      %v7926 = vshrl.u32 %v7598, 16
      %v7928 = vrot.slane %v7926, 1
      %v7929 = vshll.u32 %v7598, 16
      %v7931 = vrot.slane %v7929, 2
      %v7932 = vor.u32 %v7928, %v7931
      %v7933 = vsel %vm1578, %v7923, %v7932
      %v7935 = vshrl.u32 %v7599, 16
      %v7937 = vrot.slane %v7935, 1
      %v7938 = vshll.u32 %v7599, 16
      %v7940 = vrot.slane %v7938, 2
      %v7941 = vor.u32 %v7937, %v7940
      %v7942 = vsel %vm1578, %v7932, %v7941
      %v7944 = vshrl.u32 %v7600, 16
      %v7946 = vrot.slane %v7944, 1
      %v7947 = vshll.u32 %v7600, 16
      %v7949 = vrot.slane %v7947, 2
      %v7950 = vor.u32 %v7946, %v7949
      %v7951 = vsel %vm1578, %v7941, %v7950
      %v7953 = vshrl.u32 %v7601, 16
      %v7955 = vrot.slane %v7953, 1
      %v7956 = vshll.u32 %v7601, 16
      %v7958 = vrot.slane %v7956, 2
      %v7959 = vor.u32 %v7955, %v7958
      %v7960 = vsel %vm1578, %v7950, %v7959
      %v7962 = vshrl.u32 %v7602, 16
      %v7964 = vrot.slane %v7962, 1
      %v7965 = vshll.u32 %v7602, 16
      %v7967 = vrot.slane %v7965, 2
      %v7968 = vor.u32 %v7964, %v7967
      %v7969 = vsel %vm1578, %v7959, %v7968
      %v7971 = vshrl.u32 %v7603, 16
      %v7973 = vrot.slane %v7971, 1
      %v7974 = vshll.u32 %v7603, 16
      %v7976 = vrot.slane %v7974, 2
      %v7977 = vor.u32 %v7973, %v7976
      %v7978 = vsel %vm1578, %v7968, %v7977
      %v7980 = vshrl.u32 %v7604, 16
      %v7982 = vrot.slane %v7980, 1
      %v7983 = vshll.u32 %v7604, 16
      %v7985 = vrot.slane %v7983, 2
      %v7986 = vor.u32 %v7982, %v7985
      %v7987 = vsel %vm1578, %v7977, %v7986
      %v7989 = vshrl.u32 %v7605, 16
      %v7991 = vrot.slane %v7989, 1
      %v7992 = vshll.u32 %v7605, 16
      %v7994 = vrot.slane %v7992, 2
      %v7995 = vor.u32 %v7991, %v7994
      %v7996 = vsel %vm1578, %v7986, %v7995
      %v7998 = vshrl.u32 %v7606, 16
      %v8000 = vrot.slane %v7998, 1
      %v8001 = vshll.u32 %v7606, 16
      %v8003 = vrot.slane %v8001, 2
      %v8004 = vor.u32 %v8000, %v8003
      %v8005 = vsel %vm1578, %v7995, %v8004
      %v8007 = vshrl.u32 %v7607, 16
      %v8009 = vrot.slane %v8007, 1
      %v8010 = vshll.u32 %v7607, 16
      %v8012 = vrot.slane %v8010, 2
      %v8013 = vor.u32 %v8009, %v8012
      %v8014 = vsel %vm1578, %v8004, %v8013
      %v8016 = vshrl.u32 %v7608, 16
      %v8018 = vrot.slane %v8016, 1
      %v8019 = vshll.u32 %v7608, 16
      %v8021 = vrot.slane %v8019, 2
      %v8022 = vor.u32 %v8018, %v8021
      %v8023 = vsel %vm1578, %v8013, %v8022
      %v8025 = vshrl.u32 %v7609, 16
      %v8027 = vrot.slane %v8025, 1
      %v8028 = vshll.u32 %v7609, 16
      %v8030 = vrot.slane %v8028, 2
      %v8031 = vor.u32 %v8027, %v8030
      %v8032 = vsel %vm1578, %v8022, %v8031
      %v8034 = vshrl.u32 %v7610, 16
      %v8036 = vrot.slane %v8034, 1
      %v8037 = vshll.u32 %v7610, 16
      %v8039 = vrot.slane %v8037, 2
      %v8040 = vor.u32 %v8036, %v8039
      %v8041 = vsel %vm1578, %v8031, %v8040
      %v8043 = vsel %vm486, %v7906, 0
      %v8046 = vsel %vm486, %v7915, 0
      %v8049 = vsel %vm486, %v7924, 0
      %v8052 = vsel %vm486, %v7933, 0
      %v8055 = vsel %vm486, %v7942, 0
      %v8058 = vsel %vm486, %v7951, 0
      %v8061 = vsel %vm486, %v7960, 0
      %v8064 = vsel %vm486, %v7969, 0
      %v8067 = vsel %vm486, %v7978, 0
      %v8070 = vsel %vm486, %v7987, 0
      %v8073 = vsel %vm486, %v7996, 0
      %v8076 = vsel %vm486, %v8005, 0
      %v8079 = vsel %vm486, %v8014, 0
      %v8082 = vsel %vm486, %v8023, 0
      %v8085 = vsel %vm486, %v8032, 0
      %v8088 = vsel %vm486, %v8041, 0
      %v8091 = vsel %vm535, %v7889, 0
      %8093 = vmatprep.subr.bf16.mxu0 0
      %8094 = vmatpush1.bf16.msra.mxu0 %v8091
      %8095 = vmatprep.subr.bf16.mxu0 0
      %8096 = vmatpush1.bf16.msra.mxu0 0
      %8097 = vmatprep.subr.bf16.mxu0 0
      %8098 = vmatpush1.bf16.msra.mxu0 0
      %8099 = vmatprep.subr.bf16.mxu0 0
      %8100 = vmatpush1.bf16.msra.mxu0 0
      %8101 = vmatprep.subr.bf16.mxu0 0
      %8102 = vmatpush1.bf16.msra.mxu0 0
      %8103 = vmatprep.subr.bf16.mxu0 0
      %8104 = vmatpush1.bf16.msra.mxu0 0
      %8105 = vmatprep.subr.bf16.mxu0 0
      %8106 = vmatpush1.bf16.msra.mxu0 0
      %8107 = vmatprep.subr.bf16.mxu0 0
      %8108 = vmatpush1.bf16.msra.mxu0 0
      %8109 = vmatprep.subr.bf16.mxu0 0
      %8110 = vmatpush1.bf16.msra.mxu0 0
      %8111 = vmatprep.subr.bf16.mxu0 0
      %8112 = vmatpush1.bf16.msra.mxu0 0
      %8113 = vmatprep.subr.bf16.mxu0 0
      %8114 = vmatpush1.bf16.msra.mxu0 0
      %8115 = vmatprep.subr.bf16.mxu0 0
      %8116 = vmatpush1.bf16.msra.mxu0 0
      %8117 = vmatprep.subr.bf16.mxu0 0
      %8118 = vmatpush1.bf16.msra.mxu0 0
      %8119 = vmatprep.subr.bf16.mxu0 0
      %8120 = vmatpush1.bf16.msra.mxu0 0
      %8121 = vmatprep.subr.bf16.mxu0 0
      %8122 = vmatpush1.bf16.msra.mxu0 0
      %8123 = vmatprep.subr.bf16.mxu0 0
      %8124 = vmatpush1.bf16.msra.mxu0 0
      %8125 = vmatprep.mubr.bf16.mxu0 0
      %8126 = vmatmul.mubr.bf16.gmra.mrb[0].mxu0 %v8043
      %v8127 = vpop.f32.mrb[0].mxu0
      %v8128 = vadd.f32 0.0, %v8127
      %v8129 = vpop.f32.mrb[0].mxu0
      %v8130 = vpop.f32.mrb[0].mxu0
      %v8131 = vadd.f32 0.0, %v8130
      %v8132 = vpop.f32.mrb[0].mxu0
      %8133 = vmatprep.mubr.bf16.mxu0 0
      %8134 = vmatmul.mubr.bf16.gmra.mrb[0].mxu0 %v8046
      %v8135 = vpop.f32.mrb[0].mxu0
      %v8136 = vadd.f32 0.0, %v8135
      %v8137 = vpop.f32.mrb[0].mxu0
      %v8138 = vpop.f32.mrb[0].mxu0
      %v8139 = vadd.f32 0.0, %v8138
      %v8140 = vpop.f32.mrb[0].mxu0
      %8141 = vmatprep.mubr.bf16.mxu0 0
      %8142 = vmatmul.mubr.bf16.gmra.mrb[0].mxu0 %v8049
      %v8143 = vpop.f32.mrb[0].mxu0
      %v8144 = vadd.f32 0.0, %v8143
      %v8145 = vpop.f32.mrb[0].mxu0
      %v8146 = vpop.f32.mrb[0].mxu0
      %v8147 = vadd.f32 0.0, %v8146
      %v8148 = vpop.f32.mrb[0].mxu0
      %8149 = vmatprep.mubr.bf16.mxu0 0
      %8150 = vmatmul.mubr.bf16.gmra.mrb[0].mxu0 %v8052
      %v8151 = vpop.f32.mrb[0].mxu0
      %v8152 = vadd.f32 0.0, %v8151
      %v8153 = vpop.f32.mrb[0].mxu0
      %v8154 = vpop.f32.mrb[0].mxu0
      %v8155 = vadd.f32 0.0, %v8154
      %v8156 = vpop.f32.mrb[0].mxu0
      %8157 = vmatprep.mubr.bf16.mxu0 0
      %8158 = vmatmul.mubr.bf16.gmra.mrb[0].mxu0 %v8055
      %v8159 = vpop.f32.mrb[0].mxu0
      %v8160 = vadd.f32 0.0, %v8159
      %v8161 = vpop.f32.mrb[0].mxu0
      %v8162 = vpop.f32.mrb[0].mxu0
      %v8163 = vadd.f32 0.0, %v8162
      %v8164 = vpop.f32.mrb[0].mxu0
      %8165 = vmatprep.mubr.bf16.mxu0 0
      %8166 = vmatmul.mubr.bf16.gmra.mrb[0].mxu0 %v8058
      %v8167 = vpop.f32.mrb[0].mxu0
      %v8168 = vadd.f32 0.0, %v8167
      %v8169 = vpop.f32.mrb[0].mxu0
      %v8170 = vpop.f32.mrb[0].mxu0
      %v8171 = vadd.f32 0.0, %v8170
      %v8172 = vpop.f32.mrb[0].mxu0
      %8173 = vmatprep.mubr.bf16.mxu0 0
      %8174 = vmatmul.mubr.bf16.gmra.mrb[0].mxu0 %v8061
      %v8175 = vpop.f32.mrb[0].mxu0
      %v8176 = vadd.f32 0.0, %v8175
      %v8177 = vpop.f32.mrb[0].mxu0
      %v8178 = vpop.f32.mrb[0].mxu0
      %v8179 = vadd.f32 0.0, %v8178
      %v8180 = vpop.f32.mrb[0].mxu0
      %8181 = vmatprep.mubr.bf16.mxu0 0
      %8182 = vmatmul.mubr.bf16.gmra.mrb[0].mxu0 %v8064
      %v8183 = vpop.f32.mrb[0].mxu0
      %v8184 = vadd.f32 0.0, %v8183
      %v8185 = vpop.f32.mrb[0].mxu0
      %v8186 = vpop.f32.mrb[0].mxu0
      %v8187 = vadd.f32 0.0, %v8186
      %v8188 = vpop.f32.mrb[0].mxu0
      %8189 = vmatprep.mubr.bf16.mxu0 0
      %8190 = vmatmul.mubr.bf16.gmra.mrb[0].mxu0 %v8067
      %v8191 = vpop.f32.mrb[0].mxu0
      %v8192 = vadd.f32 0.0, %v8191
      %v8193 = vpop.f32.mrb[0].mxu0
      %v8194 = vpop.f32.mrb[0].mxu0
      %v8195 = vadd.f32 0.0, %v8194
      %v8196 = vpop.f32.mrb[0].mxu0
      %8197 = vmatprep.mubr.bf16.mxu0 0
      %8198 = vmatmul.mubr.bf16.gmra.mrb[0].mxu0 %v8070
      %v8199 = vpop.f32.mrb[0].mxu0
      %v8200 = vadd.f32 0.0, %v8199
      %v8201 = vpop.f32.mrb[0].mxu0
      %v8202 = vpop.f32.mrb[0].mxu0
      %v8203 = vadd.f32 0.0, %v8202
      %v8204 = vpop.f32.mrb[0].mxu0
      %8205 = vmatprep.mubr.bf16.mxu0 0
      %8206 = vmatmul.mubr.bf16.gmra.mrb[0].mxu0 %v8073
      %v8207 = vpop.f32.mrb[0].mxu0
      %v8208 = vadd.f32 0.0, %v8207
      %v8209 = vpop.f32.mrb[0].mxu0
      %v8210 = vpop.f32.mrb[0].mxu0
      %v8211 = vadd.f32 0.0, %v8210
      %v8212 = vpop.f32.mrb[0].mxu0
      %8213 = vmatprep.mubr.bf16.mxu0 0
      %8214 = vmatmul.mubr.bf16.gmra.mrb[0].mxu0 %v8076
      %v8215 = vpop.f32.mrb[0].mxu0
      %v8216 = vadd.f32 0.0, %v8215
      %v8217 = vpop.f32.mrb[0].mxu0
      %v8218 = vpop.f32.mrb[0].mxu0
      %v8219 = vadd.f32 0.0, %v8218
      %v8220 = vpop.f32.mrb[0].mxu0
      %8221 = vmatprep.mubr.bf16.mxu0 0
      %8222 = vmatmul.mubr.bf16.gmra.mrb[0].mxu0 %v8079
      %v8223 = vpop.f32.mrb[0].mxu0
      %v8224 = vadd.f32 0.0, %v8223
      %v8225 = vpop.f32.mrb[0].mxu0
      %v8226 = vpop.f32.mrb[0].mxu0
      %v8227 = vadd.f32 0.0, %v8226
      %v8228 = vpop.f32.mrb[0].mxu0
      %8229 = vmatprep.mubr.bf16.mxu0 0
      %8230 = vmatmul.mubr.bf16.gmra.mrb[0].mxu0 %v8082
      %v8231 = vpop.f32.mrb[0].mxu0
      %v8232 = vadd.f32 0.0, %v8231
      %v8233 = vpop.f32.mrb[0].mxu0
      %v8234 = vpop.f32.mrb[0].mxu0
      %v8235 = vadd.f32 0.0, %v8234
      %v8236 = vpop.f32.mrb[0].mxu0
      %8237 = vmatprep.mubr.bf16.mxu0 0
      %8238 = vmatmul.mubr.bf16.gmra.mrb[0].mxu0 %v8085
      %v8239 = vpop.f32.mrb[0].mxu0
      %v8240 = vadd.f32 0.0, %v8239
      %v8241 = vpop.f32.mrb[0].mxu0
      %v8242 = vpop.f32.mrb[0].mxu0
      %v8243 = vadd.f32 0.0, %v8242
      %v8244 = vpop.f32.mrb[0].mxu0
      %8245 = vmatprep.mubr.bf16.mxu0 0
      %8246 = vmatmul.mubr.bf16.gmra.mrb[0].mxu0 %v8088
      %v8247 = vpop.f32.mrb[0].mxu0
      %v8248 = vadd.f32 0.0, %v8247
      %v8249 = vpop.f32.mrb[0].mxu0
      %v8250 = vpop.f32.mrb[0].mxu0
      %v8251 = vadd.f32 0.0, %v8250
      %v8252 = vpop.f32.mrb[0].mxu0
      %8253 = vdwg.mxu0
      %v8254 = vadd.f32 %v7856, %v8128
      %v8255 = vadd.f32 %v7857, %v8131
      %v8256 = vadd.f32 %v7858, %v8136
      %v8257 = vadd.f32 %v7859, %v8139
      %v8258 = vadd.f32 %v7860, %v8144
      %v8259 = vadd.f32 %v7861, %v8147
      %v8260 = vadd.f32 %v7862, %v8152
      %v8261 = vadd.f32 %v7863, %v8155
      %v8262 = vadd.f32 %v7864, %v8160
      %v8263 = vadd.f32 %v7865, %v8163
      %v8264 = vadd.f32 %v7866, %v8168
      %v8265 = vadd.f32 %v7867, %v8171
      %v8266 = vadd.f32 %v7868, %v8176
      %v8267 = vadd.f32 %v7869, %v8179
      %v8268 = vadd.f32 %v7870, %v8184
      %v8269 = vadd.f32 %v7871, %v8187
      %v8270 = vadd.f32 %v7872, %v8192
      %v8271 = vadd.f32 %v7873, %v8195
      %v8272 = vadd.f32 %v7874, %v8200
      %v8273 = vadd.f32 %v7875, %v8203
      %v8274 = vadd.f32 %v7876, %v8208
      %v8275 = vadd.f32 %v7877, %v8211
      %v8276 = vadd.f32 %v7878, %v8216
      %v8277 = vadd.f32 %v7879, %v8219
      %v8278 = vadd.f32 %v7880, %v8224
      %v8279 = vadd.f32 %v7881, %v8227
      %v8280 = vadd.f32 %v7882, %v8232
      %v8281 = vadd.f32 %v7883, %v8235
      %v8282 = vadd.f32 %v7884, %v8240
      %v8283 = vadd.f32 %v7885, %v8243
      %v8284 = vadd.f32 %v7886, %v8248
      %v8285 = vadd.f32 %v7887, %v8251
      %s8286 = scalar_lea.vmem %s1, 46
      %v8287 = vld [vmem:[%s8286] sm:$0x3]
      %v8288 = vrot.slane %v7594, 2
      %v8289 = vrot.slane %v7595, 2
      %v8290 = vsel %vm1977, %v8288, %v8289
      %v8291 = vrot.slane %v7596, 2
      %v8292 = vsel %vm1977, %v8289, %v8291
      %v8293 = vrot.slane %v7597, 2
      %v8294 = vsel %vm1977, %v8291, %v8293
      %v8295 = vrot.slane %v7598, 2
      %v8296 = vsel %vm1977, %v8293, %v8295
      %v8297 = vrot.slane %v7599, 2
      %v8298 = vsel %vm1977, %v8295, %v8297
      %v8299 = vrot.slane %v7600, 2
      %v8300 = vsel %vm1977, %v8297, %v8299
      %v8301 = vrot.slane %v7601, 2
      %v8302 = vsel %vm1977, %v8299, %v8301
      %v8303 = vrot.slane %v7602, 2
      %v8304 = vsel %vm1977, %v8301, %v8303
      %v8305 = vrot.slane %v7603, 2
      %v8306 = vsel %vm1977, %v8303, %v8305
      %v8307 = vrot.slane %v7604, 2
      %v8308 = vsel %vm1977, %v8305, %v8307
      %v8309 = vrot.slane %v7605, 2
      %v8310 = vsel %vm1977, %v8307, %v8309
      %v8311 = vrot.slane %v7606, 2
      %v8312 = vsel %vm1977, %v8309, %v8311
      %v8313 = vrot.slane %v7607, 2
      %v8314 = vsel %vm1977, %v8311, %v8313
      %v8315 = vrot.slane %v7608, 2
      %v8316 = vsel %vm1977, %v8313, %v8315
      %v8317 = vrot.slane %v7609, 2
      %v8318 = vsel %vm1977, %v8315, %v8317
      %v8319 = vrot.slane %v7610, 2
      %v8320 = vsel %vm1977, %v8317, %v8319
      %v8322 = vsel %vm486, %v8290, 0
      %v8325 = vsel %vm486, %v8292, 0
      %v8328 = vsel %vm486, %v8294, 0
      %v8331 = vsel %vm486, %v8296, 0
      %v8334 = vsel %vm486, %v8298, 0
      %v8337 = vsel %vm486, %v8300, 0
      %v8340 = vsel %vm486, %v8302, 0
      %v8343 = vsel %vm486, %v8304, 0
      %v8346 = vsel %vm486, %v8306, 0
      %v8349 = vsel %vm486, %v8308, 0
      %v8352 = vsel %vm486, %v8310, 0
      %v8355 = vsel %vm486, %v8312, 0
      %v8358 = vsel %vm486, %v8314, 0
      %v8361 = vsel %vm486, %v8316, 0
      %v8364 = vsel %vm486, %v8318, 0
      %v8367 = vsel %vm486, %v8320, 0
      %v8370 = vsel %vm535, %v8287, 0
      %8372 = vmatprep.subr.bf16.mxu0 0
      %8373 = vmatpush1.bf16.msra.mxu0 %v8370
      %8374 = vmatprep.subr.bf16.mxu0 0
      %8375 = vmatpush1.bf16.msra.mxu0 0
      %8376 = vmatprep.subr.bf16.mxu0 0
      %8377 = vmatpush1.bf16.msra.mxu0 0
      %8378 = vmatprep.subr.bf16.mxu0 0
      %8379 = vmatpush1.bf16.msra.mxu0 0
      %8380 = vmatprep.subr.bf16.mxu0 0
      %8381 = vmatpush1.bf16.msra.mxu0 0
      %8382 = vmatprep.subr.bf16.mxu0 0
      %8383 = vmatpush1.bf16.msra.mxu0 0
      %8384 = vmatprep.subr.bf16.mxu0 0
      %8385 = vmatpush1.bf16.msra.mxu0 0
      %8386 = vmatprep.subr.bf16.mxu0 0
      %8387 = vmatpush1.bf16.msra.mxu0 0
      %8388 = vmatprep.subr.bf16.mxu0 0
      %8389 = vmatpush1.bf16.msra.mxu0 0
      %8390 = vmatprep.subr.bf16.mxu0 0
      %8391 = vmatpush1.bf16.msra.mxu0 0
      %8392 = vmatprep.subr.bf16.mxu0 0
      %8393 = vmatpush1.bf16.msra.mxu0 0
      %8394 = vmatprep.subr.bf16.mxu0 0
      %8395 = vmatpush1.bf16.msra.mxu0 0
      %8396 = vmatprep.subr.bf16.mxu0 0
      %8397 = vmatpush1.bf16.msra.mxu0 0
      %8398 = vmatprep.subr.bf16.mxu0 0
      %8399 = vmatpush1.bf16.msra.mxu0 0
      %8400 = vmatprep.subr.bf16.mxu0 0
      %8401 = vmatpush1.bf16.msra.mxu0 0
      %8402 = vmatprep.subr.bf16.mxu0 0
      %8403 = vmatpush1.bf16.msra.mxu0 0
      %8404 = vmatprep.mubr.bf16.mxu0 0
      %8405 = vmatmul.mubr.bf16.gmra.mrb[0].mxu0 %v8322
      %v8406 = vpop.f32.mrb[0].mxu0
      %v8407 = vadd.f32 0.0, %v8406
      %v8408 = vpop.f32.mrb[0].mxu0
      %v8409 = vpop.f32.mrb[0].mxu0
      %v8410 = vadd.f32 0.0, %v8409
      %v8411 = vpop.f32.mrb[0].mxu0
      %8412 = vmatprep.mubr.bf16.mxu0 0
      %8413 = vmatmul.mubr.bf16.gmra.mrb[0].mxu0 %v8325
      %v8414 = vpop.f32.mrb[0].mxu0
      %v8415 = vadd.f32 0.0, %v8414
      %v8416 = vpop.f32.mrb[0].mxu0
      %v8417 = vpop.f32.mrb[0].mxu0
      %v8418 = vadd.f32 0.0, %v8417
      %v8419 = vpop.f32.mrb[0].mxu0
      %8420 = vmatprep.mubr.bf16.mxu0 0
      %8421 = vmatmul.mubr.bf16.gmra.mrb[0].mxu0 %v8328
      %v8422 = vpop.f32.mrb[0].mxu0
      %v8423 = vadd.f32 0.0, %v8422
      %v8424 = vpop.f32.mrb[0].mxu0
      %v8425 = vpop.f32.mrb[0].mxu0
      %v8426 = vadd.f32 0.0, %v8425
      %v8427 = vpop.f32.mrb[0].mxu0
      %8428 = vmatprep.mubr.bf16.mxu0 0
      %8429 = vmatmul.mubr.bf16.gmra.mrb[0].mxu0 %v8331
      %v8430 = vpop.f32.mrb[0].mxu0
      %v8431 = vadd.f32 0.0, %v8430
      %v8432 = vpop.f32.mrb[0].mxu0
      %v8433 = vpop.f32.mrb[0].mxu0
      %v8434 = vadd.f32 0.0, %v8433
      %v8435 = vpop.f32.mrb[0].mxu0
      %8436 = vmatprep.mubr.bf16.mxu0 0
      %8437 = vmatmul.mubr.bf16.gmra.mrb[0].mxu0 %v8334
      %v8438 = vpop.f32.mrb[0].mxu0
      %v8439 = vadd.f32 0.0, %v8438
      %v8440 = vpop.f32.mrb[0].mxu0
      %v8441 = vpop.f32.mrb[0].mxu0
      %v8442 = vadd.f32 0.0, %v8441
      %v8443 = vpop.f32.mrb[0].mxu0
      %8444 = vmatprep.mubr.bf16.mxu0 0
      %8445 = vmatmul.mubr.bf16.gmra.mrb[0].mxu0 %v8337
      %v8446 = vpop.f32.mrb[0].mxu0
      %v8447 = vadd.f32 0.0, %v8446
      %v8448 = vpop.f32.mrb[0].mxu0
      %v8449 = vpop.f32.mrb[0].mxu0
      %v8450 = vadd.f32 0.0, %v8449
      %v8451 = vpop.f32.mrb[0].mxu0
      %8452 = vmatprep.mubr.bf16.mxu0 0
      %8453 = vmatmul.mubr.bf16.gmra.mrb[0].mxu0 %v8340
      %v8454 = vpop.f32.mrb[0].mxu0
      %v8455 = vadd.f32 0.0, %v8454
      %v8456 = vpop.f32.mrb[0].mxu0
      %v8457 = vpop.f32.mrb[0].mxu0
      %v8458 = vadd.f32 0.0, %v8457
      %v8459 = vpop.f32.mrb[0].mxu0
      %8460 = vmatprep.mubr.bf16.mxu0 0
      %8461 = vmatmul.mubr.bf16.gmra.mrb[0].mxu0 %v8343
      %v8462 = vpop.f32.mrb[0].mxu0
      %v8463 = vadd.f32 0.0, %v8462
      %v8464 = vpop.f32.mrb[0].mxu0
      %v8465 = vpop.f32.mrb[0].mxu0
      %v8466 = vadd.f32 0.0, %v8465
      %v8467 = vpop.f32.mrb[0].mxu0
      %8468 = vmatprep.mubr.bf16.mxu0 0
      %8469 = vmatmul.mubr.bf16.gmra.mrb[0].mxu0 %v8346
      %v8470 = vpop.f32.mrb[0].mxu0
      %v8471 = vadd.f32 0.0, %v8470
      %v8472 = vpop.f32.mrb[0].mxu0
      %v8473 = vpop.f32.mrb[0].mxu0
      %v8474 = vadd.f32 0.0, %v8473
      %v8475 = vpop.f32.mrb[0].mxu0
      %8476 = vmatprep.mubr.bf16.mxu0 0
      %8477 = vmatmul.mubr.bf16.gmra.mrb[0].mxu0 %v8349
      %v8478 = vpop.f32.mrb[0].mxu0
      %v8479 = vadd.f32 0.0, %v8478
      %v8480 = vpop.f32.mrb[0].mxu0
      %v8481 = vpop.f32.mrb[0].mxu0
      %v8482 = vadd.f32 0.0, %v8481
      %v8483 = vpop.f32.mrb[0].mxu0
      %8484 = vmatprep.mubr.bf16.mxu0 0
      %8485 = vmatmul.mubr.bf16.gmra.mrb[0].mxu0 %v8352
      %v8486 = vpop.f32.mrb[0].mxu0
      %v8487 = vadd.f32 0.0, %v8486
      %v8488 = vpop.f32.mrb[0].mxu0
      %v8489 = vpop.f32.mrb[0].mxu0
      %v8490 = vadd.f32 0.0, %v8489
      %v8491 = vpop.f32.mrb[0].mxu0
      %8492 = vmatprep.mubr.bf16.mxu0 0
      %8493 = vmatmul.mubr.bf16.gmra.mrb[0].mxu0 %v8355
      %v8494 = vpop.f32.mrb[0].mxu0
      %v8495 = vadd.f32 0.0, %v8494
      %v8496 = vpop.f32.mrb[0].mxu0
      %v8497 = vpop.f32.mrb[0].mxu0
      %v8498 = vadd.f32 0.0, %v8497
      %v8499 = vpop.f32.mrb[0].mxu0
      %8500 = vmatprep.mubr.bf16.mxu0 0
      %8501 = vmatmul.mubr.bf16.gmra.mrb[0].mxu0 %v8358
      %v8502 = vpop.f32.mrb[0].mxu0
      %v8503 = vadd.f32 0.0, %v8502
      %v8504 = vpop.f32.mrb[0].mxu0
      %v8505 = vpop.f32.mrb[0].mxu0
      %v8506 = vadd.f32 0.0, %v8505
      %v8507 = vpop.f32.mrb[0].mxu0
      %8508 = vmatprep.mubr.bf16.mxu0 0
      %8509 = vmatmul.mubr.bf16.gmra.mrb[0].mxu0 %v8361
      %v8510 = vpop.f32.mrb[0].mxu0
      %v8511 = vadd.f32 0.0, %v8510
      %v8512 = vpop.f32.mrb[0].mxu0
      %v8513 = vpop.f32.mrb[0].mxu0
      %v8514 = vadd.f32 0.0, %v8513
      %v8515 = vpop.f32.mrb[0].mxu0
      %8516 = vmatprep.mubr.bf16.mxu0 0
      %8517 = vmatmul.mubr.bf16.gmra.mrb[0].mxu0 %v8364
      %v8518 = vpop.f32.mrb[0].mxu0
      %v8519 = vadd.f32 0.0, %v8518
      %v8520 = vpop.f32.mrb[0].mxu0
      %v8521 = vpop.f32.mrb[0].mxu0
      %v8522 = vadd.f32 0.0, %v8521
      %v8523 = vpop.f32.mrb[0].mxu0
      %8524 = vmatprep.mubr.bf16.mxu0 0
      %8525 = vmatmul.mubr.bf16.gmra.mrb[0].mxu0 %v8367
      %v8526 = vpop.f32.mrb[0].mxu0
      %v8527 = vadd.f32 0.0, %v8526
      %v8528 = vpop.f32.mrb[0].mxu0
      %v8529 = vpop.f32.mrb[0].mxu0
      %v8530 = vadd.f32 0.0, %v8529
      %v8531 = vpop.f32.mrb[0].mxu0
      %8532 = vdwg.mxu0
      %v8533 = vadd.f32 %v8254, %v8407
      %v8534 = vadd.f32 %v8255, %v8410
      %v8535 = vadd.f32 %v8256, %v8415
      %v8536 = vadd.f32 %v8257, %v8418
      %v8537 = vadd.f32 %v8258, %v8423
      %v8538 = vadd.f32 %v8259, %v8426
      %v8539 = vadd.f32 %v8260, %v8431
      %v8540 = vadd.f32 %v8261, %v8434
      %v8541 = vadd.f32 %v8262, %v8439
      %v8542 = vadd.f32 %v8263, %v8442
      %v8543 = vadd.f32 %v8264, %v8447
      %v8544 = vadd.f32 %v8265, %v8450
      %v8545 = vadd.f32 %v8266, %v8455
      %v8546 = vadd.f32 %v8267, %v8458
      %v8547 = vadd.f32 %v8268, %v8463
      %v8548 = vadd.f32 %v8269, %v8466
      %v8549 = vadd.f32 %v8270, %v8471
      %v8550 = vadd.f32 %v8271, %v8474
      %v8551 = vadd.f32 %v8272, %v8479
      %v8552 = vadd.f32 %v8273, %v8482
      %v8553 = vadd.f32 %v8274, %v8487
      %v8554 = vadd.f32 %v8275, %v8490
      %v8555 = vadd.f32 %v8276, %v8495
      %v8556 = vadd.f32 %v8277, %v8498
      %v8557 = vadd.f32 %v8278, %v8503
      %v8558 = vadd.f32 %v8279, %v8506
      %v8559 = vadd.f32 %v8280, %v8511
      %v8560 = vadd.f32 %v8281, %v8514
      %v8561 = vadd.f32 %v8282, %v8519
      %v8562 = vadd.f32 %v8283, %v8522
      %v8563 = vadd.f32 %v8284, %v8527
      %v8564 = vadd.f32 %v8285, %v8530
      %s8565 = sadd.s32 %s229, 672
      %s8566 = sshra.s32 %s8565, 3
      %s8567 = sand.u32 %s8565, 7
      %s8568 = smul.addr %s8566, 4
      %s8569 = scalar_lea.vmem %s0, %s8568
      %v8570 = vld [vmem:[%s8569 + $0x4] sm:$0xf]
      %v8571 = vld [vmem:[%s8569 + $0x8] sm:$0xf]
      %v8572 = vld [vmem:[%s8569 + $0xc] sm:$0xf]
      %v8573 = vld [vmem:[%s8569 + $0x10] sm:$0xf]
      %v8574 = vld [vmem:[%s8569 + $0x14] sm:$0xf]
      %v8575 = vld [vmem:[%s8569 + $0x18] sm:$0xf]
      %v8576 = vld [vmem:[%s8569 + $0x1c] sm:$0xf]
      %v8577 = vld [vmem:[%s8569 + $0x20] sm:$0xf]
      %v8578 = vld [vmem:[%s8569 + $0x24] sm:$0xf]
      %v8579 = vld [vmem:[%s8569 + $0x28] sm:$0xf]
      %v8580 = vld [vmem:[%s8569 + $0x2c] sm:$0xf]
      %v8581 = vld [vmem:[%s8569 + $0x30] sm:$0xf]
      %v8582 = vld [vmem:[%s8569 + $0x34] sm:$0xf]
      %v8583 = vld [vmem:[%s8569 + $0x38] sm:$0xf]
      %v8584 = vld [vmem:[%s8569 + $0x3c] sm:$0xf]
      %v8585 = vld [vmem:[%s8569 + $0x40] sm:$0xf]
      %v8586 = vld [vmem:[%s8569 + $0x44] sm:$0xf]
      %v8587 = vld [vmem:[%s8569 + $0x48] sm:$0xf]
      %v8588 = vld [vmem:[%s8569 + $0x4c] sm:$0xf]
      %v8589 = vld [vmem:[%s8569 + $0x50] sm:$0xf]
      %v8590 = vld [vmem:[%s8569 + $0x54] sm:$0xf]
      %v8591 = vld [vmem:[%s8569 + $0x58] sm:$0xf]
      %v8592 = vld [vmem:[%s8569 + $0x5c] sm:$0xf]
      %v8593 = vld [vmem:[%s8569 + $0x60] sm:$0xf]
      %v8594 = vld [vmem:[%s8569 + $0x64] sm:$0xf]
      %v8595 = vld [vmem:[%s8569 + $0x68] sm:$0xf]
      %v8596 = vld [vmem:[%s8569 + $0x6c] sm:$0xf]
      %v8597 = vld [vmem:[%s8569 + $0x70] sm:$0xf]
      %v8598 = vld [vmem:[%s8569 + $0x74] sm:$0xf]
      %v8599 = vld [vmem:[%s8569 + $0x78] sm:$0xf]
      %v8600 = vld [vmem:[%s8569 + $0x7c] sm:$0xf]
      %v8601 = vld [vmem:[%s8569 + $0x80] sm:$0xf]
      %v8602 = vld [vmem:[%s8569 + $0x84] sm:$0xf]
      %s8603 = scalar_lea.vmem %s1, 48
      %v8604 = vld [vmem:[%s8603] sm:$0x3]
      %v8638 = vunpack.c.l.b16 %v8570
      %v8639 = vunpack.c.l.b16 %v8571
      %v8640 = vunpack.c.l.b16 %v8572
      %v8641 = vunpack.c.l.b16 %v8573
      %v8642 = vunpack.c.l.b16 %v8574
      %v8643 = vunpack.c.l.b16 %v8575
      %v8644 = vunpack.c.l.b16 %v8576
      %v8645 = vunpack.c.l.b16 %v8577
      %v8646 = vunpack.c.l.b16 %v8578
      %v8647 = vunpack.c.l.b16 %v8579
      %v8648 = vunpack.c.l.b16 %v8580
      %v8649 = vunpack.c.l.b16 %v8581
      %v8650 = vunpack.c.l.b16 %v8582
      %v8651 = vunpack.c.l.b16 %v8583
      %v8652 = vunpack.c.l.b16 %v8584
      %v8653 = vunpack.c.l.b16 %v8585
      %v8654 = vunpack.c.l.b16 %v8586
      %v8655 = vunpack.c.l.b16 %v8587
      %v8656 = vunpack.c.l.b16 %v8588
      %v8657 = vunpack.c.l.b16 %v8589
      %v8658 = vunpack.c.l.b16 %v8590
      %v8659 = vunpack.c.l.b16 %v8591
      %v8660 = vunpack.c.l.b16 %v8592
      %v8661 = vunpack.c.l.b16 %v8593
      %v8662 = vunpack.c.l.b16 %v8594
      %v8663 = vunpack.c.l.b16 %v8595
      %v8664 = vunpack.c.l.b16 %v8596
      %v8665 = vunpack.c.l.b16 %v8597
      %v8666 = vunpack.c.l.b16 %v8598
      %v8667 = vunpack.c.l.b16 %v8599
      %v8668 = vunpack.c.l.b16 %v8600
      %v8669 = vunpack.c.l.b16 %v8601
      %v8670 = vunpack.c.l.b16 %v8602
      %v8671 = vpack.c.b16 %v8639, %v8638
      %v8672 = vpack.c.b16 %v8641, %v8640
      %v8673 = vpack.c.b16 %v8643, %v8642
      %v8674 = vpack.c.b16 %v8645, %v8644
      %v8675 = vpack.c.b16 %v8647, %v8646
      %v8676 = vpack.c.b16 %v8649, %v8648
      %v8677 = vpack.c.b16 %v8651, %v8650
      %v8678 = vpack.c.b16 %v8653, %v8652
      %v8679 = vpack.c.b16 %v8655, %v8654
      %v8680 = vpack.c.b16 %v8657, %v8656
      %v8681 = vpack.c.b16 %v8659, %v8658
      %v8682 = vpack.c.b16 %v8661, %v8660
      %v8683 = vpack.c.b16 %v8663, %v8662
      %v8684 = vpack.c.b16 %v8665, %v8664
      %v8685 = vpack.c.b16 %v8667, %v8666
      %v8686 = vpack.c.b16 %v8669, %v8668
      %v8687 = vpack.c.b16 %v8670, %v8670
      %v8688 = vrot.slane %v8671, 2
      %v8689 = vrot.slane %v8672, 2
      %v8690 = vsel %vm1977, %v8688, %v8689
      %v8691 = vrot.slane %v8673, 2
      %v8692 = vsel %vm1977, %v8689, %v8691
      %v8693 = vrot.slane %v8674, 2
      %v8694 = vsel %vm1977, %v8691, %v8693
      %v8695 = vrot.slane %v8675, 2
      %v8696 = vsel %vm1977, %v8693, %v8695
      %v8697 = vrot.slane %v8676, 2
      %v8698 = vsel %vm1977, %v8695, %v8697
      %v8699 = vrot.slane %v8677, 2
      %v8700 = vsel %vm1977, %v8697, %v8699
      %v8701 = vrot.slane %v8678, 2
      %v8702 = vsel %vm1977, %v8699, %v8701
      %v8703 = vrot.slane %v8679, 2
      %v8704 = vsel %vm1977, %v8701, %v8703
      %v8705 = vrot.slane %v8680, 2
      %v8706 = vsel %vm1977, %v8703, %v8705
      %v8707 = vrot.slane %v8681, 2
      %v8708 = vsel %vm1977, %v8705, %v8707
      %v8709 = vrot.slane %v8682, 2
      %v8710 = vsel %vm1977, %v8707, %v8709
      %v8711 = vrot.slane %v8683, 2
      %v8712 = vsel %vm1977, %v8709, %v8711
      %v8713 = vrot.slane %v8684, 2
      %v8714 = vsel %vm1977, %v8711, %v8713
      %v8715 = vrot.slane %v8685, 2
      %v8716 = vsel %vm1977, %v8713, %v8715
      %v8717 = vrot.slane %v8686, 2
      %v8718 = vsel %vm1977, %v8715, %v8717
      %v8719 = vrot.slane %v8687, 2
      %v8720 = vsel %vm1977, %v8717, %v8719
      %v8722 = vsel %vm486, %v8690, 0
      %v8725 = vsel %vm486, %v8692, 0
      %v8728 = vsel %vm486, %v8694, 0
      %v8731 = vsel %vm486, %v8696, 0
      %v8734 = vsel %vm486, %v8698, 0
      %v8737 = vsel %vm486, %v8700, 0
      %v8740 = vsel %vm486, %v8702, 0
      %v8743 = vsel %vm486, %v8704, 0
      %v8746 = vsel %vm486, %v8706, 0
      %v8749 = vsel %vm486, %v8708, 0
      %v8752 = vsel %vm486, %v8710, 0
      %v8755 = vsel %vm486, %v8712, 0
      %v8758 = vsel %vm486, %v8714, 0
      %v8761 = vsel %vm486, %v8716, 0
      %v8764 = vsel %vm486, %v8718, 0
      %v8767 = vsel %vm486, %v8720, 0
      %v8770 = vsel %vm535, %v8604, 0
      %8772 = vmatprep.subr.bf16.mxu0 0
      %8773 = vmatpush1.bf16.msra.mxu0 %v8770
      %8774 = vmatprep.subr.bf16.mxu0 0
      %8775 = vmatpush1.bf16.msra.mxu0 0
      %8776 = vmatprep.subr.bf16.mxu0 0
      %8777 = vmatpush1.bf16.msra.mxu0 0
      %8778 = vmatprep.subr.bf16.mxu0 0
      %8779 = vmatpush1.bf16.msra.mxu0 0
      %8780 = vmatprep.subr.bf16.mxu0 0
      %8781 = vmatpush1.bf16.msra.mxu0 0
      %8782 = vmatprep.subr.bf16.mxu0 0
      %8783 = vmatpush1.bf16.msra.mxu0 0
      %8784 = vmatprep.subr.bf16.mxu0 0
      %8785 = vmatpush1.bf16.msra.mxu0 0
      %8786 = vmatprep.subr.bf16.mxu0 0
      %8787 = vmatpush1.bf16.msra.mxu0 0
      %8788 = vmatprep.subr.bf16.mxu0 0
      %8789 = vmatpush1.bf16.msra.mxu0 0
      %8790 = vmatprep.subr.bf16.mxu0 0
      %8791 = vmatpush1.bf16.msra.mxu0 0
      %8792 = vmatprep.subr.bf16.mxu0 0
      %8793 = vmatpush1.bf16.msra.mxu0 0
      %8794 = vmatprep.subr.bf16.mxu0 0
      %8795 = vmatpush1.bf16.msra.mxu0 0
      %8796 = vmatprep.subr.bf16.mxu0 0
      %8797 = vmatpush1.bf16.msra.mxu0 0
      %8798 = vmatprep.subr.bf16.mxu0 0
      %8799 = vmatpush1.bf16.msra.mxu0 0
      %8800 = vmatprep.subr.bf16.mxu0 0
      %8801 = vmatpush1.bf16.msra.mxu0 0
      %8802 = vmatprep.subr.bf16.mxu0 0
      %8803 = vmatpush1.bf16.msra.mxu0 0
      %8804 = vmatprep.mubr.bf16.mxu0 0
      %8805 = vmatmul.mubr.bf16.gmra.mrb[0].mxu0 %v8722
      %v8806 = vpop.f32.mrb[0].mxu0
      %v8807 = vadd.f32 0.0, %v8806
      %v8808 = vpop.f32.mrb[0].mxu0
      %v8809 = vpop.f32.mrb[0].mxu0
      %v8810 = vadd.f32 0.0, %v8809
      %v8811 = vpop.f32.mrb[0].mxu0
      %8812 = vmatprep.mubr.bf16.mxu0 0
      %8813 = vmatmul.mubr.bf16.gmra.mrb[0].mxu0 %v8725
      %v8814 = vpop.f32.mrb[0].mxu0
      %v8815 = vadd.f32 0.0, %v8814
      %v8816 = vpop.f32.mrb[0].mxu0
      %v8817 = vpop.f32.mrb[0].mxu0
      %v8818 = vadd.f32 0.0, %v8817
      %v8819 = vpop.f32.mrb[0].mxu0
      %8820 = vmatprep.mubr.bf16.mxu0 0
      %8821 = vmatmul.mubr.bf16.gmra.mrb[0].mxu0 %v8728
      %v8822 = vpop.f32.mrb[0].mxu0
      %v8823 = vadd.f32 0.0, %v8822
      %v8824 = vpop.f32.mrb[0].mxu0
      %v8825 = vpop.f32.mrb[0].mxu0
      %v8826 = vadd.f32 0.0, %v8825
      %v8827 = vpop.f32.mrb[0].mxu0
      %8828 = vmatprep.mubr.bf16.mxu0 0
      %8829 = vmatmul.mubr.bf16.gmra.mrb[0].mxu0 %v8731
      %v8830 = vpop.f32.mrb[0].mxu0
      %v8831 = vadd.f32 0.0, %v8830
      %v8832 = vpop.f32.mrb[0].mxu0
      %v8833 = vpop.f32.mrb[0].mxu0
      %v8834 = vadd.f32 0.0, %v8833
      %v8835 = vpop.f32.mrb[0].mxu0
      %8836 = vmatprep.mubr.bf16.mxu0 0
      %8837 = vmatmul.mubr.bf16.gmra.mrb[0].mxu0 %v8734
      %v8838 = vpop.f32.mrb[0].mxu0
      %v8839 = vadd.f32 0.0, %v8838
      %v8840 = vpop.f32.mrb[0].mxu0
      %v8841 = vpop.f32.mrb[0].mxu0
      %v8842 = vadd.f32 0.0, %v8841
      %v8843 = vpop.f32.mrb[0].mxu0
      %8844 = vmatprep.mubr.bf16.mxu0 0
      %8845 = vmatmul.mubr.bf16.gmra.mrb[0].mxu0 %v8737
      %v8846 = vpop.f32.mrb[0].mxu0
      %v8847 = vadd.f32 0.0, %v8846
      %v8848 = vpop.f32.mrb[0].mxu0
      %v8849 = vpop.f32.mrb[0].mxu0
      %v8850 = vadd.f32 0.0, %v8849
      %v8851 = vpop.f32.mrb[0].mxu0
      %8852 = vmatprep.mubr.bf16.mxu0 0
      %8853 = vmatmul.mubr.bf16.gmra.mrb[0].mxu0 %v8740
      %v8854 = vpop.f32.mrb[0].mxu0
      %v8855 = vadd.f32 0.0, %v8854
      %v8856 = vpop.f32.mrb[0].mxu0
      %v8857 = vpop.f32.mrb[0].mxu0
      %v8858 = vadd.f32 0.0, %v8857
      %v8859 = vpop.f32.mrb[0].mxu0
      %8860 = vmatprep.mubr.bf16.mxu0 0
      %8861 = vmatmul.mubr.bf16.gmra.mrb[0].mxu0 %v8743
      %v8862 = vpop.f32.mrb[0].mxu0
      %v8863 = vadd.f32 0.0, %v8862
      %v8864 = vpop.f32.mrb[0].mxu0
      %v8865 = vpop.f32.mrb[0].mxu0
      %v8866 = vadd.f32 0.0, %v8865
      %v8867 = vpop.f32.mrb[0].mxu0
      %8868 = vmatprep.mubr.bf16.mxu0 0
      %8869 = vmatmul.mubr.bf16.gmra.mrb[0].mxu0 %v8746
      %v8870 = vpop.f32.mrb[0].mxu0
      %v8871 = vadd.f32 0.0, %v8870
      %v8872 = vpop.f32.mrb[0].mxu0
      %v8873 = vpop.f32.mrb[0].mxu0
      %v8874 = vadd.f32 0.0, %v8873
      %v8875 = vpop.f32.mrb[0].mxu0
      %8876 = vmatprep.mubr.bf16.mxu0 0
      %8877 = vmatmul.mubr.bf16.gmra.mrb[0].mxu0 %v8749
      %v8878 = vpop.f32.mrb[0].mxu0
      %v8879 = vadd.f32 0.0, %v8878
      %v8880 = vpop.f32.mrb[0].mxu0
      %v8881 = vpop.f32.mrb[0].mxu0
      %v8882 = vadd.f32 0.0, %v8881
      %v8883 = vpop.f32.mrb[0].mxu0
      %8884 = vmatprep.mubr.bf16.mxu0 0
      %8885 = vmatmul.mubr.bf16.gmra.mrb[0].mxu0 %v8752
      %v8886 = vpop.f32.mrb[0].mxu0
      %v8887 = vadd.f32 0.0, %v8886
      %v8888 = vpop.f32.mrb[0].mxu0
      %v8889 = vpop.f32.mrb[0].mxu0
      %v8890 = vadd.f32 0.0, %v8889
      %v8891 = vpop.f32.mrb[0].mxu0
      %8892 = vmatprep.mubr.bf16.mxu0 0
      %8893 = vmatmul.mubr.bf16.gmra.mrb[0].mxu0 %v8755
      %v8894 = vpop.f32.mrb[0].mxu0
      %v8895 = vadd.f32 0.0, %v8894
      %v8896 = vpop.f32.mrb[0].mxu0
      %v8897 = vpop.f32.mrb[0].mxu0
      %v8898 = vadd.f32 0.0, %v8897
      %v8899 = vpop.f32.mrb[0].mxu0
      %8900 = vmatprep.mubr.bf16.mxu0 0
      %8901 = vmatmul.mubr.bf16.gmra.mrb[0].mxu0 %v8758
      %v8902 = vpop.f32.mrb[0].mxu0
      %v8903 = vadd.f32 0.0, %v8902
      %v8904 = vpop.f32.mrb[0].mxu0
      %v8905 = vpop.f32.mrb[0].mxu0
      %v8906 = vadd.f32 0.0, %v8905
      %v8907 = vpop.f32.mrb[0].mxu0
      %8908 = vmatprep.mubr.bf16.mxu0 0
      %8909 = vmatmul.mubr.bf16.gmra.mrb[0].mxu0 %v8761
      %v8910 = vpop.f32.mrb[0].mxu0
      %v8911 = vadd.f32 0.0, %v8910
      %v8912 = vpop.f32.mrb[0].mxu0
      %v8913 = vpop.f32.mrb[0].mxu0
      %v8914 = vadd.f32 0.0, %v8913
      %v8915 = vpop.f32.mrb[0].mxu0
      %8916 = vmatprep.mubr.bf16.mxu0 0
      %8917 = vmatmul.mubr.bf16.gmra.mrb[0].mxu0 %v8764
      %v8918 = vpop.f32.mrb[0].mxu0
      %v8919 = vadd.f32 0.0, %v8918
      %v8920 = vpop.f32.mrb[0].mxu0
      %v8921 = vpop.f32.mrb[0].mxu0
      %v8922 = vadd.f32 0.0, %v8921
      %v8923 = vpop.f32.mrb[0].mxu0
      %8924 = vmatprep.mubr.bf16.mxu0 0
      %8925 = vmatmul.mubr.bf16.gmra.mrb[0].mxu0 %v8767
      %v8926 = vpop.f32.mrb[0].mxu0
      %v8927 = vadd.f32 0.0, %v8926
      %v8928 = vpop.f32.mrb[0].mxu0
      %v8929 = vpop.f32.mrb[0].mxu0
      %v8930 = vadd.f32 0.0, %v8929
      %v8931 = vpop.f32.mrb[0].mxu0
      %8932 = vdwg.mxu0
      %v8933 = vadd.f32 %v8533, %v8807
      %v8934 = vadd.f32 %v8534, %v8810
      %v8935 = vadd.f32 %v8535, %v8815
      %v8936 = vadd.f32 %v8536, %v8818
      %v8937 = vadd.f32 %v8537, %v8823
      %v8938 = vadd.f32 %v8538, %v8826
      %v8939 = vadd.f32 %v8539, %v8831
      %v8940 = vadd.f32 %v8540, %v8834
      %v8941 = vadd.f32 %v8541, %v8839
      %v8942 = vadd.f32 %v8542, %v8842
      %v8943 = vadd.f32 %v8543, %v8847
      %v8944 = vadd.f32 %v8544, %v8850
      %v8945 = vadd.f32 %v8545, %v8855
      %v8946 = vadd.f32 %v8546, %v8858
      %v8947 = vadd.f32 %v8547, %v8863
      %v8948 = vadd.f32 %v8548, %v8866
      %v8949 = vadd.f32 %v8549, %v8871
      %v8950 = vadd.f32 %v8550, %v8874
      %v8951 = vadd.f32 %v8551, %v8879
      %v8952 = vadd.f32 %v8552, %v8882
      %v8953 = vadd.f32 %v8553, %v8887
      %v8954 = vadd.f32 %v8554, %v8890
      %v8955 = vadd.f32 %v8555, %v8895
      %v8956 = vadd.f32 %v8556, %v8898
      %v8957 = vadd.f32 %v8557, %v8903
      %v8958 = vadd.f32 %v8558, %v8906
      %v8959 = vadd.f32 %v8559, %v8911
      %v8960 = vadd.f32 %v8560, %v8914
      %v8961 = vadd.f32 %v8561, %v8919
      %v8962 = vadd.f32 %v8562, %v8922
      %v8963 = vadd.f32 %v8563, %v8927
      %v8964 = vadd.f32 %v8564, %v8930
      %s8965 = scalar_lea.vmem %s1, 50
      %v8966 = vld [vmem:[%s8965] sm:$0x3]
      %v8968 = vshrl.u32 %v8671, 16
      %v8970 = vrot.slane %v8968, 2
      %v8971 = vshll.u32 %v8671, 16
      %v8973 = vrot.slane %v8971, 3
      %v8974 = vor.u32 %v8970, %v8973
      %v8976 = vshrl.u32 %v8672, 16
      %v8978 = vrot.slane %v8976, 2
      %v8979 = vshll.u32 %v8672, 16
      %v8981 = vrot.slane %v8979, 3
      %v8982 = vor.u32 %v8978, %v8981
      %v8983 = vsel %vm2657, %v8974, %v8982
      %v8985 = vshrl.u32 %v8673, 16
      %v8987 = vrot.slane %v8985, 2
      %v8988 = vshll.u32 %v8673, 16
      %v8990 = vrot.slane %v8988, 3
      %v8991 = vor.u32 %v8987, %v8990
      %v8992 = vsel %vm2657, %v8982, %v8991
      %v8994 = vshrl.u32 %v8674, 16
      %v8996 = vrot.slane %v8994, 2
      %v8997 = vshll.u32 %v8674, 16
      %v8999 = vrot.slane %v8997, 3
      %v9000 = vor.u32 %v8996, %v8999
      %v9001 = vsel %vm2657, %v8991, %v9000
      %v9003 = vshrl.u32 %v8675, 16
      %v9005 = vrot.slane %v9003, 2
      %v9006 = vshll.u32 %v8675, 16
      %v9008 = vrot.slane %v9006, 3
      %v9009 = vor.u32 %v9005, %v9008
      %v9010 = vsel %vm2657, %v9000, %v9009
      %v9012 = vshrl.u32 %v8676, 16
      %v9014 = vrot.slane %v9012, 2
      %v9015 = vshll.u32 %v8676, 16
      %v9017 = vrot.slane %v9015, 3
      %v9018 = vor.u32 %v9014, %v9017
      %v9019 = vsel %vm2657, %v9009, %v9018
      %v9021 = vshrl.u32 %v8677, 16
      %v9023 = vrot.slane %v9021, 2
      %v9024 = vshll.u32 %v8677, 16
      %v9026 = vrot.slane %v9024, 3
      %v9027 = vor.u32 %v9023, %v9026
      %v9028 = vsel %vm2657, %v9018, %v9027
      %v9030 = vshrl.u32 %v8678, 16
      %v9032 = vrot.slane %v9030, 2
      %v9033 = vshll.u32 %v8678, 16
      %v9035 = vrot.slane %v9033, 3
      %v9036 = vor.u32 %v9032, %v9035
      %v9037 = vsel %vm2657, %v9027, %v9036
      %v9039 = vshrl.u32 %v8679, 16
      %v9041 = vrot.slane %v9039, 2
      %v9042 = vshll.u32 %v8679, 16
      %v9044 = vrot.slane %v9042, 3
      %v9045 = vor.u32 %v9041, %v9044
      %v9046 = vsel %vm2657, %v9036, %v9045
      %v9048 = vshrl.u32 %v8680, 16
      %v9050 = vrot.slane %v9048, 2
      %v9051 = vshll.u32 %v8680, 16
      %v9053 = vrot.slane %v9051, 3
      %v9054 = vor.u32 %v9050, %v9053
      %v9055 = vsel %vm2657, %v9045, %v9054
      %v9057 = vshrl.u32 %v8681, 16
      %v9059 = vrot.slane %v9057, 2
      %v9060 = vshll.u32 %v8681, 16
      %v9062 = vrot.slane %v9060, 3
      %v9063 = vor.u32 %v9059, %v9062
      %v9064 = vsel %vm2657, %v9054, %v9063
      %v9066 = vshrl.u32 %v8682, 16
      %v9068 = vrot.slane %v9066, 2
      %v9069 = vshll.u32 %v8682, 16
      %v9071 = vrot.slane %v9069, 3
      %v9072 = vor.u32 %v9068, %v9071
      %v9073 = vsel %vm2657, %v9063, %v9072
      %v9075 = vshrl.u32 %v8683, 16
      %v9077 = vrot.slane %v9075, 2
      %v9078 = vshll.u32 %v8683, 16
      %v9080 = vrot.slane %v9078, 3
      %v9081 = vor.u32 %v9077, %v9080
      %v9082 = vsel %vm2657, %v9072, %v9081
      %v9084 = vshrl.u32 %v8684, 16
      %v9086 = vrot.slane %v9084, 2
      %v9087 = vshll.u32 %v8684, 16
      %v9089 = vrot.slane %v9087, 3
      %v9090 = vor.u32 %v9086, %v9089
      %v9091 = vsel %vm2657, %v9081, %v9090
      %v9093 = vshrl.u32 %v8685, 16
      %v9095 = vrot.slane %v9093, 2
      %v9096 = vshll.u32 %v8685, 16
      %v9098 = vrot.slane %v9096, 3
      %v9099 = vor.u32 %v9095, %v9098
      %v9100 = vsel %vm2657, %v9090, %v9099
      %v9102 = vshrl.u32 %v8686, 16
      %v9104 = vrot.slane %v9102, 2
      %v9105 = vshll.u32 %v8686, 16
      %v9107 = vrot.slane %v9105, 3
      %v9108 = vor.u32 %v9104, %v9107
      %v9109 = vsel %vm2657, %v9099, %v9108
      %v9111 = vshrl.u32 %v8687, 16
      %v9113 = vrot.slane %v9111, 2
      %v9114 = vshll.u32 %v8687, 16
      %v9116 = vrot.slane %v9114, 3
      %v9117 = vor.u32 %v9113, %v9116
      %v9118 = vsel %vm2657, %v9108, %v9117
      %v9120 = vsel %vm486, %v8983, 0
      %v9123 = vsel %vm486, %v8992, 0
      %v9126 = vsel %vm486, %v9001, 0
      %v9129 = vsel %vm486, %v9010, 0
      %v9132 = vsel %vm486, %v9019, 0
      %v9135 = vsel %vm486, %v9028, 0
      %v9138 = vsel %vm486, %v9037, 0
      %v9141 = vsel %vm486, %v9046, 0
      %v9144 = vsel %vm486, %v9055, 0
      %v9147 = vsel %vm486, %v9064, 0
      %v9150 = vsel %vm486, %v9073, 0
      %v9153 = vsel %vm486, %v9082, 0
      %v9156 = vsel %vm486, %v9091, 0
      %v9159 = vsel %vm486, %v9100, 0
      %v9162 = vsel %vm486, %v9109, 0
      %v9165 = vsel %vm486, %v9118, 0
      %v9168 = vsel %vm535, %v8966, 0
      %9170 = vmatprep.subr.bf16.mxu0 0
      %9171 = vmatpush1.bf16.msra.mxu0 %v9168
      %9172 = vmatprep.subr.bf16.mxu0 0
      %9173 = vmatpush1.bf16.msra.mxu0 0
      %9174 = vmatprep.subr.bf16.mxu0 0
      %9175 = vmatpush1.bf16.msra.mxu0 0
      %9176 = vmatprep.subr.bf16.mxu0 0
      %9177 = vmatpush1.bf16.msra.mxu0 0
      %9178 = vmatprep.subr.bf16.mxu0 0
      %9179 = vmatpush1.bf16.msra.mxu0 0
      %9180 = vmatprep.subr.bf16.mxu0 0
      %9181 = vmatpush1.bf16.msra.mxu0 0
      %9182 = vmatprep.subr.bf16.mxu0 0
      %9183 = vmatpush1.bf16.msra.mxu0 0
      %9184 = vmatprep.subr.bf16.mxu0 0
      %9185 = vmatpush1.bf16.msra.mxu0 0
      %9186 = vmatprep.subr.bf16.mxu0 0
      %9187 = vmatpush1.bf16.msra.mxu0 0
      %9188 = vmatprep.subr.bf16.mxu0 0
      %9189 = vmatpush1.bf16.msra.mxu0 0
      %9190 = vmatprep.subr.bf16.mxu0 0
      %9191 = vmatpush1.bf16.msra.mxu0 0
      %9192 = vmatprep.subr.bf16.mxu0 0
      %9193 = vmatpush1.bf16.msra.mxu0 0
      %9194 = vmatprep.subr.bf16.mxu0 0
      %9195 = vmatpush1.bf16.msra.mxu0 0
      %9196 = vmatprep.subr.bf16.mxu0 0
      %9197 = vmatpush1.bf16.msra.mxu0 0
      %9198 = vmatprep.subr.bf16.mxu0 0
      %9199 = vmatpush1.bf16.msra.mxu0 0
      %9200 = vmatprep.subr.bf16.mxu0 0
      %9201 = vmatpush1.bf16.msra.mxu0 0
      %9202 = vmatprep.mubr.bf16.mxu0 0
      %9203 = vmatmul.mubr.bf16.gmra.mrb[0].mxu0 %v9120
      %v9204 = vpop.f32.mrb[0].mxu0
      %v9205 = vadd.f32 0.0, %v9204
      %v9206 = vpop.f32.mrb[0].mxu0
      %v9207 = vpop.f32.mrb[0].mxu0
      %v9208 = vadd.f32 0.0, %v9207
      %v9209 = vpop.f32.mrb[0].mxu0
      %9210 = vmatprep.mubr.bf16.mxu0 0
      %9211 = vmatmul.mubr.bf16.gmra.mrb[0].mxu0 %v9123
      %v9212 = vpop.f32.mrb[0].mxu0
      %v9213 = vadd.f32 0.0, %v9212
      %v9214 = vpop.f32.mrb[0].mxu0
      %v9215 = vpop.f32.mrb[0].mxu0
      %v9216 = vadd.f32 0.0, %v9215
      %v9217 = vpop.f32.mrb[0].mxu0
      %9218 = vmatprep.mubr.bf16.mxu0 0
      %9219 = vmatmul.mubr.bf16.gmra.mrb[0].mxu0 %v9126
      %v9220 = vpop.f32.mrb[0].mxu0
      %v9221 = vadd.f32 0.0, %v9220
      %v9222 = vpop.f32.mrb[0].mxu0
      %v9223 = vpop.f32.mrb[0].mxu0
      %v9224 = vadd.f32 0.0, %v9223
      %v9225 = vpop.f32.mrb[0].mxu0
      %9226 = vmatprep.mubr.bf16.mxu0 0
      %9227 = vmatmul.mubr.bf16.gmra.mrb[0].mxu0 %v9129
      %v9228 = vpop.f32.mrb[0].mxu0
      %v9229 = vadd.f32 0.0, %v9228
      %v9230 = vpop.f32.mrb[0].mxu0
      %v9231 = vpop.f32.mrb[0].mxu0
      %v9232 = vadd.f32 0.0, %v9231
      %v9233 = vpop.f32.mrb[0].mxu0
      %9234 = vmatprep.mubr.bf16.mxu0 0
      %9235 = vmatmul.mubr.bf16.gmra.mrb[0].mxu0 %v9132
      %v9236 = vpop.f32.mrb[0].mxu0
      %v9237 = vadd.f32 0.0, %v9236
      %v9238 = vpop.f32.mrb[0].mxu0
      %v9239 = vpop.f32.mrb[0].mxu0
      %v9240 = vadd.f32 0.0, %v9239
      %v9241 = vpop.f32.mrb[0].mxu0
      %9242 = vmatprep.mubr.bf16.mxu0 0
      %9243 = vmatmul.mubr.bf16.gmra.mrb[0].mxu0 %v9135
      %v9244 = vpop.f32.mrb[0].mxu0
      %v9245 = vadd.f32 0.0, %v9244
      %v9246 = vpop.f32.mrb[0].mxu0
      %v9247 = vpop.f32.mrb[0].mxu0
      %v9248 = vadd.f32 0.0, %v9247
      %v9249 = vpop.f32.mrb[0].mxu0
      %9250 = vmatprep.mubr.bf16.mxu0 0
      %9251 = vmatmul.mubr.bf16.gmra.mrb[0].mxu0 %v9138
      %v9252 = vpop.f32.mrb[0].mxu0
      %v9253 = vadd.f32 0.0, %v9252
      %v9254 = vpop.f32.mrb[0].mxu0
      %v9255 = vpop.f32.mrb[0].mxu0
      %v9256 = vadd.f32 0.0, %v9255
      %v9257 = vpop.f32.mrb[0].mxu0
      %9258 = vmatprep.mubr.bf16.mxu0 0
      %9259 = vmatmul.mubr.bf16.gmra.mrb[0].mxu0 %v9141
      %v9260 = vpop.f32.mrb[0].mxu0
      %v9261 = vadd.f32 0.0, %v9260
      %v9262 = vpop.f32.mrb[0].mxu0
      %v9263 = vpop.f32.mrb[0].mxu0
      %v9264 = vadd.f32 0.0, %v9263
      %v9265 = vpop.f32.mrb[0].mxu0
      %9266 = vmatprep.mubr.bf16.mxu0 0
      %9267 = vmatmul.mubr.bf16.gmra.mrb[0].mxu0 %v9144
      %v9268 = vpop.f32.mrb[0].mxu0
      %v9269 = vadd.f32 0.0, %v9268
      %v9270 = vpop.f32.mrb[0].mxu0
      %v9271 = vpop.f32.mrb[0].mxu0
      %v9272 = vadd.f32 0.0, %v9271
      %v9273 = vpop.f32.mrb[0].mxu0
      %9274 = vmatprep.mubr.bf16.mxu0 0
      %9275 = vmatmul.mubr.bf16.gmra.mrb[0].mxu0 %v9147
      %v9276 = vpop.f32.mrb[0].mxu0
      %v9277 = vadd.f32 0.0, %v9276
      %v9278 = vpop.f32.mrb[0].mxu0
      %v9279 = vpop.f32.mrb[0].mxu0
      %v9280 = vadd.f32 0.0, %v9279
      %v9281 = vpop.f32.mrb[0].mxu0
      %9282 = vmatprep.mubr.bf16.mxu0 0
      %9283 = vmatmul.mubr.bf16.gmra.mrb[0].mxu0 %v9150
      %v9284 = vpop.f32.mrb[0].mxu0
      %v9285 = vadd.f32 0.0, %v9284
      %v9286 = vpop.f32.mrb[0].mxu0
      %v9287 = vpop.f32.mrb[0].mxu0
      %v9288 = vadd.f32 0.0, %v9287
      %v9289 = vpop.f32.mrb[0].mxu0
      %9290 = vmatprep.mubr.bf16.mxu0 0
      %9291 = vmatmul.mubr.bf16.gmra.mrb[0].mxu0 %v9153
      %v9292 = vpop.f32.mrb[0].mxu0
      %v9293 = vadd.f32 0.0, %v9292
      %v9294 = vpop.f32.mrb[0].mxu0
      %v9295 = vpop.f32.mrb[0].mxu0
      %v9296 = vadd.f32 0.0, %v9295
      %v9297 = vpop.f32.mrb[0].mxu0
      %9298 = vmatprep.mubr.bf16.mxu0 0
      %9299 = vmatmul.mubr.bf16.gmra.mrb[0].mxu0 %v9156
      %v9300 = vpop.f32.mrb[0].mxu0
      %v9301 = vadd.f32 0.0, %v9300
      %v9302 = vpop.f32.mrb[0].mxu0
      %v9303 = vpop.f32.mrb[0].mxu0
      %v9304 = vadd.f32 0.0, %v9303
      %v9305 = vpop.f32.mrb[0].mxu0
      %9306 = vmatprep.mubr.bf16.mxu0 0
      %9307 = vmatmul.mubr.bf16.gmra.mrb[0].mxu0 %v9159
      %v9308 = vpop.f32.mrb[0].mxu0
      %v9309 = vadd.f32 0.0, %v9308
      %v9310 = vpop.f32.mrb[0].mxu0
      %v9311 = vpop.f32.mrb[0].mxu0
      %v9312 = vadd.f32 0.0, %v9311
      %v9313 = vpop.f32.mrb[0].mxu0
      %9314 = vmatprep.mubr.bf16.mxu0 0
      %9315 = vmatmul.mubr.bf16.gmra.mrb[0].mxu0 %v9162
      %v9316 = vpop.f32.mrb[0].mxu0
      %v9317 = vadd.f32 0.0, %v9316
      %v9318 = vpop.f32.mrb[0].mxu0
      %v9319 = vpop.f32.mrb[0].mxu0
      %v9320 = vadd.f32 0.0, %v9319
      %v9321 = vpop.f32.mrb[0].mxu0
      %9322 = vmatprep.mubr.bf16.mxu0 0
      %9323 = vmatmul.mubr.bf16.gmra.mrb[0].mxu0 %v9165
      %v9324 = vpop.f32.mrb[0].mxu0
      %v9325 = vadd.f32 0.0, %v9324
      %v9326 = vpop.f32.mrb[0].mxu0
      %v9327 = vpop.f32.mrb[0].mxu0
      %v9328 = vadd.f32 0.0, %v9327
      %v9329 = vpop.f32.mrb[0].mxu0
      %9330 = vdwg.mxu0
      %v9331 = vadd.f32 %v8933, %v9205
      %v9332 = vadd.f32 %v8934, %v9208
      %v9333 = vadd.f32 %v8935, %v9213
      %v9334 = vadd.f32 %v8936, %v9216
      %v9335 = vadd.f32 %v8937, %v9221
      %v9336 = vadd.f32 %v8938, %v9224
      %v9337 = vadd.f32 %v8939, %v9229
      %v9338 = vadd.f32 %v8940, %v9232
      %v9339 = vadd.f32 %v8941, %v9237
      %v9340 = vadd.f32 %v8942, %v9240
      %v9341 = vadd.f32 %v8943, %v9245
      %v9342 = vadd.f32 %v8944, %v9248
      %v9343 = vadd.f32 %v8945, %v9253
      %v9344 = vadd.f32 %v8946, %v9256
      %v9345 = vadd.f32 %v8947, %v9261
      %v9346 = vadd.f32 %v8948, %v9264
      %v9347 = vadd.f32 %v8949, %v9269
      %v9348 = vadd.f32 %v8950, %v9272
      %v9349 = vadd.f32 %v8951, %v9277
      %v9350 = vadd.f32 %v8952, %v9280
      %v9351 = vadd.f32 %v8953, %v9285
      %v9352 = vadd.f32 %v8954, %v9288
      %v9353 = vadd.f32 %v8955, %v9293
      %v9354 = vadd.f32 %v8956, %v9296
      %v9355 = vadd.f32 %v8957, %v9301
      %v9356 = vadd.f32 %v8958, %v9304
      %v9357 = vadd.f32 %v8959, %v9309
      %v9358 = vadd.f32 %v8960, %v9312
      %v9359 = vadd.f32 %v8961, %v9317
      %v9360 = vadd.f32 %v8962, %v9320
      %v9361 = vadd.f32 %v8963, %v9325
      %v9362 = vadd.f32 %v8964, %v9328
      %s9363 = scalar_lea.vmem %s1, 52
      %v9364 = vld [vmem:[%s9363] sm:$0x3]
      %v9365 = vrot.slane %v8671, 3
      %v9366 = vrot.slane %v8672, 3
      %v9367 = vsel %vm3056, %v9365, %v9366
      %v9368 = vrot.slane %v8673, 3
      %v9369 = vsel %vm3056, %v9366, %v9368
      %v9370 = vrot.slane %v8674, 3
      %v9371 = vsel %vm3056, %v9368, %v9370
      %v9372 = vrot.slane %v8675, 3
      %v9373 = vsel %vm3056, %v9370, %v9372
      %v9374 = vrot.slane %v8676, 3
      %v9375 = vsel %vm3056, %v9372, %v9374
      %v9376 = vrot.slane %v8677, 3
      %v9377 = vsel %vm3056, %v9374, %v9376
      %v9378 = vrot.slane %v8678, 3
      %v9379 = vsel %vm3056, %v9376, %v9378
      %v9380 = vrot.slane %v8679, 3
      %v9381 = vsel %vm3056, %v9378, %v9380
      %v9382 = vrot.slane %v8680, 3
      %v9383 = vsel %vm3056, %v9380, %v9382
      %v9384 = vrot.slane %v8681, 3
      %v9385 = vsel %vm3056, %v9382, %v9384
      %v9386 = vrot.slane %v8682, 3
      %v9387 = vsel %vm3056, %v9384, %v9386
      %v9388 = vrot.slane %v8683, 3
      %v9389 = vsel %vm3056, %v9386, %v9388
      %v9390 = vrot.slane %v8684, 3
      %v9391 = vsel %vm3056, %v9388, %v9390
      %v9392 = vrot.slane %v8685, 3
      %v9393 = vsel %vm3056, %v9390, %v9392
      %v9394 = vrot.slane %v8686, 3
      %v9395 = vsel %vm3056, %v9392, %v9394
      %v9396 = vrot.slane %v8687, 3
      %v9397 = vsel %vm3056, %v9394, %v9396
      %v9399 = vsel %vm486, %v9367, 0
      %v9402 = vsel %vm486, %v9369, 0
      %v9405 = vsel %vm486, %v9371, 0
      %v9408 = vsel %vm486, %v9373, 0
      %v9411 = vsel %vm486, %v9375, 0
      %v9414 = vsel %vm486, %v9377, 0
      %v9417 = vsel %vm486, %v9379, 0
      %v9420 = vsel %vm486, %v9381, 0
      %v9423 = vsel %vm486, %v9383, 0
      %v9426 = vsel %vm486, %v9385, 0
      %v9429 = vsel %vm486, %v9387, 0
      %v9432 = vsel %vm486, %v9389, 0
      %v9435 = vsel %vm486, %v9391, 0
      %v9438 = vsel %vm486, %v9393, 0
      %v9441 = vsel %vm486, %v9395, 0
      %v9444 = vsel %vm486, %v9397, 0
      %v9447 = vsel %vm535, %v9364, 0
      %9449 = vmatprep.subr.bf16.mxu0 0
      %9450 = vmatpush1.bf16.msra.mxu0 %v9447
      %9451 = vmatprep.subr.bf16.mxu0 0
      %9452 = vmatpush1.bf16.msra.mxu0 0
      %9453 = vmatprep.subr.bf16.mxu0 0
      %9454 = vmatpush1.bf16.msra.mxu0 0
      %9455 = vmatprep.subr.bf16.mxu0 0
      %9456 = vmatpush1.bf16.msra.mxu0 0
      %9457 = vmatprep.subr.bf16.mxu0 0
      %9458 = vmatpush1.bf16.msra.mxu0 0
      %9459 = vmatprep.subr.bf16.mxu0 0
      %9460 = vmatpush1.bf16.msra.mxu0 0
      %9461 = vmatprep.subr.bf16.mxu0 0
      %9462 = vmatpush1.bf16.msra.mxu0 0
      %9463 = vmatprep.subr.bf16.mxu0 0
      %9464 = vmatpush1.bf16.msra.mxu0 0
      %9465 = vmatprep.subr.bf16.mxu0 0
      %9466 = vmatpush1.bf16.msra.mxu0 0
      %9467 = vmatprep.subr.bf16.mxu0 0
      %9468 = vmatpush1.bf16.msra.mxu0 0
      %9469 = vmatprep.subr.bf16.mxu0 0
      %9470 = vmatpush1.bf16.msra.mxu0 0
      %9471 = vmatprep.subr.bf16.mxu0 0
      %9472 = vmatpush1.bf16.msra.mxu0 0
      %9473 = vmatprep.subr.bf16.mxu0 0
      %9474 = vmatpush1.bf16.msra.mxu0 0
      %9475 = vmatprep.subr.bf16.mxu0 0
      %9476 = vmatpush1.bf16.msra.mxu0 0
      %9477 = vmatprep.subr.bf16.mxu0 0
      %9478 = vmatpush1.bf16.msra.mxu0 0
      %9479 = vmatprep.subr.bf16.mxu0 0
      %9480 = vmatpush1.bf16.msra.mxu0 0
      %9481 = vmatprep.mubr.bf16.mxu0 0
      %9482 = vmatmul.mubr.bf16.gmra.mrb[0].mxu0 %v9399
      %v9483 = vpop.f32.mrb[0].mxu0
      %v9484 = vadd.f32 0.0, %v9483
      %v9485 = vpop.f32.mrb[0].mxu0
      %v9486 = vpop.f32.mrb[0].mxu0
      %v9487 = vadd.f32 0.0, %v9486
      %v9488 = vpop.f32.mrb[0].mxu0
      %9489 = vmatprep.mubr.bf16.mxu0 0
      %9490 = vmatmul.mubr.bf16.gmra.mrb[0].mxu0 %v9402
      %v9491 = vpop.f32.mrb[0].mxu0
      %v9492 = vadd.f32 0.0, %v9491
      %v9493 = vpop.f32.mrb[0].mxu0
      %v9494 = vpop.f32.mrb[0].mxu0
      %v9495 = vadd.f32 0.0, %v9494
      %v9496 = vpop.f32.mrb[0].mxu0
      %9497 = vmatprep.mubr.bf16.mxu0 0
      %9498 = vmatmul.mubr.bf16.gmra.mrb[0].mxu0 %v9405
      %v9499 = vpop.f32.mrb[0].mxu0
      %v9500 = vadd.f32 0.0, %v9499
      %v9501 = vpop.f32.mrb[0].mxu0
      %v9502 = vpop.f32.mrb[0].mxu0
      %v9503 = vadd.f32 0.0, %v9502
      %v9504 = vpop.f32.mrb[0].mxu0
      %9505 = vmatprep.mubr.bf16.mxu0 0
      %9506 = vmatmul.mubr.bf16.gmra.mrb[0].mxu0 %v9408
      %v9507 = vpop.f32.mrb[0].mxu0
      %v9508 = vadd.f32 0.0, %v9507
      %v9509 = vpop.f32.mrb[0].mxu0
      %v9510 = vpop.f32.mrb[0].mxu0
      %v9511 = vadd.f32 0.0, %v9510
      %v9512 = vpop.f32.mrb[0].mxu0
      %9513 = vmatprep.mubr.bf16.mxu0 0
      %9514 = vmatmul.mubr.bf16.gmra.mrb[0].mxu0 %v9411
      %v9515 = vpop.f32.mrb[0].mxu0
      %v9516 = vadd.f32 0.0, %v9515
      %v9517 = vpop.f32.mrb[0].mxu0
      %v9518 = vpop.f32.mrb[0].mxu0
      %v9519 = vadd.f32 0.0, %v9518
      %v9520 = vpop.f32.mrb[0].mxu0
      %9521 = vmatprep.mubr.bf16.mxu0 0
      %9522 = vmatmul.mubr.bf16.gmra.mrb[0].mxu0 %v9414
      %v9523 = vpop.f32.mrb[0].mxu0
      %v9524 = vadd.f32 0.0, %v9523
      %v9525 = vpop.f32.mrb[0].mxu0
      %v9526 = vpop.f32.mrb[0].mxu0
      %v9527 = vadd.f32 0.0, %v9526
      %v9528 = vpop.f32.mrb[0].mxu0
      %9529 = vmatprep.mubr.bf16.mxu0 0
      %9530 = vmatmul.mubr.bf16.gmra.mrb[0].mxu0 %v9417
      %v9531 = vpop.f32.mrb[0].mxu0
      %v9532 = vadd.f32 0.0, %v9531
      %v9533 = vpop.f32.mrb[0].mxu0
      %v9534 = vpop.f32.mrb[0].mxu0
      %v9535 = vadd.f32 0.0, %v9534
      %v9536 = vpop.f32.mrb[0].mxu0
      %9537 = vmatprep.mubr.bf16.mxu0 0
      %9538 = vmatmul.mubr.bf16.gmra.mrb[0].mxu0 %v9420
      %v9539 = vpop.f32.mrb[0].mxu0
      %v9540 = vadd.f32 0.0, %v9539
      %v9541 = vpop.f32.mrb[0].mxu0
      %v9542 = vpop.f32.mrb[0].mxu0
      %v9543 = vadd.f32 0.0, %v9542
      %v9544 = vpop.f32.mrb[0].mxu0
      %9545 = vmatprep.mubr.bf16.mxu0 0
      %9546 = vmatmul.mubr.bf16.gmra.mrb[0].mxu0 %v9423
      %v9547 = vpop.f32.mrb[0].mxu0
      %v9548 = vadd.f32 0.0, %v9547
      %v9549 = vpop.f32.mrb[0].mxu0
      %v9550 = vpop.f32.mrb[0].mxu0
      %v9551 = vadd.f32 0.0, %v9550
      %v9552 = vpop.f32.mrb[0].mxu0
      %9553 = vmatprep.mubr.bf16.mxu0 0
      %9554 = vmatmul.mubr.bf16.gmra.mrb[0].mxu0 %v9426
      %v9555 = vpop.f32.mrb[0].mxu0
      %v9556 = vadd.f32 0.0, %v9555
      %v9557 = vpop.f32.mrb[0].mxu0
      %v9558 = vpop.f32.mrb[0].mxu0
      %v9559 = vadd.f32 0.0, %v9558
      %v9560 = vpop.f32.mrb[0].mxu0
      %9561 = vmatprep.mubr.bf16.mxu0 0
      %9562 = vmatmul.mubr.bf16.gmra.mrb[0].mxu0 %v9429
      %v9563 = vpop.f32.mrb[0].mxu0
      %v9564 = vadd.f32 0.0, %v9563
      %v9565 = vpop.f32.mrb[0].mxu0
      %v9566 = vpop.f32.mrb[0].mxu0
      %v9567 = vadd.f32 0.0, %v9566
      %v9568 = vpop.f32.mrb[0].mxu0
      %9569 = vmatprep.mubr.bf16.mxu0 0
      %9570 = vmatmul.mubr.bf16.gmra.mrb[0].mxu0 %v9432
      %v9571 = vpop.f32.mrb[0].mxu0
      %v9572 = vadd.f32 0.0, %v9571
      %v9573 = vpop.f32.mrb[0].mxu0
      %v9574 = vpop.f32.mrb[0].mxu0
      %v9575 = vadd.f32 0.0, %v9574
      %v9576 = vpop.f32.mrb[0].mxu0
      %9577 = vmatprep.mubr.bf16.mxu0 0
      %9578 = vmatmul.mubr.bf16.gmra.mrb[0].mxu0 %v9435
      %v9579 = vpop.f32.mrb[0].mxu0
      %v9580 = vadd.f32 0.0, %v9579
      %v9581 = vpop.f32.mrb[0].mxu0
      %v9582 = vpop.f32.mrb[0].mxu0
      %v9583 = vadd.f32 0.0, %v9582
      %v9584 = vpop.f32.mrb[0].mxu0
      %9585 = vmatprep.mubr.bf16.mxu0 0
      %9586 = vmatmul.mubr.bf16.gmra.mrb[0].mxu0 %v9438
      %v9587 = vpop.f32.mrb[0].mxu0
      %v9588 = vadd.f32 0.0, %v9587
      %v9589 = vpop.f32.mrb[0].mxu0
      %v9590 = vpop.f32.mrb[0].mxu0
      %v9591 = vadd.f32 0.0, %v9590
      %v9592 = vpop.f32.mrb[0].mxu0
      %9593 = vmatprep.mubr.bf16.mxu0 0
      %9594 = vmatmul.mubr.bf16.gmra.mrb[0].mxu0 %v9441
      %v9595 = vpop.f32.mrb[0].mxu0
      %v9596 = vadd.f32 0.0, %v9595
      %v9597 = vpop.f32.mrb[0].mxu0
      %v9598 = vpop.f32.mrb[0].mxu0
      %v9599 = vadd.f32 0.0, %v9598
      %v9600 = vpop.f32.mrb[0].mxu0
      %9601 = vmatprep.mubr.bf16.mxu0 0
      %9602 = vmatmul.mubr.bf16.gmra.mrb[0].mxu0 %v9444
      %v9603 = vpop.f32.mrb[0].mxu0
      %v9604 = vadd.f32 0.0, %v9603
      %v9605 = vpop.f32.mrb[0].mxu0
      %v9606 = vpop.f32.mrb[0].mxu0
      %v9607 = vadd.f32 0.0, %v9606
      %v9608 = vpop.f32.mrb[0].mxu0
      %9609 = vdwg.mxu0
      %v9610 = vadd.f32 %v9331, %v9484
      %v9611 = vadd.f32 %v9332, %v9487
      %v9612 = vadd.f32 %v9333, %v9492
      %v9613 = vadd.f32 %v9334, %v9495
      %v9614 = vadd.f32 %v9335, %v9500
      %v9615 = vadd.f32 %v9336, %v9503
      %v9616 = vadd.f32 %v9337, %v9508
      %v9617 = vadd.f32 %v9338, %v9511
      %v9618 = vadd.f32 %v9339, %v9516
      %v9619 = vadd.f32 %v9340, %v9519
      %v9620 = vadd.f32 %v9341, %v9524
      %v9621 = vadd.f32 %v9342, %v9527
      %v9622 = vadd.f32 %v9343, %v9532
      %v9623 = vadd.f32 %v9344, %v9535
      %v9624 = vadd.f32 %v9345, %v9540
      %v9625 = vadd.f32 %v9346, %v9543
      %v9626 = vadd.f32 %v9347, %v9548
      %v9627 = vadd.f32 %v9348, %v9551
      %v9628 = vadd.f32 %v9349, %v9556
      %v9629 = vadd.f32 %v9350, %v9559
      %v9630 = vadd.f32 %v9351, %v9564
      %v9631 = vadd.f32 %v9352, %v9567
      %v9632 = vadd.f32 %v9353, %v9572
      %v9633 = vadd.f32 %v9354, %v9575
      %v9634 = vadd.f32 %v9355, %v9580
      %v9635 = vadd.f32 %v9356, %v9583
      %v9636 = vadd.f32 %v9357, %v9588
      %v9637 = vadd.f32 %v9358, %v9591
      %v9638 = vadd.f32 %v9359, %v9596
      %v9639 = vadd.f32 %v9360, %v9599
      %v9640 = vadd.f32 %v9361, %v9604
      %v9641 = vadd.f32 %v9362, %v9607
      %v9642 = vld [vmem:[%s2] sm:$0x1]
      %v9644 = vlaneseq
      %v9645 = vshrl.u32 %v9644, 7
      %v9646 = vsub.s32 0, %v9645
      %v9647 = vrot.slane %v9642, %v9646
      %v9649 = vmul.f32 %v9610, %v9647
      %v9650 = vmul.f32 %v9611, %v9647
      %v9651 = vmul.f32 %v9612, %v9647
      %v9652 = vmul.f32 %v9613, %v9647
      %v9653 = vmul.f32 %v9614, %v9647
      %v9654 = vmul.f32 %v9615, %v9647
      %v9655 = vmul.f32 %v9616, %v9647
      %v9656 = vmul.f32 %v9617, %v9647
      %v9657 = vmul.f32 %v9618, %v9647
      %v9658 = vmul.f32 %v9619, %v9647
      %v9659 = vmul.f32 %v9620, %v9647
      %v9660 = vmul.f32 %v9621, %v9647
      %v9661 = vmul.f32 %v9622, %v9647
      %v9662 = vmul.f32 %v9623, %v9647
      %v9663 = vmul.f32 %v9624, %v9647
      %v9664 = vmul.f32 %v9625, %v9647
      %v9665 = vmul.f32 %v9626, %v9647
      %v9666 = vmul.f32 %v9627, %v9647
      %v9667 = vmul.f32 %v9628, %v9647
      %v9668 = vmul.f32 %v9629, %v9647
      %v9669 = vmul.f32 %v9630, %v9647
      %v9670 = vmul.f32 %v9631, %v9647
      %v9671 = vmul.f32 %v9632, %v9647
      %v9672 = vmul.f32 %v9633, %v9647
      %v9673 = vmul.f32 %v9634, %v9647
      %v9674 = vmul.f32 %v9635, %v9647
      %v9675 = vmul.f32 %v9636, %v9647
      %v9676 = vmul.f32 %v9637, %v9647
      %v9677 = vmul.f32 %v9638, %v9647
      %v9678 = vmul.f32 %v9639, %v9647
      %v9679 = vmul.f32 %v9640, %v9647
      %v9680 = vmul.f32 %v9641, %v9647
      %v9681 = vld [vmem:[%s3] sm:$0x1]
      %v9683 = vlaneseq
      %v9684 = vshrl.u32 %v9683, 7
      %v9685 = vsub.s32 0, %v9684
      %v9686 = vrot.slane %v9681, %v9685
      %v9688 = vadd.f32 %v9649, %v9686
      %v9689 = vadd.f32 %v9650, %v9686
      %v9690 = vadd.f32 %v9651, %v9686
      %v9691 = vadd.f32 %v9652, %v9686
      %v9692 = vadd.f32 %v9653, %v9686
      %v9693 = vadd.f32 %v9654, %v9686
      %v9694 = vadd.f32 %v9655, %v9686
      %v9695 = vadd.f32 %v9656, %v9686
      %v9696 = vadd.f32 %v9657, %v9686
      %v9697 = vadd.f32 %v9658, %v9686
      %v9698 = vadd.f32 %v9659, %v9686
      %v9699 = vadd.f32 %v9660, %v9686
      %v9700 = vadd.f32 %v9661, %v9686
      %v9701 = vadd.f32 %v9662, %v9686
      %v9702 = vadd.f32 %v9663, %v9686
      %v9703 = vadd.f32 %v9664, %v9686
      %v9704 = vadd.f32 %v9665, %v9686
      %v9705 = vadd.f32 %v9666, %v9686
      %v9706 = vadd.f32 %v9667, %v9686
      %v9707 = vadd.f32 %v9668, %v9686
      %v9708 = vadd.f32 %v9669, %v9686
      %v9709 = vadd.f32 %v9670, %v9686
      %v9710 = vadd.f32 %v9671, %v9686
      %v9711 = vadd.f32 %v9672, %v9686
      %v9712 = vadd.f32 %v9673, %v9686
      %v9713 = vadd.f32 %v9674, %v9686
      %v9714 = vadd.f32 %v9675, %v9686
      %v9715 = vadd.f32 %v9676, %v9686
      %v9716 = vadd.f32 %v9677, %v9686
      %v9717 = vadd.f32 %v9678, %v9686
      %v9718 = vadd.f32 %v9679, %v9686
      %v9719 = vadd.f32 %v9680, %v9686
      %v9720 = vmax.f32 %v9688, 0.0
      %v9721 = vmax.f32 %v9689, 0.0
      %v9722 = vmax.f32 %v9690, 0.0
      %v9723 = vmax.f32 %v9691, 0.0
      %v9724 = vmax.f32 %v9692, 0.0
      %v9725 = vmax.f32 %v9693, 0.0
      %v9726 = vmax.f32 %v9694, 0.0
      %v9727 = vmax.f32 %v9695, 0.0
      %v9728 = vmax.f32 %v9696, 0.0
      %v9729 = vmax.f32 %v9697, 0.0
      %v9730 = vmax.f32 %v9698, 0.0
      %v9731 = vmax.f32 %v9699, 0.0
      %v9732 = vmax.f32 %v9700, 0.0
      %v9733 = vmax.f32 %v9701, 0.0
      %v9734 = vmax.f32 %v9702, 0.0
      %v9735 = vmax.f32 %v9703, 0.0
      %v9736 = vmax.f32 %v9704, 0.0
      %v9737 = vmax.f32 %v9705, 0.0
      %v9738 = vmax.f32 %v9706, 0.0
      %v9739 = vmax.f32 %v9707, 0.0
      %v9740 = vmax.f32 %v9708, 0.0
      %v9741 = vmax.f32 %v9709, 0.0
      %v9742 = vmax.f32 %v9710, 0.0
      %v9743 = vmax.f32 %v9711, 0.0
      %v9744 = vmax.f32 %v9712, 0.0
      %v9745 = vmax.f32 %v9713, 0.0
      %v9746 = vmax.f32 %v9714, 0.0
      %v9747 = vmax.f32 %v9715, 0.0
      %v9748 = vmax.f32 %v9716, 0.0
      %v9749 = vmax.f32 %v9717, 0.0
      %v9750 = vmax.f32 %v9718, 0.0
      %v9751 = vmax.f32 %v9719, 0.0
      %v9752 = vld [vmem:[%s220] sm:$0xff]
      %v9753 = vld [vmem:[%s220 + $0x8] sm:$0xff]
      %v9754 = vld [vmem:[%s220 + $0x10] sm:$0xff]
      %v9755 = vld [vmem:[%s220 + $0x18] sm:$0xff]
      %v9756 = vld [vmem:[%s220 + $0x20] sm:$0xff]
      %v9757 = vld [vmem:[%s220 + $0x28] sm:$0xff]
      %v9758 = vld [vmem:[%s220 + $0x30] sm:$0xff]
      %v9759 = vld [vmem:[%s220 + $0x38] sm:$0xff]
      %v9760 = vld [vmem:[%s220 + $0x40] sm:$0xff]
      %v9761 = vld [vmem:[%s220 + $0x48] sm:$0xff]
      %v9762 = vld [vmem:[%s220 + $0x50] sm:$0xff]
      %v9763 = vld [vmem:[%s220 + $0x58] sm:$0xff]
      %v9764 = vld [vmem:[%s220 + $0x60] sm:$0xff]
      %v9765 = vld [vmem:[%s220 + $0x68] sm:$0xff]
      %v9766 = vld [vmem:[%s220 + $0x70] sm:$0xff]
      %v9767 = vld [vmem:[%s220 + $0x78] sm:$0xff]
      %v9768 = vld [vmem:[%s220 + $0x80] sm:$0xff]
      %v9769 = vld [vmem:[%s220 + $0x88] sm:$0xff]
      %v9770 = vld [vmem:[%s220 + $0x90] sm:$0xff]
      %v9771 = vld [vmem:[%s220 + $0x98] sm:$0xff]
      %v9772 = vld [vmem:[%s220 + $0xa0] sm:$0xff]
      %v9773 = vld [vmem:[%s220 + $0xa8] sm:$0xff]
      %v9774 = vld [vmem:[%s220 + $0xb0] sm:$0xff]
      %v9775 = vld [vmem:[%s220 + $0xb8] sm:$0xff]
      %v9776 = vld [vmem:[%s220 + $0xc0] sm:$0xff]
      %v9777 = vld [vmem:[%s220 + $0xc8] sm:$0xff]
      %v9778 = vld [vmem:[%s220 + $0xd0] sm:$0xff]
      %v9779 = vld [vmem:[%s220 + $0xd8] sm:$0xff]
      %v9780 = vld [vmem:[%s220 + $0xe0] sm:$0xff]
      %v9781 = vld [vmem:[%s220 + $0xe8] sm:$0xff]
      %v9782 = vld [vmem:[%s220 + $0xf0] sm:$0xff]
      %v9783 = vld [vmem:[%s220 + $0xf8] sm:$0xff]
      %9785 = vset.pattern.permute.xlu0 0
      %9786 = vperm.xlu0 %9785, %v9752
      %v9787 = vpop.permute.xlu0 %9786
      %9790 = vset.pattern.permute.xlu0 0
      %9791 = vperm.xlu0 %9790, %v9753
      %v9792 = vpop.permute.xlu0 %9791
      %9795 = vset.pattern.permute.xlu0 0
      %9796 = vperm.xlu0 %9795, %v9754
      %v9797 = vpop.permute.xlu0 %9796
      %9800 = vset.pattern.permute.xlu0 0
      %9801 = vperm.xlu0 %9800, %v9755
      %v9802 = vpop.permute.xlu0 %9801
      %9805 = vset.pattern.permute.xlu0 0
      %9806 = vperm.xlu0 %9805, %v9756
      %v9807 = vpop.permute.xlu0 %9806
      %9810 = vset.pattern.permute.xlu0 0
      %9811 = vperm.xlu0 %9810, %v9757
      %v9812 = vpop.permute.xlu0 %9811
      %9815 = vset.pattern.permute.xlu0 0
      %9816 = vperm.xlu0 %9815, %v9758
      %v9817 = vpop.permute.xlu0 %9816
      %9820 = vset.pattern.permute.xlu0 0
      %9821 = vperm.xlu0 %9820, %v9759
      %v9822 = vpop.permute.xlu0 %9821
      %9825 = vset.pattern.permute.xlu0 0
      %9826 = vperm.xlu0 %9825, %v9760
      %v9827 = vpop.permute.xlu0 %9826
      %9830 = vset.pattern.permute.xlu0 0
      %9831 = vperm.xlu0 %9830, %v9761
      %v9832 = vpop.permute.xlu0 %9831
      %9835 = vset.pattern.permute.xlu0 0
      %9836 = vperm.xlu0 %9835, %v9762
      %v9837 = vpop.permute.xlu0 %9836
      %9840 = vset.pattern.permute.xlu0 0
      %9841 = vperm.xlu0 %9840, %v9763
      %v9842 = vpop.permute.xlu0 %9841
      %9845 = vset.pattern.permute.xlu0 0
      %9846 = vperm.xlu0 %9845, %v9764
      %v9847 = vpop.permute.xlu0 %9846
      %9850 = vset.pattern.permute.xlu0 0
      %9851 = vperm.xlu0 %9850, %v9765
      %v9852 = vpop.permute.xlu0 %9851
      %9855 = vset.pattern.permute.xlu0 0
      %9856 = vperm.xlu0 %9855, %v9766
      %v9857 = vpop.permute.xlu0 %9856
      %9860 = vset.pattern.permute.xlu0 0
      %9861 = vperm.xlu0 %9860, %v9767
      %v9862 = vpop.permute.xlu0 %9861
      %9865 = vset.pattern.permute.xlu0 0
      %9866 = vperm.xlu0 %9865, %v9768
      %v9867 = vpop.permute.xlu0 %9866
      %9870 = vset.pattern.permute.xlu0 0
      %9871 = vperm.xlu0 %9870, %v9769
      %v9872 = vpop.permute.xlu0 %9871
      %9875 = vset.pattern.permute.xlu0 0
      %9876 = vperm.xlu0 %9875, %v9770
      %v9877 = vpop.permute.xlu0 %9876
      %9880 = vset.pattern.permute.xlu0 0
      %9881 = vperm.xlu0 %9880, %v9771
      %v9882 = vpop.permute.xlu0 %9881
      %9885 = vset.pattern.permute.xlu0 0
      %9886 = vperm.xlu0 %9885, %v9772
      %v9887 = vpop.permute.xlu0 %9886
      %9890 = vset.pattern.permute.xlu0 0
      %9891 = vperm.xlu0 %9890, %v9773
      %v9892 = vpop.permute.xlu0 %9891
      %9895 = vset.pattern.permute.xlu0 0
      %9896 = vperm.xlu0 %9895, %v9774
      %v9897 = vpop.permute.xlu0 %9896
      %9900 = vset.pattern.permute.xlu0 0
      %9901 = vperm.xlu0 %9900, %v9775
      %v9902 = vpop.permute.xlu0 %9901
      %9905 = vset.pattern.permute.xlu0 0
      %9906 = vperm.xlu0 %9905, %v9776
      %v9907 = vpop.permute.xlu0 %9906
      %9910 = vset.pattern.permute.xlu0 0
      %9911 = vperm.xlu0 %9910, %v9777
      %v9912 = vpop.permute.xlu0 %9911
      %9915 = vset.pattern.permute.xlu0 0
      %9916 = vperm.xlu0 %9915, %v9778
      %v9917 = vpop.permute.xlu0 %9916
      %9920 = vset.pattern.permute.xlu0 0
      %9921 = vperm.xlu0 %9920, %v9779
      %v9922 = vpop.permute.xlu0 %9921
      %9925 = vset.pattern.permute.xlu0 0
      %9926 = vperm.xlu0 %9925, %v9780
      %v9927 = vpop.permute.xlu0 %9926
      %9930 = vset.pattern.permute.xlu0 0
      %9931 = vperm.xlu0 %9930, %v9781
      %v9932 = vpop.permute.xlu0 %9931
      %9935 = vset.pattern.permute.xlu0 0
      %9936 = vperm.xlu0 %9935, %v9782
      %v9937 = vpop.permute.xlu0 %9936
      %9940 = vset.pattern.permute.xlu0 0
      %9941 = vperm.xlu0 %9940, %v9783
      %v9942 = vpop.permute.xlu0 %9941
      %v9944 = vmul.f32 %v9720, %v9787
      %v9945 = vmul.f32 %v9721, %v9792
      %v9946 = vmul.f32 %v9722, %v9797
      %v9947 = vmul.f32 %v9723, %v9802
      %v9948 = vmul.f32 %v9724, %v9807
      %v9949 = vmul.f32 %v9725, %v9812
      %v9950 = vmul.f32 %v9726, %v9817
      %v9951 = vmul.f32 %v9727, %v9822
      %v9952 = vmul.f32 %v9728, %v9827
      %v9953 = vmul.f32 %v9729, %v9832
      %v9954 = vmul.f32 %v9730, %v9837
      %v9955 = vmul.f32 %v9731, %v9842
      %v9956 = vmul.f32 %v9732, %v9847
      %v9957 = vmul.f32 %v9733, %v9852
      %v9958 = vmul.f32 %v9734, %v9857
      %v9959 = vmul.f32 %v9735, %v9862
      %v9960 = vmul.f32 %v9736, %v9867
      %v9961 = vmul.f32 %v9737, %v9872
      %v9962 = vmul.f32 %v9738, %v9877
      %v9963 = vmul.f32 %v9739, %v9882
      %v9964 = vmul.f32 %v9740, %v9887
      %v9965 = vmul.f32 %v9741, %v9892
      %v9966 = vmul.f32 %v9742, %v9897
      %v9967 = vmul.f32 %v9743, %v9902
      %v9968 = vmul.f32 %v9744, %v9907
      %v9969 = vmul.f32 %v9745, %v9912
      %v9970 = vmul.f32 %v9746, %v9917
      %v9971 = vmul.f32 %v9747, %v9922
      %v9972 = vmul.f32 %v9748, %v9927
      %v9973 = vmul.f32 %v9749, %v9932
      %v9974 = vmul.f32 %v9750, %v9937
      %v9975 = vmul.f32 %v9751, %v9942
      %v9976 = vpack.c.bf16 %v9945, %v9944
      %v9977 = vpack.c.bf16 %v9947, %v9946
      %v9978 = vpack.c.bf16 %v9949, %v9948
      %v9979 = vpack.c.bf16 %v9951, %v9950
      %v9980 = vpack.c.bf16 %v9953, %v9952
      %v9981 = vpack.c.bf16 %v9955, %v9954
      %v9982 = vpack.c.bf16 %v9957, %v9956
      %v9983 = vpack.c.bf16 %v9959, %v9958
      %v9984 = vpack.c.bf16 %v9961, %v9960
      %v9985 = vpack.c.bf16 %v9963, %v9962
      %v9986 = vpack.c.bf16 %v9965, %v9964
      %v9987 = vpack.c.bf16 %v9967, %v9966
      %v9988 = vpack.c.bf16 %v9969, %v9968
      %v9989 = vpack.c.bf16 %v9971, %v9970
      %v9990 = vpack.c.bf16 %v9973, %v9972
      %v9991 = vpack.c.bf16 %v9975, %v9974
      %v10008 = vunpack.c.l.b16 %v9976
      %v10009 = vunpack.c.h.b16 %v9976
      %v10010 = vunpack.c.l.b16 %v9977
      %v10011 = vunpack.c.h.b16 %v9977
      %v10012 = vunpack.c.l.b16 %v9978
      %v10013 = vunpack.c.h.b16 %v9978
      %v10014 = vunpack.c.l.b16 %v9979
      %v10015 = vunpack.c.h.b16 %v9979
      %v10016 = vunpack.c.l.b16 %v9980
      %v10017 = vunpack.c.h.b16 %v9980
      %v10018 = vunpack.c.l.b16 %v9981
      %v10019 = vunpack.c.h.b16 %v9981
      %v10020 = vunpack.c.l.b16 %v9982
      %v10021 = vunpack.c.h.b16 %v9982
      %v10022 = vunpack.c.l.b16 %v9983
      %v10023 = vunpack.c.h.b16 %v9983
      %v10024 = vunpack.c.l.b16 %v9984
      %v10025 = vunpack.c.h.b16 %v9984
      %v10026 = vunpack.c.l.b16 %v9985
      %v10027 = vunpack.c.h.b16 %v9985
      %v10028 = vunpack.c.l.b16 %v9986
      %v10029 = vunpack.c.h.b16 %v9986
      %v10030 = vunpack.c.l.b16 %v9987
      %v10031 = vunpack.c.h.b16 %v9987
      %v10032 = vunpack.c.l.b16 %v9988
      %v10033 = vunpack.c.h.b16 %v9988
      %v10034 = vunpack.c.l.b16 %v9989
      %v10035 = vunpack.c.h.b16 %v9989
      %v10036 = vunpack.c.l.b16 %v9990
      %v10037 = vunpack.c.h.b16 %v9990
      %v10038 = vunpack.c.l.b16 %v9991
      %v10039 = vunpack.c.h.b16 %v9991
      %v10040 = vpack.c.b16 %v10008, %v10008
      %v10041 = vpack.c.b16 %v10009, %v10009
      %v10042 = vpack.c.b16 %v10010, %v10010
      %v10043 = vpack.c.b16 %v10011, %v10011
      %v10044 = vpack.c.b16 %v10012, %v10012
      %v10045 = vpack.c.b16 %v10013, %v10013
      %v10046 = vpack.c.b16 %v10014, %v10014
      %v10047 = vpack.c.b16 %v10015, %v10015
      %v10048 = vpack.c.b16 %v10016, %v10016
      %v10049 = vpack.c.b16 %v10017, %v10017
      %v10050 = vpack.c.b16 %v10018, %v10018
      %v10051 = vpack.c.b16 %v10019, %v10019
      %v10052 = vpack.c.b16 %v10020, %v10020
      %v10053 = vpack.c.b16 %v10021, %v10021
      %v10054 = vpack.c.b16 %v10022, %v10022
      %v10055 = vpack.c.b16 %v10023, %v10023
      %v10056 = vpack.c.b16 %v10024, %v10024
      %v10057 = vpack.c.b16 %v10025, %v10025
      %v10058 = vpack.c.b16 %v10026, %v10026
      %v10059 = vpack.c.b16 %v10027, %v10027
      %v10060 = vpack.c.b16 %v10028, %v10028
      %v10061 = vpack.c.b16 %v10029, %v10029
      %v10062 = vpack.c.b16 %v10030, %v10030
      %v10063 = vpack.c.b16 %v10031, %v10031
      %v10064 = vpack.c.b16 %v10032, %v10032
      %v10065 = vpack.c.b16 %v10033, %v10033
      %v10066 = vpack.c.b16 %v10034, %v10034
      %v10067 = vpack.c.b16 %v10035, %v10035
      %v10068 = vpack.c.b16 %v10036, %v10036
      %v10069 = vpack.c.b16 %v10037, %v10037
      %v10070 = vpack.c.b16 %v10038, %v10038
      %v10071 = vpack.c.b16 %v10039, %v10039
      %vm10104 = vcmask 125952
      %10105 = vst.msk [vmem:[%s226] sm:$0xf] %vm10104, %v10040
      %10106 = vst.msk [vmem:[%s226 + $0x4] sm:$0xf] %vm10104, %v10041
      %10107 = vst.msk [vmem:[%s226 + $0x8] sm:$0xf] %vm10104, %v10042
      %10108 = vst.msk [vmem:[%s226 + $0xc] sm:$0xf] %vm10104, %v10043
      %10109 = vst.msk [vmem:[%s226 + $0x10] sm:$0xf] %vm10104, %v10044
      %10110 = vst.msk [vmem:[%s226 + $0x14] sm:$0xf] %vm10104, %v10045
      %10111 = vst.msk [vmem:[%s226 + $0x18] sm:$0xf] %vm10104, %v10046
      %10112 = vst.msk [vmem:[%s226 + $0x1c] sm:$0xf] %vm10104, %v10047
      %10113 = vst.msk [vmem:[%s226 + $0x20] sm:$0xf] %vm10104, %v10048
      %10114 = vst.msk [vmem:[%s226 + $0x24] sm:$0xf] %vm10104, %v10049
      %10115 = vst.msk [vmem:[%s226 + $0x28] sm:$0xf] %vm10104, %v10050
      %10116 = vst.msk [vmem:[%s226 + $0x2c] sm:$0xf] %vm10104, %v10051
      %10117 = vst.msk [vmem:[%s226 + $0x30] sm:$0xf] %vm10104, %v10052
      %10118 = vst.msk [vmem:[%s226 + $0x34] sm:$0xf] %vm10104, %v10053
      %10119 = vst.msk [vmem:[%s226 + $0x38] sm:$0xf] %vm10104, %v10054
      %10120 = vst.msk [vmem:[%s226 + $0x3c] sm:$0xf] %vm10104, %v10055
      %10121 = vst.msk [vmem:[%s226 + $0x40] sm:$0xf] %vm10104, %v10056
      %10122 = vst.msk [vmem:[%s226 + $0x44] sm:$0xf] %vm10104, %v10057
      %10123 = vst.msk [vmem:[%s226 + $0x48] sm:$0xf] %vm10104, %v10058
      %10124 = vst.msk [vmem:[%s226 + $0x4c] sm:$0xf] %vm10104, %v10059
      %10125 = vst.msk [vmem:[%s226 + $0x50] sm:$0xf] %vm10104, %v10060
      %10126 = vst.msk [vmem:[%s226 + $0x54] sm:$0xf] %vm10104, %v10061
      %10127 = vst.msk [vmem:[%s226 + $0x58] sm:$0xf] %vm10104, %v10062
      %10128 = vst.msk [vmem:[%s226 + $0x5c] sm:$0xf] %vm10104, %v10063
      %10129 = vst.msk [vmem:[%s226 + $0x60] sm:$0xf] %vm10104, %v10064
      %10130 = vst.msk [vmem:[%s226 + $0x64] sm:$0xf] %vm10104, %v10065
      %10131 = vst.msk [vmem:[%s226 + $0x68] sm:$0xf] %vm10104, %v10066
      %10132 = vst.msk [vmem:[%s226 + $0x6c] sm:$0xf] %vm10104, %v10067
      %10133 = vst.msk [vmem:[%s226 + $0x70] sm:$0xf] %vm10104, %v10068
      %10134 = vst.msk [vmem:[%s226 + $0x74] sm:$0xf] %vm10104, %v10069
      %10135 = vst.msk [vmem:[%s226 + $0x78] sm:$0xf] %vm10104, %v10070
      %10136 = vst.msk [vmem:[%s226 + $0x7c] sm:$0xf] %vm10104, %v10071
      %s10137 = smul.u32 32, %s16
      %p10138 = scmp.lt.s32.totalorder %s10137, 3487
      %s10139 = scalar_select %p10138, %s10137, 3487
      %s10140 = smul.addr %s10139, 4
      %s10141 = scalar_lea.vmem %s5, %s10140
      // Predicated region
      $region41: #{tpu_custom_call.1} parent=39 // pred_check
        %p10142 = pneg %p144
      $region42: #{tpu_custom_call.1} parent=39 // pred_check_branch
        %10144 = sbr.rel (%p10142) target = $region44
      $region43: #{tpu_custom_call.1} parent=39 // pred_region
        %s10145 = smul.u32 32, %s16
      $region44: #{tpu_custom_call.1} parent=39 // pred_fallthru
        _
    $region40: #{tpu_custom_call.1} parent=5 // pred_fallthru
      _
    %p10146 = scmp.le.s32.totalorder 2, %s11
    // Predicated region
    $region45: #{tpu_custom_call.1} parent=5 // pred_check
      %p10147 = pneg %p10146
    $region46: #{tpu_custom_call.1} parent=5 // pred_check_branch
      %10149 = sbr.rel (%p10147) target = $region48
    $region47: #{tpu_custom_call.1} parent=5 // pred_region
      %s10150 = ssub.s32 %s11, 2
      // Predicated region
      $region49: #{tpu_custom_call.1} parent=47 // pred_check
        %p10151 = pneg %p150
      $region50: #{tpu_custom_call.1} parent=47 // pred_check_branch
        %10153 = sbr.rel (%p10151) target = $region52
      $region51: #{tpu_custom_call.1} parent=47 // pred_region
        %s10154 = smul.u32 32, %s17
        %p10155 = scmp.lt.s32.totalorder %s10154, 3487
        %s10156 = scalar_select %p10155, %s10154, 3487
        %s10157 = smul.addr %s10156, 4
        %s10158 = scalar_lea.vmem %s5, %s10157
      $region52: #{tpu_custom_call.1} parent=47 // pred_fallthru
        _
    $region48: #{tpu_custom_call.1} parent=5 // pred_fallthru
      _
  $region6: #{tpu_custom_call.1} parent=0 // loop_footer
    %s15 = sadd.s32 1, %s11
  $region7: #{tpu_custom_call.1} parent=0 // loop_footer_branch
    %10 = sbr.rel target = $region3
  $region8: #{tpu_custom_call.1} parent=0 // loop_exit
    _

</llo_original>
